<compile_context>
chip_gen: v7x
topology: tpu7x:2x2x1
jax: 0.10.0
libtpu: 0.0.40
codegen_flags: <defaults>
</compile_context>

<pallas_src>
import functools

import jax
import jax.numpy as jnp
from jax.experimental import pallas as pl
from jax.experimental.pallas import tpu as pltpu

_VMEM_LIMIT = 32 * 1024 * 1024
_TM = 256   # matmul row tile (matches the 256-row MXU on v6e/v7x)
_TN = 128   # cout lane tile (matches the 128-wide MXU on v5e, fine on v6e/v7x)


def _round_up(x, m):
    return (x + m - 1) // m * m


# ----------------------------------------------------------------------------
# Pallas kernels
# ----------------------------------------------------------------------------
def _conv_mm_kernel(x_ref, w_ref, o_ref, *, leaky):
    """One (TM, K) x (K, TN) MXU tile of the im2col'd conv, optional LeakyReLU."""
    acc = jnp.dot(x_ref[...], w_ref[...], preferred_element_type=jnp.float32)
    if leaky:
        acc = jnp.where(acc > 0, acc, 0.2 * acc)
    o_ref[...] = acc.astype(o_ref.dtype)


def _conv_mm_stats_kernel(x_ref, w_ref, o_ref, s_ref, q_ref):
    """Conv matmul tile + fused per-channel BN statistics (sum, sum of squares).

    Grid is (cout_tiles, m_tiles).  The M axis is innermost and 'arbitrary' so
    the (1, TN) stats blocks stay resident in VMEM and accumulate across all M
    tiles, while the (K, TN) weight block is DMA'd only once per cout tile.
    Zero-padded M rows contribute exactly zero to both sums.
    """
    i = pl.program_id(1)

    @pl.when(i == 0)
    def _():
        s_ref[...] = jnp.zeros_like(s_ref)
        q_ref[...] = jnp.zeros_like(q_ref)

    acc = jnp.dot(x_ref[...], w_ref[...], preferred_element_type=jnp.float32)
    o_ref[...] = acc.astype(o_ref.dtype)
    s_ref[...] += jnp.sum(acc, axis=0, keepdims=True)
    q_ref[...] += jnp.sum(acc * acc, axis=0, keepdims=True)


def _final_kernel(x_ref, w_ref, s_ref, b_ref, o_ref):
    """Fused BN4 affine + LeakyReLU + conv5 (4x4 valid, Cout=1) + sigmoid."""
    x = x_ref[...].astype(jnp.float32)                      # (tb, K)
    a = x * s_ref[...] + b_ref[...]
    a = jnp.where(a > 0, a, 0.2 * a)
    y = jnp.sum(a * w_ref[...], axis=-1, keepdims=True)     # VPU mul + XLU reduce
    o_ref[...] = 1.0 / (1.0 + jnp.exp(-y))


# ----------------------------------------------------------------------------
# layout plumbing (XLA): block-space im2col + weight reorder
# ----------------------------------------------------------------------------
def _prep_conv_weight(w, cin_glue, cout_p):
    """(Cout, Cin, 4, 4) torch layout -> (16*cin_glue, cout_p) bf16 matching im2col."""
    cout, cin, _, _ = w.shape
    wpd = jnp.pad(w, ((0, cout_p - cout), (0, cin_glue - cin), (0, 0), (0, 0)))
    wpd = jnp.transpose(wpd, (2, 3, 1, 0))                 # (kh, kw, ci, co)
    wpd = wpd.reshape(2, 2, 2, 2, cin_glue, cout_p)        # (bh, sh, bw, sw, ci, co)
    wpd = jnp.transpose(wpd, (0, 2, 1, 3, 4, 5))           # (bh, bw, sh, sw, ci, co)
    return wpd.reshape(16 * cin_glue, cout_p).astype(jnp.bfloat16)


def _im2col_s2(y):
    """k=4, s=2, p=1 im2col via space-to-depth; y (n,h,w,c) -> (n*oh*ow, 16c) bf16."""
    n, h, w, c = y.shape
    oh, ow = h // 2, w // 2
    hp, wp = oh + 1, ow + 1
    yp = jnp.pad(y, ((0, 0), (1, 1), (1, 1), (0, 0)))
    yb = yp.reshape(n, hp, 2, wp, 2, c)
    yb = jnp.transpose(yb, (0, 1, 3, 2, 4, 5)).reshape(n, hp, wp, 4 * c)
    taps = [yb[:, bh:bh + oh, bw:bw + ow, :] for bh in (0, 1) for bw in (0, 1)]
    x = jnp.concatenate(taps, axis=-1)                     # (n, oh, ow, 16c)
    return x.reshape(n * oh * ow, 16 * c)


# ----------------------------------------------------------------------------
# conv layer wrapper
# ----------------------------------------------------------------------------
def conv4x4_s2(y, w_torch, cout_p, *, leaky_epilogue=False, want_stats=False,
               prologue=None, cin_glue=None):
    """Conv2d(k=4, s=2, p=1, bias=False) on an NHWC bf16 activation.

    prologue: optional per-input-channel (scale, shift); applies
      LeakyReLU_0.2(y*scale + shift) BEFORE the conv.  It is fused into the XLA
      layout pass that builds the im2col, so the zero padding border added
      afterwards stays exactly zero (PyTorch pads the post-activation).
    want_stats: additionally returns fp32 per-output-channel (sum, sum_sq, count)
      computed inside the conv kernel epilogue, for the following BatchNorm.
    """
    if prologue is not None:
        scale, shift = prologue
        yf = y.astype(jnp.float32) * scale + shift
        y = jnp.where(yf > 0, yf, 0.2 * yf).astype(jnp.bfloat16)

    n, h, w, c = y.shape
    if cin_glue is not None and cin_glue != c:
        y = jnp.pad(y, ((0, 0), (0, 0), (0, 0), (0, cin_glue - c)))
        c = cin_glue

    oh, ow = h // 2, w // 2
    k = 16 * c                                             # multiple of 128
    x2 = _im2col_s2(y)
    m_total = n * oh * ow
    m_pad = _round_up(m_total, _TM)
    if m_pad != m_total:
        x2 = jnp.pad(x2, ((0, m_pad - m_total), (0, 0)))
    wb = _prep_conv_weight(w_torch, c, cout_p)

    ni = m_pad // _TM
    nj = cout_p // _TN

    if not want_stats:
        # conv1: fully parallel grid (megacore-shardable on both axes).
        o = pl.pallas_call(
            functools.partial(_conv_mm_kernel, leaky=leaky_epilogue),
            out_shape=jax.ShapeDtypeStruct((m_pad, cout_p), jnp.bfloat16),
            grid=(ni, nj),
            in_specs=[pl.BlockSpec((_TM, k), lambda i, j: (i, 0)),
                      pl.BlockSpec((k, _TN), lambda i, j: (0, j))],
            out_specs=pl.BlockSpec((_TM, _TN), lambda i, j: (i, j)),
            compiler_params=pltpu.CompilerParams(
                dimension_semantics=("parallel", "parallel"),
                vmem_limit_bytes=_VMEM_LIMIT),
        )(x2, wb)
        return o[:m_total].reshape(n, oh, ow, cout_p)

    # stats layers: weight-tile axis outermost (resident weights), M axis inner
    # & 'arbitrary' so the (1, TN) stats accumulators stay resident in VMEM.
    o, s, q = pl.pallas_call(
        _conv_mm_stats_kernel,
        out_shape=(jax.ShapeDtypeStruct((m_pad, cout_p), jnp.bfloat16),
                   jax.ShapeDtypeStruct((1, cout_p), jnp.float32),
                   jax.ShapeDtypeStruct((1, cout_p), jnp.float32)),
        grid=(nj, ni),
        in_specs=[pl.BlockSpec((_TM, k), lambda j, i: (i, 0)),
                  pl.BlockSpec((k, _TN), lambda j, i: (0, j))],
        out_specs=(pl.BlockSpec((_TM, _TN), lambda j, i: (i, j)),
                   pl.BlockSpec((1, _TN), lambda j, i: (0, j)),
                   pl.BlockSpec((1, _TN), lambda j, i: (0, j))),
        compiler_params=pltpu.CompilerParams(
            dimension_semantics=("parallel", "arbitrary"),
            vmem_limit_bytes=_VMEM_LIMIT),
    )(x2, wb)
    return (o[:m_total].reshape(n, oh, ow, cout_p), s[0], q[0],
            jnp.float32(m_total))


# ----------------------------------------------------------------------------
# BatchNorm (training-batch stats, eps=1e-5) folded into per-channel scale/shift
# ----------------------------------------------------------------------------
def _bn_scale_shift(s, q, count, gamma, beta, c_p):
    mean = s / count
    var = jnp.maximum(q / count - mean * mean, 0.0)        # biased variance
    inv = jax.lax.rsqrt(var + 1e-5)
    g = jnp.pad(gamma.astype(jnp.float32), (0, c_p - gamma.shape[0]))
    b = jnp.pad(beta.astype(jnp.float32), (0, c_p - beta.shape[0]))
    scale = g * inv
    shift = b - mean * scale
    return scale, shift                                    # (c_p,), padded slots -> 0


# ----------------------------------------------------------------------------
# final fused kernel wrapper (BN4 + LeakyReLU + conv5 + sigmoid), batch-tiled
# ----------------------------------------------------------------------------
def final_bn_lrelu_conv5_sigmoid(y4, w5_torch, scale, shift):
    n, h, w, c = y4.shape                                  # h == w == 4
    k = h * w * c
    x2 = y4.reshape(n, k)
    tb = min(256, _round_up(n, 16))
    n_pad = _round_up(n, tb)
    if n_pad != n:
        x2 = jnp.pad(x2, ((0, n_pad - n), (0, 0)))

    w5 = jnp.pad(w5_torch, ((0, 0), (0, c - w5_torch.shape[1]), (0, 0), (0, 0)))
    w5 = jnp.transpose(w5[0], (1, 2, 0)).reshape(1, k).astype(jnp.float32)
    scale_f = jnp.tile(scale.reshape(1, c), (1, h * w))
    shift_f = jnp.tile(shift.reshape(1, c), (1, h * w))

    out = pl.pallas_call(
        _final_kernel,
        out_shape=jax.ShapeDtypeStruct((n_pad, 1), jnp.float32),
        grid=(n_pad // tb,),
        in_specs=[pl.BlockSpec((tb, k), lambda i: (i, 0)),
                  pl.BlockSpec((1, k), lambda i: (0, 0)),
                  pl.BlockSpec((1, k), lambda i: (0, 0)),
                  pl.BlockSpec((1, k), lambda i: (0, 0))],
        out_specs=pl.BlockSpec((tb, 1), lambda i: (i, 0)),
        compiler_params=pltpu.CompilerParams(
            dimension_semantics=("parallel",),
            vmem_limit_bytes=_VMEM_LIMIT),
    )(x2, w5, scale_f, shift_f)
    return out[:n, 0]


# ----------------------------------------------------------------------------
# FrameDiscriminator forward
# ----------------------------------------------------------------------------
def init_params(key, nc, ndf):
    ks = jax.random.split(key, 12)
    p = {}
    p["w1"] = 0.02 * jax.random.normal(ks[0], (ndf, nc, 4, 4), jnp.float32)
    p["w2"] = 0.02 * jax.random.normal(ks[1], (ndf * 2, ndf, 4, 4), jnp.float32)
    p["w3"] = 0.02 * jax.random.normal(ks[2], (ndf * 4, ndf * 2, 4, 4), jnp.float32)
    p["w4"] = 0.02 * jax.random.normal(ks[3], (ndf * 8, ndf * 4, 4, 4), jnp.float32)
    p["w5"] = 0.02 * jax.random.normal(ks[4], (1, ndf * 8, 4, 4), jnp.float32)
    p["g2"] = 1.0 + 0.02 * jax.random.normal(ks[5], (ndf * 2,), jnp.float32)
    p["b2"] = 0.02 * jax.random.normal(ks[6], (ndf * 2,), jnp.float32)
    p["g3"] = 1.0 + 0.02 * jax.random.normal(ks[7], (ndf * 4,), jnp.float32)
    p["b3"] = 0.02 * jax.random.normal(ks[8], (ndf * 4,), jnp.float32)
    p["g4"] = 1.0 + 0.02 * jax.random.normal(ks[9], (ndf * 8,), jnp.float32)
    p["b4"] = 0.02 * jax.random.normal(ks[10], (ndf * 8,), jnp.float32)
    return p


def frame_discriminator_forward(x_nchw, p):
    nc = x_nchw.shape[1]
    ndf = p["w1"].shape[0]

    c1 = _round_up(ndf, 128)
    c2 = _round_up(ndf * 2, 128)
    c3 = _round_up(ndf * 4, 128)
    c4 = _round_up(ndf * 8, 128)
    cin1 = _round_up(max(nc, 8), 8)          # 16*cin1 is a multiple of 128

    x = jnp.transpose(x_nchw, (0, 2, 3, 1)).astype(jnp.bfloat16)

    # conv1 + fused LeakyReLU epilogue (no BN on layer 1)
    a1 = conv4x4_s2(x, p["w1"], c1, leaky_epilogue=True, cin_glue=cin1)
    # conv2 (raw output) + fused per-channel BN statistics
    a2, s2, q2, n2 = conv4x4_s2(a1, p["w2"], c2, want_stats=True)
    sc2, sh2 = _bn_scale_shift(s2, q2, n2, p["g2"], p["b2"], c2)
    # BN2 affine + LeakyReLU applied as conv3's input prologue (fused with glue)
    a3, s3, q3, n3 = conv4x4_s2(a2, p["w3"], c3, want_stats=True, prologue=(sc2, sh2))
    sc3, sh3 = _bn_scale_shift(s3, q3, n3, p["g3"], p["b3"], c3)
    a4, s4, q4, n4 = conv4x4_s2(a3, p["w4"], c4, want_stats=True, prologue=(sc3, sh3))
    sc4, sh4 = _bn_scale_shift(s4, q4, n4, p["g4"], p["b4"], c4)
    # fused BN4 affine + LeakyReLU + conv5 (4x4 valid) + sigmoid, batch-tiled
    out = final_bn_lrelu_conv5_sigmoid(a4, p["w5"], sc4, sh4)
    return jnp.squeeze(out)                  # matches torch .squeeze(): (N,) for N > 1


# ----------------------------------------------------------------------------
# pure-JAX fp32 reference (PyTorch training-mode BN semantics)
# ----------------------------------------------------------------------------
def _reference_forward(x_nchw, p):
    f32 = jnp.float32
    hi = jax.lax.Precision.HIGHEST

    def conv(x, w, stride, pad):
        return jax.lax.conv_general_dilated(
            x, w.astype(f32), (stride, stride), [(pad, pad), (pad, pad)],
            dimension_numbers=("NCHW", "OIHW", "NCHW"), precision=hi)

    def bn(x, g, b):
        mean = jnp.mean(x, axis=(0, 2, 3), keepdims=True)
        var = jnp.mean(jnp.square(x - mean), axis=(0, 2, 3), keepdims=True)
        xh = (x - mean) * jax.lax.rsqrt(var + 1e-5)
        return xh * g.reshape(1, -1, 1, 1) + b.reshape(1, -1, 1, 1)

    lrelu = lambda v: jnp.where(v > 0, v, 0.2 * v)
    x = x_nchw.astype(f32)
    x = lrelu(conv(x, p["w1"], 2, 1))
    x = lrelu(bn(conv(x, p["w2"], 2, 1), p["g2"], p["b2"]))
    x = lrelu(bn(conv(x, p["w3"], 2, 1), p["g3"], p["b3"]))
    x = lrelu(bn(conv(x, p["w4"], 2, 1), p["g4"], p["b4"]))
    x = jax.nn.sigmoid(conv(x, p["w5"], 1, 0))
    return jnp.squeeze(x)


if __name__ == "__main__":
    # DCGAN-discriminator-consistent shapes: spatial 64 so the final 4x4 valid
    # conv sees a 4x4 feature map (64 -> 32 -> 16 -> 8 -> 4 -> 1).
    N, NC, NDF, S = 2, 3, 8, 64

    key = jax.random.PRNGKey(0)
    k_params, k_x = jax.random.split(key)
    params = init_params(k_params, NC, NDF)
    x = jax.random.normal(k_x, (N, NC, S, S), jnp.float32)

    fwd = jax.jit(frame_discriminator_forward)
    out = jax.block_until_ready(fwd(x, params))

    assert out.shape == (N,), out.shape
    assert bool(jnp.all(jnp.isfinite(out)))
    assert bool(jnp.all((out >= 0.0) & (out <= 1.0)))      # sigmoid output range

    # bf16 pipeline vs fp32 reference: loose absolute tolerance on the sigmoid output
    ref = jax.block_until_ready(_reference_forward(x, params))
    assert bool(jnp.max(jnp.abs(out.astype(jnp.float32) - ref)) < 5e-2), (out, ref)

    print("KERNEL_OK")
</pallas_src>

<mosaic_0001>
module attributes {stable_mosaic.version = 11 : i64} {
  func.func @_conv_mm_kernel(%arg0: i32, %arg1: i32, %arg2: memref<256x128xbf16, #tpu.memory_space<vmem>>, %arg3: memref<128x128xbf16, #tpu.memory_space<vmem>>, %arg4: memref<256x128xbf16, #tpu.memory_space<vmem>>) attributes {dimension_semantics = [#tpu.dimension_semantics<parallel>, #tpu.dimension_semantics<parallel>], iteration_bounds = array<i64: 8, 1>, scalar_prefetch = 0 : i64, scratch_operands = 0 : i64, tpu.core_type = #tpu.core_type<tc>, window_params = [{transform_indices = @transform_0, window_bounds = array<i64: 256, 128>}, {transform_indices = @transform_1, window_bounds = array<i64: 128, 128>}, {transform_indices = @transform_2, window_bounds = array<i64: 256, 128>}]} {
    %c0 = arith.constant 0 : index
    %c0_0 = arith.constant 0 : index
    %0 = vector.load %arg2[%c0, %c0_0] : memref<256x128xbf16, #tpu.memory_space<vmem>>, vector<256x128xbf16>
    %c0_1 = arith.constant 0 : index
    %c0_2 = arith.constant 0 : index
    %1 = vector.load %arg3[%c0_1, %c0_2] : memref<128x128xbf16, #tpu.memory_space<vmem>>, vector<128x128xbf16>
    %cst = arith.constant dense<0.000000e+00> : vector<256x128xf32>
    %2 = tpu.matmul %0, %1, %cst {dimension_numbers = #tpu.dot_dimension_numbers<[1], [0], [0], [1], [0, 0, 1, 1], [], []>} : vector<256x128xbf16>, vector<128x128xbf16>, vector<256x128xf32> -> vector<256x128xf32>
    %cst_3 = arith.constant 0.000000e+00 : f32
    %3 = vector.broadcast %cst_3 : f32 to vector<256x128xf32>
    %4 = arith.cmpf ogt, %2, %3 : vector<256x128xf32>
    %cst_4 = arith.constant 2.000000e-01 : f32
    %5 = vector.broadcast %cst_4 : f32 to vector<256x128xf32>
    %6 = arith.mulf %5, %2 : vector<256x128xf32>
    %7 = arith.select %4, %2, %6 : vector<256x128xi1>, vector<256x128xf32>
    %8 = arith.truncf %7 : vector<256x128xf32> to vector<256x128xbf16>
    %c0_5 = arith.constant 0 : index
    %c0_6 = arith.constant 0 : index
    %9 = vector.load %arg4[%c0_5, %c0_6] : memref<256x128xbf16, #tpu.memory_space<vmem>>, vector<256x128xbf16>
    tpu.vector_store %arg4[%c0_5, %c0_6], %8 {strides = array<i32>} : memref<256x128xbf16, #tpu.memory_space<vmem>>, vector<256x128xbf16>,
    return
  }
  func.func @transform_0(%arg0: i32, %arg1: i32) -> (i32, i32) {
    %c0_i32 = arith.constant 0 : i32
    %c0_i32_0 = arith.constant 0 : i32
    return %arg0, %c0_i32 : i32, i32
  }
  func.func @transform_1(%arg0: i32, %arg1: i32) -> (i32, i32) {
    %c0_i32 = arith.constant 0 : i32
    %c0_i32_0 = arith.constant 0 : i32
    return %c0_i32, %arg1 : i32, i32
  }
  func.func @transform_2(%arg0: i32, %arg1: i32) -> (i32, i32) {
    %c0_i32 = arith.constant 0 : i32
    return %arg0, %arg1 : i32, i32
  }
}

module attributes {stable_mosaic.version = 11 : i64} {
  func.func @_conv_mm_stats_kernel(%arg0: i32, %arg1: i32, %arg2: memref<256x2048xbf16, #tpu.memory_space<vmem>>, %arg3: memref<2048x128xbf16, #tpu.memory_space<vmem>>, %arg4: memref<256x128xbf16, #tpu.memory_space<vmem>>, %arg5: memref<1x128xf32, #tpu.memory_space<vmem>>, %arg6: memref<1x128xf32, #tpu.memory_space<vmem>>) attributes {dimension_semantics = [#tpu.dimension_semantics<parallel>, #tpu.dimension_semantics<arbitrary>], iteration_bounds = array<i64: 1, 2>, scalar_prefetch = 0 : i64, scratch_operands = 0 : i64, tpu.core_type = #tpu.core_type<tc>, window_params = [{transform_indices = @transform_0, window_bounds = array<i64: 256, 2048>}, {transform_indices = @transform_1, window_bounds = array<i64: 2048, 128>}, {transform_indices = @transform_2, window_bounds = array<i64: 256, 128>}, {transform_indices = @transform_3, window_bounds = array<i64: 1, 128>}, {transform_indices = @transform_4, window_bounds = array<i64: 1, 128>}]} {
    %c0_i32 = arith.constant 0 : i32
    %0 = arith.cmpi eq, %arg1, %c0_i32 : i32
    %1 = arith.extui %0 : i1 to i32
    %c0_i32_0 = arith.constant 0 : i32
    %2 = arith.cmpi ne, %1, %c0_i32_0 : i32
    scf.if %2 {
      %cst_16 = arith.constant 0.000000e+00 : f32
      %19 = vector.broadcast %cst_16 : f32 to vector<1x128xf32>
      %c0_17 = arith.constant 0 : index
      %c0_18 = arith.constant 0 : index
      %20 = vector.load %arg5[%c0_17, %c0_18] : memref<1x128xf32, #tpu.memory_space<vmem>>, vector<1x128xf32>
      tpu.vector_store %arg5[%c0_17, %c0_18], %19 {strides = array<i32>} : memref<1x128xf32, #tpu.memory_space<vmem>>, vector<1x128xf32>,
      %cst_19 = arith.constant 0.000000e+00 : f32
      %21 = vector.broadcast %cst_19 : f32 to vector<1x128xf32>
      %c0_20 = arith.constant 0 : index
      %c0_21 = arith.constant 0 : index
      %22 = vector.load %arg6[%c0_20, %c0_21] : memref<1x128xf32, #tpu.memory_space<vmem>>, vector<1x128xf32>
      tpu.vector_store %arg6[%c0_20, %c0_21], %21 {strides = array<i32>} : memref<1x128xf32, #tpu.memory_space<vmem>>, vector<1x128xf32>,
    } else {
    }
    %c0 = arith.constant 0 : index
    %c0_1 = arith.constant 0 : index
    %3 = vector.load %arg2[%c0, %c0_1] : memref<256x2048xbf16, #tpu.memory_space<vmem>>, vector<256x2048xbf16>
    %c0_2 = arith.constant 0 : index
    %c0_3 = arith.constant 0 : index
    %4 = vector.load %arg3[%c0_2, %c0_3] : memref<2048x128xbf16, #tpu.memory_space<vmem>>, vector<2048x128xbf16>
    %cst = arith.constant dense<0.000000e+00> : vector<256x128xf32>
    %5 = tpu.matmul %3, %4, %cst {dimension_numbers = #tpu.dot_dimension_numbers<[1], [0], [0], [1], [0, 0, 1, 1], [], []>} : vector<256x2048xbf16>, vector<2048x128xbf16>, vector<256x128xf32> -> vector<256x128xf32>
    %6 = arith.truncf %5 : vector<256x128xf32> to vector<256x128xbf16>
    %c0_4 = arith.constant 0 : index
    %c0_5 = arith.constant 0 : index
    %7 = vector.load %arg4[%c0_4, %c0_5] : memref<256x128xbf16, #tpu.memory_space<vmem>>, vector<256x128xbf16>
    tpu.vector_store %arg4[%c0_4, %c0_5], %6 {strides = array<i32>} : memref<256x128xbf16, #tpu.memory_space<vmem>>, vector<256x128xbf16>,
    %c0_6 = arith.constant 0 : index
    %c0_7 = arith.constant 0 : index
    %8 = vector.load %arg5[%c0_6, %c0_7] : memref<1x128xf32, #tpu.memory_space<vmem>>, vector<1x128xf32>
    %cst_8 = arith.constant dense<0.000000e+00> : vector<128xf32>
    %9 = vector.multi_reduction <add>, %5, %cst_8 [0] : vector<256x128xf32> to vector<128xf32>
    %10 = vector.shape_cast %9 : vector<128xf32> to vector<1x128xf32>
    %11 = arith.addf %8, %10 : vector<1x128xf32>
    %c0_9 = arith.constant 0 : index
    %c0_10 = arith.constant 0 : index
    %12 = vector.load %arg5[%c0_9, %c0_10] : memref<1x128xf32, #tpu.memory_space<vmem>>, vector<1x128xf32>
    tpu.vector_store %arg5[%c0_9, %c0_10], %11 {strides = array<i32>} : memref<1x128xf32, #tpu.memory_space<vmem>>, vector<1x128xf32>,
    %c0_11 = arith.constant 0 : index
    %c0_12 = arith.constant 0 : index
    %13 = vector.load %arg6[%c0_11, %c0_12] : memref<1x128xf32, #tpu.memory_space<vmem>>, vector<1x128xf32>
    %14 = arith.mulf %5, %5 : vector<256x128xf32>
    %cst_13 = arith.constant dense<0.000000e+00> : vector<128xf32>
    %15 = vector.multi_reduction <add>, %14, %cst_13 [0] : vector<256x128xf32> to vector<128xf32>
    %16 = vector.shape_cast %15 : vector<128xf32> to vector<1x128xf32>
    %17 = arith.addf %13, %16 : vector<1x128xf32>
    %c0_14 = arith.constant 0 : index
    %c0_15 = arith.constant 0 : index
    %18 = vector.load %arg6[%c0_14, %c0_15] : memref<1x128xf32, #tpu.memory_space<vmem>>, vector<1x128xf32>
    tpu.vector_store %arg6[%c0_14, %c0_15], %17 {strides = array<i32>} : memref<1x128xf32, #tpu.memory_space<vmem>>, vector<1x128xf32>,
    return
  }
  func.func @transform_0(%arg0: i32, %arg1: i32) -> (i32, i32) {
    %c0_i32 = arith.constant 0 : i32
    %c0_i32_0 = arith.constant 0 : i32
    return %arg1, %c0_i32 : i32, i32
  }
  func.func @transform_1(%arg0: i32, %arg1: i32) -> (i32, i32) {
    %c0_i32 = arith.constant 0 : i32
    %c0_i32_0 = arith.constant 0 : i32
    return %c0_i32, %arg0 : i32, i32
  }
  func.func @transform_2(%arg0: i32, %arg1: i32) -> (i32, i32) {
    %c0_i32 = arith.constant 0 : i32
    return %arg1, %arg0 : i32, i32
  }
  func.func @transform_3(%arg0: i32, %arg1: i32) -> (i32, i32) {
    %c0_i32 = arith.constant 0 : i32
    %c0_i32_0 = arith.constant 0 : i32
    return %c0_i32, %arg0 : i32, i32
  }
  func.func @transform_4(%arg0: i32, %arg1: i32) -> (i32, i32) {
    %c0_i32 = arith.constant 0 : i32
    %c0_i32_0 = arith.constant 0 : i32
    return %c0_i32, %arg0 : i32, i32
  }
}

module attributes {stable_mosaic.version = 11 : i64} {
  func.func @_conv_mm_stats_kernel(%arg0: i32, %arg1: i32, %arg2: memref<256x2048xbf16, #tpu.memory_space<vmem>>, %arg3: memref<2048x128xbf16, #tpu.memory_space<vmem>>, %arg4: memref<256x128xbf16, #tpu.memory_space<vmem>>, %arg5: memref<1x128xf32, #tpu.memory_space<vmem>>, %arg6: memref<1x128xf32, #tpu.memory_space<vmem>>) attributes {dimension_semantics = [#tpu.dimension_semantics<parallel>, #tpu.dimension_semantics<arbitrary>], iteration_bounds = array<i64: 1, 1>, scalar_prefetch = 0 : i64, scratch_operands = 0 : i64, tpu.core_type = #tpu.core_type<tc>, window_params = [{transform_indices = @transform_0, window_bounds = array<i64: 256, 2048>}, {transform_indices = @transform_1, window_bounds = array<i64: 2048, 128>}, {transform_indices = @transform_2, window_bounds = array<i64: 256, 128>}, {transform_indices = @transform_3, window_bounds = array<i64: 1, 128>}, {transform_indices = @transform_4, window_bounds = array<i64: 1, 128>}]} {
    %c0_i32 = arith.constant 0 : i32
    %0 = arith.cmpi eq, %arg1, %c0_i32 : i32
    %1 = arith.extui %0 : i1 to i32
    %c0_i32_0 = arith.constant 0 : i32
    %2 = arith.cmpi ne, %1, %c0_i32_0 : i32
    scf.if %2 {
      %cst_16 = arith.constant 0.000000e+00 : f32
      %19 = vector.broadcast %cst_16 : f32 to vector<1x128xf32>
      %c0_17 = arith.constant 0 : index
      %c0_18 = arith.constant 0 : index
      %20 = vector.load %arg5[%c0_17, %c0_18] : memref<1x128xf32, #tpu.memory_space<vmem>>, vector<1x128xf32>
      tpu.vector_store %arg5[%c0_17, %c0_18], %19 {strides = array<i32>} : memref<1x128xf32, #tpu.memory_space<vmem>>, vector<1x128xf32>,
      %cst_19 = arith.constant 0.000000e+00 : f32
      %21 = vector.broadcast %cst_19 : f32 to vector<1x128xf32>
      %c0_20 = arith.constant 0 : index
      %c0_21 = arith.constant 0 : index
      %22 = vector.load %arg6[%c0_20, %c0_21] : memref<1x128xf32, #tpu.memory_space<vmem>>, vector<1x128xf32>
      tpu.vector_store %arg6[%c0_20, %c0_21], %21 {strides = array<i32>} : memref<1x128xf32, #tpu.memory_space<vmem>>, vector<1x128xf32>,
    } else {
    }
    %c0 = arith.constant 0 : index
    %c0_1 = arith.constant 0 : index
    %3 = vector.load %arg2[%c0, %c0_1] : memref<256x2048xbf16, #tpu.memory_space<vmem>>, vector<256x2048xbf16>
    %c0_2 = arith.constant 0 : index
    %c0_3 = arith.constant 0 : index
    %4 = vector.load %arg3[%c0_2, %c0_3] : memref<2048x128xbf16, #tpu.memory_space<vmem>>, vector<2048x128xbf16>
    %cst = arith.constant dense<0.000000e+00> : vector<256x128xf32>
    %5 = tpu.matmul %3, %4, %cst {dimension_numbers = #tpu.dot_dimension_numbers<[1], [0], [0], [1], [0, 0, 1, 1], [], []>} : vector<256x2048xbf16>, vector<2048x128xbf16>, vector<256x128xf32> -> vector<256x128xf32>
    %6 = arith.truncf %5 : vector<256x128xf32> to vector<256x128xbf16>
    %c0_4 = arith.constant 0 : index
    %c0_5 = arith.constant 0 : index
    %7 = vector.load %arg4[%c0_4, %c0_5] : memref<256x128xbf16, #tpu.memory_space<vmem>>, vector<256x128xbf16>
    tpu.vector_store %arg4[%c0_4, %c0_5], %6 {strides = array<i32>} : memref<256x128xbf16, #tpu.memory_space<vmem>>, vector<256x128xbf16>,
    %c0_6 = arith.constant 0 : index
    %c0_7 = arith.constant 0 : index
    %8 = vector.load %arg5[%c0_6, %c0_7] : memref<1x128xf32, #tpu.memory_space<vmem>>, vector<1x128xf32>
    %cst_8 = arith.constant dense<0.000000e+00> : vector<128xf32>
    %9 = vector.multi_reduction <add>, %5, %cst_8 [0] : vector<256x128xf32> to vector<128xf32>
    %10 = vector.shape_cast %9 : vector<128xf32> to vector<1x128xf32>
    %11 = arith.addf %8, %10 : vector<1x128xf32>
    %c0_9 = arith.constant 0 : index
    %c0_10 = arith.constant 0 : index
    %12 = vector.load %arg5[%c0_9, %c0_10] : memref<1x128xf32, #tpu.memory_space<vmem>>, vector<1x128xf32>
    tpu.vector_store %arg5[%c0_9, %c0_10], %11 {strides = array<i32>} : memref<1x128xf32, #tpu.memory_space<vmem>>, vector<1x128xf32>,
    %c0_11 = arith.constant 0 : index
    %c0_12 = arith.constant 0 : index
    %13 = vector.load %arg6[%c0_11, %c0_12] : memref<1x128xf32, #tpu.memory_space<vmem>>, vector<1x128xf32>
    %14 = arith.mulf %5, %5 : vector<256x128xf32>
    %cst_13 = arith.constant dense<0.000000e+00> : vector<128xf32>
    %15 = vector.multi_reduction <add>, %14, %cst_13 [0] : vector<256x128xf32> to vector<128xf32>
    %16 = vector.shape_cast %15 : vector<128xf32> to vector<1x128xf32>
    %17 = arith.addf %13, %16 : vector<1x128xf32>
    %c0_14 = arith.constant 0 : index
    %c0_15 = arith.constant 0 : index
    %18 = vector.load %arg6[%c0_14, %c0_15] : memref<1x128xf32, #tpu.memory_space<vmem>>, vector<1x128xf32>
    tpu.vector_store %arg6[%c0_14, %c0_15], %17 {strides = array<i32>} : memref<1x128xf32, #tpu.memory_space<vmem>>, vector<1x128xf32>,
    return
  }
  func.func @transform_0(%arg0: i32, %arg1: i32) -> (i32, i32) {
    %c0_i32 = arith.constant 0 : i32
    %c0_i32_0 = arith.constant 0 : i32
    return %arg1, %c0_i32 : i32, i32
  }
  func.func @transform_1(%arg0: i32, %arg1: i32) -> (i32, i32) {
    %c0_i32 = arith.constant 0 : i32
    %c0_i32_0 = arith.constant 0 : i32
    return %c0_i32, %arg0 : i32, i32
  }
  func.func @transform_2(%arg0: i32, %arg1: i32) -> (i32, i32) {
    %c0_i32 = arith.constant 0 : i32
    return %arg1, %arg0 : i32, i32
  }
  func.func @transform_3(%arg0: i32, %arg1: i32) -> (i32, i32) {
    %c0_i32 = arith.constant 0 : i32
    %c0_i32_0 = arith.constant 0 : i32
    return %c0_i32, %arg0 : i32, i32
  }
  func.func @transform_4(%arg0: i32, %arg1: i32) -> (i32, i32) {
    %c0_i32 = arith.constant 0 : i32
    %c0_i32_0 = arith.constant 0 : i32
    return %c0_i32, %arg0 : i32, i32
  }
}

module attributes {stable_mosaic.version = 11 : i64} {
  func.func @_final_kernel(%arg0: i32, %arg1: memref<16x2048xbf16, #tpu.memory_space<vmem>>, %arg2: memref<1x2048xf32, #tpu.memory_space<vmem>>, %arg3: memref<1x2048xf32, #tpu.memory_space<vmem>>, %arg4: memref<1x2048xf32, #tpu.memory_space<vmem>>, %arg5: memref<16x1xf32, #tpu.memory_space<vmem>>) attributes {dimension_semantics = [#tpu.dimension_semantics<parallel>], iteration_bounds = array<i64: 1>, scalar_prefetch = 0 : i64, scratch_operands = 0 : i64, tpu.core_type = #tpu.core_type<tc>, window_params = [{transform_indices = @transform_0, window_bounds = array<i64: 16, 2048>}, {pipeline_mode = #tpu.pipeline_mode<synchronous>, transform_indices = @transform_1, window_bounds = array<i64: 1, 2048>}, {pipeline_mode = #tpu.pipeline_mode<synchronous>, transform_indices = @transform_2, window_bounds = array<i64: 1, 2048>}, {pipeline_mode = #tpu.pipeline_mode<synchronous>, transform_indices = @transform_3, window_bounds = array<i64: 1, 2048>}, {transform_indices = @transform_4, window_bounds = array<i64: 16, 1>}]} {
    %c0 = arith.constant 0 : index
    %c0_0 = arith.constant 0 : index
    %0 = vector.load %arg1[%c0, %c0_0] : memref<16x2048xbf16, #tpu.memory_space<vmem>>, vector<16x2048xbf16>
    %1 = arith.extf %0 : vector<16x2048xbf16> to vector<16x2048xf32>
    %c0_1 = arith.constant 0 : index
    %c0_2 = arith.constant 0 : index
    %2 = vector.load %arg3[%c0_1, %c0_2] : memref<1x2048xf32, #tpu.memory_space<vmem>>, vector<1x2048xf32>
    %3 = vector.broadcast %2 : vector<1x2048xf32> to vector<16x2048xf32>
    %4 = arith.mulf %1, %3 : vector<16x2048xf32>
    %c0_3 = arith.constant 0 : index
    %c0_4 = arith.constant 0 : index
    %5 = vector.load %arg4[%c0_3, %c0_4] : memref<1x2048xf32, #tpu.memory_space<vmem>>, vector<1x2048xf32>
    %6 = vector.broadcast %5 : vector<1x2048xf32> to vector<16x2048xf32>
    %7 = arith.addf %4, %6 : vector<16x2048xf32>
    %cst = arith.constant 0.000000e+00 : f32
    %8 = vector.broadcast %cst : f32 to vector<16x2048xf32>
    %9 = arith.cmpf ogt, %7, %8 : vector<16x2048xf32>
    %cst_5 = arith.constant 2.000000e-01 : f32
    %10 = vector.broadcast %cst_5 : f32 to vector<16x2048xf32>
    %11 = arith.mulf %10, %7 : vector<16x2048xf32>
    %12 = arith.select %9, %7, %11 : vector<16x2048xi1>, vector<16x2048xf32>
    %c0_6 = arith.constant 0 : index
    %c0_7 = arith.constant 0 : index
    %13 = vector.load %arg2[%c0_6, %c0_7] : memref<1x2048xf32, #tpu.memory_space<vmem>>, vector<1x2048xf32>
    %14 = vector.broadcast %13 : vector<1x2048xf32> to vector<16x2048xf32>
    %15 = arith.mulf %12, %14 : vector<16x2048xf32>
    %cst_8 = arith.constant dense<0.000000e+00> : vector<16xf32>
    %16 = vector.multi_reduction <add>, %15, %cst_8 [1] : vector<16x2048xf32> to vector<16xf32>
    %17 = vector.shape_cast %16 : vector<16xf32> to vector<16x1xf32>
    %cst_9 = arith.constant 0.000000e+00 : f32
    %18 = vector.broadcast %cst_9 : f32 to vector<16x1xf32>
    %19 = arith.subf %18, %17 : vector<16x1xf32>
    %20 = math.exp %19 : vector<16x1xf32>
    %cst_10 = arith.constant 1.000000e+00 : f32
    %21 = vector.broadcast %cst_10 : f32 to vector<16x1xf32>
    %22 = arith.addf %21, %20 : vector<16x1xf32>
    %cst_11 = arith.constant 1.000000e+00 : f32
    %23 = vector.broadcast %cst_11 : f32 to vector<16x1xf32>
    %24 = arith.divf %23, %22 : vector<16x1xf32>
    %c0_12 = arith.constant 0 : index
    %c0_13 = arith.constant 0 : index
    %25 = vector.load %arg5[%c0_12, %c0_13] : memref<16x1xf32, #tpu.memory_space<vmem>>, vector<16x1xf32>
    tpu.vector_store %arg5[%c0_12, %c0_13], %24 {strides = array<i32>} : memref<16x1xf32, #tpu.memory_space<vmem>>, vector<16x1xf32>,
    return
  }
  func.func @transform_0(%arg0: i32) -> (i32, i32) {
    %c0_i32 = arith.constant 0 : i32
    %c0_i32_0 = arith.constant 0 : i32
    return %arg0, %c0_i32 : i32, i32
  }
  func.func @transform_1(%arg0: i32) -> (i32, i32) {
    %c0_i32 = arith.constant 0 : i32
    %c0_i32_0 = arith.constant 0 : i32
    %c0_i32_1 = arith.constant 0 : i32
    return %c0_i32, %c0_i32_0 : i32, i32
  }
  func.func @transform_2(%arg0: i32) -> (i32, i32) {
    %c0_i32 = arith.constant 0 : i32
    %c0_i32_0 = arith.constant 0 : i32
    %c0_i32_1 = arith.constant 0 : i32
    return %c0_i32, %c0_i32_0 : i32, i32
  }
  func.func @transform_3(%arg0: i32) -> (i32, i32) {
    %c0_i32 = arith.constant 0 : i32
    %c0_i32_0 = arith.constant 0 : i32
    %c0_i32_1 = arith.constant 0 : i32
    return %c0_i32, %c0_i32_0 : i32, i32
  }
  func.func @transform_4(%arg0: i32) -> (i32, i32) {
    %c0_i32 = arith.constant 0 : i32
    %c0_i32_0 = arith.constant 0 : i32
    return %arg0, %c0_i32 : i32, i32
  }
}

</mosaic_0001>

<llo_original>
// kernel: frame_discriminator_forward.5
$region0: #{frame_discriminator_forward.5}
  #allocation0 [shape = 'u32[]', space=smem, size = 0x4, offset = 0x4, fixed_abs, tag = 'smem constant byte address 0x4 - core index']
  #allocation1 [shape = 'u32[144,128]{1,0:T(1,128)}', space=vmem, size = 0x12000, scoped, tag = 'internal scratch']
  %s0 = inlined_call_operand.vmem [shape: bf16[2048,128], index: 0, kind: input, shape index: {}]
  %s1 = inlined_call_operand.vmem [shape: bf16[128,128], index: 1, kind: input, shape index: {}]
  %s2 = inlined_call_operand.vmem [shape: bf16[2048,128], index: 2, kind: output, shape index: {}]
  %s3 = sld [smem:[#allocation0]]
  $region41: #{frame_discriminator_forward.5} parent=0
    _
  %s5 = ssub.s32 1, %s3
  %s6 = scalar_select 0, %s5, %s3
  loop: start=0, step=1, limit=10
  $region2: #{frame_discriminator_forward.5} parent=0 // loop_pre_header
    _
  $region3: #{frame_discriminator_forward.5} parent=0 // loop_header
    %s8 = sphi 0, %s12
    %p9 = scmp.ge.s32.totalorder %s8, 10
    %s15 = sphi 0, %s27
    %s16 = sphi 0, %s23
    %s17 = sphi 0, %s15
    %s18 = sphi 0, %s16
    %s19 = sphi 0, %s17
    %s20 = sphi 0, %s18
    %s30 = sphi 0, %s32
    %s33 = sphi 0, %s30
    %s34 = sphi 0, %s33
    %s50 = sphi 0, %s34
    %s56 = sphi 0, %s58
    %s59 = sphi 0, %s56
    %s60 = sphi 0, %s59
    %s76 = sphi 0, %s60
    %s84 = sphi 0, %s86
    %s87 = sphi 0, %s84
    %s88 = sphi 0, %s87
    %s104 = sphi 0, %s88
  $region4: #{frame_discriminator_forward.5} parent=0 // loop_header_branch
    %11 = sbr.rel (%p9) target = $region8
  $region5: #{frame_discriminator_forward.5} parent=0 // loop_body
    %s13 = ssub.s32 %s8, 1
    %s14 = ssub.s32 %s8, 2
    %s21 = sadd.s32 1, %s16
    %p22 = scmp.ge.s32.totalorder %s21, 1
    %s23 = scalar_select %p22, 0, %s21
    %s24 = sadd.s32 1, %s15
    %s25 = scalar_select %p22, %s24, %s15
    %p26 = scmp.ge.s32.totalorder %s25, 8
    %s27 = scalar_select %p26, 0, %s25
    %s28 = ssub.s32 %s15, %s27
    %p29 = scmp.eq.s32.totalorder %s28, 0
    %s31 = sadd.s32 %s30, 1
    %s32 = scalar_select %p29, %s30, %s31
    %p35 = pneg %p29
    %p36 = scmp.eq.s32.totalorder %s8, 7
    %p37 = por %p35, %p36
    %p38 = scmp.ne.s32.totalorder %s30, %s33
    %p39 = scmp.eq.s32.totalorder %s8, 0
    %p40 = por %p38, %p39
    %p41 = scmp.ne.s32.totalorder %s30, %s33
    %p42 = scmp.eq.s32.totalorder %s13, 7
    %p43 = por %p41, %p42
    %p44 = scmp.ne.s32.totalorder %s33, %s34
    %p45 = scmp.eq.s32.totalorder %s13, 0
    %p46 = por %p44, %p45
    %p47 = scmp.ne.s32.totalorder %s33, %s34
    %p48 = scmp.eq.s32.totalorder %s14, 7
    %p49 = por %p47, %p48
    %p51 = scmp.ne.s32.totalorder %s34, %s50
    %p52 = scmp.eq.s32.totalorder %s14, 0
    %p53 = por %p51, %p52
    %s54 = ssub.s32 %s16, %s23
    %p55 = scmp.eq.s32.totalorder %s54, 0
    %s57 = sadd.s32 %s56, 1
    %s58 = scalar_select %p55, %s56, %s57
    %p61 = pneg %p55
    %p62 = scmp.eq.s32.totalorder %s8, 7
    %p63 = por %p61, %p62
    %p64 = scmp.ne.s32.totalorder %s56, %s59
    %p65 = scmp.eq.s32.totalorder %s8, 0
    %p66 = por %p64, %p65
    %p67 = scmp.ne.s32.totalorder %s56, %s59
    %p68 = scmp.eq.s32.totalorder %s13, 7
    %p69 = por %p67, %p68
    %p70 = scmp.ne.s32.totalorder %s59, %s60
    %p71 = scmp.eq.s32.totalorder %s13, 0
    %p72 = por %p70, %p71
    %p73 = scmp.ne.s32.totalorder %s59, %s60
    %p74 = scmp.eq.s32.totalorder %s14, 7
    %p75 = por %p73, %p74
    %p77 = scmp.ne.s32.totalorder %s60, %s76
    %p78 = scmp.eq.s32.totalorder %s14, 0
    %p79 = por %p77, %p78
    %s80 = ssub.s32 %s15, %s27
    %s81 = ssub.s32 %s16, %s23
    %s82 = sor.u32 %s80, %s81
    %p83 = scmp.eq.s32.totalorder %s82, 0
    %s85 = sadd.s32 %s84, 1
    %s86 = scalar_select %p83, %s84, %s85
    %p89 = pneg %p83
    %p90 = scmp.eq.s32.totalorder %s8, 7
    %p91 = por %p89, %p90
    %p92 = scmp.ne.s32.totalorder %s84, %s87
    %p93 = scmp.eq.s32.totalorder %s8, 0
    %p94 = por %p92, %p93
    %p95 = scmp.ne.s32.totalorder %s84, %s87
    %p96 = scmp.eq.s32.totalorder %s13, 7
    %p97 = por %p95, %p96
    %p98 = scmp.ne.s32.totalorder %s87, %s88
    %p99 = scmp.eq.s32.totalorder %s13, 0
    %p100 = por %p98, %p99
    %p101 = scmp.ne.s32.totalorder %s87, %s88
    %p102 = scmp.eq.s32.totalorder %s14, 7
    %p103 = por %p101, %p102
    %p105 = scmp.ne.s32.totalorder %s88, %s104
    %p106 = scmp.eq.s32.totalorder %s14, 0
    %p107 = por %p105, %p106
    %p108 = scmp.le.s32.totalorder 1, %s8
    %p109 = scmp.lt.s32.totalorder %s8, 9
    %p110 = pnand %p108, %p109
    %p111 = pneg %p110
    // Predicated region
    $region9: #{frame_discriminator_forward.5} parent=5 // pred_check
      _
    $region10: #{frame_discriminator_forward.5} parent=5 // pred_check_branch
      %113 = sbr.rel (%p110) target = $region12
    $region11: #{frame_discriminator_forward.5} parent=5 // pred_region
      %s114 = ssub.s32 %s8, 1
      // Predicated region
      $region13: #{frame_discriminator_forward.5} parent=11 // pred_check
        %p115 = pneg %p72
      $region14: #{frame_discriminator_forward.5} parent=11 // pred_check_branch
        %117 = sbr.rel (%p115) target = $region16
      $region15: #{frame_discriminator_forward.5} parent=11 // pred_region
        %p118 = scmp.lt.s32.totalorder %s18, 0
        %s119 = scalar_select %p118, %s18, 0
        %s120 = smul.addr %s119, 4
        %s121 = scalar_lea.vmem %s1, %s120
      $region16: #{frame_discriminator_forward.5} parent=11 // pred_fallthru
        _
    $region12: #{frame_discriminator_forward.5} parent=5 // pred_fallthru
      _
    %p122 = scmp.lt.s32.totalorder %s8, 8
    // Predicated region
    $region17: #{frame_discriminator_forward.5} parent=5 // pred_check
      %p123 = pneg %p122
    $region18: #{frame_discriminator_forward.5} parent=5 // pred_check_branch
      %125 = sbr.rel (%p123) target = $region20
    $region19: #{frame_discriminator_forward.5} parent=5 // pred_region
      // Predicated region
      $region21: #{frame_discriminator_forward.5} parent=19 // pred_check
        %p126 = pneg %p40
      $region22: #{frame_discriminator_forward.5} parent=19 // pred_check_branch
        %128 = sbr.rel (%p126) target = $region24
      $region23: #{frame_discriminator_forward.5} parent=19 // pred_region
        %s129 = smul.u32 32, %s15
        %p130 = scmp.lt.s32.totalorder %s129, 255
        %s131 = scalar_select %p130, %s129, 255
        %s132 = smul.addr %s131, 4
        %s133 = scalar_lea.vmem %s0, %s132
        %s134 = smul.u32 32, %s15
      $region24: #{frame_discriminator_forward.5} parent=19 // pred_fallthru
        _
    $region20: #{frame_discriminator_forward.5} parent=5 // pred_fallthru
      _
    %p135 = scmp.le.s32.totalorder 1, %s8
    %p136 = scmp.lt.s32.totalorder %s8, 9
    %p137 = pnand %p135, %p136
    %p138 = pneg %p137
    // Predicated region
    $region25: #{frame_discriminator_forward.5} parent=5 // pred_check
      _
    $region26: #{frame_discriminator_forward.5} parent=5 // pred_check_branch
      %140 = sbr.rel (%p137) target = $region28
    $region27: #{frame_discriminator_forward.5} parent=5 // pred_region
      %s141 = ssub.s32 %s8, 1
      %s142 = smul.u32 32, %s17
      %p143 = scmp.lt.s32.totalorder %s142, 255
      %s144 = scalar_select %p143, %s142, 255
      %s145 = smul.addr %s144, 4
      %s146 = scalar_lea.vmem %s0, %s145
      %p147 = pneg %p46
      %p148 = pneg %p43
      %p149 = scmp.lt.s32.totalorder %s18, 0
      %s150 = scalar_select %p149, %s18, 0
      %s151 = smul.addr %s150, 4
      %s152 = scalar_lea.vmem %s1, %s151
      %p153 = pneg %p72
      %p154 = pneg %p69
      %p155 = pneg %p100
      %p156 = pneg %p97
      %s157 = smul.u32 32, %s17
      %p158 = scmp.lt.s32.totalorder %s157, 255
      %s159 = scalar_select %p158, %s157, 255
      %p160 = scmp.lt.s32.totalorder %s18, 0
      %s161 = scalar_select %p160, %s18, 0
      %s162 = sadd.s32 %s161, %s159
      %s163 = smul.addr %s162, 4
      %s164 = scalar_lea.vmem %s2, %s163
      %s165 = smul.u32 32, %s17
      %p166 = scmp.lt.s32.totalorder %s165, 255
      %s167 = scalar_select %p166, %s165, 255
      %s168 = smul.addr %s167, 4
      %s169 = scalar_lea.vmem %s0, %s168
      %s170 = smul.u32 32, %s17
      %p171 = scmp.lt.s32.totalorder %s18, 0
      %s172 = scalar_select %p171, %s18, 0
      %s173 = smul.addr %s172, 4
      %s174 = scalar_lea.vmem %s1, %s173
      %s175 = smul.u32 32, %s17
      %p176 = scmp.lt.s32.totalorder %s175, 255
      %s177 = scalar_select %p176, %s175, 255
      %p178 = scmp.lt.s32.totalorder %s18, 0
      %s179 = scalar_select %p178, %s18, 0
      %s180 = sadd.s32 %s179, %s177
      %s181 = smul.addr %s180, 4
      %s182 = scalar_lea.vmem %s2, %s181
      %s183 = smul.u32 32, %s17
      %v185 = vld [vmem:[%s169] sm:$0xf]
      %v186 = vld [vmem:[%s169 + $0x4] sm:$0xf]
      %v187 = vld [vmem:[%s169 + $0x8] sm:$0xf]
      %v188 = vld [vmem:[%s169 + $0xc] sm:$0xf]
      %v189 = vld [vmem:[%s169 + $0x10] sm:$0xf]
      %v190 = vld [vmem:[%s169 + $0x14] sm:$0xf]
      %v191 = vld [vmem:[%s169 + $0x18] sm:$0xf]
      %v192 = vld [vmem:[%s169 + $0x1c] sm:$0xf]
      %v193 = vld [vmem:[%s169 + $0x20] sm:$0xf]
      %v194 = vld [vmem:[%s169 + $0x24] sm:$0xf]
      %v195 = vld [vmem:[%s169 + $0x28] sm:$0xf]
      %v196 = vld [vmem:[%s169 + $0x2c] sm:$0xf]
      %v197 = vld [vmem:[%s169 + $0x30] sm:$0xf]
      %v198 = vld [vmem:[%s169 + $0x34] sm:$0xf]
      %v199 = vld [vmem:[%s169 + $0x38] sm:$0xf]
      %v200 = vld [vmem:[%s169 + $0x3c] sm:$0xf]
      %v201 = vld [vmem:[%s169 + $0x40] sm:$0xf]
      %v202 = vld [vmem:[%s169 + $0x44] sm:$0xf]
      %v203 = vld [vmem:[%s169 + $0x48] sm:$0xf]
      %v204 = vld [vmem:[%s169 + $0x4c] sm:$0xf]
      %v205 = vld [vmem:[%s169 + $0x50] sm:$0xf]
      %v206 = vld [vmem:[%s169 + $0x54] sm:$0xf]
      %v207 = vld [vmem:[%s169 + $0x58] sm:$0xf]
      %v208 = vld [vmem:[%s169 + $0x5c] sm:$0xf]
      %v209 = vld [vmem:[%s169 + $0x60] sm:$0xf]
      %v210 = vld [vmem:[%s169 + $0x64] sm:$0xf]
      %v211 = vld [vmem:[%s169 + $0x68] sm:$0xf]
      %v212 = vld [vmem:[%s169 + $0x6c] sm:$0xf]
      %v213 = vld [vmem:[%s169 + $0x70] sm:$0xf]
      %v214 = vld [vmem:[%s169 + $0x74] sm:$0xf]
      %v215 = vld [vmem:[%s169 + $0x78] sm:$0xf]
      %v216 = vld [vmem:[%s169 + $0x7c] sm:$0xf]
      %v217 = vld [vmem:[%s174] sm:$0xf]
      %v218 = vld [vmem:[%s174 + $0x4] sm:$0xf]
      %v219 = vld [vmem:[%s174 + $0x8] sm:$0xf]
      %v220 = vld [vmem:[%s174 + $0xc] sm:$0xf]
      %v221 = vld [vmem:[%s174 + $0x10] sm:$0xf]
      %v222 = vld [vmem:[%s174 + $0x14] sm:$0xf]
      %v223 = vld [vmem:[%s174 + $0x18] sm:$0xf]
      %v224 = vld [vmem:[%s174 + $0x1c] sm:$0xf]
      %v225 = vld [vmem:[%s174 + $0x20] sm:$0xf]
      %v226 = vld [vmem:[%s174 + $0x24] sm:$0xf]
      %v227 = vld [vmem:[%s174 + $0x28] sm:$0xf]
      %v228 = vld [vmem:[%s174 + $0x2c] sm:$0xf]
      %v229 = vld [vmem:[%s174 + $0x30] sm:$0xf]
      %v230 = vld [vmem:[%s174 + $0x34] sm:$0xf]
      %v231 = vld [vmem:[%s174 + $0x38] sm:$0xf]
      %v232 = vld [vmem:[%s174 + $0x3c] sm:$0xf]
      %v265 = vunpack.c.l.b16 %v185
      %v266 = vunpack.c.l.b16 %v186
      %v267 = vunpack.c.l.b16 %v187
      %v268 = vunpack.c.l.b16 %v188
      %v269 = vunpack.c.l.b16 %v189
      %v270 = vunpack.c.l.b16 %v190
      %v271 = vunpack.c.l.b16 %v191
      %v272 = vunpack.c.l.b16 %v192
      %v273 = vunpack.c.l.b16 %v193
      %v274 = vunpack.c.l.b16 %v194
      %v275 = vunpack.c.l.b16 %v195
      %v276 = vunpack.c.l.b16 %v196
      %v277 = vunpack.c.l.b16 %v197
      %v278 = vunpack.c.l.b16 %v198
      %v279 = vunpack.c.l.b16 %v199
      %v280 = vunpack.c.l.b16 %v200
      %v281 = vunpack.c.l.b16 %v201
      %v282 = vunpack.c.l.b16 %v202
      %v283 = vunpack.c.l.b16 %v203
      %v284 = vunpack.c.l.b16 %v204
      %v285 = vunpack.c.l.b16 %v205
      %v286 = vunpack.c.l.b16 %v206
      %v287 = vunpack.c.l.b16 %v207
      %v288 = vunpack.c.l.b16 %v208
      %v289 = vunpack.c.l.b16 %v209
      %v290 = vunpack.c.l.b16 %v210
      %v291 = vunpack.c.l.b16 %v211
      %v292 = vunpack.c.l.b16 %v212
      %v293 = vunpack.c.l.b16 %v213
      %v294 = vunpack.c.l.b16 %v214
      %v295 = vunpack.c.l.b16 %v215
      %v296 = vunpack.c.l.b16 %v216
      %v297 = vpack.c.b16 %v266, %v265
      %v298 = vpack.c.b16 %v268, %v267
      %v299 = vpack.c.b16 %v270, %v269
      %v300 = vpack.c.b16 %v272, %v271
      %v301 = vpack.c.b16 %v274, %v273
      %v302 = vpack.c.b16 %v276, %v275
      %v303 = vpack.c.b16 %v278, %v277
      %v304 = vpack.c.b16 %v280, %v279
      %v305 = vpack.c.b16 %v282, %v281
      %v306 = vpack.c.b16 %v284, %v283
      %v307 = vpack.c.b16 %v286, %v285
      %v308 = vpack.c.b16 %v288, %v287
      %v309 = vpack.c.b16 %v290, %v289
      %v310 = vpack.c.b16 %v292, %v291
      %v311 = vpack.c.b16 %v294, %v293
      %v312 = vpack.c.b16 %v296, %v295
      %v345 = vunpack.c.l.b16 %v217
      %v346 = vunpack.c.l.b16 %v218
      %v347 = vunpack.c.l.b16 %v219
      %v348 = vunpack.c.l.b16 %v220
      %v349 = vunpack.c.l.b16 %v221
      %v350 = vunpack.c.l.b16 %v222
      %v351 = vunpack.c.l.b16 %v223
      %v352 = vunpack.c.l.b16 %v224
      %v353 = vunpack.c.l.b16 %v225
      %v354 = vunpack.c.l.b16 %v226
      %v355 = vunpack.c.l.b16 %v227
      %v356 = vunpack.c.l.b16 %v228
      %v357 = vunpack.c.l.b16 %v229
      %v358 = vunpack.c.l.b16 %v230
      %v359 = vunpack.c.l.b16 %v231
      %v360 = vunpack.c.l.b16 %v232
      %v361 = vpack.c.b16 %v346, %v345
      %v362 = vpack.c.b16 %v348, %v347
      %v363 = vpack.c.b16 %v350, %v349
      %v364 = vpack.c.b16 %v352, %v351
      %v365 = vpack.c.b16 %v354, %v353
      %v366 = vpack.c.b16 %v356, %v355
      %v367 = vpack.c.b16 %v358, %v357
      %v368 = vpack.c.b16 %v360, %v359
      %377 = vmatprep.subr.bf16.mxu0 0
      %378 = vmatpush1.bf16.msra.mxu0 %v361
      %379 = vmatprep.subr.bf16.mxu0 0
      %380 = vmatpush1.bf16.msra.mxu0 %v362
      %381 = vmatprep.subr.bf16.mxu0 0
      %382 = vmatpush1.bf16.msra.mxu0 %v363
      %383 = vmatprep.subr.bf16.mxu0 0
      %384 = vmatpush1.bf16.msra.mxu0 %v364
      %385 = vmatprep.subr.bf16.mxu0 0
      %386 = vmatpush1.bf16.msra.mxu0 %v365
      %387 = vmatprep.subr.bf16.mxu0 0
      %388 = vmatpush1.bf16.msra.mxu0 %v366
      %389 = vmatprep.subr.bf16.mxu0 0
      %390 = vmatpush1.bf16.msra.mxu0 %v367
      %391 = vmatprep.subr.bf16.mxu0 0
      %392 = vmatpush1.bf16.msra.mxu0 %v368
      %393 = vmatprep.subr.bf16.mxu0 0
      %394 = vmatpush1.bf16.msra.mxu0 0
      %395 = vmatprep.subr.bf16.mxu0 0
      %396 = vmatpush1.bf16.msra.mxu0 0
      %397 = vmatprep.subr.bf16.mxu0 0
      %398 = vmatpush1.bf16.msra.mxu0 0
      %399 = vmatprep.subr.bf16.mxu0 0
      %400 = vmatpush1.bf16.msra.mxu0 0
      %401 = vmatprep.subr.bf16.mxu0 0
      %402 = vmatpush1.bf16.msra.mxu0 0
      %403 = vmatprep.subr.bf16.mxu0 0
      %404 = vmatpush1.bf16.msra.mxu0 0
      %405 = vmatprep.subr.bf16.mxu0 0
      %406 = vmatpush1.bf16.msra.mxu0 0
      %407 = vmatprep.subr.bf16.mxu0 0
      %408 = vmatpush1.bf16.msra.mxu0 0
      %409 = vmatprep.mubr.bf16.mxu0 0
      %410 = vmatmul.mubr.bf16.gmra.mrb[0].mxu0 %v297
      %v411 = vpop.f32.mrb[0].mxu0
      %v412 = vadd.f32 0.0, %v411
      %v413 = vpop.f32.mrb[0].mxu0
      %v414 = vpop.f32.mrb[0].mxu0
      %v415 = vadd.f32 0.0, %v414
      %v416 = vpop.f32.mrb[0].mxu0
      %417 = vmatprep.mubr.bf16.mxu0 0
      %418 = vmatmul.mubr.bf16.gmra.mrb[0].mxu0 %v298
      %v419 = vpop.f32.mrb[0].mxu0
      %v420 = vadd.f32 0.0, %v419
      %v421 = vpop.f32.mrb[0].mxu0
      %v422 = vpop.f32.mrb[0].mxu0
      %v423 = vadd.f32 0.0, %v422
      %v424 = vpop.f32.mrb[0].mxu0
      %425 = vmatprep.mubr.bf16.mxu0 0
      %426 = vmatmul.mubr.bf16.gmra.mrb[0].mxu0 %v299
      %v427 = vpop.f32.mrb[0].mxu0
      %v428 = vadd.f32 0.0, %v427
      %v429 = vpop.f32.mrb[0].mxu0
      %v430 = vpop.f32.mrb[0].mxu0
      %v431 = vadd.f32 0.0, %v430
      %v432 = vpop.f32.mrb[0].mxu0
      %433 = vmatprep.mubr.bf16.mxu0 0
      %434 = vmatmul.mubr.bf16.gmra.mrb[0].mxu0 %v300
      %v435 = vpop.f32.mrb[0].mxu0
      %v436 = vadd.f32 0.0, %v435
      %v437 = vpop.f32.mrb[0].mxu0
      %v438 = vpop.f32.mrb[0].mxu0
      %v439 = vadd.f32 0.0, %v438
      %v440 = vpop.f32.mrb[0].mxu0
      %441 = vmatprep.mubr.bf16.mxu0 0
      %442 = vmatmul.mubr.bf16.gmra.mrb[0].mxu0 %v301
      %v443 = vpop.f32.mrb[0].mxu0
      %v444 = vadd.f32 0.0, %v443
      %v445 = vpop.f32.mrb[0].mxu0
      %v446 = vpop.f32.mrb[0].mxu0
      %v447 = vadd.f32 0.0, %v446
      %v448 = vpop.f32.mrb[0].mxu0
      %449 = vmatprep.mubr.bf16.mxu0 0
      %450 = vmatmul.mubr.bf16.gmra.mrb[0].mxu0 %v302
      %v451 = vpop.f32.mrb[0].mxu0
      %v452 = vadd.f32 0.0, %v451
      %v453 = vpop.f32.mrb[0].mxu0
      %v454 = vpop.f32.mrb[0].mxu0
      %v455 = vadd.f32 0.0, %v454
      %v456 = vpop.f32.mrb[0].mxu0
      %457 = vmatprep.mubr.bf16.mxu0 0
      %458 = vmatmul.mubr.bf16.gmra.mrb[0].mxu0 %v303
      %v459 = vpop.f32.mrb[0].mxu0
      %v460 = vadd.f32 0.0, %v459
      %v461 = vpop.f32.mrb[0].mxu0
      %v462 = vpop.f32.mrb[0].mxu0
      %v463 = vadd.f32 0.0, %v462
      %v464 = vpop.f32.mrb[0].mxu0
      %465 = vmatprep.mubr.bf16.mxu0 0
      %466 = vmatmul.mubr.bf16.gmra.mrb[0].mxu0 %v304
      %v467 = vpop.f32.mrb[0].mxu0
      %v468 = vadd.f32 0.0, %v467
      %v469 = vpop.f32.mrb[0].mxu0
      %v470 = vpop.f32.mrb[0].mxu0
      %v471 = vadd.f32 0.0, %v470
      %v472 = vpop.f32.mrb[0].mxu0
      %473 = vmatprep.mubr.bf16.mxu0 0
      %474 = vmatmul.mubr.bf16.gmra.mrb[0].mxu0 %v305
      %v475 = vpop.f32.mrb[0].mxu0
      %v476 = vadd.f32 0.0, %v475
      %v477 = vpop.f32.mrb[0].mxu0
      %v478 = vpop.f32.mrb[0].mxu0
      %v479 = vadd.f32 0.0, %v478
      %v480 = vpop.f32.mrb[0].mxu0
      %481 = vmatprep.mubr.bf16.mxu0 0
      %482 = vmatmul.mubr.bf16.gmra.mrb[0].mxu0 %v306
      %v483 = vpop.f32.mrb[0].mxu0
      %v484 = vadd.f32 0.0, %v483
      %v485 = vpop.f32.mrb[0].mxu0
      %v486 = vpop.f32.mrb[0].mxu0
      %v487 = vadd.f32 0.0, %v486
      %v488 = vpop.f32.mrb[0].mxu0
      %489 = vmatprep.mubr.bf16.mxu0 0
      %490 = vmatmul.mubr.bf16.gmra.mrb[0].mxu0 %v307
      %v491 = vpop.f32.mrb[0].mxu0
      %v492 = vadd.f32 0.0, %v491
      %v493 = vpop.f32.mrb[0].mxu0
      %v494 = vpop.f32.mrb[0].mxu0
      %v495 = vadd.f32 0.0, %v494
      %v496 = vpop.f32.mrb[0].mxu0
      %497 = vmatprep.mubr.bf16.mxu0 0
      %498 = vmatmul.mubr.bf16.gmra.mrb[0].mxu0 %v308
      %v499 = vpop.f32.mrb[0].mxu0
      %v500 = vadd.f32 0.0, %v499
      %v501 = vpop.f32.mrb[0].mxu0
      %v502 = vpop.f32.mrb[0].mxu0
      %v503 = vadd.f32 0.0, %v502
      %v504 = vpop.f32.mrb[0].mxu0
      %505 = vmatprep.mubr.bf16.mxu0 0
      %506 = vmatmul.mubr.bf16.gmra.mrb[0].mxu0 %v309
      %v507 = vpop.f32.mrb[0].mxu0
      %v508 = vadd.f32 0.0, %v507
      %v509 = vpop.f32.mrb[0].mxu0
      %v510 = vpop.f32.mrb[0].mxu0
      %v511 = vadd.f32 0.0, %v510
      %v512 = vpop.f32.mrb[0].mxu0
      %513 = vmatprep.mubr.bf16.mxu0 0
      %514 = vmatmul.mubr.bf16.gmra.mrb[0].mxu0 %v310
      %v515 = vpop.f32.mrb[0].mxu0
      %v516 = vadd.f32 0.0, %v515
      %v517 = vpop.f32.mrb[0].mxu0
      %v518 = vpop.f32.mrb[0].mxu0
      %v519 = vadd.f32 0.0, %v518
      %v520 = vpop.f32.mrb[0].mxu0
      %521 = vmatprep.mubr.bf16.mxu0 0
      %522 = vmatmul.mubr.bf16.gmra.mrb[0].mxu0 %v311
      %v523 = vpop.f32.mrb[0].mxu0
      %v524 = vadd.f32 0.0, %v523
      %v525 = vpop.f32.mrb[0].mxu0
      %v526 = vpop.f32.mrb[0].mxu0
      %v527 = vadd.f32 0.0, %v526
      %v528 = vpop.f32.mrb[0].mxu0
      %529 = vmatprep.mubr.bf16.mxu0 0
      %530 = vmatmul.mubr.bf16.gmra.mrb[0].mxu0 %v312
      %v531 = vpop.f32.mrb[0].mxu0
      %v532 = vadd.f32 0.0, %v531
      %v533 = vpop.f32.mrb[0].mxu0
      %v534 = vpop.f32.mrb[0].mxu0
      %v535 = vadd.f32 0.0, %v534
      %v536 = vpop.f32.mrb[0].mxu0
      %537 = vdwg.mxu0
      %vm538 = vcmp.gt.f32.partialorder %v412, 0.0
      %vm539 = vcmp.gt.f32.partialorder %v415, 0.0
      %vm540 = vcmp.gt.f32.partialorder %v420, 0.0
      %vm541 = vcmp.gt.f32.partialorder %v423, 0.0
      %vm542 = vcmp.gt.f32.partialorder %v428, 0.0
      %vm543 = vcmp.gt.f32.partialorder %v431, 0.0
      %vm544 = vcmp.gt.f32.partialorder %v436, 0.0
      %vm545 = vcmp.gt.f32.partialorder %v439, 0.0
      %vm546 = vcmp.gt.f32.partialorder %v444, 0.0
      %vm547 = vcmp.gt.f32.partialorder %v447, 0.0
      %vm548 = vcmp.gt.f32.partialorder %v452, 0.0
      %vm549 = vcmp.gt.f32.partialorder %v455, 0.0
      %vm550 = vcmp.gt.f32.partialorder %v460, 0.0
      %vm551 = vcmp.gt.f32.partialorder %v463, 0.0
      %vm552 = vcmp.gt.f32.partialorder %v468, 0.0
      %vm553 = vcmp.gt.f32.partialorder %v471, 0.0
      %vm554 = vcmp.gt.f32.partialorder %v476, 0.0
      %vm555 = vcmp.gt.f32.partialorder %v479, 0.0
      %vm556 = vcmp.gt.f32.partialorder %v484, 0.0
      %vm557 = vcmp.gt.f32.partialorder %v487, 0.0
      %vm558 = vcmp.gt.f32.partialorder %v492, 0.0
      %vm559 = vcmp.gt.f32.partialorder %v495, 0.0
      %vm560 = vcmp.gt.f32.partialorder %v500, 0.0
      %vm561 = vcmp.gt.f32.partialorder %v503, 0.0
      %vm562 = vcmp.gt.f32.partialorder %v508, 0.0
      %vm563 = vcmp.gt.f32.partialorder %v511, 0.0
      %vm564 = vcmp.gt.f32.partialorder %v516, 0.0
      %vm565 = vcmp.gt.f32.partialorder %v519, 0.0
      %vm566 = vcmp.gt.f32.partialorder %v524, 0.0
      %vm567 = vcmp.gt.f32.partialorder %v527, 0.0
      %vm568 = vcmp.gt.f32.partialorder %v532, 0.0
      %vm569 = vcmp.gt.f32.partialorder %v535, 0.0
      %v570 = vmul.f32 %v412, 0.2
      %v571 = vmul.f32 %v415, 0.2
      %v572 = vmul.f32 %v420, 0.2
      %v573 = vmul.f32 %v423, 0.2
      %v574 = vmul.f32 %v428, 0.2
      %v575 = vmul.f32 %v431, 0.2
      %v576 = vmul.f32 %v436, 0.2
      %v577 = vmul.f32 %v439, 0.2
      %v578 = vmul.f32 %v444, 0.2
      %v579 = vmul.f32 %v447, 0.2
      %v580 = vmul.f32 %v452, 0.2
      %v581 = vmul.f32 %v455, 0.2
      %v582 = vmul.f32 %v460, 0.2
      %v583 = vmul.f32 %v463, 0.2
      %v584 = vmul.f32 %v468, 0.2
      %v585 = vmul.f32 %v471, 0.2
      %v586 = vmul.f32 %v476, 0.2
      %v587 = vmul.f32 %v479, 0.2
      %v588 = vmul.f32 %v484, 0.2
      %v589 = vmul.f32 %v487, 0.2
      %v590 = vmul.f32 %v492, 0.2
      %v591 = vmul.f32 %v495, 0.2
      %v592 = vmul.f32 %v500, 0.2
      %v593 = vmul.f32 %v503, 0.2
      %v594 = vmul.f32 %v508, 0.2
      %v595 = vmul.f32 %v511, 0.2
      %v596 = vmul.f32 %v516, 0.2
      %v597 = vmul.f32 %v519, 0.2
      %v598 = vmul.f32 %v524, 0.2
      %v599 = vmul.f32 %v527, 0.2
      %v600 = vmul.f32 %v532, 0.2
      %v601 = vmul.f32 %v535, 0.2
      %v602 = vsel %vm538, %v412, %v570
      %v603 = vsel %vm539, %v415, %v571
      %v604 = vsel %vm540, %v420, %v572
      %v605 = vsel %vm541, %v423, %v573
      %v606 = vsel %vm542, %v428, %v574
      %v607 = vsel %vm543, %v431, %v575
      %v608 = vsel %vm544, %v436, %v576
      %v609 = vsel %vm545, %v439, %v577
      %v610 = vsel %vm546, %v444, %v578
      %v611 = vsel %vm547, %v447, %v579
      %v612 = vsel %vm548, %v452, %v580
      %v613 = vsel %vm549, %v455, %v581
      %v614 = vsel %vm550, %v460, %v582
      %v615 = vsel %vm551, %v463, %v583
      %v616 = vsel %vm552, %v468, %v584
      %v617 = vsel %vm553, %v471, %v585
      %v618 = vsel %vm554, %v476, %v586
      %v619 = vsel %vm555, %v479, %v587
      %v620 = vsel %vm556, %v484, %v588
      %v621 = vsel %vm557, %v487, %v589
      %v622 = vsel %vm558, %v492, %v590
      %v623 = vsel %vm559, %v495, %v591
      %v624 = vsel %vm560, %v500, %v592
      %v625 = vsel %vm561, %v503, %v593
      %v626 = vsel %vm562, %v508, %v594
      %v627 = vsel %vm563, %v511, %v595
      %v628 = vsel %vm564, %v516, %v596
      %v629 = vsel %vm565, %v519, %v597
      %v630 = vsel %vm566, %v524, %v598
      %v631 = vsel %vm567, %v527, %v599
      %v632 = vsel %vm568, %v532, %v600
      %v633 = vsel %vm569, %v535, %v601
      %v634 = vpack.c.bf16 %v603, %v602
      %v635 = vpack.c.bf16 %v605, %v604
      %v636 = vpack.c.bf16 %v607, %v606
      %v637 = vpack.c.bf16 %v609, %v608
      %v638 = vpack.c.bf16 %v611, %v610
      %v639 = vpack.c.bf16 %v613, %v612
      %v640 = vpack.c.bf16 %v615, %v614
      %v641 = vpack.c.bf16 %v617, %v616
      %v642 = vpack.c.bf16 %v619, %v618
      %v643 = vpack.c.bf16 %v621, %v620
      %v644 = vpack.c.bf16 %v623, %v622
      %v645 = vpack.c.bf16 %v625, %v624
      %v646 = vpack.c.bf16 %v627, %v626
      %v647 = vpack.c.bf16 %v629, %v628
      %v648 = vpack.c.bf16 %v631, %v630
      %v649 = vpack.c.bf16 %v633, %v632
      %v666 = vunpack.c.l.b16 %v634
      %v667 = vunpack.c.h.b16 %v634
      %v668 = vunpack.c.l.b16 %v635
      %v669 = vunpack.c.h.b16 %v635
      %v670 = vunpack.c.l.b16 %v636
      %v671 = vunpack.c.h.b16 %v636
      %v672 = vunpack.c.l.b16 %v637
      %v673 = vunpack.c.h.b16 %v637
      %v674 = vunpack.c.l.b16 %v638
      %v675 = vunpack.c.h.b16 %v638
      %v676 = vunpack.c.l.b16 %v639
      %v677 = vunpack.c.h.b16 %v639
      %v678 = vunpack.c.l.b16 %v640
      %v679 = vunpack.c.h.b16 %v640
      %v680 = vunpack.c.l.b16 %v641
      %v681 = vunpack.c.h.b16 %v641
      %v682 = vunpack.c.l.b16 %v642
      %v683 = vunpack.c.h.b16 %v642
      %v684 = vunpack.c.l.b16 %v643
      %v685 = vunpack.c.h.b16 %v643
      %v686 = vunpack.c.l.b16 %v644
      %v687 = vunpack.c.h.b16 %v644
      %v688 = vunpack.c.l.b16 %v645
      %v689 = vunpack.c.h.b16 %v645
      %v690 = vunpack.c.l.b16 %v646
      %v691 = vunpack.c.h.b16 %v646
      %v692 = vunpack.c.l.b16 %v647
      %v693 = vunpack.c.h.b16 %v647
      %v694 = vunpack.c.l.b16 %v648
      %v695 = vunpack.c.h.b16 %v648
      %v696 = vunpack.c.l.b16 %v649
      %v697 = vunpack.c.h.b16 %v649
      %v698 = vpack.c.b16 %v666, %v666
      %v699 = vpack.c.b16 %v667, %v667
      %v700 = vpack.c.b16 %v668, %v668
      %v701 = vpack.c.b16 %v669, %v669
      %v702 = vpack.c.b16 %v670, %v670
      %v703 = vpack.c.b16 %v671, %v671
      %v704 = vpack.c.b16 %v672, %v672
      %v705 = vpack.c.b16 %v673, %v673
      %v706 = vpack.c.b16 %v674, %v674
      %v707 = vpack.c.b16 %v675, %v675
      %v708 = vpack.c.b16 %v676, %v676
      %v709 = vpack.c.b16 %v677, %v677
      %v710 = vpack.c.b16 %v678, %v678
      %v711 = vpack.c.b16 %v679, %v679
      %v712 = vpack.c.b16 %v680, %v680
      %v713 = vpack.c.b16 %v681, %v681
      %v714 = vpack.c.b16 %v682, %v682
      %v715 = vpack.c.b16 %v683, %v683
      %v716 = vpack.c.b16 %v684, %v684
      %v717 = vpack.c.b16 %v685, %v685
      %v718 = vpack.c.b16 %v686, %v686
      %v719 = vpack.c.b16 %v687, %v687
      %v720 = vpack.c.b16 %v688, %v688
      %v721 = vpack.c.b16 %v689, %v689
      %v722 = vpack.c.b16 %v690, %v690
      %v723 = vpack.c.b16 %v691, %v691
      %v724 = vpack.c.b16 %v692, %v692
      %v725 = vpack.c.b16 %v693, %v693
      %v726 = vpack.c.b16 %v694, %v694
      %v727 = vpack.c.b16 %v695, %v695
      %v728 = vpack.c.b16 %v696, %v696
      %v729 = vpack.c.b16 %v697, %v697
      %762 = vst [vmem:[%s182] sm:$0xf] %v698
      %763 = vst [vmem:[%s182 + $0x4] sm:$0xf] %v699
      %764 = vst [vmem:[%s182 + $0x8] sm:$0xf] %v700
      %765 = vst [vmem:[%s182 + $0xc] sm:$0xf] %v701
      %766 = vst [vmem:[%s182 + $0x10] sm:$0xf] %v702
      %767 = vst [vmem:[%s182 + $0x14] sm:$0xf] %v703
      %768 = vst [vmem:[%s182 + $0x18] sm:$0xf] %v704
      %769 = vst [vmem:[%s182 + $0x1c] sm:$0xf] %v705
      %770 = vst [vmem:[%s182 + $0x20] sm:$0xf] %v706
      %771 = vst [vmem:[%s182 + $0x24] sm:$0xf] %v707
      %772 = vst [vmem:[%s182 + $0x28] sm:$0xf] %v708
      %773 = vst [vmem:[%s182 + $0x2c] sm:$0xf] %v709
      %774 = vst [vmem:[%s182 + $0x30] sm:$0xf] %v710
      %775 = vst [vmem:[%s182 + $0x34] sm:$0xf] %v711
      %776 = vst [vmem:[%s182 + $0x38] sm:$0xf] %v712
      %777 = vst [vmem:[%s182 + $0x3c] sm:$0xf] %v713
      %778 = vst [vmem:[%s182 + $0x40] sm:$0xf] %v714
      %779 = vst [vmem:[%s182 + $0x44] sm:$0xf] %v715
      %780 = vst [vmem:[%s182 + $0x48] sm:$0xf] %v716
      %781 = vst [vmem:[%s182 + $0x4c] sm:$0xf] %v717
      %782 = vst [vmem:[%s182 + $0x50] sm:$0xf] %v718
      %783 = vst [vmem:[%s182 + $0x54] sm:$0xf] %v719
      %784 = vst [vmem:[%s182 + $0x58] sm:$0xf] %v720
      %785 = vst [vmem:[%s182 + $0x5c] sm:$0xf] %v721
      %786 = vst [vmem:[%s182 + $0x60] sm:$0xf] %v722
      %787 = vst [vmem:[%s182 + $0x64] sm:$0xf] %v723
      %788 = vst [vmem:[%s182 + $0x68] sm:$0xf] %v724
      %789 = vst [vmem:[%s182 + $0x6c] sm:$0xf] %v725
      %790 = vst [vmem:[%s182 + $0x70] sm:$0xf] %v726
      %791 = vst [vmem:[%s182 + $0x74] sm:$0xf] %v727
      %792 = vst [vmem:[%s182 + $0x78] sm:$0xf] %v728
      %793 = vst [vmem:[%s182 + $0x7c] sm:$0xf] %v729
      %s794 = smul.u32 32, %s17
      %p795 = scmp.lt.s32.totalorder %s794, 255
      %s796 = scalar_select %p795, %s794, 255
      %p797 = scmp.lt.s32.totalorder %s18, 0
      %s798 = scalar_select %p797, %s18, 0
      %s799 = sadd.s32 %s798, %s796
      %s800 = smul.addr %s799, 4
      %s801 = scalar_lea.vmem %s2, %s800
      // Predicated region
      $region29: #{frame_discriminator_forward.5} parent=27 // pred_check
        %p802 = pneg %p97
      $region30: #{frame_discriminator_forward.5} parent=27 // pred_check_branch
        %804 = sbr.rel (%p802) target = $region32
      $region31: #{frame_discriminator_forward.5} parent=27 // pred_region
        %s805 = smul.u32 32, %s17
      $region32: #{frame_discriminator_forward.5} parent=27 // pred_fallthru
        _
    $region28: #{frame_discriminator_forward.5} parent=5 // pred_fallthru
      _
    %p806 = scmp.le.s32.totalorder 2, %s8
    // Predicated region
    $region33: #{frame_discriminator_forward.5} parent=5 // pred_check
      %p807 = pneg %p806
    $region34: #{frame_discriminator_forward.5} parent=5 // pred_check_branch
      %809 = sbr.rel (%p807) target = $region36
    $region35: #{frame_discriminator_forward.5} parent=5 // pred_region
      %s810 = ssub.s32 %s8, 2
      // Predicated region
      $region37: #{frame_discriminator_forward.5} parent=35 // pred_check
        %p811 = pneg %p103
      $region38: #{frame_discriminator_forward.5} parent=35 // pred_check_branch
        %813 = sbr.rel (%p811) target = $region40
      $region39: #{frame_discriminator_forward.5} parent=35 // pred_region
        %s814 = smul.u32 32, %s19
        %p815 = scmp.lt.s32.totalorder %s814, 255
        %s816 = scalar_select %p815, %s814, 255
        %p817 = scmp.lt.s32.totalorder %s20, 0
        %s818 = scalar_select %p817, %s20, 0
        %s819 = sadd.s32 %s818, %s816
        %s820 = smul.addr %s819, 4
        %s821 = scalar_lea.vmem %s2, %s820
      $region40: #{frame_discriminator_forward.5} parent=35 // pred_fallthru
        _
    $region36: #{frame_discriminator_forward.5} parent=5 // pred_fallthru
      _
  $region6: #{frame_discriminator_forward.5} parent=0 // loop_footer
    %s12 = sadd.s32 1, %s8
  $region7: #{frame_discriminator_forward.5} parent=0 // loop_footer_branch
    %7 = sbr.rel target = $region3
  $region8: #{frame_discriminator_forward.5} parent=0 // loop_exit
    _

// kernel: frame_discriminator_forward.6
$region0: #{frame_discriminator_forward.6}
  #allocation0 [shape = 'u32[]', space=smem, size = 0x4, offset = 0x4, fixed_abs, tag = 'smem constant byte address 0x4 - core index']
  #allocation1 [shape = 'u32[144,128]{1,0:T(1,128)}', space=vmem, size = 0x12000, scoped, tag = 'internal scratch']
  %s0 = inlined_call_operand.vmem [shape: bf16[512,2048], index: 0, kind: input, shape index: {}]
  %s1 = inlined_call_operand.vmem [shape: bf16[2048,128], index: 1, kind: input, shape index: {}]
  %s2 = inlined_call_operand.vmem [shape: bf16[512,128], index: 2, kind: output, shape index: {0}]
  %s3 = inlined_call_operand.vmem [shape: f32[1,128], index: 3, kind: output, shape index: {1}]
  %s4 = inlined_call_operand.vmem [shape: f32[1,128], index: 4, kind: output, shape index: {2}]
  %5 = xla_tuple %s2, %s3, %s4
  %s6 = sld [smem:[#allocation0]]
  $region61: #{frame_discriminator_forward.6} parent=0
    _
  %s8 = ssub.s32 1, %s6
  %s9 = scalar_select 0, %s8, %s6
  loop: start=0, step=1, limit=4
  $region2: #{frame_discriminator_forward.6} parent=0 // loop_pre_header
    _
  $region3: #{frame_discriminator_forward.6} parent=0 // loop_header
    %s11 = sphi 0, %s15
    %p12 = scmp.ge.s32.totalorder %s11, 4
    %s18 = sphi 0, %s30
    %s19 = sphi 0, %s26
    %s20 = sphi 0, %s18
    %s21 = sphi 0, %s19
    %s22 = sphi 0, %s20
    %s23 = sphi 0, %s21
    %s33 = sphi 0, %s35
    %s36 = sphi 0, %s33
    %s37 = sphi 0, %s36
    %s53 = sphi 0, %s37
    %s59 = sphi 0, %s61
    %s62 = sphi 0, %s59
    %s63 = sphi 0, %s62
    %s79 = sphi 0, %s63
    %s87 = sphi 0, %s89
    %s90 = sphi 0, %s87
    %s91 = sphi 0, %s90
    %s107 = sphi 0, %s91
    %s113 = sphi 0, %s115
    %s116 = sphi 0, %s113
    %s117 = sphi 0, %s116
    %s133 = sphi 0, %s117
    %s139 = sphi 0, %s141
    %s142 = sphi 0, %s139
    %s143 = sphi 0, %s142
    %s159 = sphi 0, %s143
  $region4: #{frame_discriminator_forward.6} parent=0 // loop_header_branch
    %14 = sbr.rel (%p12) target = $region8
  $region5: #{frame_discriminator_forward.6} parent=0 // loop_body
    %s16 = ssub.s32 %s11, 1
    %s17 = ssub.s32 %s11, 2
    %s24 = sadd.s32 1, %s19
    %p25 = scmp.ge.s32.totalorder %s24, 2
    %s26 = scalar_select %p25, 0, %s24
    %s27 = sadd.s32 1, %s18
    %s28 = scalar_select %p25, %s27, %s18
    %p29 = scmp.ge.s32.totalorder %s28, 1
    %s30 = scalar_select %p29, 0, %s28
    %s31 = ssub.s32 %s19, %s26
    %p32 = scmp.eq.s32.totalorder %s31, 0
    %s34 = sadd.s32 %s33, 1
    %s35 = scalar_select %p32, %s33, %s34
    %p38 = pneg %p32
    %p39 = scmp.eq.s32.totalorder %s11, 1
    %p40 = por %p38, %p39
    %p41 = scmp.ne.s32.totalorder %s33, %s36
    %p42 = scmp.eq.s32.totalorder %s11, 0
    %p43 = por %p41, %p42
    %p44 = scmp.ne.s32.totalorder %s33, %s36
    %p45 = scmp.eq.s32.totalorder %s16, 1
    %p46 = por %p44, %p45
    %p47 = scmp.ne.s32.totalorder %s36, %s37
    %p48 = scmp.eq.s32.totalorder %s16, 0
    %p49 = por %p47, %p48
    %p50 = scmp.ne.s32.totalorder %s36, %s37
    %p51 = scmp.eq.s32.totalorder %s17, 1
    %p52 = por %p50, %p51
    %p54 = scmp.ne.s32.totalorder %s37, %s53
    %p55 = scmp.eq.s32.totalorder %s17, 0
    %p56 = por %p54, %p55
    %s57 = ssub.s32 %s18, %s30
    %p58 = scmp.eq.s32.totalorder %s57, 0
    %s60 = sadd.s32 %s59, 1
    %s61 = scalar_select %p58, %s59, %s60
    %p64 = pneg %p58
    %p65 = scmp.eq.s32.totalorder %s11, 1
    %p66 = por %p64, %p65
    %p67 = scmp.ne.s32.totalorder %s59, %s62
    %p68 = scmp.eq.s32.totalorder %s11, 0
    %p69 = por %p67, %p68
    %p70 = scmp.ne.s32.totalorder %s59, %s62
    %p71 = scmp.eq.s32.totalorder %s16, 1
    %p72 = por %p70, %p71
    %p73 = scmp.ne.s32.totalorder %s62, %s63
    %p74 = scmp.eq.s32.totalorder %s16, 0
    %p75 = por %p73, %p74
    %p76 = scmp.ne.s32.totalorder %s62, %s63
    %p77 = scmp.eq.s32.totalorder %s17, 1
    %p78 = por %p76, %p77
    %p80 = scmp.ne.s32.totalorder %s63, %s79
    %p81 = scmp.eq.s32.totalorder %s17, 0
    %p82 = por %p80, %p81
    %s83 = ssub.s32 %s19, %s26
    %s84 = ssub.s32 %s18, %s30
    %s85 = sor.u32 %s83, %s84
    %p86 = scmp.eq.s32.totalorder %s85, 0
    %s88 = sadd.s32 %s87, 1
    %s89 = scalar_select %p86, %s87, %s88
    %p92 = pneg %p86
    %p93 = scmp.eq.s32.totalorder %s11, 1
    %p94 = por %p92, %p93
    %p95 = scmp.ne.s32.totalorder %s87, %s90
    %p96 = scmp.eq.s32.totalorder %s11, 0
    %p97 = por %p95, %p96
    %p98 = scmp.ne.s32.totalorder %s87, %s90
    %p99 = scmp.eq.s32.totalorder %s16, 1
    %p100 = por %p98, %p99
    %p101 = scmp.ne.s32.totalorder %s90, %s91
    %p102 = scmp.eq.s32.totalorder %s16, 0
    %p103 = por %p101, %p102
    %p104 = scmp.ne.s32.totalorder %s90, %s91
    %p105 = scmp.eq.s32.totalorder %s17, 1
    %p106 = por %p104, %p105
    %p108 = scmp.ne.s32.totalorder %s91, %s107
    %p109 = scmp.eq.s32.totalorder %s17, 0
    %p110 = por %p108, %p109
    %s111 = ssub.s32 %s18, %s30
    %p112 = scmp.eq.s32.totalorder %s111, 0
    %s114 = sadd.s32 %s113, 1
    %s115 = scalar_select %p112, %s113, %s114
    %p118 = pneg %p112
    %p119 = scmp.eq.s32.totalorder %s11, 1
    %p120 = por %p118, %p119
    %p121 = scmp.ne.s32.totalorder %s113, %s116
    %p122 = scmp.eq.s32.totalorder %s11, 0
    %p123 = por %p121, %p122
    %p124 = scmp.ne.s32.totalorder %s113, %s116
    %p125 = scmp.eq.s32.totalorder %s16, 1
    %p126 = por %p124, %p125
    %p127 = scmp.ne.s32.totalorder %s116, %s117
    %p128 = scmp.eq.s32.totalorder %s16, 0
    %p129 = por %p127, %p128
    %p130 = scmp.ne.s32.totalorder %s116, %s117
    %p131 = scmp.eq.s32.totalorder %s17, 1
    %p132 = por %p130, %p131
    %p134 = scmp.ne.s32.totalorder %s117, %s133
    %p135 = scmp.eq.s32.totalorder %s17, 0
    %p136 = por %p134, %p135
    %s137 = ssub.s32 %s18, %s30
    %p138 = scmp.eq.s32.totalorder %s137, 0
    %s140 = sadd.s32 %s139, 1
    %s141 = scalar_select %p138, %s139, %s140
    %p144 = pneg %p138
    %p145 = scmp.eq.s32.totalorder %s11, 1
    %p146 = por %p144, %p145
    %p147 = scmp.ne.s32.totalorder %s139, %s142
    %p148 = scmp.eq.s32.totalorder %s11, 0
    %p149 = por %p147, %p148
    %p150 = scmp.ne.s32.totalorder %s139, %s142
    %p151 = scmp.eq.s32.totalorder %s16, 1
    %p152 = por %p150, %p151
    %p153 = scmp.ne.s32.totalorder %s142, %s143
    %p154 = scmp.eq.s32.totalorder %s16, 0
    %p155 = por %p153, %p154
    %p156 = scmp.ne.s32.totalorder %s142, %s143
    %p157 = scmp.eq.s32.totalorder %s17, 1
    %p158 = por %p156, %p157
    %p160 = scmp.ne.s32.totalorder %s143, %s159
    %p161 = scmp.eq.s32.totalorder %s17, 0
    %p162 = por %p160, %p161
    %p163 = scmp.le.s32.totalorder 1, %s11
    %p164 = scmp.lt.s32.totalorder %s11, 3
    %p165 = pnand %p163, %p164
    %p166 = pneg %p165
    // Predicated region
    $region9: #{frame_discriminator_forward.6} parent=5 // pred_check
      _
    $region10: #{frame_discriminator_forward.6} parent=5 // pred_check_branch
      %168 = sbr.rel (%p165) target = $region12
    $region11: #{frame_discriminator_forward.6} parent=5 // pred_region
      %s169 = ssub.s32 %s11, 1
      // Predicated region
      $region13: #{frame_discriminator_forward.6} parent=11 // pred_check
        %p170 = pneg %p75
      $region14: #{frame_discriminator_forward.6} parent=11 // pred_check_branch
        %172 = sbr.rel (%p170) target = $region16
      $region15: #{frame_discriminator_forward.6} parent=11 // pred_region
        %p173 = scmp.lt.s32.totalorder %s20, 0
        %s174 = scalar_select %p173, %s20, 0
        %s175 = smul.addr %s174, 4
        %s176 = scalar_lea.vmem %s1, %s175
      $region16: #{frame_discriminator_forward.6} parent=11 // pred_fallthru
        _
    $region12: #{frame_discriminator_forward.6} parent=5 // pred_fallthru
      _
    %p177 = scmp.lt.s32.totalorder %s11, 2
    // Predicated region
    $region17: #{frame_discriminator_forward.6} parent=5 // pred_check
      %p178 = pneg %p177
    $region18: #{frame_discriminator_forward.6} parent=5 // pred_check_branch
      %180 = sbr.rel (%p178) target = $region20
    $region19: #{frame_discriminator_forward.6} parent=5 // pred_region
      // Predicated region
      $region21: #{frame_discriminator_forward.6} parent=19 // pred_check
        %p181 = pneg %p43
      $region22: #{frame_discriminator_forward.6} parent=19 // pred_check_branch
        %183 = sbr.rel (%p181) target = $region24
      $region23: #{frame_discriminator_forward.6} parent=19 // pred_region
        %s184 = smul.u32 32, %s19
        %p185 = scmp.lt.s32.totalorder %s184, 63
        %s186 = scalar_select %p185, %s184, 63
        %s187 = smul.addr %s186, 16
        %s188 = smul.addr %s187, 4
        %s189 = scalar_lea.vmem %s0, %s188
        %s190 = smul.u32 32, %s19
      $region24: #{frame_discriminator_forward.6} parent=19 // pred_fallthru
        _
    $region20: #{frame_discriminator_forward.6} parent=5 // pred_fallthru
      _
    %p191 = scmp.le.s32.totalorder 1, %s11
    %p192 = scmp.lt.s32.totalorder %s11, 3
    %p193 = pnand %p191, %p192
    %p194 = pneg %p193
    // Predicated region
    $region25: #{frame_discriminator_forward.6} parent=5 // pred_check
      _
    $region26: #{frame_discriminator_forward.6} parent=5 // pred_check_branch
      %196 = sbr.rel (%p193) target = $region28
    $region27: #{frame_discriminator_forward.6} parent=5 // pred_region
      %s197 = ssub.s32 %s11, 1
      %s198 = smul.u32 32, %s21
      %p199 = scmp.lt.s32.totalorder %s198, 63
      %s200 = scalar_select %p199, %s198, 63
      %s201 = smul.addr %s200, 16
      %s202 = smul.addr %s201, 4
      %s203 = scalar_lea.vmem %s0, %s202
      %p204 = pneg %p49
      %p205 = pneg %p46
      %p206 = scmp.lt.s32.totalorder %s20, 0
      %s207 = scalar_select %p206, %s20, 0
      %s208 = smul.addr %s207, 4
      %s209 = scalar_lea.vmem %s1, %s208
      %p210 = pneg %p75
      %p211 = pneg %p72
      %p212 = pneg %p103
      %p213 = pneg %p100
      %s214 = smul.u32 32, %s21
      %p215 = scmp.lt.s32.totalorder %s214, 63
      %s216 = scalar_select %p215, %s214, 63
      %p217 = scmp.lt.s32.totalorder %s20, 0
      %s218 = scalar_select %p217, %s20, 0
      %s219 = sadd.s32 %s218, %s216
      %s220 = smul.addr %s219, 4
      %s221 = scalar_lea.vmem %s2, %s220
      %p222 = pneg %p129
      %p223 = pneg %p126
      %p224 = scmp.lt.s32.totalorder %s20, 0
      %s225 = scalar_select %p224, %s20, 0
      %s226 = scalar_lea.vmem %s3, %s225
      %p227 = pneg %p155
      %p228 = pneg %p152
      %p229 = scmp.lt.s32.totalorder %s20, 0
      %s230 = scalar_select %p229, %s20, 0
      %s231 = scalar_lea.vmem %s4, %s230
      %s232 = smul.u32 32, %s21
      %p233 = scmp.lt.s32.totalorder %s232, 63
      %s234 = scalar_select %p233, %s232, 63
      %s235 = smul.addr %s234, 16
      %s236 = smul.addr %s235, 4
      %s237 = scalar_lea.vmem %s0, %s236
      %s238 = smul.u32 32, %s21
      %p239 = scmp.lt.s32.totalorder %s20, 0
      %s240 = scalar_select %p239, %s20, 0
      %s241 = smul.addr %s240, 4
      %s242 = scalar_lea.vmem %s1, %s241
      %s243 = smul.u32 32, %s21
      %p244 = scmp.lt.s32.totalorder %s243, 63
      %s245 = scalar_select %p244, %s243, 63
      %p246 = scmp.lt.s32.totalorder %s20, 0
      %s247 = scalar_select %p246, %s20, 0
      %s248 = sadd.s32 %s247, %s245
      %s249 = smul.addr %s248, 4
      %s250 = scalar_lea.vmem %s2, %s249
      %s251 = smul.u32 32, %s21
      %p252 = scmp.lt.s32.totalorder %s20, 0
      %s253 = scalar_select %p252, %s20, 0
      %s254 = scalar_lea.vmem %s3, %s253
      %p255 = scmp.lt.s32.totalorder %s20, 0
      %s256 = scalar_select %p255, %s20, 0
      %s257 = scalar_lea.vmem %s4, %s256
      %p259 = scmp.eq.s32.totalorder %s21, 0
      // Predicated region
      $region29: #{frame_discriminator_forward.6} parent=27 // pred_check
        %p260 = pneg %p259
      $region30: #{frame_discriminator_forward.6} parent=27 // pred_check_branch
        %262 = sbr.rel (%p260) target = $region32
      $region31: #{frame_discriminator_forward.6} parent=27 // pred_region
        %263 = vst [vmem:[%s254] sm:$0x1] 0.0
        %264 = vst [vmem:[%s257] sm:$0x1] 0.0
      $region32: #{frame_discriminator_forward.6} parent=27 // pred_fallthru
        _
      %v265 = vld [vmem:[%s237] sm:$0xff]
      %v266 = vld [vmem:[%s237 + $0x8] sm:$0xff]
      %v267 = vld [vmem:[%s237 + $0x10] sm:$0xff]
      %v268 = vld [vmem:[%s237 + $0x18] sm:$0xff]
      %v269 = vld [vmem:[%s237 + $0x20] sm:$0xff]
      %v270 = vld [vmem:[%s237 + $0x28] sm:$0xff]
      %v271 = vld [vmem:[%s237 + $0x30] sm:$0xff]
      %v272 = vld [vmem:[%s237 + $0x38] sm:$0xff]
      %v273 = vld [vmem:[%s237 + $0x40] sm:$0xff]
      %v274 = vld [vmem:[%s237 + $0x48] sm:$0xff]
      %v275 = vld [vmem:[%s237 + $0x50] sm:$0xff]
      %v276 = vld [vmem:[%s237 + $0x58] sm:$0xff]
      %v277 = vld [vmem:[%s237 + $0x60] sm:$0xff]
      %v278 = vld [vmem:[%s237 + $0x68] sm:$0xff]
      %v279 = vld [vmem:[%s237 + $0x70] sm:$0xff]
      %v280 = vld [vmem:[%s237 + $0x78] sm:$0xff]
      %v281 = vld [vmem:[%s237 + $0x80] sm:$0xff]
      %v282 = vld [vmem:[%s237 + $0x88] sm:$0xff]
      %v283 = vld [vmem:[%s237 + $0x90] sm:$0xff]
      %v284 = vld [vmem:[%s237 + $0x98] sm:$0xff]
      %v285 = vld [vmem:[%s237 + $0xa0] sm:$0xff]
      %v286 = vld [vmem:[%s237 + $0xa8] sm:$0xff]
      %v287 = vld [vmem:[%s237 + $0xb0] sm:$0xff]
      %v288 = vld [vmem:[%s237 + $0xb8] sm:$0xff]
      %v289 = vld [vmem:[%s237 + $0xc0] sm:$0xff]
      %v290 = vld [vmem:[%s237 + $0xc8] sm:$0xff]
      %v291 = vld [vmem:[%s237 + $0xd0] sm:$0xff]
      %v292 = vld [vmem:[%s237 + $0xd8] sm:$0xff]
      %v293 = vld [vmem:[%s237 + $0xe0] sm:$0xff]
      %v294 = vld [vmem:[%s237 + $0xe8] sm:$0xff]
      %v295 = vld [vmem:[%s237 + $0xf0] sm:$0xff]
      %v296 = vld [vmem:[%s237 + $0xf8] sm:$0xff]
      %v297 = vld [vmem:[%s237 + $0x100] sm:$0xff]
      %v298 = vld [vmem:[%s237 + $0x108] sm:$0xff]
      %v299 = vld [vmem:[%s237 + $0x110] sm:$0xff]
      %v300 = vld [vmem:[%s237 + $0x118] sm:$0xff]
      %v301 = vld [vmem:[%s237 + $0x120] sm:$0xff]
      %v302 = vld [vmem:[%s237 + $0x128] sm:$0xff]
      %v303 = vld [vmem:[%s237 + $0x130] sm:$0xff]
      %v304 = vld [vmem:[%s237 + $0x138] sm:$0xff]
      %v305 = vld [vmem:[%s237 + $0x140] sm:$0xff]
      %v306 = vld [vmem:[%s237 + $0x148] sm:$0xff]
      %v307 = vld [vmem:[%s237 + $0x150] sm:$0xff]
      %v308 = vld [vmem:[%s237 + $0x158] sm:$0xff]
      %v309 = vld [vmem:[%s237 + $0x160] sm:$0xff]
      %v310 = vld [vmem:[%s237 + $0x168] sm:$0xff]
      %v311 = vld [vmem:[%s237 + $0x170] sm:$0xff]
      %v312 = vld [vmem:[%s237 + $0x178] sm:$0xff]
      %v313 = vld [vmem:[%s237 + $0x180] sm:$0xff]
      %v314 = vld [vmem:[%s237 + $0x188] sm:$0xff]
      %v315 = vld [vmem:[%s237 + $0x190] sm:$0xff]
      %v316 = vld [vmem:[%s237 + $0x198] sm:$0xff]
      %v317 = vld [vmem:[%s237 + $0x1a0] sm:$0xff]
      %v318 = vld [vmem:[%s237 + $0x1a8] sm:$0xff]
      %v319 = vld [vmem:[%s237 + $0x1b0] sm:$0xff]
      %v320 = vld [vmem:[%s237 + $0x1b8] sm:$0xff]
      %v321 = vld [vmem:[%s237 + $0x1c0] sm:$0xff]
      %v322 = vld [vmem:[%s237 + $0x1c8] sm:$0xff]
      %v323 = vld [vmem:[%s237 + $0x1d0] sm:$0xff]
      %v324 = vld [vmem:[%s237 + $0x1d8] sm:$0xff]
      %v325 = vld [vmem:[%s237 + $0x1e0] sm:$0xff]
      %v326 = vld [vmem:[%s237 + $0x1e8] sm:$0xff]
      %v327 = vld [vmem:[%s237 + $0x1f0] sm:$0xff]
      %v328 = vld [vmem:[%s237 + $0x1f8] sm:$0xff]
      %v329 = vld [vmem:[%s237 + $0x200] sm:$0xff]
      %v330 = vld [vmem:[%s237 + $0x208] sm:$0xff]
      %v331 = vld [vmem:[%s237 + $0x210] sm:$0xff]
      %v332 = vld [vmem:[%s237 + $0x218] sm:$0xff]
      %v333 = vld [vmem:[%s237 + $0x220] sm:$0xff]
      %v334 = vld [vmem:[%s237 + $0x228] sm:$0xff]
      %v335 = vld [vmem:[%s237 + $0x230] sm:$0xff]
      %v336 = vld [vmem:[%s237 + $0x238] sm:$0xff]
      %v337 = vld [vmem:[%s237 + $0x240] sm:$0xff]
      %v338 = vld [vmem:[%s237 + $0x248] sm:$0xff]
      %v339 = vld [vmem:[%s237 + $0x250] sm:$0xff]
      %v340 = vld [vmem:[%s237 + $0x258] sm:$0xff]
      %v341 = vld [vmem:[%s237 + $0x260] sm:$0xff]
      %v342 = vld [vmem:[%s237 + $0x268] sm:$0xff]
      %v343 = vld [vmem:[%s237 + $0x270] sm:$0xff]
      %v344 = vld [vmem:[%s237 + $0x278] sm:$0xff]
      %v345 = vld [vmem:[%s237 + $0x280] sm:$0xff]
      %v346 = vld [vmem:[%s237 + $0x288] sm:$0xff]
      %v347 = vld [vmem:[%s237 + $0x290] sm:$0xff]
      %v348 = vld [vmem:[%s237 + $0x298] sm:$0xff]
      %v349 = vld [vmem:[%s237 + $0x2a0] sm:$0xff]
      %v350 = vld [vmem:[%s237 + $0x2a8] sm:$0xff]
      %v351 = vld [vmem:[%s237 + $0x2b0] sm:$0xff]
      %v352 = vld [vmem:[%s237 + $0x2b8] sm:$0xff]
      %v353 = vld [vmem:[%s237 + $0x2c0] sm:$0xff]
      %v354 = vld [vmem:[%s237 + $0x2c8] sm:$0xff]
      %v355 = vld [vmem:[%s237 + $0x2d0] sm:$0xff]
      %v356 = vld [vmem:[%s237 + $0x2d8] sm:$0xff]
      %v357 = vld [vmem:[%s237 + $0x2e0] sm:$0xff]
      %v358 = vld [vmem:[%s237 + $0x2e8] sm:$0xff]
      %v359 = vld [vmem:[%s237 + $0x2f0] sm:$0xff]
      %v360 = vld [vmem:[%s237 + $0x2f8] sm:$0xff]
      %v361 = vld [vmem:[%s237 + $0x300] sm:$0xff]
      %v362 = vld [vmem:[%s237 + $0x308] sm:$0xff]
      %v363 = vld [vmem:[%s237 + $0x310] sm:$0xff]
      %v364 = vld [vmem:[%s237 + $0x318] sm:$0xff]
      %v365 = vld [vmem:[%s237 + $0x320] sm:$0xff]
      %v366 = vld [vmem:[%s237 + $0x328] sm:$0xff]
      %v367 = vld [vmem:[%s237 + $0x330] sm:$0xff]
      %v368 = vld [vmem:[%s237 + $0x338] sm:$0xff]
      %v369 = vld [vmem:[%s237 + $0x340] sm:$0xff]
      %v370 = vld [vmem:[%s237 + $0x348] sm:$0xff]
      %v371 = vld [vmem:[%s237 + $0x350] sm:$0xff]
      %v372 = vld [vmem:[%s237 + $0x358] sm:$0xff]
      %v373 = vld [vmem:[%s237 + $0x360] sm:$0xff]
      %v374 = vld [vmem:[%s237 + $0x368] sm:$0xff]
      %v375 = vld [vmem:[%s237 + $0x370] sm:$0xff]
      %v376 = vld [vmem:[%s237 + $0x378] sm:$0xff]
      %v377 = vld [vmem:[%s237 + $0x380] sm:$0xff]
      %v378 = vld [vmem:[%s237 + $0x388] sm:$0xff]
      %v379 = vld [vmem:[%s237 + $0x390] sm:$0xff]
      %v380 = vld [vmem:[%s237 + $0x398] sm:$0xff]
      %v381 = vld [vmem:[%s237 + $0x3a0] sm:$0xff]
      %v382 = vld [vmem:[%s237 + $0x3a8] sm:$0xff]
      %v383 = vld [vmem:[%s237 + $0x3b0] sm:$0xff]
      %v384 = vld [vmem:[%s237 + $0x3b8] sm:$0xff]
      %v385 = vld [vmem:[%s237 + $0x3c0] sm:$0xff]
      %v386 = vld [vmem:[%s237 + $0x3c8] sm:$0xff]
      %v387 = vld [vmem:[%s237 + $0x3d0] sm:$0xff]
      %v388 = vld [vmem:[%s237 + $0x3d8] sm:$0xff]
      %v389 = vld [vmem:[%s237 + $0x3e0] sm:$0xff]
      %v390 = vld [vmem:[%s237 + $0x3e8] sm:$0xff]
      %v391 = vld [vmem:[%s237 + $0x3f0] sm:$0xff]
      %v392 = vld [vmem:[%s237 + $0x3f8] sm:$0xff]
      %v393 = vld [vmem:[%s237 + $0x400] sm:$0xff]
      %v394 = vld [vmem:[%s237 + $0x408] sm:$0xff]
      %v395 = vld [vmem:[%s237 + $0x410] sm:$0xff]
      %v396 = vld [vmem:[%s237 + $0x418] sm:$0xff]
      %v397 = vld [vmem:[%s237 + $0x420] sm:$0xff]
      %v398 = vld [vmem:[%s237 + $0x428] sm:$0xff]
      %v399 = vld [vmem:[%s237 + $0x430] sm:$0xff]
      %v400 = vld [vmem:[%s237 + $0x438] sm:$0xff]
      %v401 = vld [vmem:[%s237 + $0x440] sm:$0xff]
      %v402 = vld [vmem:[%s237 + $0x448] sm:$0xff]
      %v403 = vld [vmem:[%s237 + $0x450] sm:$0xff]
      %v404 = vld [vmem:[%s237 + $0x458] sm:$0xff]
      %v405 = vld [vmem:[%s237 + $0x460] sm:$0xff]
      %v406 = vld [vmem:[%s237 + $0x468] sm:$0xff]
      %v407 = vld [vmem:[%s237 + $0x470] sm:$0xff]
      %v408 = vld [vmem:[%s237 + $0x478] sm:$0xff]
      %v409 = vld [vmem:[%s237 + $0x480] sm:$0xff]
      %v410 = vld [vmem:[%s237 + $0x488] sm:$0xff]
      %v411 = vld [vmem:[%s237 + $0x490] sm:$0xff]
      %v412 = vld [vmem:[%s237 + $0x498] sm:$0xff]
      %v413 = vld [vmem:[%s237 + $0x4a0] sm:$0xff]
      %v414 = vld [vmem:[%s237 + $0x4a8] sm:$0xff]
      %v415 = vld [vmem:[%s237 + $0x4b0] sm:$0xff]
      %v416 = vld [vmem:[%s237 + $0x4b8] sm:$0xff]
      %v417 = vld [vmem:[%s237 + $0x4c0] sm:$0xff]
      %v418 = vld [vmem:[%s237 + $0x4c8] sm:$0xff]
      %v419 = vld [vmem:[%s237 + $0x4d0] sm:$0xff]
      %v420 = vld [vmem:[%s237 + $0x4d8] sm:$0xff]
      %v421 = vld [vmem:[%s237 + $0x4e0] sm:$0xff]
      %v422 = vld [vmem:[%s237 + $0x4e8] sm:$0xff]
      %v423 = vld [vmem:[%s237 + $0x4f0] sm:$0xff]
      %v424 = vld [vmem:[%s237 + $0x4f8] sm:$0xff]
      %v425 = vld [vmem:[%s237 + $0x500] sm:$0xff]
      %v426 = vld [vmem:[%s237 + $0x508] sm:$0xff]
      %v427 = vld [vmem:[%s237 + $0x510] sm:$0xff]
      %v428 = vld [vmem:[%s237 + $0x518] sm:$0xff]
      %v429 = vld [vmem:[%s237 + $0x520] sm:$0xff]
      %v430 = vld [vmem:[%s237 + $0x528] sm:$0xff]
      %v431 = vld [vmem:[%s237 + $0x530] sm:$0xff]
      %v432 = vld [vmem:[%s237 + $0x538] sm:$0xff]
      %v433 = vld [vmem:[%s237 + $0x540] sm:$0xff]
      %v434 = vld [vmem:[%s237 + $0x548] sm:$0xff]
      %v435 = vld [vmem:[%s237 + $0x550] sm:$0xff]
      %v436 = vld [vmem:[%s237 + $0x558] sm:$0xff]
      %v437 = vld [vmem:[%s237 + $0x560] sm:$0xff]
      %v438 = vld [vmem:[%s237 + $0x568] sm:$0xff]
      %v439 = vld [vmem:[%s237 + $0x570] sm:$0xff]
      %v440 = vld [vmem:[%s237 + $0x578] sm:$0xff]
      %v441 = vld [vmem:[%s237 + $0x580] sm:$0xff]
      %v442 = vld [vmem:[%s237 + $0x588] sm:$0xff]
      %v443 = vld [vmem:[%s237 + $0x590] sm:$0xff]
      %v444 = vld [vmem:[%s237 + $0x598] sm:$0xff]
      %v445 = vld [vmem:[%s237 + $0x5a0] sm:$0xff]
      %v446 = vld [vmem:[%s237 + $0x5a8] sm:$0xff]
      %v447 = vld [vmem:[%s237 + $0x5b0] sm:$0xff]
      %v448 = vld [vmem:[%s237 + $0x5b8] sm:$0xff]
      %v449 = vld [vmem:[%s237 + $0x5c0] sm:$0xff]
      %v450 = vld [vmem:[%s237 + $0x5c8] sm:$0xff]
      %v451 = vld [vmem:[%s237 + $0x5d0] sm:$0xff]
      %v452 = vld [vmem:[%s237 + $0x5d8] sm:$0xff]
      %v453 = vld [vmem:[%s237 + $0x5e0] sm:$0xff]
      %v454 = vld [vmem:[%s237 + $0x5e8] sm:$0xff]
      %v455 = vld [vmem:[%s237 + $0x5f0] sm:$0xff]
      %v456 = vld [vmem:[%s237 + $0x5f8] sm:$0xff]
      %v457 = vld [vmem:[%s237 + $0x600] sm:$0xff]
      %v458 = vld [vmem:[%s237 + $0x608] sm:$0xff]
      %v459 = vld [vmem:[%s237 + $0x610] sm:$0xff]
      %v460 = vld [vmem:[%s237 + $0x618] sm:$0xff]
      %v461 = vld [vmem:[%s237 + $0x620] sm:$0xff]
      %v462 = vld [vmem:[%s237 + $0x628] sm:$0xff]
      %v463 = vld [vmem:[%s237 + $0x630] sm:$0xff]
      %v464 = vld [vmem:[%s237 + $0x638] sm:$0xff]
      %v465 = vld [vmem:[%s237 + $0x640] sm:$0xff]
      %v466 = vld [vmem:[%s237 + $0x648] sm:$0xff]
      %v467 = vld [vmem:[%s237 + $0x650] sm:$0xff]
      %v468 = vld [vmem:[%s237 + $0x658] sm:$0xff]
      %v469 = vld [vmem:[%s237 + $0x660] sm:$0xff]
      %v470 = vld [vmem:[%s237 + $0x668] sm:$0xff]
      %v471 = vld [vmem:[%s237 + $0x670] sm:$0xff]
      %v472 = vld [vmem:[%s237 + $0x678] sm:$0xff]
      %v473 = vld [vmem:[%s237 + $0x680] sm:$0xff]
      %v474 = vld [vmem:[%s237 + $0x688] sm:$0xff]
      %v475 = vld [vmem:[%s237 + $0x690] sm:$0xff]
      %v476 = vld [vmem:[%s237 + $0x698] sm:$0xff]
      %v477 = vld [vmem:[%s237 + $0x6a0] sm:$0xff]
      %v478 = vld [vmem:[%s237 + $0x6a8] sm:$0xff]
      %v479 = vld [vmem:[%s237 + $0x6b0] sm:$0xff]
      %v480 = vld [vmem:[%s237 + $0x6b8] sm:$0xff]
      %v481 = vld [vmem:[%s237 + $0x6c0] sm:$0xff]
      %v482 = vld [vmem:[%s237 + $0x6c8] sm:$0xff]
      %v483 = vld [vmem:[%s237 + $0x6d0] sm:$0xff]
      %v484 = vld [vmem:[%s237 + $0x6d8] sm:$0xff]
      %v485 = vld [vmem:[%s237 + $0x6e0] sm:$0xff]
      %v486 = vld [vmem:[%s237 + $0x6e8] sm:$0xff]
      %v487 = vld [vmem:[%s237 + $0x6f0] sm:$0xff]
      %v488 = vld [vmem:[%s237 + $0x6f8] sm:$0xff]
      %v489 = vld [vmem:[%s237 + $0x700] sm:$0xff]
      %v490 = vld [vmem:[%s237 + $0x708] sm:$0xff]
      %v491 = vld [vmem:[%s237 + $0x710] sm:$0xff]
      %v492 = vld [vmem:[%s237 + $0x718] sm:$0xff]
      %v493 = vld [vmem:[%s237 + $0x720] sm:$0xff]
      %v494 = vld [vmem:[%s237 + $0x728] sm:$0xff]
      %v495 = vld [vmem:[%s237 + $0x730] sm:$0xff]
      %v496 = vld [vmem:[%s237 + $0x738] sm:$0xff]
      %v497 = vld [vmem:[%s237 + $0x740] sm:$0xff]
      %v498 = vld [vmem:[%s237 + $0x748] sm:$0xff]
      %v499 = vld [vmem:[%s237 + $0x750] sm:$0xff]
      %v500 = vld [vmem:[%s237 + $0x758] sm:$0xff]
      %v501 = vld [vmem:[%s237 + $0x760] sm:$0xff]
      %v502 = vld [vmem:[%s237 + $0x768] sm:$0xff]
      %v503 = vld [vmem:[%s237 + $0x770] sm:$0xff]
      %v504 = vld [vmem:[%s237 + $0x778] sm:$0xff]
      %v505 = vld [vmem:[%s237 + $0x780] sm:$0xff]
      %v506 = vld [vmem:[%s237 + $0x788] sm:$0xff]
      %v507 = vld [vmem:[%s237 + $0x790] sm:$0xff]
      %v508 = vld [vmem:[%s237 + $0x798] sm:$0xff]
      %v509 = vld [vmem:[%s237 + $0x7a0] sm:$0xff]
      %v510 = vld [vmem:[%s237 + $0x7a8] sm:$0xff]
      %v511 = vld [vmem:[%s237 + $0x7b0] sm:$0xff]
      %v512 = vld [vmem:[%s237 + $0x7b8] sm:$0xff]
      %v513 = vld [vmem:[%s237 + $0x7c0] sm:$0xff]
      %v514 = vld [vmem:[%s237 + $0x7c8] sm:$0xff]
      %v515 = vld [vmem:[%s237 + $0x7d0] sm:$0xff]
      %v516 = vld [vmem:[%s237 + $0x7d8] sm:$0xff]
      %v517 = vld [vmem:[%s237 + $0x7e0] sm:$0xff]
      %v518 = vld [vmem:[%s237 + $0x7e8] sm:$0xff]
      %v519 = vld [vmem:[%s237 + $0x7f0] sm:$0xff]
      %v520 = vld [vmem:[%s237 + $0x7f8] sm:$0xff]
      %v521 = vld [vmem:[%s242] sm:$0xf]
      %v522 = vld [vmem:[%s242 + $0x4] sm:$0xf]
      %v523 = vld [vmem:[%s242 + $0x8] sm:$0xf]
      %v524 = vld [vmem:[%s242 + $0xc] sm:$0xf]
      %v525 = vld [vmem:[%s242 + $0x10] sm:$0xf]
      %v526 = vld [vmem:[%s242 + $0x14] sm:$0xf]
      %v527 = vld [vmem:[%s242 + $0x18] sm:$0xf]
      %v528 = vld [vmem:[%s242 + $0x1c] sm:$0xf]
      %v529 = vld [vmem:[%s242 + $0x20] sm:$0xf]
      %v530 = vld [vmem:[%s242 + $0x24] sm:$0xf]
      %v531 = vld [vmem:[%s242 + $0x28] sm:$0xf]
      %v532 = vld [vmem:[%s242 + $0x2c] sm:$0xf]
      %v533 = vld [vmem:[%s242 + $0x30] sm:$0xf]
      %v534 = vld [vmem:[%s242 + $0x34] sm:$0xf]
      %v535 = vld [vmem:[%s242 + $0x38] sm:$0xf]
      %v536 = vld [vmem:[%s242 + $0x3c] sm:$0xf]
      %v537 = vld [vmem:[%s242 + $0x40] sm:$0xf]
      %v538 = vld [vmem:[%s242 + $0x44] sm:$0xf]
      %v539 = vld [vmem:[%s242 + $0x48] sm:$0xf]
      %v540 = vld [vmem:[%s242 + $0x4c] sm:$0xf]
      %v541 = vld [vmem:[%s242 + $0x50] sm:$0xf]
      %v542 = vld [vmem:[%s242 + $0x54] sm:$0xf]
      %v543 = vld [vmem:[%s242 + $0x58] sm:$0xf]
      %v544 = vld [vmem:[%s242 + $0x5c] sm:$0xf]
      %v545 = vld [vmem:[%s242 + $0x60] sm:$0xf]
      %v546 = vld [vmem:[%s242 + $0x64] sm:$0xf]
      %v547 = vld [vmem:[%s242 + $0x68] sm:$0xf]
      %v548 = vld [vmem:[%s242 + $0x6c] sm:$0xf]
      %v549 = vld [vmem:[%s242 + $0x70] sm:$0xf]
      %v550 = vld [vmem:[%s242 + $0x74] sm:$0xf]
      %v551 = vld [vmem:[%s242 + $0x78] sm:$0xf]
      %v552 = vld [vmem:[%s242 + $0x7c] sm:$0xf]
      %v553 = vld [vmem:[%s242 + $0x80] sm:$0xf]
      %v554 = vld [vmem:[%s242 + $0x84] sm:$0xf]
      %v555 = vld [vmem:[%s242 + $0x88] sm:$0xf]
      %v556 = vld [vmem:[%s242 + $0x8c] sm:$0xf]
      %v557 = vld [vmem:[%s242 + $0x90] sm:$0xf]
      %v558 = vld [vmem:[%s242 + $0x94] sm:$0xf]
      %v559 = vld [vmem:[%s242 + $0x98] sm:$0xf]
      %v560 = vld [vmem:[%s242 + $0x9c] sm:$0xf]
      %v561 = vld [vmem:[%s242 + $0xa0] sm:$0xf]
      %v562 = vld [vmem:[%s242 + $0xa4] sm:$0xf]
      %v563 = vld [vmem:[%s242 + $0xa8] sm:$0xf]
      %v564 = vld [vmem:[%s242 + $0xac] sm:$0xf]
      %v565 = vld [vmem:[%s242 + $0xb0] sm:$0xf]
      %v566 = vld [vmem:[%s242 + $0xb4] sm:$0xf]
      %v567 = vld [vmem:[%s242 + $0xb8] sm:$0xf]
      %v568 = vld [vmem:[%s242 + $0xbc] sm:$0xf]
      %v569 = vld [vmem:[%s242 + $0xc0] sm:$0xf]
      %v570 = vld [vmem:[%s242 + $0xc4] sm:$0xf]
      %v571 = vld [vmem:[%s242 + $0xc8] sm:$0xf]
      %v572 = vld [vmem:[%s242 + $0xcc] sm:$0xf]
      %v573 = vld [vmem:[%s242 + $0xd0] sm:$0xf]
      %v574 = vld [vmem:[%s242 + $0xd4] sm:$0xf]
      %v575 = vld [vmem:[%s242 + $0xd8] sm:$0xf]
      %v576 = vld [vmem:[%s242 + $0xdc] sm:$0xf]
      %v577 = vld [vmem:[%s242 + $0xe0] sm:$0xf]
      %v578 = vld [vmem:[%s242 + $0xe4] sm:$0xf]
      %v579 = vld [vmem:[%s242 + $0xe8] sm:$0xf]
      %v580 = vld [vmem:[%s242 + $0xec] sm:$0xf]
      %v581 = vld [vmem:[%s242 + $0xf0] sm:$0xf]
      %v582 = vld [vmem:[%s242 + $0xf4] sm:$0xf]
      %v583 = vld [vmem:[%s242 + $0xf8] sm:$0xf]
      %v584 = vld [vmem:[%s242 + $0xfc] sm:$0xf]
      %v585 = vld [vmem:[%s242 + $0x100] sm:$0xf]
      %v586 = vld [vmem:[%s242 + $0x104] sm:$0xf]
      %v587 = vld [vmem:[%s242 + $0x108] sm:$0xf]
      %v588 = vld [vmem:[%s242 + $0x10c] sm:$0xf]
      %v589 = vld [vmem:[%s242 + $0x110] sm:$0xf]
      %v590 = vld [vmem:[%s242 + $0x114] sm:$0xf]
      %v591 = vld [vmem:[%s242 + $0x118] sm:$0xf]
      %v592 = vld [vmem:[%s242 + $0x11c] sm:$0xf]
      %v593 = vld [vmem:[%s242 + $0x120] sm:$0xf]
      %v594 = vld [vmem:[%s242 + $0x124] sm:$0xf]
      %v595 = vld [vmem:[%s242 + $0x128] sm:$0xf]
      %v596 = vld [vmem:[%s242 + $0x12c] sm:$0xf]
      %v597 = vld [vmem:[%s242 + $0x130] sm:$0xf]
      %v598 = vld [vmem:[%s242 + $0x134] sm:$0xf]
      %v599 = vld [vmem:[%s242 + $0x138] sm:$0xf]
      %v600 = vld [vmem:[%s242 + $0x13c] sm:$0xf]
      %v601 = vld [vmem:[%s242 + $0x140] sm:$0xf]
      %v602 = vld [vmem:[%s242 + $0x144] sm:$0xf]
      %v603 = vld [vmem:[%s242 + $0x148] sm:$0xf]
      %v604 = vld [vmem:[%s242 + $0x14c] sm:$0xf]
      %v605 = vld [vmem:[%s242 + $0x150] sm:$0xf]
      %v606 = vld [vmem:[%s242 + $0x154] sm:$0xf]
      %v607 = vld [vmem:[%s242 + $0x158] sm:$0xf]
      %v608 = vld [vmem:[%s242 + $0x15c] sm:$0xf]
      %v609 = vld [vmem:[%s242 + $0x160] sm:$0xf]
      %v610 = vld [vmem:[%s242 + $0x164] sm:$0xf]
      %v611 = vld [vmem:[%s242 + $0x168] sm:$0xf]
      %v612 = vld [vmem:[%s242 + $0x16c] sm:$0xf]
      %v613 = vld [vmem:[%s242 + $0x170] sm:$0xf]
      %v614 = vld [vmem:[%s242 + $0x174] sm:$0xf]
      %v615 = vld [vmem:[%s242 + $0x178] sm:$0xf]
      %v616 = vld [vmem:[%s242 + $0x17c] sm:$0xf]
      %v617 = vld [vmem:[%s242 + $0x180] sm:$0xf]
      %v618 = vld [vmem:[%s242 + $0x184] sm:$0xf]
      %v619 = vld [vmem:[%s242 + $0x188] sm:$0xf]
      %v620 = vld [vmem:[%s242 + $0x18c] sm:$0xf]
      %v621 = vld [vmem:[%s242 + $0x190] sm:$0xf]
      %v622 = vld [vmem:[%s242 + $0x194] sm:$0xf]
      %v623 = vld [vmem:[%s242 + $0x198] sm:$0xf]
      %v624 = vld [vmem:[%s242 + $0x19c] sm:$0xf]
      %v625 = vld [vmem:[%s242 + $0x1a0] sm:$0xf]
      %v626 = vld [vmem:[%s242 + $0x1a4] sm:$0xf]
      %v627 = vld [vmem:[%s242 + $0x1a8] sm:$0xf]
      %v628 = vld [vmem:[%s242 + $0x1ac] sm:$0xf]
      %v629 = vld [vmem:[%s242 + $0x1b0] sm:$0xf]
      %v630 = vld [vmem:[%s242 + $0x1b4] sm:$0xf]
      %v631 = vld [vmem:[%s242 + $0x1b8] sm:$0xf]
      %v632 = vld [vmem:[%s242 + $0x1bc] sm:$0xf]
      %v633 = vld [vmem:[%s242 + $0x1c0] sm:$0xf]
      %v634 = vld [vmem:[%s242 + $0x1c4] sm:$0xf]
      %v635 = vld [vmem:[%s242 + $0x1c8] sm:$0xf]
      %v636 = vld [vmem:[%s242 + $0x1cc] sm:$0xf]
      %v637 = vld [vmem:[%s242 + $0x1d0] sm:$0xf]
      %v638 = vld [vmem:[%s242 + $0x1d4] sm:$0xf]
      %v639 = vld [vmem:[%s242 + $0x1d8] sm:$0xf]
      %v640 = vld [vmem:[%s242 + $0x1dc] sm:$0xf]
      %v641 = vld [vmem:[%s242 + $0x1e0] sm:$0xf]
      %v642 = vld [vmem:[%s242 + $0x1e4] sm:$0xf]
      %v643 = vld [vmem:[%s242 + $0x1e8] sm:$0xf]
      %v644 = vld [vmem:[%s242 + $0x1ec] sm:$0xf]
      %v645 = vld [vmem:[%s242 + $0x1f0] sm:$0xf]
      %v646 = vld [vmem:[%s242 + $0x1f4] sm:$0xf]
      %v647 = vld [vmem:[%s242 + $0x1f8] sm:$0xf]
      %v648 = vld [vmem:[%s242 + $0x1fc] sm:$0xf]
      %v649 = vld [vmem:[%s242 + $0x200] sm:$0xf]
      %v650 = vld [vmem:[%s242 + $0x204] sm:$0xf]
      %v651 = vld [vmem:[%s242 + $0x208] sm:$0xf]
      %v652 = vld [vmem:[%s242 + $0x20c] sm:$0xf]
      %v653 = vld [vmem:[%s242 + $0x210] sm:$0xf]
      %v654 = vld [vmem:[%s242 + $0x214] sm:$0xf]
      %v655 = vld [vmem:[%s242 + $0x218] sm:$0xf]
      %v656 = vld [vmem:[%s242 + $0x21c] sm:$0xf]
      %v657 = vld [vmem:[%s242 + $0x220] sm:$0xf]
      %v658 = vld [vmem:[%s242 + $0x224] sm:$0xf]
      %v659 = vld [vmem:[%s242 + $0x228] sm:$0xf]
      %v660 = vld [vmem:[%s242 + $0x22c] sm:$0xf]
      %v661 = vld [vmem:[%s242 + $0x230] sm:$0xf]
      %v662 = vld [vmem:[%s242 + $0x234] sm:$0xf]
      %v663 = vld [vmem:[%s242 + $0x238] sm:$0xf]
      %v664 = vld [vmem:[%s242 + $0x23c] sm:$0xf]
      %v665 = vld [vmem:[%s242 + $0x240] sm:$0xf]
      %v666 = vld [vmem:[%s242 + $0x244] sm:$0xf]
      %v667 = vld [vmem:[%s242 + $0x248] sm:$0xf]
      %v668 = vld [vmem:[%s242 + $0x24c] sm:$0xf]
      %v669 = vld [vmem:[%s242 + $0x250] sm:$0xf]
      %v670 = vld [vmem:[%s242 + $0x254] sm:$0xf]
      %v671 = vld [vmem:[%s242 + $0x258] sm:$0xf]
      %v672 = vld [vmem:[%s242 + $0x25c] sm:$0xf]
      %v673 = vld [vmem:[%s242 + $0x260] sm:$0xf]
      %v674 = vld [vmem:[%s242 + $0x264] sm:$0xf]
      %v675 = vld [vmem:[%s242 + $0x268] sm:$0xf]
      %v676 = vld [vmem:[%s242 + $0x26c] sm:$0xf]
      %v677 = vld [vmem:[%s242 + $0x270] sm:$0xf]
      %v678 = vld [vmem:[%s242 + $0x274] sm:$0xf]
      %v679 = vld [vmem:[%s242 + $0x278] sm:$0xf]
      %v680 = vld [vmem:[%s242 + $0x27c] sm:$0xf]
      %v681 = vld [vmem:[%s242 + $0x280] sm:$0xf]
      %v682 = vld [vmem:[%s242 + $0x284] sm:$0xf]
      %v683 = vld [vmem:[%s242 + $0x288] sm:$0xf]
      %v684 = vld [vmem:[%s242 + $0x28c] sm:$0xf]
      %v685 = vld [vmem:[%s242 + $0x290] sm:$0xf]
      %v686 = vld [vmem:[%s242 + $0x294] sm:$0xf]
      %v687 = vld [vmem:[%s242 + $0x298] sm:$0xf]
      %v688 = vld [vmem:[%s242 + $0x29c] sm:$0xf]
      %v689 = vld [vmem:[%s242 + $0x2a0] sm:$0xf]
      %v690 = vld [vmem:[%s242 + $0x2a4] sm:$0xf]
      %v691 = vld [vmem:[%s242 + $0x2a8] sm:$0xf]
      %v692 = vld [vmem:[%s242 + $0x2ac] sm:$0xf]
      %v693 = vld [vmem:[%s242 + $0x2b0] sm:$0xf]
      %v694 = vld [vmem:[%s242 + $0x2b4] sm:$0xf]
      %v695 = vld [vmem:[%s242 + $0x2b8] sm:$0xf]
      %v696 = vld [vmem:[%s242 + $0x2bc] sm:$0xf]
      %v697 = vld [vmem:[%s242 + $0x2c0] sm:$0xf]
      %v698 = vld [vmem:[%s242 + $0x2c4] sm:$0xf]
      %v699 = vld [vmem:[%s242 + $0x2c8] sm:$0xf]
      %v700 = vld [vmem:[%s242 + $0x2cc] sm:$0xf]
      %v701 = vld [vmem:[%s242 + $0x2d0] sm:$0xf]
      %v702 = vld [vmem:[%s242 + $0x2d4] sm:$0xf]
      %v703 = vld [vmem:[%s242 + $0x2d8] sm:$0xf]
      %v704 = vld [vmem:[%s242 + $0x2dc] sm:$0xf]
      %v705 = vld [vmem:[%s242 + $0x2e0] sm:$0xf]
      %v706 = vld [vmem:[%s242 + $0x2e4] sm:$0xf]
      %v707 = vld [vmem:[%s242 + $0x2e8] sm:$0xf]
      %v708 = vld [vmem:[%s242 + $0x2ec] sm:$0xf]
      %v709 = vld [vmem:[%s242 + $0x2f0] sm:$0xf]
      %v710 = vld [vmem:[%s242 + $0x2f4] sm:$0xf]
      %v711 = vld [vmem:[%s242 + $0x2f8] sm:$0xf]
      %v712 = vld [vmem:[%s242 + $0x2fc] sm:$0xf]
      %v713 = vld [vmem:[%s242 + $0x300] sm:$0xf]
      %v714 = vld [vmem:[%s242 + $0x304] sm:$0xf]
      %v715 = vld [vmem:[%s242 + $0x308] sm:$0xf]
      %v716 = vld [vmem:[%s242 + $0x30c] sm:$0xf]
      %v717 = vld [vmem:[%s242 + $0x310] sm:$0xf]
      %v718 = vld [vmem:[%s242 + $0x314] sm:$0xf]
      %v719 = vld [vmem:[%s242 + $0x318] sm:$0xf]
      %v720 = vld [vmem:[%s242 + $0x31c] sm:$0xf]
      %v721 = vld [vmem:[%s242 + $0x320] sm:$0xf]
      %v722 = vld [vmem:[%s242 + $0x324] sm:$0xf]
      %v723 = vld [vmem:[%s242 + $0x328] sm:$0xf]
      %v724 = vld [vmem:[%s242 + $0x32c] sm:$0xf]
      %v725 = vld [vmem:[%s242 + $0x330] sm:$0xf]
      %v726 = vld [vmem:[%s242 + $0x334] sm:$0xf]
      %v727 = vld [vmem:[%s242 + $0x338] sm:$0xf]
      %v728 = vld [vmem:[%s242 + $0x33c] sm:$0xf]
      %v729 = vld [vmem:[%s242 + $0x340] sm:$0xf]
      %v730 = vld [vmem:[%s242 + $0x344] sm:$0xf]
      %v731 = vld [vmem:[%s242 + $0x348] sm:$0xf]
      %v732 = vld [vmem:[%s242 + $0x34c] sm:$0xf]
      %v733 = vld [vmem:[%s242 + $0x350] sm:$0xf]
      %v734 = vld [vmem:[%s242 + $0x354] sm:$0xf]
      %v735 = vld [vmem:[%s242 + $0x358] sm:$0xf]
      %v736 = vld [vmem:[%s242 + $0x35c] sm:$0xf]
      %v737 = vld [vmem:[%s242 + $0x360] sm:$0xf]
      %v738 = vld [vmem:[%s242 + $0x364] sm:$0xf]
      %v739 = vld [vmem:[%s242 + $0x368] sm:$0xf]
      %v740 = vld [vmem:[%s242 + $0x36c] sm:$0xf]
      %v741 = vld [vmem:[%s242 + $0x370] sm:$0xf]
      %v742 = vld [vmem:[%s242 + $0x374] sm:$0xf]
      %v743 = vld [vmem:[%s242 + $0x378] sm:$0xf]
      %v744 = vld [vmem:[%s242 + $0x37c] sm:$0xf]
      %v745 = vld [vmem:[%s242 + $0x380] sm:$0xf]
      %v746 = vld [vmem:[%s242 + $0x384] sm:$0xf]
      %v747 = vld [vmem:[%s242 + $0x388] sm:$0xf]
      %v748 = vld [vmem:[%s242 + $0x38c] sm:$0xf]
      %v749 = vld [vmem:[%s242 + $0x390] sm:$0xf]
      %v750 = vld [vmem:[%s242 + $0x394] sm:$0xf]
      %v751 = vld [vmem:[%s242 + $0x398] sm:$0xf]
      %v752 = vld [vmem:[%s242 + $0x39c] sm:$0xf]
      %v753 = vld [vmem:[%s242 + $0x3a0] sm:$0xf]
      %v754 = vld [vmem:[%s242 + $0x3a4] sm:$0xf]
      %v755 = vld [vmem:[%s242 + $0x3a8] sm:$0xf]
      %v756 = vld [vmem:[%s242 + $0x3ac] sm:$0xf]
      %v757 = vld [vmem:[%s242 + $0x3b0] sm:$0xf]
      %v758 = vld [vmem:[%s242 + $0x3b4] sm:$0xf]
      %v759 = vld [vmem:[%s242 + $0x3b8] sm:$0xf]
      %v760 = vld [vmem:[%s242 + $0x3bc] sm:$0xf]
      %v761 = vld [vmem:[%s242 + $0x3c0] sm:$0xf]
      %v762 = vld [vmem:[%s242 + $0x3c4] sm:$0xf]
      %v763 = vld [vmem:[%s242 + $0x3c8] sm:$0xf]
      %v764 = vld [vmem:[%s242 + $0x3cc] sm:$0xf]
      %v765 = vld [vmem:[%s242 + $0x3d0] sm:$0xf]
      %v766 = vld [vmem:[%s242 + $0x3d4] sm:$0xf]
      %v767 = vld [vmem:[%s242 + $0x3d8] sm:$0xf]
      %v768 = vld [vmem:[%s242 + $0x3dc] sm:$0xf]
      %v769 = vld [vmem:[%s242 + $0x3e0] sm:$0xf]
      %v770 = vld [vmem:[%s242 + $0x3e4] sm:$0xf]
      %v771 = vld [vmem:[%s242 + $0x3e8] sm:$0xf]
      %v772 = vld [vmem:[%s242 + $0x3ec] sm:$0xf]
      %v773 = vld [vmem:[%s242 + $0x3f0] sm:$0xf]
      %v774 = vld [vmem:[%s242 + $0x3f4] sm:$0xf]
      %v775 = vld [vmem:[%s242 + $0x3f8] sm:$0xf]
      %v776 = vld [vmem:[%s242 + $0x3fc] sm:$0xf]
      %v1033 = vunpack.c.l.b16 %v265
      %v1034 = vunpack.c.h.b16 %v265
      %v1035 = vunpack.c.l.b16 %v266
      %v1036 = vunpack.c.h.b16 %v266
      %v1037 = vunpack.c.l.b16 %v267
      %v1038 = vunpack.c.h.b16 %v267
      %v1039 = vunpack.c.l.b16 %v268
      %v1040 = vunpack.c.h.b16 %v268
      %v1041 = vunpack.c.l.b16 %v269
      %v1042 = vunpack.c.h.b16 %v269
      %v1043 = vunpack.c.l.b16 %v270
      %v1044 = vunpack.c.h.b16 %v270
      %v1045 = vunpack.c.l.b16 %v271
      %v1046 = vunpack.c.h.b16 %v271
      %v1047 = vunpack.c.l.b16 %v272
      %v1048 = vunpack.c.h.b16 %v272
      %v1049 = vunpack.c.l.b16 %v273
      %v1050 = vunpack.c.h.b16 %v273
      %v1051 = vunpack.c.l.b16 %v274
      %v1052 = vunpack.c.h.b16 %v274
      %v1053 = vunpack.c.l.b16 %v275
      %v1054 = vunpack.c.h.b16 %v275
      %v1055 = vunpack.c.l.b16 %v276
      %v1056 = vunpack.c.h.b16 %v276
      %v1057 = vunpack.c.l.b16 %v277
      %v1058 = vunpack.c.h.b16 %v277
      %v1059 = vunpack.c.l.b16 %v278
      %v1060 = vunpack.c.h.b16 %v278
      %v1061 = vunpack.c.l.b16 %v279
      %v1062 = vunpack.c.h.b16 %v279
      %v1063 = vunpack.c.l.b16 %v280
      %v1064 = vunpack.c.h.b16 %v280
      %v1065 = vunpack.c.l.b16 %v281
      %v1066 = vunpack.c.h.b16 %v281
      %v1067 = vunpack.c.l.b16 %v282
      %v1068 = vunpack.c.h.b16 %v282
      %v1069 = vunpack.c.l.b16 %v283
      %v1070 = vunpack.c.h.b16 %v283
      %v1071 = vunpack.c.l.b16 %v284
      %v1072 = vunpack.c.h.b16 %v284
      %v1073 = vunpack.c.l.b16 %v285
      %v1074 = vunpack.c.h.b16 %v285
      %v1075 = vunpack.c.l.b16 %v286
      %v1076 = vunpack.c.h.b16 %v286
      %v1077 = vunpack.c.l.b16 %v287
      %v1078 = vunpack.c.h.b16 %v287
      %v1079 = vunpack.c.l.b16 %v288
      %v1080 = vunpack.c.h.b16 %v288
      %v1081 = vunpack.c.l.b16 %v289
      %v1082 = vunpack.c.h.b16 %v289
      %v1083 = vunpack.c.l.b16 %v290
      %v1084 = vunpack.c.h.b16 %v290
      %v1085 = vunpack.c.l.b16 %v291
      %v1086 = vunpack.c.h.b16 %v291
      %v1087 = vunpack.c.l.b16 %v292
      %v1088 = vunpack.c.h.b16 %v292
      %v1089 = vunpack.c.l.b16 %v293
      %v1090 = vunpack.c.h.b16 %v293
      %v1091 = vunpack.c.l.b16 %v294
      %v1092 = vunpack.c.h.b16 %v294
      %v1093 = vunpack.c.l.b16 %v295
      %v1094 = vunpack.c.h.b16 %v295
      %v1095 = vunpack.c.l.b16 %v296
      %v1096 = vunpack.c.h.b16 %v296
      %v1097 = vunpack.c.l.b16 %v297
      %v1098 = vunpack.c.h.b16 %v297
      %v1099 = vunpack.c.l.b16 %v298
      %v1100 = vunpack.c.h.b16 %v298
      %v1101 = vunpack.c.l.b16 %v299
      %v1102 = vunpack.c.h.b16 %v299
      %v1103 = vunpack.c.l.b16 %v300
      %v1104 = vunpack.c.h.b16 %v300
      %v1105 = vunpack.c.l.b16 %v301
      %v1106 = vunpack.c.h.b16 %v301
      %v1107 = vunpack.c.l.b16 %v302
      %v1108 = vunpack.c.h.b16 %v302
      %v1109 = vunpack.c.l.b16 %v303
      %v1110 = vunpack.c.h.b16 %v303
      %v1111 = vunpack.c.l.b16 %v304
      %v1112 = vunpack.c.h.b16 %v304
      %v1113 = vunpack.c.l.b16 %v305
      %v1114 = vunpack.c.h.b16 %v305
      %v1115 = vunpack.c.l.b16 %v306
      %v1116 = vunpack.c.h.b16 %v306
      %v1117 = vunpack.c.l.b16 %v307
      %v1118 = vunpack.c.h.b16 %v307
      %v1119 = vunpack.c.l.b16 %v308
      %v1120 = vunpack.c.h.b16 %v308
      %v1121 = vunpack.c.l.b16 %v309
      %v1122 = vunpack.c.h.b16 %v309
      %v1123 = vunpack.c.l.b16 %v310
      %v1124 = vunpack.c.h.b16 %v310
      %v1125 = vunpack.c.l.b16 %v311
      %v1126 = vunpack.c.h.b16 %v311
      %v1127 = vunpack.c.l.b16 %v312
      %v1128 = vunpack.c.h.b16 %v312
      %v1129 = vunpack.c.l.b16 %v313
      %v1130 = vunpack.c.h.b16 %v313
      %v1131 = vunpack.c.l.b16 %v314
      %v1132 = vunpack.c.h.b16 %v314
      %v1133 = vunpack.c.l.b16 %v315
      %v1134 = vunpack.c.h.b16 %v315
      %v1135 = vunpack.c.l.b16 %v316
      %v1136 = vunpack.c.h.b16 %v316
      %v1137 = vunpack.c.l.b16 %v317
      %v1138 = vunpack.c.h.b16 %v317
      %v1139 = vunpack.c.l.b16 %v318
      %v1140 = vunpack.c.h.b16 %v318
      %v1141 = vunpack.c.l.b16 %v319
      %v1142 = vunpack.c.h.b16 %v319
      %v1143 = vunpack.c.l.b16 %v320
      %v1144 = vunpack.c.h.b16 %v320
      %v1145 = vunpack.c.l.b16 %v321
      %v1146 = vunpack.c.h.b16 %v321
      %v1147 = vunpack.c.l.b16 %v322
      %v1148 = vunpack.c.h.b16 %v322
      %v1149 = vunpack.c.l.b16 %v323
      %v1150 = vunpack.c.h.b16 %v323
      %v1151 = vunpack.c.l.b16 %v324
      %v1152 = vunpack.c.h.b16 %v324
      %v1153 = vunpack.c.l.b16 %v325
      %v1154 = vunpack.c.h.b16 %v325
      %v1155 = vunpack.c.l.b16 %v326
      %v1156 = vunpack.c.h.b16 %v326
      %v1157 = vunpack.c.l.b16 %v327
      %v1158 = vunpack.c.h.b16 %v327
      %v1159 = vunpack.c.l.b16 %v328
      %v1160 = vunpack.c.h.b16 %v328
      %v1161 = vunpack.c.l.b16 %v329
      %v1162 = vunpack.c.h.b16 %v329
      %v1163 = vunpack.c.l.b16 %v330
      %v1164 = vunpack.c.h.b16 %v330
      %v1165 = vunpack.c.l.b16 %v331
      %v1166 = vunpack.c.h.b16 %v331
      %v1167 = vunpack.c.l.b16 %v332
      %v1168 = vunpack.c.h.b16 %v332
      %v1169 = vunpack.c.l.b16 %v333
      %v1170 = vunpack.c.h.b16 %v333
      %v1171 = vunpack.c.l.b16 %v334
      %v1172 = vunpack.c.h.b16 %v334
      %v1173 = vunpack.c.l.b16 %v335
      %v1174 = vunpack.c.h.b16 %v335
      %v1175 = vunpack.c.l.b16 %v336
      %v1176 = vunpack.c.h.b16 %v336
      %v1177 = vunpack.c.l.b16 %v337
      %v1178 = vunpack.c.h.b16 %v337
      %v1179 = vunpack.c.l.b16 %v338
      %v1180 = vunpack.c.h.b16 %v338
      %v1181 = vunpack.c.l.b16 %v339
      %v1182 = vunpack.c.h.b16 %v339
      %v1183 = vunpack.c.l.b16 %v340
      %v1184 = vunpack.c.h.b16 %v340
      %v1185 = vunpack.c.l.b16 %v341
      %v1186 = vunpack.c.h.b16 %v341
      %v1187 = vunpack.c.l.b16 %v342
      %v1188 = vunpack.c.h.b16 %v342
      %v1189 = vunpack.c.l.b16 %v343
      %v1190 = vunpack.c.h.b16 %v343
      %v1191 = vunpack.c.l.b16 %v344
      %v1192 = vunpack.c.h.b16 %v344
      %v1193 = vunpack.c.l.b16 %v345
      %v1194 = vunpack.c.h.b16 %v345
      %v1195 = vunpack.c.l.b16 %v346
      %v1196 = vunpack.c.h.b16 %v346
      %v1197 = vunpack.c.l.b16 %v347
      %v1198 = vunpack.c.h.b16 %v347
      %v1199 = vunpack.c.l.b16 %v348
      %v1200 = vunpack.c.h.b16 %v348
      %v1201 = vunpack.c.l.b16 %v349
      %v1202 = vunpack.c.h.b16 %v349
      %v1203 = vunpack.c.l.b16 %v350
      %v1204 = vunpack.c.h.b16 %v350
      %v1205 = vunpack.c.l.b16 %v351
      %v1206 = vunpack.c.h.b16 %v351
      %v1207 = vunpack.c.l.b16 %v352
      %v1208 = vunpack.c.h.b16 %v352
      %v1209 = vunpack.c.l.b16 %v353
      %v1210 = vunpack.c.h.b16 %v353
      %v1211 = vunpack.c.l.b16 %v354
      %v1212 = vunpack.c.h.b16 %v354
      %v1213 = vunpack.c.l.b16 %v355
      %v1214 = vunpack.c.h.b16 %v355
      %v1215 = vunpack.c.l.b16 %v356
      %v1216 = vunpack.c.h.b16 %v356
      %v1217 = vunpack.c.l.b16 %v357
      %v1218 = vunpack.c.h.b16 %v357
      %v1219 = vunpack.c.l.b16 %v358
      %v1220 = vunpack.c.h.b16 %v358
      %v1221 = vunpack.c.l.b16 %v359
      %v1222 = vunpack.c.h.b16 %v359
      %v1223 = vunpack.c.l.b16 %v360
      %v1224 = vunpack.c.h.b16 %v360
      %v1225 = vunpack.c.l.b16 %v361
      %v1226 = vunpack.c.h.b16 %v361
      %v1227 = vunpack.c.l.b16 %v362
      %v1228 = vunpack.c.h.b16 %v362
      %v1229 = vunpack.c.l.b16 %v363
      %v1230 = vunpack.c.h.b16 %v363
      %v1231 = vunpack.c.l.b16 %v364
      %v1232 = vunpack.c.h.b16 %v364
      %v1233 = vunpack.c.l.b16 %v365
      %v1234 = vunpack.c.h.b16 %v365
      %v1235 = vunpack.c.l.b16 %v366
      %v1236 = vunpack.c.h.b16 %v366
      %v1237 = vunpack.c.l.b16 %v367
      %v1238 = vunpack.c.h.b16 %v367
      %v1239 = vunpack.c.l.b16 %v368
      %v1240 = vunpack.c.h.b16 %v368
      %v1241 = vunpack.c.l.b16 %v369
      %v1242 = vunpack.c.h.b16 %v369
      %v1243 = vunpack.c.l.b16 %v370
      %v1244 = vunpack.c.h.b16 %v370
      %v1245 = vunpack.c.l.b16 %v371
      %v1246 = vunpack.c.h.b16 %v371
      %v1247 = vunpack.c.l.b16 %v372
      %v1248 = vunpack.c.h.b16 %v372
      %v1249 = vunpack.c.l.b16 %v373
      %v1250 = vunpack.c.h.b16 %v373
      %v1251 = vunpack.c.l.b16 %v374
      %v1252 = vunpack.c.h.b16 %v374
      %v1253 = vunpack.c.l.b16 %v375
      %v1254 = vunpack.c.h.b16 %v375
      %v1255 = vunpack.c.l.b16 %v376
      %v1256 = vunpack.c.h.b16 %v376
      %v1257 = vunpack.c.l.b16 %v377
      %v1258 = vunpack.c.h.b16 %v377
      %v1259 = vunpack.c.l.b16 %v378
      %v1260 = vunpack.c.h.b16 %v378
      %v1261 = vunpack.c.l.b16 %v379
      %v1262 = vunpack.c.h.b16 %v379
      %v1263 = vunpack.c.l.b16 %v380
      %v1264 = vunpack.c.h.b16 %v380
      %v1265 = vunpack.c.l.b16 %v381
      %v1266 = vunpack.c.h.b16 %v381
      %v1267 = vunpack.c.l.b16 %v382
      %v1268 = vunpack.c.h.b16 %v382
      %v1269 = vunpack.c.l.b16 %v383
      %v1270 = vunpack.c.h.b16 %v383
      %v1271 = vunpack.c.l.b16 %v384
      %v1272 = vunpack.c.h.b16 %v384
      %v1273 = vunpack.c.l.b16 %v385
      %v1274 = vunpack.c.h.b16 %v385
      %v1275 = vunpack.c.l.b16 %v386
      %v1276 = vunpack.c.h.b16 %v386
      %v1277 = vunpack.c.l.b16 %v387
      %v1278 = vunpack.c.h.b16 %v387
      %v1279 = vunpack.c.l.b16 %v388
      %v1280 = vunpack.c.h.b16 %v388
      %v1281 = vunpack.c.l.b16 %v389
      %v1282 = vunpack.c.h.b16 %v389
      %v1283 = vunpack.c.l.b16 %v390
      %v1284 = vunpack.c.h.b16 %v390
      %v1285 = vunpack.c.l.b16 %v391
      %v1286 = vunpack.c.h.b16 %v391
      %v1287 = vunpack.c.l.b16 %v392
      %v1288 = vunpack.c.h.b16 %v392
      %v1289 = vunpack.c.l.b16 %v393
      %v1290 = vunpack.c.h.b16 %v393
      %v1291 = vunpack.c.l.b16 %v394
      %v1292 = vunpack.c.h.b16 %v394
      %v1293 = vunpack.c.l.b16 %v395
      %v1294 = vunpack.c.h.b16 %v395
      %v1295 = vunpack.c.l.b16 %v396
      %v1296 = vunpack.c.h.b16 %v396
      %v1297 = vunpack.c.l.b16 %v397
      %v1298 = vunpack.c.h.b16 %v397
      %v1299 = vunpack.c.l.b16 %v398
      %v1300 = vunpack.c.h.b16 %v398
      %v1301 = vunpack.c.l.b16 %v399
      %v1302 = vunpack.c.h.b16 %v399
      %v1303 = vunpack.c.l.b16 %v400
      %v1304 = vunpack.c.h.b16 %v400
      %v1305 = vunpack.c.l.b16 %v401
      %v1306 = vunpack.c.h.b16 %v401
      %v1307 = vunpack.c.l.b16 %v402
      %v1308 = vunpack.c.h.b16 %v402
      %v1309 = vunpack.c.l.b16 %v403
      %v1310 = vunpack.c.h.b16 %v403
      %v1311 = vunpack.c.l.b16 %v404
      %v1312 = vunpack.c.h.b16 %v404
      %v1313 = vunpack.c.l.b16 %v405
      %v1314 = vunpack.c.h.b16 %v405
      %v1315 = vunpack.c.l.b16 %v406
      %v1316 = vunpack.c.h.b16 %v406
      %v1317 = vunpack.c.l.b16 %v407
      %v1318 = vunpack.c.h.b16 %v407
      %v1319 = vunpack.c.l.b16 %v408
      %v1320 = vunpack.c.h.b16 %v408
      %v1321 = vunpack.c.l.b16 %v409
      %v1322 = vunpack.c.h.b16 %v409
      %v1323 = vunpack.c.l.b16 %v410
      %v1324 = vunpack.c.h.b16 %v410
      %v1325 = vunpack.c.l.b16 %v411
      %v1326 = vunpack.c.h.b16 %v411
      %v1327 = vunpack.c.l.b16 %v412
      %v1328 = vunpack.c.h.b16 %v412
      %v1329 = vunpack.c.l.b16 %v413
      %v1330 = vunpack.c.h.b16 %v413
      %v1331 = vunpack.c.l.b16 %v414
      %v1332 = vunpack.c.h.b16 %v414
      %v1333 = vunpack.c.l.b16 %v415
      %v1334 = vunpack.c.h.b16 %v415
      %v1335 = vunpack.c.l.b16 %v416
      %v1336 = vunpack.c.h.b16 %v416
      %v1337 = vunpack.c.l.b16 %v417
      %v1338 = vunpack.c.h.b16 %v417
      %v1339 = vunpack.c.l.b16 %v418
      %v1340 = vunpack.c.h.b16 %v418
      %v1341 = vunpack.c.l.b16 %v419
      %v1342 = vunpack.c.h.b16 %v419
      %v1343 = vunpack.c.l.b16 %v420
      %v1344 = vunpack.c.h.b16 %v420
      %v1345 = vunpack.c.l.b16 %v421
      %v1346 = vunpack.c.h.b16 %v421
      %v1347 = vunpack.c.l.b16 %v422
      %v1348 = vunpack.c.h.b16 %v422
      %v1349 = vunpack.c.l.b16 %v423
      %v1350 = vunpack.c.h.b16 %v423
      %v1351 = vunpack.c.l.b16 %v424
      %v1352 = vunpack.c.h.b16 %v424
      %v1353 = vunpack.c.l.b16 %v425
      %v1354 = vunpack.c.h.b16 %v425
      %v1355 = vunpack.c.l.b16 %v426
      %v1356 = vunpack.c.h.b16 %v426
      %v1357 = vunpack.c.l.b16 %v427
      %v1358 = vunpack.c.h.b16 %v427
      %v1359 = vunpack.c.l.b16 %v428
      %v1360 = vunpack.c.h.b16 %v428
      %v1361 = vunpack.c.l.b16 %v429
      %v1362 = vunpack.c.h.b16 %v429
      %v1363 = vunpack.c.l.b16 %v430
      %v1364 = vunpack.c.h.b16 %v430
      %v1365 = vunpack.c.l.b16 %v431
      %v1366 = vunpack.c.h.b16 %v431
      %v1367 = vunpack.c.l.b16 %v432
      %v1368 = vunpack.c.h.b16 %v432
      %v1369 = vunpack.c.l.b16 %v433
      %v1370 = vunpack.c.h.b16 %v433
      %v1371 = vunpack.c.l.b16 %v434
      %v1372 = vunpack.c.h.b16 %v434
      %v1373 = vunpack.c.l.b16 %v435
      %v1374 = vunpack.c.h.b16 %v435
      %v1375 = vunpack.c.l.b16 %v436
      %v1376 = vunpack.c.h.b16 %v436
      %v1377 = vunpack.c.l.b16 %v437
      %v1378 = vunpack.c.h.b16 %v437
      %v1379 = vunpack.c.l.b16 %v438
      %v1380 = vunpack.c.h.b16 %v438
      %v1381 = vunpack.c.l.b16 %v439
      %v1382 = vunpack.c.h.b16 %v439
      %v1383 = vunpack.c.l.b16 %v440
      %v1384 = vunpack.c.h.b16 %v440
      %v1385 = vunpack.c.l.b16 %v441
      %v1386 = vunpack.c.h.b16 %v441
      %v1387 = vunpack.c.l.b16 %v442
      %v1388 = vunpack.c.h.b16 %v442
      %v1389 = vunpack.c.l.b16 %v443
      %v1390 = vunpack.c.h.b16 %v443
      %v1391 = vunpack.c.l.b16 %v444
      %v1392 = vunpack.c.h.b16 %v444
      %v1393 = vunpack.c.l.b16 %v445
      %v1394 = vunpack.c.h.b16 %v445
      %v1395 = vunpack.c.l.b16 %v446
      %v1396 = vunpack.c.h.b16 %v446
      %v1397 = vunpack.c.l.b16 %v447
      %v1398 = vunpack.c.h.b16 %v447
      %v1399 = vunpack.c.l.b16 %v448
      %v1400 = vunpack.c.h.b16 %v448
      %v1401 = vunpack.c.l.b16 %v449
      %v1402 = vunpack.c.h.b16 %v449
      %v1403 = vunpack.c.l.b16 %v450
      %v1404 = vunpack.c.h.b16 %v450
      %v1405 = vunpack.c.l.b16 %v451
      %v1406 = vunpack.c.h.b16 %v451
      %v1407 = vunpack.c.l.b16 %v452
      %v1408 = vunpack.c.h.b16 %v452
      %v1409 = vunpack.c.l.b16 %v453
      %v1410 = vunpack.c.h.b16 %v453
      %v1411 = vunpack.c.l.b16 %v454
      %v1412 = vunpack.c.h.b16 %v454
      %v1413 = vunpack.c.l.b16 %v455
      %v1414 = vunpack.c.h.b16 %v455
      %v1415 = vunpack.c.l.b16 %v456
      %v1416 = vunpack.c.h.b16 %v456
      %v1417 = vunpack.c.l.b16 %v457
      %v1418 = vunpack.c.h.b16 %v457
      %v1419 = vunpack.c.l.b16 %v458
      %v1420 = vunpack.c.h.b16 %v458
      %v1421 = vunpack.c.l.b16 %v459
      %v1422 = vunpack.c.h.b16 %v459
      %v1423 = vunpack.c.l.b16 %v460
      %v1424 = vunpack.c.h.b16 %v460
      %v1425 = vunpack.c.l.b16 %v461
      %v1426 = vunpack.c.h.b16 %v461
      %v1427 = vunpack.c.l.b16 %v462
      %v1428 = vunpack.c.h.b16 %v462
      %v1429 = vunpack.c.l.b16 %v463
      %v1430 = vunpack.c.h.b16 %v463
      %v1431 = vunpack.c.l.b16 %v464
      %v1432 = vunpack.c.h.b16 %v464
      %v1433 = vunpack.c.l.b16 %v465
      %v1434 = vunpack.c.h.b16 %v465
      %v1435 = vunpack.c.l.b16 %v466
      %v1436 = vunpack.c.h.b16 %v466
      %v1437 = vunpack.c.l.b16 %v467
      %v1438 = vunpack.c.h.b16 %v467
      %v1439 = vunpack.c.l.b16 %v468
      %v1440 = vunpack.c.h.b16 %v468
      %v1441 = vunpack.c.l.b16 %v469
      %v1442 = vunpack.c.h.b16 %v469
      %v1443 = vunpack.c.l.b16 %v470
      %v1444 = vunpack.c.h.b16 %v470
      %v1445 = vunpack.c.l.b16 %v471
      %v1446 = vunpack.c.h.b16 %v471
      %v1447 = vunpack.c.l.b16 %v472
      %v1448 = vunpack.c.h.b16 %v472
      %v1449 = vunpack.c.l.b16 %v473
      %v1450 = vunpack.c.h.b16 %v473
      %v1451 = vunpack.c.l.b16 %v474
      %v1452 = vunpack.c.h.b16 %v474
      %v1453 = vunpack.c.l.b16 %v475
      %v1454 = vunpack.c.h.b16 %v475
      %v1455 = vunpack.c.l.b16 %v476
      %v1456 = vunpack.c.h.b16 %v476
      %v1457 = vunpack.c.l.b16 %v477
      %v1458 = vunpack.c.h.b16 %v477
      %v1459 = vunpack.c.l.b16 %v478
      %v1460 = vunpack.c.h.b16 %v478
      %v1461 = vunpack.c.l.b16 %v479
      %v1462 = vunpack.c.h.b16 %v479
      %v1463 = vunpack.c.l.b16 %v480
      %v1464 = vunpack.c.h.b16 %v480
      %v1465 = vunpack.c.l.b16 %v481
      %v1466 = vunpack.c.h.b16 %v481
      %v1467 = vunpack.c.l.b16 %v482
      %v1468 = vunpack.c.h.b16 %v482
      %v1469 = vunpack.c.l.b16 %v483
      %v1470 = vunpack.c.h.b16 %v483
      %v1471 = vunpack.c.l.b16 %v484
      %v1472 = vunpack.c.h.b16 %v484
      %v1473 = vunpack.c.l.b16 %v485
      %v1474 = vunpack.c.h.b16 %v485
      %v1475 = vunpack.c.l.b16 %v486
      %v1476 = vunpack.c.h.b16 %v486
      %v1477 = vunpack.c.l.b16 %v487
      %v1478 = vunpack.c.h.b16 %v487
      %v1479 = vunpack.c.l.b16 %v488
      %v1480 = vunpack.c.h.b16 %v488
      %v1481 = vunpack.c.l.b16 %v489
      %v1482 = vunpack.c.h.b16 %v489
      %v1483 = vunpack.c.l.b16 %v490
      %v1484 = vunpack.c.h.b16 %v490
      %v1485 = vunpack.c.l.b16 %v491
      %v1486 = vunpack.c.h.b16 %v491
      %v1487 = vunpack.c.l.b16 %v492
      %v1488 = vunpack.c.h.b16 %v492
      %v1489 = vunpack.c.l.b16 %v493
      %v1490 = vunpack.c.h.b16 %v493
      %v1491 = vunpack.c.l.b16 %v494
      %v1492 = vunpack.c.h.b16 %v494
      %v1493 = vunpack.c.l.b16 %v495
      %v1494 = vunpack.c.h.b16 %v495
      %v1495 = vunpack.c.l.b16 %v496
      %v1496 = vunpack.c.h.b16 %v496
      %v1497 = vunpack.c.l.b16 %v497
      %v1498 = vunpack.c.h.b16 %v497
      %v1499 = vunpack.c.l.b16 %v498
      %v1500 = vunpack.c.h.b16 %v498
      %v1501 = vunpack.c.l.b16 %v499
      %v1502 = vunpack.c.h.b16 %v499
      %v1503 = vunpack.c.l.b16 %v500
      %v1504 = vunpack.c.h.b16 %v500
      %v1505 = vunpack.c.l.b16 %v501
      %v1506 = vunpack.c.h.b16 %v501
      %v1507 = vunpack.c.l.b16 %v502
      %v1508 = vunpack.c.h.b16 %v502
      %v1509 = vunpack.c.l.b16 %v503
      %v1510 = vunpack.c.h.b16 %v503
      %v1511 = vunpack.c.l.b16 %v504
      %v1512 = vunpack.c.h.b16 %v504
      %v1513 = vunpack.c.l.b16 %v505
      %v1514 = vunpack.c.h.b16 %v505
      %v1515 = vunpack.c.l.b16 %v506
      %v1516 = vunpack.c.h.b16 %v506
      %v1517 = vunpack.c.l.b16 %v507
      %v1518 = vunpack.c.h.b16 %v507
      %v1519 = vunpack.c.l.b16 %v508
      %v1520 = vunpack.c.h.b16 %v508
      %v1521 = vunpack.c.l.b16 %v509
      %v1522 = vunpack.c.h.b16 %v509
      %v1523 = vunpack.c.l.b16 %v510
      %v1524 = vunpack.c.h.b16 %v510
      %v1525 = vunpack.c.l.b16 %v511
      %v1526 = vunpack.c.h.b16 %v511
      %v1527 = vunpack.c.l.b16 %v512
      %v1528 = vunpack.c.h.b16 %v512
      %v1529 = vunpack.c.l.b16 %v513
      %v1530 = vunpack.c.h.b16 %v513
      %v1531 = vunpack.c.l.b16 %v514
      %v1532 = vunpack.c.h.b16 %v514
      %v1533 = vunpack.c.l.b16 %v515
      %v1534 = vunpack.c.h.b16 %v515
      %v1535 = vunpack.c.l.b16 %v516
      %v1536 = vunpack.c.h.b16 %v516
      %v1537 = vunpack.c.l.b16 %v517
      %v1538 = vunpack.c.h.b16 %v517
      %v1539 = vunpack.c.l.b16 %v518
      %v1540 = vunpack.c.h.b16 %v518
      %v1541 = vunpack.c.l.b16 %v519
      %v1542 = vunpack.c.h.b16 %v519
      %v1543 = vunpack.c.l.b16 %v520
      %v1544 = vunpack.c.h.b16 %v520
      %v1545 = vpack.c.b16 %v1049, %v1033
      %v1546 = vpack.c.b16 %v1050, %v1034
      %v1547 = vpack.c.b16 %v1051, %v1035
      %v1548 = vpack.c.b16 %v1052, %v1036
      %v1549 = vpack.c.b16 %v1053, %v1037
      %v1550 = vpack.c.b16 %v1054, %v1038
      %v1551 = vpack.c.b16 %v1055, %v1039
      %v1552 = vpack.c.b16 %v1056, %v1040
      %v1553 = vpack.c.b16 %v1057, %v1041
      %v1554 = vpack.c.b16 %v1058, %v1042
      %v1555 = vpack.c.b16 %v1059, %v1043
      %v1556 = vpack.c.b16 %v1060, %v1044
      %v1557 = vpack.c.b16 %v1061, %v1045
      %v1558 = vpack.c.b16 %v1062, %v1046
      %v1559 = vpack.c.b16 %v1063, %v1047
      %v1560 = vpack.c.b16 %v1064, %v1048
      %v1561 = vpack.c.b16 %v1081, %v1065
      %v1562 = vpack.c.b16 %v1082, %v1066
      %v1563 = vpack.c.b16 %v1083, %v1067
      %v1564 = vpack.c.b16 %v1084, %v1068
      %v1565 = vpack.c.b16 %v1085, %v1069
      %v1566 = vpack.c.b16 %v1086, %v1070
      %v1567 = vpack.c.b16 %v1087, %v1071
      %v1568 = vpack.c.b16 %v1088, %v1072
      %v1569 = vpack.c.b16 %v1089, %v1073
      %v1570 = vpack.c.b16 %v1090, %v1074
      %v1571 = vpack.c.b16 %v1091, %v1075
      %v1572 = vpack.c.b16 %v1092, %v1076
      %v1573 = vpack.c.b16 %v1093, %v1077
      %v1574 = vpack.c.b16 %v1094, %v1078
      %v1575 = vpack.c.b16 %v1095, %v1079
      %v1576 = vpack.c.b16 %v1096, %v1080
      %v1577 = vpack.c.b16 %v1113, %v1097
      %v1578 = vpack.c.b16 %v1114, %v1098
      %v1579 = vpack.c.b16 %v1115, %v1099
      %v1580 = vpack.c.b16 %v1116, %v1100
      %v1581 = vpack.c.b16 %v1117, %v1101
      %v1582 = vpack.c.b16 %v1118, %v1102
      %v1583 = vpack.c.b16 %v1119, %v1103
      %v1584 = vpack.c.b16 %v1120, %v1104
      %v1585 = vpack.c.b16 %v1121, %v1105
      %v1586 = vpack.c.b16 %v1122, %v1106
      %v1587 = vpack.c.b16 %v1123, %v1107
      %v1588 = vpack.c.b16 %v1124, %v1108
      %v1589 = vpack.c.b16 %v1125, %v1109
      %v1590 = vpack.c.b16 %v1126, %v1110
      %v1591 = vpack.c.b16 %v1127, %v1111
      %v1592 = vpack.c.b16 %v1128, %v1112
      %v1593 = vpack.c.b16 %v1145, %v1129
      %v1594 = vpack.c.b16 %v1146, %v1130
      %v1595 = vpack.c.b16 %v1147, %v1131
      %v1596 = vpack.c.b16 %v1148, %v1132
      %v1597 = vpack.c.b16 %v1149, %v1133
      %v1598 = vpack.c.b16 %v1150, %v1134
      %v1599 = vpack.c.b16 %v1151, %v1135
      %v1600 = vpack.c.b16 %v1152, %v1136
      %v1601 = vpack.c.b16 %v1153, %v1137
      %v1602 = vpack.c.b16 %v1154, %v1138
      %v1603 = vpack.c.b16 %v1155, %v1139
      %v1604 = vpack.c.b16 %v1156, %v1140
      %v1605 = vpack.c.b16 %v1157, %v1141
      %v1606 = vpack.c.b16 %v1158, %v1142
      %v1607 = vpack.c.b16 %v1159, %v1143
      %v1608 = vpack.c.b16 %v1160, %v1144
      %v1609 = vpack.c.b16 %v1177, %v1161
      %v1610 = vpack.c.b16 %v1178, %v1162
      %v1611 = vpack.c.b16 %v1179, %v1163
      %v1612 = vpack.c.b16 %v1180, %v1164
      %v1613 = vpack.c.b16 %v1181, %v1165
      %v1614 = vpack.c.b16 %v1182, %v1166
      %v1615 = vpack.c.b16 %v1183, %v1167
      %v1616 = vpack.c.b16 %v1184, %v1168
      %v1617 = vpack.c.b16 %v1185, %v1169
      %v1618 = vpack.c.b16 %v1186, %v1170
      %v1619 = vpack.c.b16 %v1187, %v1171
      %v1620 = vpack.c.b16 %v1188, %v1172
      %v1621 = vpack.c.b16 %v1189, %v1173
      %v1622 = vpack.c.b16 %v1190, %v1174
      %v1623 = vpack.c.b16 %v1191, %v1175
      %v1624 = vpack.c.b16 %v1192, %v1176
      %v1625 = vpack.c.b16 %v1209, %v1193
      %v1626 = vpack.c.b16 %v1210, %v1194
      %v1627 = vpack.c.b16 %v1211, %v1195
      %v1628 = vpack.c.b16 %v1212, %v1196
      %v1629 = vpack.c.b16 %v1213, %v1197
      %v1630 = vpack.c.b16 %v1214, %v1198
      %v1631 = vpack.c.b16 %v1215, %v1199
      %v1632 = vpack.c.b16 %v1216, %v1200
      %v1633 = vpack.c.b16 %v1217, %v1201
      %v1634 = vpack.c.b16 %v1218, %v1202
      %v1635 = vpack.c.b16 %v1219, %v1203
      %v1636 = vpack.c.b16 %v1220, %v1204
      %v1637 = vpack.c.b16 %v1221, %v1205
      %v1638 = vpack.c.b16 %v1222, %v1206
      %v1639 = vpack.c.b16 %v1223, %v1207
      %v1640 = vpack.c.b16 %v1224, %v1208
      %v1641 = vpack.c.b16 %v1241, %v1225
      %v1642 = vpack.c.b16 %v1242, %v1226
      %v1643 = vpack.c.b16 %v1243, %v1227
      %v1644 = vpack.c.b16 %v1244, %v1228
      %v1645 = vpack.c.b16 %v1245, %v1229
      %v1646 = vpack.c.b16 %v1246, %v1230
      %v1647 = vpack.c.b16 %v1247, %v1231
      %v1648 = vpack.c.b16 %v1248, %v1232
      %v1649 = vpack.c.b16 %v1249, %v1233
      %v1650 = vpack.c.b16 %v1250, %v1234
      %v1651 = vpack.c.b16 %v1251, %v1235
      %v1652 = vpack.c.b16 %v1252, %v1236
      %v1653 = vpack.c.b16 %v1253, %v1237
      %v1654 = vpack.c.b16 %v1254, %v1238
      %v1655 = vpack.c.b16 %v1255, %v1239
      %v1656 = vpack.c.b16 %v1256, %v1240
      %v1657 = vpack.c.b16 %v1273, %v1257
      %v1658 = vpack.c.b16 %v1274, %v1258
      %v1659 = vpack.c.b16 %v1275, %v1259
      %v1660 = vpack.c.b16 %v1276, %v1260
      %v1661 = vpack.c.b16 %v1277, %v1261
      %v1662 = vpack.c.b16 %v1278, %v1262
      %v1663 = vpack.c.b16 %v1279, %v1263
      %v1664 = vpack.c.b16 %v1280, %v1264
      %v1665 = vpack.c.b16 %v1281, %v1265
      %v1666 = vpack.c.b16 %v1282, %v1266
      %v1667 = vpack.c.b16 %v1283, %v1267
      %v1668 = vpack.c.b16 %v1284, %v1268
      %v1669 = vpack.c.b16 %v1285, %v1269
      %v1670 = vpack.c.b16 %v1286, %v1270
      %v1671 = vpack.c.b16 %v1287, %v1271
      %v1672 = vpack.c.b16 %v1288, %v1272
      %v1673 = vpack.c.b16 %v1305, %v1289
      %v1674 = vpack.c.b16 %v1306, %v1290
      %v1675 = vpack.c.b16 %v1307, %v1291
      %v1676 = vpack.c.b16 %v1308, %v1292
      %v1677 = vpack.c.b16 %v1309, %v1293
      %v1678 = vpack.c.b16 %v1310, %v1294
      %v1679 = vpack.c.b16 %v1311, %v1295
      %v1680 = vpack.c.b16 %v1312, %v1296
      %v1681 = vpack.c.b16 %v1313, %v1297
      %v1682 = vpack.c.b16 %v1314, %v1298
      %v1683 = vpack.c.b16 %v1315, %v1299
      %v1684 = vpack.c.b16 %v1316, %v1300
      %v1685 = vpack.c.b16 %v1317, %v1301
      %v1686 = vpack.c.b16 %v1318, %v1302
      %v1687 = vpack.c.b16 %v1319, %v1303
      %v1688 = vpack.c.b16 %v1320, %v1304
      %v1689 = vpack.c.b16 %v1337, %v1321
      %v1690 = vpack.c.b16 %v1338, %v1322
      %v1691 = vpack.c.b16 %v1339, %v1323
      %v1692 = vpack.c.b16 %v1340, %v1324
      %v1693 = vpack.c.b16 %v1341, %v1325
      %v1694 = vpack.c.b16 %v1342, %v1326
      %v1695 = vpack.c.b16 %v1343, %v1327
      %v1696 = vpack.c.b16 %v1344, %v1328
      %v1697 = vpack.c.b16 %v1345, %v1329
      %v1698 = vpack.c.b16 %v1346, %v1330
      %v1699 = vpack.c.b16 %v1347, %v1331
      %v1700 = vpack.c.b16 %v1348, %v1332
      %v1701 = vpack.c.b16 %v1349, %v1333
      %v1702 = vpack.c.b16 %v1350, %v1334
      %v1703 = vpack.c.b16 %v1351, %v1335
      %v1704 = vpack.c.b16 %v1352, %v1336
      %v1705 = vpack.c.b16 %v1369, %v1353
      %v1706 = vpack.c.b16 %v1370, %v1354
      %v1707 = vpack.c.b16 %v1371, %v1355
      %v1708 = vpack.c.b16 %v1372, %v1356
      %v1709 = vpack.c.b16 %v1373, %v1357
      %v1710 = vpack.c.b16 %v1374, %v1358
      %v1711 = vpack.c.b16 %v1375, %v1359
      %v1712 = vpack.c.b16 %v1376, %v1360
      %v1713 = vpack.c.b16 %v1377, %v1361
      %v1714 = vpack.c.b16 %v1378, %v1362
      %v1715 = vpack.c.b16 %v1379, %v1363
      %v1716 = vpack.c.b16 %v1380, %v1364
      %v1717 = vpack.c.b16 %v1381, %v1365
      %v1718 = vpack.c.b16 %v1382, %v1366
      %v1719 = vpack.c.b16 %v1383, %v1367
      %v1720 = vpack.c.b16 %v1384, %v1368
      %v1721 = vpack.c.b16 %v1401, %v1385
      %v1722 = vpack.c.b16 %v1402, %v1386
      %v1723 = vpack.c.b16 %v1403, %v1387
      %v1724 = vpack.c.b16 %v1404, %v1388
      %v1725 = vpack.c.b16 %v1405, %v1389
      %v1726 = vpack.c.b16 %v1406, %v1390
      %v1727 = vpack.c.b16 %v1407, %v1391
      %v1728 = vpack.c.b16 %v1408, %v1392
      %v1729 = vpack.c.b16 %v1409, %v1393
      %v1730 = vpack.c.b16 %v1410, %v1394
      %v1731 = vpack.c.b16 %v1411, %v1395
      %v1732 = vpack.c.b16 %v1412, %v1396
      %v1733 = vpack.c.b16 %v1413, %v1397
      %v1734 = vpack.c.b16 %v1414, %v1398
      %v1735 = vpack.c.b16 %v1415, %v1399
      %v1736 = vpack.c.b16 %v1416, %v1400
      %v1737 = vpack.c.b16 %v1433, %v1417
      %v1738 = vpack.c.b16 %v1434, %v1418
      %v1739 = vpack.c.b16 %v1435, %v1419
      %v1740 = vpack.c.b16 %v1436, %v1420
      %v1741 = vpack.c.b16 %v1437, %v1421
      %v1742 = vpack.c.b16 %v1438, %v1422
      %v1743 = vpack.c.b16 %v1439, %v1423
      %v1744 = vpack.c.b16 %v1440, %v1424
      %v1745 = vpack.c.b16 %v1441, %v1425
      %v1746 = vpack.c.b16 %v1442, %v1426
      %v1747 = vpack.c.b16 %v1443, %v1427
      %v1748 = vpack.c.b16 %v1444, %v1428
      %v1749 = vpack.c.b16 %v1445, %v1429
      %v1750 = vpack.c.b16 %v1446, %v1430
      %v1751 = vpack.c.b16 %v1447, %v1431
      %v1752 = vpack.c.b16 %v1448, %v1432
      %v1753 = vpack.c.b16 %v1465, %v1449
      %v1754 = vpack.c.b16 %v1466, %v1450
      %v1755 = vpack.c.b16 %v1467, %v1451
      %v1756 = vpack.c.b16 %v1468, %v1452
      %v1757 = vpack.c.b16 %v1469, %v1453
      %v1758 = vpack.c.b16 %v1470, %v1454
      %v1759 = vpack.c.b16 %v1471, %v1455
      %v1760 = vpack.c.b16 %v1472, %v1456
      %v1761 = vpack.c.b16 %v1473, %v1457
      %v1762 = vpack.c.b16 %v1474, %v1458
      %v1763 = vpack.c.b16 %v1475, %v1459
      %v1764 = vpack.c.b16 %v1476, %v1460
      %v1765 = vpack.c.b16 %v1477, %v1461
      %v1766 = vpack.c.b16 %v1478, %v1462
      %v1767 = vpack.c.b16 %v1479, %v1463
      %v1768 = vpack.c.b16 %v1480, %v1464
      %v1769 = vpack.c.b16 %v1497, %v1481
      %v1770 = vpack.c.b16 %v1498, %v1482
      %v1771 = vpack.c.b16 %v1499, %v1483
      %v1772 = vpack.c.b16 %v1500, %v1484
      %v1773 = vpack.c.b16 %v1501, %v1485
      %v1774 = vpack.c.b16 %v1502, %v1486
      %v1775 = vpack.c.b16 %v1503, %v1487
      %v1776 = vpack.c.b16 %v1504, %v1488
      %v1777 = vpack.c.b16 %v1505, %v1489
      %v1778 = vpack.c.b16 %v1506, %v1490
      %v1779 = vpack.c.b16 %v1507, %v1491
      %v1780 = vpack.c.b16 %v1508, %v1492
      %v1781 = vpack.c.b16 %v1509, %v1493
      %v1782 = vpack.c.b16 %v1510, %v1494
      %v1783 = vpack.c.b16 %v1511, %v1495
      %v1784 = vpack.c.b16 %v1512, %v1496
      %v1785 = vpack.c.b16 %v1529, %v1513
      %v1786 = vpack.c.b16 %v1530, %v1514
      %v1787 = vpack.c.b16 %v1531, %v1515
      %v1788 = vpack.c.b16 %v1532, %v1516
      %v1789 = vpack.c.b16 %v1533, %v1517
      %v1790 = vpack.c.b16 %v1534, %v1518
      %v1791 = vpack.c.b16 %v1535, %v1519
      %v1792 = vpack.c.b16 %v1536, %v1520
      %v1793 = vpack.c.b16 %v1537, %v1521
      %v1794 = vpack.c.b16 %v1538, %v1522
      %v1795 = vpack.c.b16 %v1539, %v1523
      %v1796 = vpack.c.b16 %v1540, %v1524
      %v1797 = vpack.c.b16 %v1541, %v1525
      %v1798 = vpack.c.b16 %v1542, %v1526
      %v1799 = vpack.c.b16 %v1543, %v1527
      %v1800 = vpack.c.b16 %v1544, %v1528
      %v2313 = vunpack.c.l.b16 %v521
      %v2314 = vunpack.c.l.b16 %v522
      %v2315 = vunpack.c.l.b16 %v523
      %v2316 = vunpack.c.l.b16 %v524
      %v2317 = vunpack.c.l.b16 %v525
      %v2318 = vunpack.c.l.b16 %v526
      %v2319 = vunpack.c.l.b16 %v527
      %v2320 = vunpack.c.l.b16 %v528
      %v2321 = vunpack.c.l.b16 %v529
      %v2322 = vunpack.c.l.b16 %v530
      %v2323 = vunpack.c.l.b16 %v531
      %v2324 = vunpack.c.l.b16 %v532
      %v2325 = vunpack.c.l.b16 %v533
      %v2326 = vunpack.c.l.b16 %v534
      %v2327 = vunpack.c.l.b16 %v535
      %v2328 = vunpack.c.l.b16 %v536
      %v2329 = vunpack.c.l.b16 %v537
      %v2330 = vunpack.c.l.b16 %v538
      %v2331 = vunpack.c.l.b16 %v539
      %v2332 = vunpack.c.l.b16 %v540
      %v2333 = vunpack.c.l.b16 %v541
      %v2334 = vunpack.c.l.b16 %v542
      %v2335 = vunpack.c.l.b16 %v543
      %v2336 = vunpack.c.l.b16 %v544
      %v2337 = vunpack.c.l.b16 %v545
      %v2338 = vunpack.c.l.b16 %v546
      %v2339 = vunpack.c.l.b16 %v547
      %v2340 = vunpack.c.l.b16 %v548
      %v2341 = vunpack.c.l.b16 %v549
      %v2342 = vunpack.c.l.b16 %v550
      %v2343 = vunpack.c.l.b16 %v551
      %v2344 = vunpack.c.l.b16 %v552
      %v2345 = vunpack.c.l.b16 %v553
      %v2346 = vunpack.c.l.b16 %v554
      %v2347 = vunpack.c.l.b16 %v555
      %v2348 = vunpack.c.l.b16 %v556
      %v2349 = vunpack.c.l.b16 %v557
      %v2350 = vunpack.c.l.b16 %v558
      %v2351 = vunpack.c.l.b16 %v559
      %v2352 = vunpack.c.l.b16 %v560
      %v2353 = vunpack.c.l.b16 %v561
      %v2354 = vunpack.c.l.b16 %v562
      %v2355 = vunpack.c.l.b16 %v563
      %v2356 = vunpack.c.l.b16 %v564
      %v2357 = vunpack.c.l.b16 %v565
      %v2358 = vunpack.c.l.b16 %v566
      %v2359 = vunpack.c.l.b16 %v567
      %v2360 = vunpack.c.l.b16 %v568
      %v2361 = vunpack.c.l.b16 %v569
      %v2362 = vunpack.c.l.b16 %v570
      %v2363 = vunpack.c.l.b16 %v571
      %v2364 = vunpack.c.l.b16 %v572
      %v2365 = vunpack.c.l.b16 %v573
      %v2366 = vunpack.c.l.b16 %v574
      %v2367 = vunpack.c.l.b16 %v575
      %v2368 = vunpack.c.l.b16 %v576
      %v2369 = vunpack.c.l.b16 %v577
      %v2370 = vunpack.c.l.b16 %v578
      %v2371 = vunpack.c.l.b16 %v579
      %v2372 = vunpack.c.l.b16 %v580
      %v2373 = vunpack.c.l.b16 %v581
      %v2374 = vunpack.c.l.b16 %v582
      %v2375 = vunpack.c.l.b16 %v583
      %v2376 = vunpack.c.l.b16 %v584
      %v2377 = vunpack.c.l.b16 %v585
      %v2378 = vunpack.c.l.b16 %v586
      %v2379 = vunpack.c.l.b16 %v587
      %v2380 = vunpack.c.l.b16 %v588
      %v2381 = vunpack.c.l.b16 %v589
      %v2382 = vunpack.c.l.b16 %v590
      %v2383 = vunpack.c.l.b16 %v591
      %v2384 = vunpack.c.l.b16 %v592
      %v2385 = vunpack.c.l.b16 %v593
      %v2386 = vunpack.c.l.b16 %v594
      %v2387 = vunpack.c.l.b16 %v595
      %v2388 = vunpack.c.l.b16 %v596
      %v2389 = vunpack.c.l.b16 %v597
      %v2390 = vunpack.c.l.b16 %v598
      %v2391 = vunpack.c.l.b16 %v599
      %v2392 = vunpack.c.l.b16 %v600
      %v2393 = vunpack.c.l.b16 %v601
      %v2394 = vunpack.c.l.b16 %v602
      %v2395 = vunpack.c.l.b16 %v603
      %v2396 = vunpack.c.l.b16 %v604
      %v2397 = vunpack.c.l.b16 %v605
      %v2398 = vunpack.c.l.b16 %v606
      %v2399 = vunpack.c.l.b16 %v607
      %v2400 = vunpack.c.l.b16 %v608
      %v2401 = vunpack.c.l.b16 %v609
      %v2402 = vunpack.c.l.b16 %v610
      %v2403 = vunpack.c.l.b16 %v611
      %v2404 = vunpack.c.l.b16 %v612
      %v2405 = vunpack.c.l.b16 %v613
      %v2406 = vunpack.c.l.b16 %v614
      %v2407 = vunpack.c.l.b16 %v615
      %v2408 = vunpack.c.l.b16 %v616
      %v2409 = vunpack.c.l.b16 %v617
      %v2410 = vunpack.c.l.b16 %v618
      %v2411 = vunpack.c.l.b16 %v619
      %v2412 = vunpack.c.l.b16 %v620
      %v2413 = vunpack.c.l.b16 %v621
      %v2414 = vunpack.c.l.b16 %v622
      %v2415 = vunpack.c.l.b16 %v623
      %v2416 = vunpack.c.l.b16 %v624
      %v2417 = vunpack.c.l.b16 %v625
      %v2418 = vunpack.c.l.b16 %v626
      %v2419 = vunpack.c.l.b16 %v627
      %v2420 = vunpack.c.l.b16 %v628
      %v2421 = vunpack.c.l.b16 %v629
      %v2422 = vunpack.c.l.b16 %v630
      %v2423 = vunpack.c.l.b16 %v631
      %v2424 = vunpack.c.l.b16 %v632
      %v2425 = vunpack.c.l.b16 %v633
      %v2426 = vunpack.c.l.b16 %v634
      %v2427 = vunpack.c.l.b16 %v635
      %v2428 = vunpack.c.l.b16 %v636
      %v2429 = vunpack.c.l.b16 %v637
      %v2430 = vunpack.c.l.b16 %v638
      %v2431 = vunpack.c.l.b16 %v639
      %v2432 = vunpack.c.l.b16 %v640
      %v2433 = vunpack.c.l.b16 %v641
      %v2434 = vunpack.c.l.b16 %v642
      %v2435 = vunpack.c.l.b16 %v643
      %v2436 = vunpack.c.l.b16 %v644
      %v2437 = vunpack.c.l.b16 %v645
      %v2438 = vunpack.c.l.b16 %v646
      %v2439 = vunpack.c.l.b16 %v647
      %v2440 = vunpack.c.l.b16 %v648
      %v2441 = vunpack.c.l.b16 %v649
      %v2442 = vunpack.c.l.b16 %v650
      %v2443 = vunpack.c.l.b16 %v651
      %v2444 = vunpack.c.l.b16 %v652
      %v2445 = vunpack.c.l.b16 %v653
      %v2446 = vunpack.c.l.b16 %v654
      %v2447 = vunpack.c.l.b16 %v655
      %v2448 = vunpack.c.l.b16 %v656
      %v2449 = vunpack.c.l.b16 %v657
      %v2450 = vunpack.c.l.b16 %v658
      %v2451 = vunpack.c.l.b16 %v659
      %v2452 = vunpack.c.l.b16 %v660
      %v2453 = vunpack.c.l.b16 %v661
      %v2454 = vunpack.c.l.b16 %v662
      %v2455 = vunpack.c.l.b16 %v663
      %v2456 = vunpack.c.l.b16 %v664
      %v2457 = vunpack.c.l.b16 %v665
      %v2458 = vunpack.c.l.b16 %v666
      %v2459 = vunpack.c.l.b16 %v667
      %v2460 = vunpack.c.l.b16 %v668
      %v2461 = vunpack.c.l.b16 %v669
      %v2462 = vunpack.c.l.b16 %v670
      %v2463 = vunpack.c.l.b16 %v671
      %v2464 = vunpack.c.l.b16 %v672
      %v2465 = vunpack.c.l.b16 %v673
      %v2466 = vunpack.c.l.b16 %v674
      %v2467 = vunpack.c.l.b16 %v675
      %v2468 = vunpack.c.l.b16 %v676
      %v2469 = vunpack.c.l.b16 %v677
      %v2470 = vunpack.c.l.b16 %v678
      %v2471 = vunpack.c.l.b16 %v679
      %v2472 = vunpack.c.l.b16 %v680
      %v2473 = vunpack.c.l.b16 %v681
      %v2474 = vunpack.c.l.b16 %v682
      %v2475 = vunpack.c.l.b16 %v683
      %v2476 = vunpack.c.l.b16 %v684
      %v2477 = vunpack.c.l.b16 %v685
      %v2478 = vunpack.c.l.b16 %v686
      %v2479 = vunpack.c.l.b16 %v687
      %v2480 = vunpack.c.l.b16 %v688
      %v2481 = vunpack.c.l.b16 %v689
      %v2482 = vunpack.c.l.b16 %v690
      %v2483 = vunpack.c.l.b16 %v691
      %v2484 = vunpack.c.l.b16 %v692
      %v2485 = vunpack.c.l.b16 %v693
      %v2486 = vunpack.c.l.b16 %v694
      %v2487 = vunpack.c.l.b16 %v695
      %v2488 = vunpack.c.l.b16 %v696
      %v2489 = vunpack.c.l.b16 %v697
      %v2490 = vunpack.c.l.b16 %v698
      %v2491 = vunpack.c.l.b16 %v699
      %v2492 = vunpack.c.l.b16 %v700
      %v2493 = vunpack.c.l.b16 %v701
      %v2494 = vunpack.c.l.b16 %v702
      %v2495 = vunpack.c.l.b16 %v703
      %v2496 = vunpack.c.l.b16 %v704
      %v2497 = vunpack.c.l.b16 %v705
      %v2498 = vunpack.c.l.b16 %v706
      %v2499 = vunpack.c.l.b16 %v707
      %v2500 = vunpack.c.l.b16 %v708
      %v2501 = vunpack.c.l.b16 %v709
      %v2502 = vunpack.c.l.b16 %v710
      %v2503 = vunpack.c.l.b16 %v711
      %v2504 = vunpack.c.l.b16 %v712
      %v2505 = vunpack.c.l.b16 %v713
      %v2506 = vunpack.c.l.b16 %v714
      %v2507 = vunpack.c.l.b16 %v715
      %v2508 = vunpack.c.l.b16 %v716
      %v2509 = vunpack.c.l.b16 %v717
      %v2510 = vunpack.c.l.b16 %v718
      %v2511 = vunpack.c.l.b16 %v719
      %v2512 = vunpack.c.l.b16 %v720
      %v2513 = vunpack.c.l.b16 %v721
      %v2514 = vunpack.c.l.b16 %v722
      %v2515 = vunpack.c.l.b16 %v723
      %v2516 = vunpack.c.l.b16 %v724
      %v2517 = vunpack.c.l.b16 %v725
      %v2518 = vunpack.c.l.b16 %v726
      %v2519 = vunpack.c.l.b16 %v727
      %v2520 = vunpack.c.l.b16 %v728
      %v2521 = vunpack.c.l.b16 %v729
      %v2522 = vunpack.c.l.b16 %v730
      %v2523 = vunpack.c.l.b16 %v731
      %v2524 = vunpack.c.l.b16 %v732
      %v2525 = vunpack.c.l.b16 %v733
      %v2526 = vunpack.c.l.b16 %v734
      %v2527 = vunpack.c.l.b16 %v735
      %v2528 = vunpack.c.l.b16 %v736
      %v2529 = vunpack.c.l.b16 %v737
      %v2530 = vunpack.c.l.b16 %v738
      %v2531 = vunpack.c.l.b16 %v739
      %v2532 = vunpack.c.l.b16 %v740
      %v2533 = vunpack.c.l.b16 %v741
      %v2534 = vunpack.c.l.b16 %v742
      %v2535 = vunpack.c.l.b16 %v743
      %v2536 = vunpack.c.l.b16 %v744
      %v2537 = vunpack.c.l.b16 %v745
      %v2538 = vunpack.c.l.b16 %v746
      %v2539 = vunpack.c.l.b16 %v747
      %v2540 = vunpack.c.l.b16 %v748
      %v2541 = vunpack.c.l.b16 %v749
      %v2542 = vunpack.c.l.b16 %v750
      %v2543 = vunpack.c.l.b16 %v751
      %v2544 = vunpack.c.l.b16 %v752
      %v2545 = vunpack.c.l.b16 %v753
      %v2546 = vunpack.c.l.b16 %v754
      %v2547 = vunpack.c.l.b16 %v755
      %v2548 = vunpack.c.l.b16 %v756
      %v2549 = vunpack.c.l.b16 %v757
      %v2550 = vunpack.c.l.b16 %v758
      %v2551 = vunpack.c.l.b16 %v759
      %v2552 = vunpack.c.l.b16 %v760
      %v2553 = vunpack.c.l.b16 %v761
      %v2554 = vunpack.c.l.b16 %v762
      %v2555 = vunpack.c.l.b16 %v763
      %v2556 = vunpack.c.l.b16 %v764
      %v2557 = vunpack.c.l.b16 %v765
      %v2558 = vunpack.c.l.b16 %v766
      %v2559 = vunpack.c.l.b16 %v767
      %v2560 = vunpack.c.l.b16 %v768
      %v2561 = vunpack.c.l.b16 %v769
      %v2562 = vunpack.c.l.b16 %v770
      %v2563 = vunpack.c.l.b16 %v771
      %v2564 = vunpack.c.l.b16 %v772
      %v2565 = vunpack.c.l.b16 %v773
      %v2566 = vunpack.c.l.b16 %v774
      %v2567 = vunpack.c.l.b16 %v775
      %v2568 = vunpack.c.l.b16 %v776
      %v2569 = vpack.c.b16 %v2314, %v2313
      %v2570 = vpack.c.b16 %v2316, %v2315
      %v2571 = vpack.c.b16 %v2318, %v2317
      %v2572 = vpack.c.b16 %v2320, %v2319
      %v2573 = vpack.c.b16 %v2322, %v2321
      %v2574 = vpack.c.b16 %v2324, %v2323
      %v2575 = vpack.c.b16 %v2326, %v2325
      %v2576 = vpack.c.b16 %v2328, %v2327
      %v2577 = vpack.c.b16 %v2330, %v2329
      %v2578 = vpack.c.b16 %v2332, %v2331
      %v2579 = vpack.c.b16 %v2334, %v2333
      %v2580 = vpack.c.b16 %v2336, %v2335
      %v2581 = vpack.c.b16 %v2338, %v2337
      %v2582 = vpack.c.b16 %v2340, %v2339
      %v2583 = vpack.c.b16 %v2342, %v2341
      %v2584 = vpack.c.b16 %v2344, %v2343
      %v2585 = vpack.c.b16 %v2346, %v2345
      %v2586 = vpack.c.b16 %v2348, %v2347
      %v2587 = vpack.c.b16 %v2350, %v2349
      %v2588 = vpack.c.b16 %v2352, %v2351
      %v2589 = vpack.c.b16 %v2354, %v2353
      %v2590 = vpack.c.b16 %v2356, %v2355
      %v2591 = vpack.c.b16 %v2358, %v2357
      %v2592 = vpack.c.b16 %v2360, %v2359
      %v2593 = vpack.c.b16 %v2362, %v2361
      %v2594 = vpack.c.b16 %v2364, %v2363
      %v2595 = vpack.c.b16 %v2366, %v2365
      %v2596 = vpack.c.b16 %v2368, %v2367
      %v2597 = vpack.c.b16 %v2370, %v2369
      %v2598 = vpack.c.b16 %v2372, %v2371
      %v2599 = vpack.c.b16 %v2374, %v2373
      %v2600 = vpack.c.b16 %v2376, %v2375
      %v2601 = vpack.c.b16 %v2378, %v2377
      %v2602 = vpack.c.b16 %v2380, %v2379
      %v2603 = vpack.c.b16 %v2382, %v2381
      %v2604 = vpack.c.b16 %v2384, %v2383
      %v2605 = vpack.c.b16 %v2386, %v2385
      %v2606 = vpack.c.b16 %v2388, %v2387
      %v2607 = vpack.c.b16 %v2390, %v2389
      %v2608 = vpack.c.b16 %v2392, %v2391
      %v2609 = vpack.c.b16 %v2394, %v2393
      %v2610 = vpack.c.b16 %v2396, %v2395
      %v2611 = vpack.c.b16 %v2398, %v2397
      %v2612 = vpack.c.b16 %v2400, %v2399
      %v2613 = vpack.c.b16 %v2402, %v2401
      %v2614 = vpack.c.b16 %v2404, %v2403
      %v2615 = vpack.c.b16 %v2406, %v2405
      %v2616 = vpack.c.b16 %v2408, %v2407
      %v2617 = vpack.c.b16 %v2410, %v2409
      %v2618 = vpack.c.b16 %v2412, %v2411
      %v2619 = vpack.c.b16 %v2414, %v2413
      %v2620 = vpack.c.b16 %v2416, %v2415
      %v2621 = vpack.c.b16 %v2418, %v2417
      %v2622 = vpack.c.b16 %v2420, %v2419
      %v2623 = vpack.c.b16 %v2422, %v2421
      %v2624 = vpack.c.b16 %v2424, %v2423
      %v2625 = vpack.c.b16 %v2426, %v2425
      %v2626 = vpack.c.b16 %v2428, %v2427
      %v2627 = vpack.c.b16 %v2430, %v2429
      %v2628 = vpack.c.b16 %v2432, %v2431
      %v2629 = vpack.c.b16 %v2434, %v2433
      %v2630 = vpack.c.b16 %v2436, %v2435
      %v2631 = vpack.c.b16 %v2438, %v2437
      %v2632 = vpack.c.b16 %v2440, %v2439
      %v2633 = vpack.c.b16 %v2442, %v2441
      %v2634 = vpack.c.b16 %v2444, %v2443
      %v2635 = vpack.c.b16 %v2446, %v2445
      %v2636 = vpack.c.b16 %v2448, %v2447
      %v2637 = vpack.c.b16 %v2450, %v2449
      %v2638 = vpack.c.b16 %v2452, %v2451
      %v2639 = vpack.c.b16 %v2454, %v2453
      %v2640 = vpack.c.b16 %v2456, %v2455
      %v2641 = vpack.c.b16 %v2458, %v2457
      %v2642 = vpack.c.b16 %v2460, %v2459
      %v2643 = vpack.c.b16 %v2462, %v2461
      %v2644 = vpack.c.b16 %v2464, %v2463
      %v2645 = vpack.c.b16 %v2466, %v2465
      %v2646 = vpack.c.b16 %v2468, %v2467
      %v2647 = vpack.c.b16 %v2470, %v2469
      %v2648 = vpack.c.b16 %v2472, %v2471
      %v2649 = vpack.c.b16 %v2474, %v2473
      %v2650 = vpack.c.b16 %v2476, %v2475
      %v2651 = vpack.c.b16 %v2478, %v2477
      %v2652 = vpack.c.b16 %v2480, %v2479
      %v2653 = vpack.c.b16 %v2482, %v2481
      %v2654 = vpack.c.b16 %v2484, %v2483
      %v2655 = vpack.c.b16 %v2486, %v2485
      %v2656 = vpack.c.b16 %v2488, %v2487
      %v2657 = vpack.c.b16 %v2490, %v2489
      %v2658 = vpack.c.b16 %v2492, %v2491
      %v2659 = vpack.c.b16 %v2494, %v2493
      %v2660 = vpack.c.b16 %v2496, %v2495
      %v2661 = vpack.c.b16 %v2498, %v2497
      %v2662 = vpack.c.b16 %v2500, %v2499
      %v2663 = vpack.c.b16 %v2502, %v2501
      %v2664 = vpack.c.b16 %v2504, %v2503
      %v2665 = vpack.c.b16 %v2506, %v2505
      %v2666 = vpack.c.b16 %v2508, %v2507
      %v2667 = vpack.c.b16 %v2510, %v2509
      %v2668 = vpack.c.b16 %v2512, %v2511
      %v2669 = vpack.c.b16 %v2514, %v2513
      %v2670 = vpack.c.b16 %v2516, %v2515
      %v2671 = vpack.c.b16 %v2518, %v2517
      %v2672 = vpack.c.b16 %v2520, %v2519
      %v2673 = vpack.c.b16 %v2522, %v2521
      %v2674 = vpack.c.b16 %v2524, %v2523
      %v2675 = vpack.c.b16 %v2526, %v2525
      %v2676 = vpack.c.b16 %v2528, %v2527
      %v2677 = vpack.c.b16 %v2530, %v2529
      %v2678 = vpack.c.b16 %v2532, %v2531
      %v2679 = vpack.c.b16 %v2534, %v2533
      %v2680 = vpack.c.b16 %v2536, %v2535
      %v2681 = vpack.c.b16 %v2538, %v2537
      %v2682 = vpack.c.b16 %v2540, %v2539
      %v2683 = vpack.c.b16 %v2542, %v2541
      %v2684 = vpack.c.b16 %v2544, %v2543
      %v2685 = vpack.c.b16 %v2546, %v2545
      %v2686 = vpack.c.b16 %v2548, %v2547
      %v2687 = vpack.c.b16 %v2550, %v2549
      %v2688 = vpack.c.b16 %v2552, %v2551
      %v2689 = vpack.c.b16 %v2554, %v2553
      %v2690 = vpack.c.b16 %v2556, %v2555
      %v2691 = vpack.c.b16 %v2558, %v2557
      %v2692 = vpack.c.b16 %v2560, %v2559
      %v2693 = vpack.c.b16 %v2562, %v2561
      %v2694 = vpack.c.b16 %v2564, %v2563
      %v2695 = vpack.c.b16 %v2566, %v2565
      %v2696 = vpack.c.b16 %v2568, %v2567
      %2825 = vmatprep.subr.bf16.mxu0 0
      %2826 = vmatpush1.bf16.msra.mxu0 %v2569
      %2827 = vmatprep.subr.bf16.mxu0 0
      %2828 = vmatpush1.bf16.msra.mxu0 %v2570
      %2829 = vmatprep.subr.bf16.mxu0 0
      %2830 = vmatpush1.bf16.msra.mxu0 %v2571
      %2831 = vmatprep.subr.bf16.mxu0 0
      %2832 = vmatpush1.bf16.msra.mxu0 %v2572
      %2833 = vmatprep.subr.bf16.mxu0 0
      %2834 = vmatpush1.bf16.msra.mxu0 %v2573
      %2835 = vmatprep.subr.bf16.mxu0 0
      %2836 = vmatpush1.bf16.msra.mxu0 %v2574
      %2837 = vmatprep.subr.bf16.mxu0 0
      %2838 = vmatpush1.bf16.msra.mxu0 %v2575
      %2839 = vmatprep.subr.bf16.mxu0 0
      %2840 = vmatpush1.bf16.msra.mxu0 %v2576
      %2841 = vmatprep.subr.bf16.mxu0 0
      %2842 = vmatpush1.bf16.msra.mxu0 %v2577
      %2843 = vmatprep.subr.bf16.mxu0 0
      %2844 = vmatpush1.bf16.msra.mxu0 %v2578
      %2845 = vmatprep.subr.bf16.mxu0 0
      %2846 = vmatpush1.bf16.msra.mxu0 %v2579
      %2847 = vmatprep.subr.bf16.mxu0 0
      %2848 = vmatpush1.bf16.msra.mxu0 %v2580
      %2849 = vmatprep.subr.bf16.mxu0 0
      %2850 = vmatpush1.bf16.msra.mxu0 %v2581
      %2851 = vmatprep.subr.bf16.mxu0 0
      %2852 = vmatpush1.bf16.msra.mxu0 %v2582
      %2853 = vmatprep.subr.bf16.mxu0 0
      %2854 = vmatpush1.bf16.msra.mxu0 %v2583
      %2855 = vmatprep.subr.bf16.mxu0 0
      %2856 = vmatpush1.bf16.msra.mxu0 %v2584
      %2857 = vmatprep.mubr.bf16.mxu0 %v1546
      %2858 = vmatmul.mubr.bf16.gmra.mrb[0].mxu0 %v1545
      %v2859 = vpop.f32.mrb[0].mxu0
      %v2860 = vadd.f32 0.0, %v2859
      %v2861 = vpop.f32.mrb[0].mxu0
      %v2862 = vpop.f32.mrb[0].mxu0
      %v2863 = vadd.f32 0.0, %v2862
      %v2864 = vpop.f32.mrb[0].mxu0
      %2865 = vmatprep.mubr.bf16.mxu0 %v1562
      %2866 = vmatmul.mubr.bf16.gmra.mrb[0].mxu0 %v1561
      %v2867 = vpop.f32.mrb[0].mxu0
      %v2868 = vadd.f32 0.0, %v2867
      %v2869 = vpop.f32.mrb[0].mxu0
      %v2870 = vpop.f32.mrb[0].mxu0
      %v2871 = vadd.f32 0.0, %v2870
      %v2872 = vpop.f32.mrb[0].mxu0
      %2873 = vmatprep.mubr.bf16.mxu0 %v1578
      %2874 = vmatmul.mubr.bf16.gmra.mrb[0].mxu0 %v1577
      %v2875 = vpop.f32.mrb[0].mxu0
      %v2876 = vadd.f32 0.0, %v2875
      %v2877 = vpop.f32.mrb[0].mxu0
      %v2878 = vpop.f32.mrb[0].mxu0
      %v2879 = vadd.f32 0.0, %v2878
      %v2880 = vpop.f32.mrb[0].mxu0
      %2881 = vmatprep.mubr.bf16.mxu0 %v1594
      %2882 = vmatmul.mubr.bf16.gmra.mrb[0].mxu0 %v1593
      %v2883 = vpop.f32.mrb[0].mxu0
      %v2884 = vadd.f32 0.0, %v2883
      %v2885 = vpop.f32.mrb[0].mxu0
      %v2886 = vpop.f32.mrb[0].mxu0
      %v2887 = vadd.f32 0.0, %v2886
      %v2888 = vpop.f32.mrb[0].mxu0
      %2889 = vmatprep.mubr.bf16.mxu0 %v1610
      %2890 = vmatmul.mubr.bf16.gmra.mrb[0].mxu0 %v1609
      %v2891 = vpop.f32.mrb[0].mxu0
      %v2892 = vadd.f32 0.0, %v2891
      %v2893 = vpop.f32.mrb[0].mxu0
      %v2894 = vpop.f32.mrb[0].mxu0
      %v2895 = vadd.f32 0.0, %v2894
      %v2896 = vpop.f32.mrb[0].mxu0
      %2897 = vmatprep.mubr.bf16.mxu0 %v1626
      %2898 = vmatmul.mubr.bf16.gmra.mrb[0].mxu0 %v1625
      %v2899 = vpop.f32.mrb[0].mxu0
      %v2900 = vadd.f32 0.0, %v2899
      %v2901 = vpop.f32.mrb[0].mxu0
      %v2902 = vpop.f32.mrb[0].mxu0
      %v2903 = vadd.f32 0.0, %v2902
      %v2904 = vpop.f32.mrb[0].mxu0
      %2905 = vmatprep.mubr.bf16.mxu0 %v1642
      %2906 = vmatmul.mubr.bf16.gmra.mrb[0].mxu0 %v1641
      %v2907 = vpop.f32.mrb[0].mxu0
      %v2908 = vadd.f32 0.0, %v2907
      %v2909 = vpop.f32.mrb[0].mxu0
      %v2910 = vpop.f32.mrb[0].mxu0
      %v2911 = vadd.f32 0.0, %v2910
      %v2912 = vpop.f32.mrb[0].mxu0
      %2913 = vmatprep.mubr.bf16.mxu0 %v1658
      %2914 = vmatmul.mubr.bf16.gmra.mrb[0].mxu0 %v1657
      %v2915 = vpop.f32.mrb[0].mxu0
      %v2916 = vadd.f32 0.0, %v2915
      %v2917 = vpop.f32.mrb[0].mxu0
      %v2918 = vpop.f32.mrb[0].mxu0
      %v2919 = vadd.f32 0.0, %v2918
      %v2920 = vpop.f32.mrb[0].mxu0
      %2921 = vmatprep.mubr.bf16.mxu0 %v1674
      %2922 = vmatmul.mubr.bf16.gmra.mrb[0].mxu0 %v1673
      %v2923 = vpop.f32.mrb[0].mxu0
      %v2924 = vadd.f32 0.0, %v2923
      %v2925 = vpop.f32.mrb[0].mxu0
      %v2926 = vpop.f32.mrb[0].mxu0
      %v2927 = vadd.f32 0.0, %v2926
      %v2928 = vpop.f32.mrb[0].mxu0
      %2929 = vmatprep.mubr.bf16.mxu0 %v1690
      %2930 = vmatmul.mubr.bf16.gmra.mrb[0].mxu0 %v1689
      %v2931 = vpop.f32.mrb[0].mxu0
      %v2932 = vadd.f32 0.0, %v2931
      %v2933 = vpop.f32.mrb[0].mxu0
      %v2934 = vpop.f32.mrb[0].mxu0
      %v2935 = vadd.f32 0.0, %v2934
      %v2936 = vpop.f32.mrb[0].mxu0
      %2937 = vmatprep.mubr.bf16.mxu0 %v1706
      %2938 = vmatmul.mubr.bf16.gmra.mrb[0].mxu0 %v1705
      %v2939 = vpop.f32.mrb[0].mxu0
      %v2940 = vadd.f32 0.0, %v2939
      %v2941 = vpop.f32.mrb[0].mxu0
      %v2942 = vpop.f32.mrb[0].mxu0
      %v2943 = vadd.f32 0.0, %v2942
      %v2944 = vpop.f32.mrb[0].mxu0
      %2945 = vmatprep.mubr.bf16.mxu0 %v1722
      %2946 = vmatmul.mubr.bf16.gmra.mrb[0].mxu0 %v1721
      %v2947 = vpop.f32.mrb[0].mxu0
      %v2948 = vadd.f32 0.0, %v2947
      %v2949 = vpop.f32.mrb[0].mxu0
      %v2950 = vpop.f32.mrb[0].mxu0
      %v2951 = vadd.f32 0.0, %v2950
      %v2952 = vpop.f32.mrb[0].mxu0
      %2953 = vmatprep.mubr.bf16.mxu0 %v1738
      %2954 = vmatmul.mubr.bf16.gmra.mrb[0].mxu0 %v1737
      %v2955 = vpop.f32.mrb[0].mxu0
      %v2956 = vadd.f32 0.0, %v2955
      %v2957 = vpop.f32.mrb[0].mxu0
      %v2958 = vpop.f32.mrb[0].mxu0
      %v2959 = vadd.f32 0.0, %v2958
      %v2960 = vpop.f32.mrb[0].mxu0
      %2961 = vmatprep.mubr.bf16.mxu0 %v1754
      %2962 = vmatmul.mubr.bf16.gmra.mrb[0].mxu0 %v1753
      %v2963 = vpop.f32.mrb[0].mxu0
      %v2964 = vadd.f32 0.0, %v2963
      %v2965 = vpop.f32.mrb[0].mxu0
      %v2966 = vpop.f32.mrb[0].mxu0
      %v2967 = vadd.f32 0.0, %v2966
      %v2968 = vpop.f32.mrb[0].mxu0
      %2969 = vmatprep.mubr.bf16.mxu0 %v1770
      %2970 = vmatmul.mubr.bf16.gmra.mrb[0].mxu0 %v1769
      %v2971 = vpop.f32.mrb[0].mxu0
      %v2972 = vadd.f32 0.0, %v2971
      %v2973 = vpop.f32.mrb[0].mxu0
      %v2974 = vpop.f32.mrb[0].mxu0
      %v2975 = vadd.f32 0.0, %v2974
      %v2976 = vpop.f32.mrb[0].mxu0
      %2977 = vmatprep.mubr.bf16.mxu0 %v1786
      %2978 = vmatmul.mubr.bf16.gmra.mrb[0].mxu0 %v1785
      %v2979 = vpop.f32.mrb[0].mxu0
      %v2980 = vadd.f32 0.0, %v2979
      %v2981 = vpop.f32.mrb[0].mxu0
      %v2982 = vpop.f32.mrb[0].mxu0
      %v2983 = vadd.f32 0.0, %v2982
      %v2984 = vpop.f32.mrb[0].mxu0
      %2985 = vdwg.mxu0
      %2986 = vmatprep.subr.bf16.mxu0 0
      %2987 = vmatpush1.bf16.msra.mxu0 %v2585
      %2988 = vmatprep.subr.bf16.mxu0 0
      %2989 = vmatpush1.bf16.msra.mxu0 %v2586
      %2990 = vmatprep.subr.bf16.mxu0 0
      %2991 = vmatpush1.bf16.msra.mxu0 %v2587
      %2992 = vmatprep.subr.bf16.mxu0 0
      %2993 = vmatpush1.bf16.msra.mxu0 %v2588
      %2994 = vmatprep.subr.bf16.mxu0 0
      %2995 = vmatpush1.bf16.msra.mxu0 %v2589
      %2996 = vmatprep.subr.bf16.mxu0 0
      %2997 = vmatpush1.bf16.msra.mxu0 %v2590
      %2998 = vmatprep.subr.bf16.mxu0 0
      %2999 = vmatpush1.bf16.msra.mxu0 %v2591
      %3000 = vmatprep.subr.bf16.mxu0 0
      %3001 = vmatpush1.bf16.msra.mxu0 %v2592
      %3002 = vmatprep.subr.bf16.mxu0 0
      %3003 = vmatpush1.bf16.msra.mxu0 %v2593
      %3004 = vmatprep.subr.bf16.mxu0 0
      %3005 = vmatpush1.bf16.msra.mxu0 %v2594
      %3006 = vmatprep.subr.bf16.mxu0 0
      %3007 = vmatpush1.bf16.msra.mxu0 %v2595
      %3008 = vmatprep.subr.bf16.mxu0 0
      %3009 = vmatpush1.bf16.msra.mxu0 %v2596
      %3010 = vmatprep.subr.bf16.mxu0 0
      %3011 = vmatpush1.bf16.msra.mxu0 %v2597
      %3012 = vmatprep.subr.bf16.mxu0 0
      %3013 = vmatpush1.bf16.msra.mxu0 %v2598
      %3014 = vmatprep.subr.bf16.mxu0 0
      %3015 = vmatpush1.bf16.msra.mxu0 %v2599
      %3016 = vmatprep.subr.bf16.mxu0 0
      %3017 = vmatpush1.bf16.msra.mxu0 %v2600
      %3018 = vmatprep.mubr.bf16.mxu0 %v1548
      %3019 = vmatmul.mubr.bf16.gmra.mrb[0].mxu0 %v1547
      %v3020 = vpop.f32.mrb[0].mxu0
      %v3021 = vadd.f32 %v2860, %v3020
      %v3022 = vpop.f32.mrb[0].mxu0
      %v3023 = vpop.f32.mrb[0].mxu0
      %v3024 = vadd.f32 %v2863, %v3023
      %v3025 = vpop.f32.mrb[0].mxu0
      %3026 = vmatprep.mubr.bf16.mxu0 %v1564
      %3027 = vmatmul.mubr.bf16.gmra.mrb[0].mxu0 %v1563
      %v3028 = vpop.f32.mrb[0].mxu0
      %v3029 = vadd.f32 %v2868, %v3028
      %v3030 = vpop.f32.mrb[0].mxu0
      %v3031 = vpop.f32.mrb[0].mxu0
      %v3032 = vadd.f32 %v2871, %v3031
      %v3033 = vpop.f32.mrb[0].mxu0
      %3034 = vmatprep.mubr.bf16.mxu0 %v1580
      %3035 = vmatmul.mubr.bf16.gmra.mrb[0].mxu0 %v1579
      %v3036 = vpop.f32.mrb[0].mxu0
      %v3037 = vadd.f32 %v2876, %v3036
      %v3038 = vpop.f32.mrb[0].mxu0
      %v3039 = vpop.f32.mrb[0].mxu0
      %v3040 = vadd.f32 %v2879, %v3039
      %v3041 = vpop.f32.mrb[0].mxu0
      %3042 = vmatprep.mubr.bf16.mxu0 %v1596
      %3043 = vmatmul.mubr.bf16.gmra.mrb[0].mxu0 %v1595
      %v3044 = vpop.f32.mrb[0].mxu0
      %v3045 = vadd.f32 %v2884, %v3044
      %v3046 = vpop.f32.mrb[0].mxu0
      %v3047 = vpop.f32.mrb[0].mxu0
      %v3048 = vadd.f32 %v2887, %v3047
      %v3049 = vpop.f32.mrb[0].mxu0
      %3050 = vmatprep.mubr.bf16.mxu0 %v1612
      %3051 = vmatmul.mubr.bf16.gmra.mrb[0].mxu0 %v1611
      %v3052 = vpop.f32.mrb[0].mxu0
      %v3053 = vadd.f32 %v2892, %v3052
      %v3054 = vpop.f32.mrb[0].mxu0
      %v3055 = vpop.f32.mrb[0].mxu0
      %v3056 = vadd.f32 %v2895, %v3055
      %v3057 = vpop.f32.mrb[0].mxu0
      %3058 = vmatprep.mubr.bf16.mxu0 %v1628
      %3059 = vmatmul.mubr.bf16.gmra.mrb[0].mxu0 %v1627
      %v3060 = vpop.f32.mrb[0].mxu0
      %v3061 = vadd.f32 %v2900, %v3060
      %v3062 = vpop.f32.mrb[0].mxu0
      %v3063 = vpop.f32.mrb[0].mxu0
      %v3064 = vadd.f32 %v2903, %v3063
      %v3065 = vpop.f32.mrb[0].mxu0
      %3066 = vmatprep.mubr.bf16.mxu0 %v1644
      %3067 = vmatmul.mubr.bf16.gmra.mrb[0].mxu0 %v1643
      %v3068 = vpop.f32.mrb[0].mxu0
      %v3069 = vadd.f32 %v2908, %v3068
      %v3070 = vpop.f32.mrb[0].mxu0
      %v3071 = vpop.f32.mrb[0].mxu0
      %v3072 = vadd.f32 %v2911, %v3071
      %v3073 = vpop.f32.mrb[0].mxu0
      %3074 = vmatprep.mubr.bf16.mxu0 %v1660
      %3075 = vmatmul.mubr.bf16.gmra.mrb[0].mxu0 %v1659
      %v3076 = vpop.f32.mrb[0].mxu0
      %v3077 = vadd.f32 %v2916, %v3076
      %v3078 = vpop.f32.mrb[0].mxu0
      %v3079 = vpop.f32.mrb[0].mxu0
      %v3080 = vadd.f32 %v2919, %v3079
      %v3081 = vpop.f32.mrb[0].mxu0
      %3082 = vmatprep.mubr.bf16.mxu0 %v1676
      %3083 = vmatmul.mubr.bf16.gmra.mrb[0].mxu0 %v1675
      %v3084 = vpop.f32.mrb[0].mxu0
      %v3085 = vadd.f32 %v2924, %v3084
      %v3086 = vpop.f32.mrb[0].mxu0
      %v3087 = vpop.f32.mrb[0].mxu0
      %v3088 = vadd.f32 %v2927, %v3087
      %v3089 = vpop.f32.mrb[0].mxu0
      %3090 = vmatprep.mubr.bf16.mxu0 %v1692
      %3091 = vmatmul.mubr.bf16.gmra.mrb[0].mxu0 %v1691
      %v3092 = vpop.f32.mrb[0].mxu0
      %v3093 = vadd.f32 %v2932, %v3092
      %v3094 = vpop.f32.mrb[0].mxu0
      %v3095 = vpop.f32.mrb[0].mxu0
      %v3096 = vadd.f32 %v2935, %v3095
      %v3097 = vpop.f32.mrb[0].mxu0
      %3098 = vmatprep.mubr.bf16.mxu0 %v1708
      %3099 = vmatmul.mubr.bf16.gmra.mrb[0].mxu0 %v1707
      %v3100 = vpop.f32.mrb[0].mxu0
      %v3101 = vadd.f32 %v2940, %v3100
      %v3102 = vpop.f32.mrb[0].mxu0
      %v3103 = vpop.f32.mrb[0].mxu0
      %v3104 = vadd.f32 %v2943, %v3103
      %v3105 = vpop.f32.mrb[0].mxu0
      %3106 = vmatprep.mubr.bf16.mxu0 %v1724
      %3107 = vmatmul.mubr.bf16.gmra.mrb[0].mxu0 %v1723
      %v3108 = vpop.f32.mrb[0].mxu0
      %v3109 = vadd.f32 %v2948, %v3108
      %v3110 = vpop.f32.mrb[0].mxu0
      %v3111 = vpop.f32.mrb[0].mxu0
      %v3112 = vadd.f32 %v2951, %v3111
      %v3113 = vpop.f32.mrb[0].mxu0
      %3114 = vmatprep.mubr.bf16.mxu0 %v1740
      %3115 = vmatmul.mubr.bf16.gmra.mrb[0].mxu0 %v1739
      %v3116 = vpop.f32.mrb[0].mxu0
      %v3117 = vadd.f32 %v2956, %v3116
      %v3118 = vpop.f32.mrb[0].mxu0
      %v3119 = vpop.f32.mrb[0].mxu0
      %v3120 = vadd.f32 %v2959, %v3119
      %v3121 = vpop.f32.mrb[0].mxu0
      %3122 = vmatprep.mubr.bf16.mxu0 %v1756
      %3123 = vmatmul.mubr.bf16.gmra.mrb[0].mxu0 %v1755
      %v3124 = vpop.f32.mrb[0].mxu0
      %v3125 = vadd.f32 %v2964, %v3124
      %v3126 = vpop.f32.mrb[0].mxu0
      %v3127 = vpop.f32.mrb[0].mxu0
      %v3128 = vadd.f32 %v2967, %v3127
      %v3129 = vpop.f32.mrb[0].mxu0
      %3130 = vmatprep.mubr.bf16.mxu0 %v1772
      %3131 = vmatmul.mubr.bf16.gmra.mrb[0].mxu0 %v1771
      %v3132 = vpop.f32.mrb[0].mxu0
      %v3133 = vadd.f32 %v2972, %v3132
      %v3134 = vpop.f32.mrb[0].mxu0
      %v3135 = vpop.f32.mrb[0].mxu0
      %v3136 = vadd.f32 %v2975, %v3135
      %v3137 = vpop.f32.mrb[0].mxu0
      %3138 = vmatprep.mubr.bf16.mxu0 %v1788
      %3139 = vmatmul.mubr.bf16.gmra.mrb[0].mxu0 %v1787
      %v3140 = vpop.f32.mrb[0].mxu0
      %v3141 = vadd.f32 %v2980, %v3140
      %v3142 = vpop.f32.mrb[0].mxu0
      %v3143 = vpop.f32.mrb[0].mxu0
      %v3144 = vadd.f32 %v2983, %v3143
      %v3145 = vpop.f32.mrb[0].mxu0
      %3146 = vdwg.mxu0
      %3147 = vmatprep.subr.bf16.mxu0 0
      %3148 = vmatpush1.bf16.msra.mxu0 %v2601
      %3149 = vmatprep.subr.bf16.mxu0 0
      %3150 = vmatpush1.bf16.msra.mxu0 %v2602
      %3151 = vmatprep.subr.bf16.mxu0 0
      %3152 = vmatpush1.bf16.msra.mxu0 %v2603
      %3153 = vmatprep.subr.bf16.mxu0 0
      %3154 = vmatpush1.bf16.msra.mxu0 %v2604
      %3155 = vmatprep.subr.bf16.mxu0 0
      %3156 = vmatpush1.bf16.msra.mxu0 %v2605
      %3157 = vmatprep.subr.bf16.mxu0 0
      %3158 = vmatpush1.bf16.msra.mxu0 %v2606
      %3159 = vmatprep.subr.bf16.mxu0 0
      %3160 = vmatpush1.bf16.msra.mxu0 %v2607
      %3161 = vmatprep.subr.bf16.mxu0 0
      %3162 = vmatpush1.bf16.msra.mxu0 %v2608
      %3163 = vmatprep.subr.bf16.mxu0 0
      %3164 = vmatpush1.bf16.msra.mxu0 %v2609
      %3165 = vmatprep.subr.bf16.mxu0 0
      %3166 = vmatpush1.bf16.msra.mxu0 %v2610
      %3167 = vmatprep.subr.bf16.mxu0 0
      %3168 = vmatpush1.bf16.msra.mxu0 %v2611
      %3169 = vmatprep.subr.bf16.mxu0 0
      %3170 = vmatpush1.bf16.msra.mxu0 %v2612
      %3171 = vmatprep.subr.bf16.mxu0 0
      %3172 = vmatpush1.bf16.msra.mxu0 %v2613
      %3173 = vmatprep.subr.bf16.mxu0 0
      %3174 = vmatpush1.bf16.msra.mxu0 %v2614
      %3175 = vmatprep.subr.bf16.mxu0 0
      %3176 = vmatpush1.bf16.msra.mxu0 %v2615
      %3177 = vmatprep.subr.bf16.mxu0 0
      %3178 = vmatpush1.bf16.msra.mxu0 %v2616
      %3179 = vmatprep.mubr.bf16.mxu0 %v1550
      %3180 = vmatmul.mubr.bf16.gmra.mrb[0].mxu0 %v1549
      %v3181 = vpop.f32.mrb[0].mxu0
      %v3182 = vadd.f32 %v3021, %v3181
      %v3183 = vpop.f32.mrb[0].mxu0
      %v3184 = vpop.f32.mrb[0].mxu0
      %v3185 = vadd.f32 %v3024, %v3184
      %v3186 = vpop.f32.mrb[0].mxu0
      %3187 = vmatprep.mubr.bf16.mxu0 %v1566
      %3188 = vmatmul.mubr.bf16.gmra.mrb[0].mxu0 %v1565
      %v3189 = vpop.f32.mrb[0].mxu0
      %v3190 = vadd.f32 %v3029, %v3189
      %v3191 = vpop.f32.mrb[0].mxu0
      %v3192 = vpop.f32.mrb[0].mxu0
      %v3193 = vadd.f32 %v3032, %v3192
      %v3194 = vpop.f32.mrb[0].mxu0
      %3195 = vmatprep.mubr.bf16.mxu0 %v1582
      %3196 = vmatmul.mubr.bf16.gmra.mrb[0].mxu0 %v1581
      %v3197 = vpop.f32.mrb[0].mxu0
      %v3198 = vadd.f32 %v3037, %v3197
      %v3199 = vpop.f32.mrb[0].mxu0
      %v3200 = vpop.f32.mrb[0].mxu0
      %v3201 = vadd.f32 %v3040, %v3200
      %v3202 = vpop.f32.mrb[0].mxu0
      %3203 = vmatprep.mubr.bf16.mxu0 %v1598
      %3204 = vmatmul.mubr.bf16.gmra.mrb[0].mxu0 %v1597
      %v3205 = vpop.f32.mrb[0].mxu0
      %v3206 = vadd.f32 %v3045, %v3205
      %v3207 = vpop.f32.mrb[0].mxu0
      %v3208 = vpop.f32.mrb[0].mxu0
      %v3209 = vadd.f32 %v3048, %v3208
      %v3210 = vpop.f32.mrb[0].mxu0
      %3211 = vmatprep.mubr.bf16.mxu0 %v1614
      %3212 = vmatmul.mubr.bf16.gmra.mrb[0].mxu0 %v1613
      %v3213 = vpop.f32.mrb[0].mxu0
      %v3214 = vadd.f32 %v3053, %v3213
      %v3215 = vpop.f32.mrb[0].mxu0
      %v3216 = vpop.f32.mrb[0].mxu0
      %v3217 = vadd.f32 %v3056, %v3216
      %v3218 = vpop.f32.mrb[0].mxu0
      %3219 = vmatprep.mubr.bf16.mxu0 %v1630
      %3220 = vmatmul.mubr.bf16.gmra.mrb[0].mxu0 %v1629
      %v3221 = vpop.f32.mrb[0].mxu0
      %v3222 = vadd.f32 %v3061, %v3221
      %v3223 = vpop.f32.mrb[0].mxu0
      %v3224 = vpop.f32.mrb[0].mxu0
      %v3225 = vadd.f32 %v3064, %v3224
      %v3226 = vpop.f32.mrb[0].mxu0
      %3227 = vmatprep.mubr.bf16.mxu0 %v1646
      %3228 = vmatmul.mubr.bf16.gmra.mrb[0].mxu0 %v1645
      %v3229 = vpop.f32.mrb[0].mxu0
      %v3230 = vadd.f32 %v3069, %v3229
      %v3231 = vpop.f32.mrb[0].mxu0
      %v3232 = vpop.f32.mrb[0].mxu0
      %v3233 = vadd.f32 %v3072, %v3232
      %v3234 = vpop.f32.mrb[0].mxu0
      %3235 = vmatprep.mubr.bf16.mxu0 %v1662
      %3236 = vmatmul.mubr.bf16.gmra.mrb[0].mxu0 %v1661
      %v3237 = vpop.f32.mrb[0].mxu0
      %v3238 = vadd.f32 %v3077, %v3237
      %v3239 = vpop.f32.mrb[0].mxu0
      %v3240 = vpop.f32.mrb[0].mxu0
      %v3241 = vadd.f32 %v3080, %v3240
      %v3242 = vpop.f32.mrb[0].mxu0
      %3243 = vmatprep.mubr.bf16.mxu0 %v1678
      %3244 = vmatmul.mubr.bf16.gmra.mrb[0].mxu0 %v1677
      %v3245 = vpop.f32.mrb[0].mxu0
      %v3246 = vadd.f32 %v3085, %v3245
      %v3247 = vpop.f32.mrb[0].mxu0
      %v3248 = vpop.f32.mrb[0].mxu0
      %v3249 = vadd.f32 %v3088, %v3248
      %v3250 = vpop.f32.mrb[0].mxu0
      %3251 = vmatprep.mubr.bf16.mxu0 %v1694
      %3252 = vmatmul.mubr.bf16.gmra.mrb[0].mxu0 %v1693
      %v3253 = vpop.f32.mrb[0].mxu0
      %v3254 = vadd.f32 %v3093, %v3253
      %v3255 = vpop.f32.mrb[0].mxu0
      %v3256 = vpop.f32.mrb[0].mxu0
      %v3257 = vadd.f32 %v3096, %v3256
      %v3258 = vpop.f32.mrb[0].mxu0
      %3259 = vmatprep.mubr.bf16.mxu0 %v1710
      %3260 = vmatmul.mubr.bf16.gmra.mrb[0].mxu0 %v1709
      %v3261 = vpop.f32.mrb[0].mxu0
      %v3262 = vadd.f32 %v3101, %v3261
      %v3263 = vpop.f32.mrb[0].mxu0
      %v3264 = vpop.f32.mrb[0].mxu0
      %v3265 = vadd.f32 %v3104, %v3264
      %v3266 = vpop.f32.mrb[0].mxu0
      %3267 = vmatprep.mubr.bf16.mxu0 %v1726
      %3268 = vmatmul.mubr.bf16.gmra.mrb[0].mxu0 %v1725
      %v3269 = vpop.f32.mrb[0].mxu0
      %v3270 = vadd.f32 %v3109, %v3269
      %v3271 = vpop.f32.mrb[0].mxu0
      %v3272 = vpop.f32.mrb[0].mxu0
      %v3273 = vadd.f32 %v3112, %v3272
      %v3274 = vpop.f32.mrb[0].mxu0
      %3275 = vmatprep.mubr.bf16.mxu0 %v1742
      %3276 = vmatmul.mubr.bf16.gmra.mrb[0].mxu0 %v1741
      %v3277 = vpop.f32.mrb[0].mxu0
      %v3278 = vadd.f32 %v3117, %v3277
      %v3279 = vpop.f32.mrb[0].mxu0
      %v3280 = vpop.f32.mrb[0].mxu0
      %v3281 = vadd.f32 %v3120, %v3280
      %v3282 = vpop.f32.mrb[0].mxu0
      %3283 = vmatprep.mubr.bf16.mxu0 %v1758
      %3284 = vmatmul.mubr.bf16.gmra.mrb[0].mxu0 %v1757
      %v3285 = vpop.f32.mrb[0].mxu0
      %v3286 = vadd.f32 %v3125, %v3285
      %v3287 = vpop.f32.mrb[0].mxu0
      %v3288 = vpop.f32.mrb[0].mxu0
      %v3289 = vadd.f32 %v3128, %v3288
      %v3290 = vpop.f32.mrb[0].mxu0
      %3291 = vmatprep.mubr.bf16.mxu0 %v1774
      %3292 = vmatmul.mubr.bf16.gmra.mrb[0].mxu0 %v1773
      %v3293 = vpop.f32.mrb[0].mxu0
      %v3294 = vadd.f32 %v3133, %v3293
      %v3295 = vpop.f32.mrb[0].mxu0
      %v3296 = vpop.f32.mrb[0].mxu0
      %v3297 = vadd.f32 %v3136, %v3296
      %v3298 = vpop.f32.mrb[0].mxu0
      %3299 = vmatprep.mubr.bf16.mxu0 %v1790
      %3300 = vmatmul.mubr.bf16.gmra.mrb[0].mxu0 %v1789
      %v3301 = vpop.f32.mrb[0].mxu0
      %v3302 = vadd.f32 %v3141, %v3301
      %v3303 = vpop.f32.mrb[0].mxu0
      %v3304 = vpop.f32.mrb[0].mxu0
      %v3305 = vadd.f32 %v3144, %v3304
      %v3306 = vpop.f32.mrb[0].mxu0
      %3307 = vdwg.mxu0
      %3308 = vmatprep.subr.bf16.mxu0 0
      %3309 = vmatpush1.bf16.msra.mxu0 %v2617
      %3310 = vmatprep.subr.bf16.mxu0 0
      %3311 = vmatpush1.bf16.msra.mxu0 %v2618
      %3312 = vmatprep.subr.bf16.mxu0 0
      %3313 = vmatpush1.bf16.msra.mxu0 %v2619
      %3314 = vmatprep.subr.bf16.mxu0 0
      %3315 = vmatpush1.bf16.msra.mxu0 %v2620
      %3316 = vmatprep.subr.bf16.mxu0 0
      %3317 = vmatpush1.bf16.msra.mxu0 %v2621
      %3318 = vmatprep.subr.bf16.mxu0 0
      %3319 = vmatpush1.bf16.msra.mxu0 %v2622
      %3320 = vmatprep.subr.bf16.mxu0 0
      %3321 = vmatpush1.bf16.msra.mxu0 %v2623
      %3322 = vmatprep.subr.bf16.mxu0 0
      %3323 = vmatpush1.bf16.msra.mxu0 %v2624
      %3324 = vmatprep.subr.bf16.mxu0 0
      %3325 = vmatpush1.bf16.msra.mxu0 %v2625
      %3326 = vmatprep.subr.bf16.mxu0 0
      %3327 = vmatpush1.bf16.msra.mxu0 %v2626
      %3328 = vmatprep.subr.bf16.mxu0 0
      %3329 = vmatpush1.bf16.msra.mxu0 %v2627
      %3330 = vmatprep.subr.bf16.mxu0 0
      %3331 = vmatpush1.bf16.msra.mxu0 %v2628
      %3332 = vmatprep.subr.bf16.mxu0 0
      %3333 = vmatpush1.bf16.msra.mxu0 %v2629
      %3334 = vmatprep.subr.bf16.mxu0 0
      %3335 = vmatpush1.bf16.msra.mxu0 %v2630
      %3336 = vmatprep.subr.bf16.mxu0 0
      %3337 = vmatpush1.bf16.msra.mxu0 %v2631
      %3338 = vmatprep.subr.bf16.mxu0 0
      %3339 = vmatpush1.bf16.msra.mxu0 %v2632
      %3340 = vmatprep.mubr.bf16.mxu0 %v1552
      %3341 = vmatmul.mubr.bf16.gmra.mrb[0].mxu0 %v1551
      %v3342 = vpop.f32.mrb[0].mxu0
      %v3343 = vadd.f32 %v3182, %v3342
      %v3344 = vpop.f32.mrb[0].mxu0
      %v3345 = vpop.f32.mrb[0].mxu0
      %v3346 = vadd.f32 %v3185, %v3345
      %v3347 = vpop.f32.mrb[0].mxu0
      %3348 = vmatprep.mubr.bf16.mxu0 %v1568
      %3349 = vmatmul.mubr.bf16.gmra.mrb[0].mxu0 %v1567
      %v3350 = vpop.f32.mrb[0].mxu0
      %v3351 = vadd.f32 %v3190, %v3350
      %v3352 = vpop.f32.mrb[0].mxu0
      %v3353 = vpop.f32.mrb[0].mxu0
      %v3354 = vadd.f32 %v3193, %v3353
      %v3355 = vpop.f32.mrb[0].mxu0
      %3356 = vmatprep.mubr.bf16.mxu0 %v1584
      %3357 = vmatmul.mubr.bf16.gmra.mrb[0].mxu0 %v1583
      %v3358 = vpop.f32.mrb[0].mxu0
      %v3359 = vadd.f32 %v3198, %v3358
      %v3360 = vpop.f32.mrb[0].mxu0
      %v3361 = vpop.f32.mrb[0].mxu0
      %v3362 = vadd.f32 %v3201, %v3361
      %v3363 = vpop.f32.mrb[0].mxu0
      %3364 = vmatprep.mubr.bf16.mxu0 %v1600
      %3365 = vmatmul.mubr.bf16.gmra.mrb[0].mxu0 %v1599
      %v3366 = vpop.f32.mrb[0].mxu0
      %v3367 = vadd.f32 %v3206, %v3366
      %v3368 = vpop.f32.mrb[0].mxu0
      %v3369 = vpop.f32.mrb[0].mxu0
      %v3370 = vadd.f32 %v3209, %v3369
      %v3371 = vpop.f32.mrb[0].mxu0
      %3372 = vmatprep.mubr.bf16.mxu0 %v1616
      %3373 = vmatmul.mubr.bf16.gmra.mrb[0].mxu0 %v1615
      %v3374 = vpop.f32.mrb[0].mxu0
      %v3375 = vadd.f32 %v3214, %v3374
      %v3376 = vpop.f32.mrb[0].mxu0
      %v3377 = vpop.f32.mrb[0].mxu0
      %v3378 = vadd.f32 %v3217, %v3377
      %v3379 = vpop.f32.mrb[0].mxu0
      %3380 = vmatprep.mubr.bf16.mxu0 %v1632
      %3381 = vmatmul.mubr.bf16.gmra.mrb[0].mxu0 %v1631
      %v3382 = vpop.f32.mrb[0].mxu0
      %v3383 = vadd.f32 %v3222, %v3382
      %v3384 = vpop.f32.mrb[0].mxu0
      %v3385 = vpop.f32.mrb[0].mxu0
      %v3386 = vadd.f32 %v3225, %v3385
      %v3387 = vpop.f32.mrb[0].mxu0
      %3388 = vmatprep.mubr.bf16.mxu0 %v1648
      %3389 = vmatmul.mubr.bf16.gmra.mrb[0].mxu0 %v1647
      %v3390 = vpop.f32.mrb[0].mxu0
      %v3391 = vadd.f32 %v3230, %v3390
      %v3392 = vpop.f32.mrb[0].mxu0
      %v3393 = vpop.f32.mrb[0].mxu0
      %v3394 = vadd.f32 %v3233, %v3393
      %v3395 = vpop.f32.mrb[0].mxu0
      %3396 = vmatprep.mubr.bf16.mxu0 %v1664
      %3397 = vmatmul.mubr.bf16.gmra.mrb[0].mxu0 %v1663
      %v3398 = vpop.f32.mrb[0].mxu0
      %v3399 = vadd.f32 %v3238, %v3398
      %v3400 = vpop.f32.mrb[0].mxu0
      %v3401 = vpop.f32.mrb[0].mxu0
      %v3402 = vadd.f32 %v3241, %v3401
      %v3403 = vpop.f32.mrb[0].mxu0
      %3404 = vmatprep.mubr.bf16.mxu0 %v1680
      %3405 = vmatmul.mubr.bf16.gmra.mrb[0].mxu0 %v1679
      %v3406 = vpop.f32.mrb[0].mxu0
      %v3407 = vadd.f32 %v3246, %v3406
      %v3408 = vpop.f32.mrb[0].mxu0
      %v3409 = vpop.f32.mrb[0].mxu0
      %v3410 = vadd.f32 %v3249, %v3409
      %v3411 = vpop.f32.mrb[0].mxu0
      %3412 = vmatprep.mubr.bf16.mxu0 %v1696
      %3413 = vmatmul.mubr.bf16.gmra.mrb[0].mxu0 %v1695
      %v3414 = vpop.f32.mrb[0].mxu0
      %v3415 = vadd.f32 %v3254, %v3414
      %v3416 = vpop.f32.mrb[0].mxu0
      %v3417 = vpop.f32.mrb[0].mxu0
      %v3418 = vadd.f32 %v3257, %v3417
      %v3419 = vpop.f32.mrb[0].mxu0
      %3420 = vmatprep.mubr.bf16.mxu0 %v1712
      %3421 = vmatmul.mubr.bf16.gmra.mrb[0].mxu0 %v1711
      %v3422 = vpop.f32.mrb[0].mxu0
      %v3423 = vadd.f32 %v3262, %v3422
      %v3424 = vpop.f32.mrb[0].mxu0
      %v3425 = vpop.f32.mrb[0].mxu0
      %v3426 = vadd.f32 %v3265, %v3425
      %v3427 = vpop.f32.mrb[0].mxu0
      %3428 = vmatprep.mubr.bf16.mxu0 %v1728
      %3429 = vmatmul.mubr.bf16.gmra.mrb[0].mxu0 %v1727
      %v3430 = vpop.f32.mrb[0].mxu0
      %v3431 = vadd.f32 %v3270, %v3430
      %v3432 = vpop.f32.mrb[0].mxu0
      %v3433 = vpop.f32.mrb[0].mxu0
      %v3434 = vadd.f32 %v3273, %v3433
      %v3435 = vpop.f32.mrb[0].mxu0
      %3436 = vmatprep.mubr.bf16.mxu0 %v1744
      %3437 = vmatmul.mubr.bf16.gmra.mrb[0].mxu0 %v1743
      %v3438 = vpop.f32.mrb[0].mxu0
      %v3439 = vadd.f32 %v3278, %v3438
      %v3440 = vpop.f32.mrb[0].mxu0
      %v3441 = vpop.f32.mrb[0].mxu0
      %v3442 = vadd.f32 %v3281, %v3441
      %v3443 = vpop.f32.mrb[0].mxu0
      %3444 = vmatprep.mubr.bf16.mxu0 %v1760
      %3445 = vmatmul.mubr.bf16.gmra.mrb[0].mxu0 %v1759
      %v3446 = vpop.f32.mrb[0].mxu0
      %v3447 = vadd.f32 %v3286, %v3446
      %v3448 = vpop.f32.mrb[0].mxu0
      %v3449 = vpop.f32.mrb[0].mxu0
      %v3450 = vadd.f32 %v3289, %v3449
      %v3451 = vpop.f32.mrb[0].mxu0
      %3452 = vmatprep.mubr.bf16.mxu0 %v1776
      %3453 = vmatmul.mubr.bf16.gmra.mrb[0].mxu0 %v1775
      %v3454 = vpop.f32.mrb[0].mxu0
      %v3455 = vadd.f32 %v3294, %v3454
      %v3456 = vpop.f32.mrb[0].mxu0
      %v3457 = vpop.f32.mrb[0].mxu0
      %v3458 = vadd.f32 %v3297, %v3457
      %v3459 = vpop.f32.mrb[0].mxu0
      %3460 = vmatprep.mubr.bf16.mxu0 %v1792
      %3461 = vmatmul.mubr.bf16.gmra.mrb[0].mxu0 %v1791
      %v3462 = vpop.f32.mrb[0].mxu0
      %v3463 = vadd.f32 %v3302, %v3462
      %v3464 = vpop.f32.mrb[0].mxu0
      %v3465 = vpop.f32.mrb[0].mxu0
      %v3466 = vadd.f32 %v3305, %v3465
      %v3467 = vpop.f32.mrb[0].mxu0
      %3468 = vdwg.mxu0
      %3469 = vmatprep.subr.bf16.mxu0 0
      %3470 = vmatpush1.bf16.msra.mxu0 %v2633
      %3471 = vmatprep.subr.bf16.mxu0 0
      %3472 = vmatpush1.bf16.msra.mxu0 %v2634
      %3473 = vmatprep.subr.bf16.mxu0 0
      %3474 = vmatpush1.bf16.msra.mxu0 %v2635
      %3475 = vmatprep.subr.bf16.mxu0 0
      %3476 = vmatpush1.bf16.msra.mxu0 %v2636
      %3477 = vmatprep.subr.bf16.mxu0 0
      %3478 = vmatpush1.bf16.msra.mxu0 %v2637
      %3479 = vmatprep.subr.bf16.mxu0 0
      %3480 = vmatpush1.bf16.msra.mxu0 %v2638
      %3481 = vmatprep.subr.bf16.mxu0 0
      %3482 = vmatpush1.bf16.msra.mxu0 %v2639
      %3483 = vmatprep.subr.bf16.mxu0 0
      %3484 = vmatpush1.bf16.msra.mxu0 %v2640
      %3485 = vmatprep.subr.bf16.mxu0 0
      %3486 = vmatpush1.bf16.msra.mxu0 %v2641
      %3487 = vmatprep.subr.bf16.mxu0 0
      %3488 = vmatpush1.bf16.msra.mxu0 %v2642
      %3489 = vmatprep.subr.bf16.mxu0 0
      %3490 = vmatpush1.bf16.msra.mxu0 %v2643
      %3491 = vmatprep.subr.bf16.mxu0 0
      %3492 = vmatpush1.bf16.msra.mxu0 %v2644
      %3493 = vmatprep.subr.bf16.mxu0 0
      %3494 = vmatpush1.bf16.msra.mxu0 %v2645
      %3495 = vmatprep.subr.bf16.mxu0 0
      %3496 = vmatpush1.bf16.msra.mxu0 %v2646
      %3497 = vmatprep.subr.bf16.mxu0 0
      %3498 = vmatpush1.bf16.msra.mxu0 %v2647
      %3499 = vmatprep.subr.bf16.mxu0 0
      %3500 = vmatpush1.bf16.msra.mxu0 %v2648
      %3501 = vmatprep.mubr.bf16.mxu0 %v1554
      %3502 = vmatmul.mubr.bf16.gmra.mrb[0].mxu0 %v1553
      %v3503 = vpop.f32.mrb[0].mxu0
      %v3504 = vadd.f32 %v3343, %v3503
      %v3505 = vpop.f32.mrb[0].mxu0
      %v3506 = vpop.f32.mrb[0].mxu0
      %v3507 = vadd.f32 %v3346, %v3506
      %v3508 = vpop.f32.mrb[0].mxu0
      %3509 = vmatprep.mubr.bf16.mxu0 %v1570
      %3510 = vmatmul.mubr.bf16.gmra.mrb[0].mxu0 %v1569
      %v3511 = vpop.f32.mrb[0].mxu0
      %v3512 = vadd.f32 %v3351, %v3511
      %v3513 = vpop.f32.mrb[0].mxu0
      %v3514 = vpop.f32.mrb[0].mxu0
      %v3515 = vadd.f32 %v3354, %v3514
      %v3516 = vpop.f32.mrb[0].mxu0
      %3517 = vmatprep.mubr.bf16.mxu0 %v1586
      %3518 = vmatmul.mubr.bf16.gmra.mrb[0].mxu0 %v1585
      %v3519 = vpop.f32.mrb[0].mxu0
      %v3520 = vadd.f32 %v3359, %v3519
      %v3521 = vpop.f32.mrb[0].mxu0
      %v3522 = vpop.f32.mrb[0].mxu0
      %v3523 = vadd.f32 %v3362, %v3522
      %v3524 = vpop.f32.mrb[0].mxu0
      %3525 = vmatprep.mubr.bf16.mxu0 %v1602
      %3526 = vmatmul.mubr.bf16.gmra.mrb[0].mxu0 %v1601
      %v3527 = vpop.f32.mrb[0].mxu0
      %v3528 = vadd.f32 %v3367, %v3527
      %v3529 = vpop.f32.mrb[0].mxu0
      %v3530 = vpop.f32.mrb[0].mxu0
      %v3531 = vadd.f32 %v3370, %v3530
      %v3532 = vpop.f32.mrb[0].mxu0
      %3533 = vmatprep.mubr.bf16.mxu0 %v1618
      %3534 = vmatmul.mubr.bf16.gmra.mrb[0].mxu0 %v1617
      %v3535 = vpop.f32.mrb[0].mxu0
      %v3536 = vadd.f32 %v3375, %v3535
      %v3537 = vpop.f32.mrb[0].mxu0
      %v3538 = vpop.f32.mrb[0].mxu0
      %v3539 = vadd.f32 %v3378, %v3538
      %v3540 = vpop.f32.mrb[0].mxu0
      %3541 = vmatprep.mubr.bf16.mxu0 %v1634
      %3542 = vmatmul.mubr.bf16.gmra.mrb[0].mxu0 %v1633
      %v3543 = vpop.f32.mrb[0].mxu0
      %v3544 = vadd.f32 %v3383, %v3543
      %v3545 = vpop.f32.mrb[0].mxu0
      %v3546 = vpop.f32.mrb[0].mxu0
      %v3547 = vadd.f32 %v3386, %v3546
      %v3548 = vpop.f32.mrb[0].mxu0
      %3549 = vmatprep.mubr.bf16.mxu0 %v1650
      %3550 = vmatmul.mubr.bf16.gmra.mrb[0].mxu0 %v1649
      %v3551 = vpop.f32.mrb[0].mxu0
      %v3552 = vadd.f32 %v3391, %v3551
      %v3553 = vpop.f32.mrb[0].mxu0
      %v3554 = vpop.f32.mrb[0].mxu0
      %v3555 = vadd.f32 %v3394, %v3554
      %v3556 = vpop.f32.mrb[0].mxu0
      %3557 = vmatprep.mubr.bf16.mxu0 %v1666
      %3558 = vmatmul.mubr.bf16.gmra.mrb[0].mxu0 %v1665
      %v3559 = vpop.f32.mrb[0].mxu0
      %v3560 = vadd.f32 %v3399, %v3559
      %v3561 = vpop.f32.mrb[0].mxu0
      %v3562 = vpop.f32.mrb[0].mxu0
      %v3563 = vadd.f32 %v3402, %v3562
      %v3564 = vpop.f32.mrb[0].mxu0
      %3565 = vmatprep.mubr.bf16.mxu0 %v1682
      %3566 = vmatmul.mubr.bf16.gmra.mrb[0].mxu0 %v1681
      %v3567 = vpop.f32.mrb[0].mxu0
      %v3568 = vadd.f32 %v3407, %v3567
      %v3569 = vpop.f32.mrb[0].mxu0
      %v3570 = vpop.f32.mrb[0].mxu0
      %v3571 = vadd.f32 %v3410, %v3570
      %v3572 = vpop.f32.mrb[0].mxu0
      %3573 = vmatprep.mubr.bf16.mxu0 %v1698
      %3574 = vmatmul.mubr.bf16.gmra.mrb[0].mxu0 %v1697
      %v3575 = vpop.f32.mrb[0].mxu0
      %v3576 = vadd.f32 %v3415, %v3575
      %v3577 = vpop.f32.mrb[0].mxu0
      %v3578 = vpop.f32.mrb[0].mxu0
      %v3579 = vadd.f32 %v3418, %v3578
      %v3580 = vpop.f32.mrb[0].mxu0
      %3581 = vmatprep.mubr.bf16.mxu0 %v1714
      %3582 = vmatmul.mubr.bf16.gmra.mrb[0].mxu0 %v1713
      %v3583 = vpop.f32.mrb[0].mxu0
      %v3584 = vadd.f32 %v3423, %v3583
      %v3585 = vpop.f32.mrb[0].mxu0
      %v3586 = vpop.f32.mrb[0].mxu0
      %v3587 = vadd.f32 %v3426, %v3586
      %v3588 = vpop.f32.mrb[0].mxu0
      %3589 = vmatprep.mubr.bf16.mxu0 %v1730
      %3590 = vmatmul.mubr.bf16.gmra.mrb[0].mxu0 %v1729
      %v3591 = vpop.f32.mrb[0].mxu0
      %v3592 = vadd.f32 %v3431, %v3591
      %v3593 = vpop.f32.mrb[0].mxu0
      %v3594 = vpop.f32.mrb[0].mxu0
      %v3595 = vadd.f32 %v3434, %v3594
      %v3596 = vpop.f32.mrb[0].mxu0
      %3597 = vmatprep.mubr.bf16.mxu0 %v1746
      %3598 = vmatmul.mubr.bf16.gmra.mrb[0].mxu0 %v1745
      %v3599 = vpop.f32.mrb[0].mxu0
      %v3600 = vadd.f32 %v3439, %v3599
      %v3601 = vpop.f32.mrb[0].mxu0
      %v3602 = vpop.f32.mrb[0].mxu0
      %v3603 = vadd.f32 %v3442, %v3602
      %v3604 = vpop.f32.mrb[0].mxu0
      %3605 = vmatprep.mubr.bf16.mxu0 %v1762
      %3606 = vmatmul.mubr.bf16.gmra.mrb[0].mxu0 %v1761
      %v3607 = vpop.f32.mrb[0].mxu0
      %v3608 = vadd.f32 %v3447, %v3607
      %v3609 = vpop.f32.mrb[0].mxu0
      %v3610 = vpop.f32.mrb[0].mxu0
      %v3611 = vadd.f32 %v3450, %v3610
      %v3612 = vpop.f32.mrb[0].mxu0
      %3613 = vmatprep.mubr.bf16.mxu0 %v1778
      %3614 = vmatmul.mubr.bf16.gmra.mrb[0].mxu0 %v1777
      %v3615 = vpop.f32.mrb[0].mxu0
      %v3616 = vadd.f32 %v3455, %v3615
      %v3617 = vpop.f32.mrb[0].mxu0
      %v3618 = vpop.f32.mrb[0].mxu0
      %v3619 = vadd.f32 %v3458, %v3618
      %v3620 = vpop.f32.mrb[0].mxu0
      %3621 = vmatprep.mubr.bf16.mxu0 %v1794
      %3622 = vmatmul.mubr.bf16.gmra.mrb[0].mxu0 %v1793
      %v3623 = vpop.f32.mrb[0].mxu0
      %v3624 = vadd.f32 %v3463, %v3623
      %v3625 = vpop.f32.mrb[0].mxu0
      %v3626 = vpop.f32.mrb[0].mxu0
      %v3627 = vadd.f32 %v3466, %v3626
      %v3628 = vpop.f32.mrb[0].mxu0
      %3629 = vdwg.mxu0
      %3630 = vmatprep.subr.bf16.mxu0 0
      %3631 = vmatpush1.bf16.msra.mxu0 %v2649
      %3632 = vmatprep.subr.bf16.mxu0 0
      %3633 = vmatpush1.bf16.msra.mxu0 %v2650
      %3634 = vmatprep.subr.bf16.mxu0 0
      %3635 = vmatpush1.bf16.msra.mxu0 %v2651
      %3636 = vmatprep.subr.bf16.mxu0 0
      %3637 = vmatpush1.bf16.msra.mxu0 %v2652
      %3638 = vmatprep.subr.bf16.mxu0 0
      %3639 = vmatpush1.bf16.msra.mxu0 %v2653
      %3640 = vmatprep.subr.bf16.mxu0 0
      %3641 = vmatpush1.bf16.msra.mxu0 %v2654
      %3642 = vmatprep.subr.bf16.mxu0 0
      %3643 = vmatpush1.bf16.msra.mxu0 %v2655
      %3644 = vmatprep.subr.bf16.mxu0 0
      %3645 = vmatpush1.bf16.msra.mxu0 %v2656
      %3646 = vmatprep.subr.bf16.mxu0 0
      %3647 = vmatpush1.bf16.msra.mxu0 %v2657
      %3648 = vmatprep.subr.bf16.mxu0 0
      %3649 = vmatpush1.bf16.msra.mxu0 %v2658
      %3650 = vmatprep.subr.bf16.mxu0 0
      %3651 = vmatpush1.bf16.msra.mxu0 %v2659
      %3652 = vmatprep.subr.bf16.mxu0 0
      %3653 = vmatpush1.bf16.msra.mxu0 %v2660
      %3654 = vmatprep.subr.bf16.mxu0 0
      %3655 = vmatpush1.bf16.msra.mxu0 %v2661
      %3656 = vmatprep.subr.bf16.mxu0 0
      %3657 = vmatpush1.bf16.msra.mxu0 %v2662
      %3658 = vmatprep.subr.bf16.mxu0 0
      %3659 = vmatpush1.bf16.msra.mxu0 %v2663
      %3660 = vmatprep.subr.bf16.mxu0 0
      %3661 = vmatpush1.bf16.msra.mxu0 %v2664
      %3662 = vmatprep.mubr.bf16.mxu0 %v1556
      %3663 = vmatmul.mubr.bf16.gmra.mrb[0].mxu0 %v1555
      %v3664 = vpop.f32.mrb[0].mxu0
      %v3665 = vadd.f32 %v3504, %v3664
      %v3666 = vpop.f32.mrb[0].mxu0
      %v3667 = vpop.f32.mrb[0].mxu0
      %v3668 = vadd.f32 %v3507, %v3667
      %v3669 = vpop.f32.mrb[0].mxu0
      %3670 = vmatprep.mubr.bf16.mxu0 %v1572
      %3671 = vmatmul.mubr.bf16.gmra.mrb[0].mxu0 %v1571
      %v3672 = vpop.f32.mrb[0].mxu0
      %v3673 = vadd.f32 %v3512, %v3672
      %v3674 = vpop.f32.mrb[0].mxu0
      %v3675 = vpop.f32.mrb[0].mxu0
      %v3676 = vadd.f32 %v3515, %v3675
      %v3677 = vpop.f32.mrb[0].mxu0
      %3678 = vmatprep.mubr.bf16.mxu0 %v1588
      %3679 = vmatmul.mubr.bf16.gmra.mrb[0].mxu0 %v1587
      %v3680 = vpop.f32.mrb[0].mxu0
      %v3681 = vadd.f32 %v3520, %v3680
      %v3682 = vpop.f32.mrb[0].mxu0
      %v3683 = vpop.f32.mrb[0].mxu0
      %v3684 = vadd.f32 %v3523, %v3683
      %v3685 = vpop.f32.mrb[0].mxu0
      %3686 = vmatprep.mubr.bf16.mxu0 %v1604
      %3687 = vmatmul.mubr.bf16.gmra.mrb[0].mxu0 %v1603
      %v3688 = vpop.f32.mrb[0].mxu0
      %v3689 = vadd.f32 %v3528, %v3688
      %v3690 = vpop.f32.mrb[0].mxu0
      %v3691 = vpop.f32.mrb[0].mxu0
      %v3692 = vadd.f32 %v3531, %v3691
      %v3693 = vpop.f32.mrb[0].mxu0
      %3694 = vmatprep.mubr.bf16.mxu0 %v1620
      %3695 = vmatmul.mubr.bf16.gmra.mrb[0].mxu0 %v1619
      %v3696 = vpop.f32.mrb[0].mxu0
      %v3697 = vadd.f32 %v3536, %v3696
      %v3698 = vpop.f32.mrb[0].mxu0
      %v3699 = vpop.f32.mrb[0].mxu0
      %v3700 = vadd.f32 %v3539, %v3699
      %v3701 = vpop.f32.mrb[0].mxu0
      %3702 = vmatprep.mubr.bf16.mxu0 %v1636
      %3703 = vmatmul.mubr.bf16.gmra.mrb[0].mxu0 %v1635
      %v3704 = vpop.f32.mrb[0].mxu0
      %v3705 = vadd.f32 %v3544, %v3704
      %v3706 = vpop.f32.mrb[0].mxu0
      %v3707 = vpop.f32.mrb[0].mxu0
      %v3708 = vadd.f32 %v3547, %v3707
      %v3709 = vpop.f32.mrb[0].mxu0
      %3710 = vmatprep.mubr.bf16.mxu0 %v1652
      %3711 = vmatmul.mubr.bf16.gmra.mrb[0].mxu0 %v1651
      %v3712 = vpop.f32.mrb[0].mxu0
      %v3713 = vadd.f32 %v3552, %v3712
      %v3714 = vpop.f32.mrb[0].mxu0
      %v3715 = vpop.f32.mrb[0].mxu0
      %v3716 = vadd.f32 %v3555, %v3715
      %v3717 = vpop.f32.mrb[0].mxu0
      %3718 = vmatprep.mubr.bf16.mxu0 %v1668
      %3719 = vmatmul.mubr.bf16.gmra.mrb[0].mxu0 %v1667
      %v3720 = vpop.f32.mrb[0].mxu0
      %v3721 = vadd.f32 %v3560, %v3720
      %v3722 = vpop.f32.mrb[0].mxu0
      %v3723 = vpop.f32.mrb[0].mxu0
      %v3724 = vadd.f32 %v3563, %v3723
      %v3725 = vpop.f32.mrb[0].mxu0
      %3726 = vmatprep.mubr.bf16.mxu0 %v1684
      %3727 = vmatmul.mubr.bf16.gmra.mrb[0].mxu0 %v1683
      %v3728 = vpop.f32.mrb[0].mxu0
      %v3729 = vadd.f32 %v3568, %v3728
      %v3730 = vpop.f32.mrb[0].mxu0
      %v3731 = vpop.f32.mrb[0].mxu0
      %v3732 = vadd.f32 %v3571, %v3731
      %v3733 = vpop.f32.mrb[0].mxu0
      %3734 = vmatprep.mubr.bf16.mxu0 %v1700
      %3735 = vmatmul.mubr.bf16.gmra.mrb[0].mxu0 %v1699
      %v3736 = vpop.f32.mrb[0].mxu0
      %v3737 = vadd.f32 %v3576, %v3736
      %v3738 = vpop.f32.mrb[0].mxu0
      %v3739 = vpop.f32.mrb[0].mxu0
      %v3740 = vadd.f32 %v3579, %v3739
      %v3741 = vpop.f32.mrb[0].mxu0
      %3742 = vmatprep.mubr.bf16.mxu0 %v1716
      %3743 = vmatmul.mubr.bf16.gmra.mrb[0].mxu0 %v1715
      %v3744 = vpop.f32.mrb[0].mxu0
      %v3745 = vadd.f32 %v3584, %v3744
      %v3746 = vpop.f32.mrb[0].mxu0
      %v3747 = vpop.f32.mrb[0].mxu0
      %v3748 = vadd.f32 %v3587, %v3747
      %v3749 = vpop.f32.mrb[0].mxu0
      %3750 = vmatprep.mubr.bf16.mxu0 %v1732
      %3751 = vmatmul.mubr.bf16.gmra.mrb[0].mxu0 %v1731
      %v3752 = vpop.f32.mrb[0].mxu0
      %v3753 = vadd.f32 %v3592, %v3752
      %v3754 = vpop.f32.mrb[0].mxu0
      %v3755 = vpop.f32.mrb[0].mxu0
      %v3756 = vadd.f32 %v3595, %v3755
      %v3757 = vpop.f32.mrb[0].mxu0
      %3758 = vmatprep.mubr.bf16.mxu0 %v1748
      %3759 = vmatmul.mubr.bf16.gmra.mrb[0].mxu0 %v1747
      %v3760 = vpop.f32.mrb[0].mxu0
      %v3761 = vadd.f32 %v3600, %v3760
      %v3762 = vpop.f32.mrb[0].mxu0
      %v3763 = vpop.f32.mrb[0].mxu0
      %v3764 = vadd.f32 %v3603, %v3763
      %v3765 = vpop.f32.mrb[0].mxu0
      %3766 = vmatprep.mubr.bf16.mxu0 %v1764
      %3767 = vmatmul.mubr.bf16.gmra.mrb[0].mxu0 %v1763
      %v3768 = vpop.f32.mrb[0].mxu0
      %v3769 = vadd.f32 %v3608, %v3768
      %v3770 = vpop.f32.mrb[0].mxu0
      %v3771 = vpop.f32.mrb[0].mxu0
      %v3772 = vadd.f32 %v3611, %v3771
      %v3773 = vpop.f32.mrb[0].mxu0
      %3774 = vmatprep.mubr.bf16.mxu0 %v1780
      %3775 = vmatmul.mubr.bf16.gmra.mrb[0].mxu0 %v1779
      %v3776 = vpop.f32.mrb[0].mxu0
      %v3777 = vadd.f32 %v3616, %v3776
      %v3778 = vpop.f32.mrb[0].mxu0
      %v3779 = vpop.f32.mrb[0].mxu0
      %v3780 = vadd.f32 %v3619, %v3779
      %v3781 = vpop.f32.mrb[0].mxu0
      %3782 = vmatprep.mubr.bf16.mxu0 %v1796
      %3783 = vmatmul.mubr.bf16.gmra.mrb[0].mxu0 %v1795
      %v3784 = vpop.f32.mrb[0].mxu0
      %v3785 = vadd.f32 %v3624, %v3784
      %v3786 = vpop.f32.mrb[0].mxu0
      %v3787 = vpop.f32.mrb[0].mxu0
      %v3788 = vadd.f32 %v3627, %v3787
      %v3789 = vpop.f32.mrb[0].mxu0
      %3790 = vdwg.mxu0
      %3791 = vmatprep.subr.bf16.mxu0 0
      %3792 = vmatpush1.bf16.msra.mxu0 %v2665
      %3793 = vmatprep.subr.bf16.mxu0 0
      %3794 = vmatpush1.bf16.msra.mxu0 %v2666
      %3795 = vmatprep.subr.bf16.mxu0 0
      %3796 = vmatpush1.bf16.msra.mxu0 %v2667
      %3797 = vmatprep.subr.bf16.mxu0 0
      %3798 = vmatpush1.bf16.msra.mxu0 %v2668
      %3799 = vmatprep.subr.bf16.mxu0 0
      %3800 = vmatpush1.bf16.msra.mxu0 %v2669
      %3801 = vmatprep.subr.bf16.mxu0 0
      %3802 = vmatpush1.bf16.msra.mxu0 %v2670
      %3803 = vmatprep.subr.bf16.mxu0 0
      %3804 = vmatpush1.bf16.msra.mxu0 %v2671
      %3805 = vmatprep.subr.bf16.mxu0 0
      %3806 = vmatpush1.bf16.msra.mxu0 %v2672
      %3807 = vmatprep.subr.bf16.mxu0 0
      %3808 = vmatpush1.bf16.msra.mxu0 %v2673
      %3809 = vmatprep.subr.bf16.mxu0 0
      %3810 = vmatpush1.bf16.msra.mxu0 %v2674
      %3811 = vmatprep.subr.bf16.mxu0 0
      %3812 = vmatpush1.bf16.msra.mxu0 %v2675
      %3813 = vmatprep.subr.bf16.mxu0 0
      %3814 = vmatpush1.bf16.msra.mxu0 %v2676
      %3815 = vmatprep.subr.bf16.mxu0 0
      %3816 = vmatpush1.bf16.msra.mxu0 %v2677
      %3817 = vmatprep.subr.bf16.mxu0 0
      %3818 = vmatpush1.bf16.msra.mxu0 %v2678
      %3819 = vmatprep.subr.bf16.mxu0 0
      %3820 = vmatpush1.bf16.msra.mxu0 %v2679
      %3821 = vmatprep.subr.bf16.mxu0 0
      %3822 = vmatpush1.bf16.msra.mxu0 %v2680
      %3823 = vmatprep.mubr.bf16.mxu0 %v1558
      %3824 = vmatmul.mubr.bf16.gmra.mrb[0].mxu0 %v1557
      %v3825 = vpop.f32.mrb[0].mxu0
      %v3826 = vadd.f32 %v3665, %v3825
      %v3827 = vpop.f32.mrb[0].mxu0
      %v3828 = vpop.f32.mrb[0].mxu0
      %v3829 = vadd.f32 %v3668, %v3828
      %v3830 = vpop.f32.mrb[0].mxu0
      %3831 = vmatprep.mubr.bf16.mxu0 %v1574
      %3832 = vmatmul.mubr.bf16.gmra.mrb[0].mxu0 %v1573
      %v3833 = vpop.f32.mrb[0].mxu0
      %v3834 = vadd.f32 %v3673, %v3833
      %v3835 = vpop.f32.mrb[0].mxu0
      %v3836 = vpop.f32.mrb[0].mxu0
      %v3837 = vadd.f32 %v3676, %v3836
      %v3838 = vpop.f32.mrb[0].mxu0
      %3839 = vmatprep.mubr.bf16.mxu0 %v1590
      %3840 = vmatmul.mubr.bf16.gmra.mrb[0].mxu0 %v1589
      %v3841 = vpop.f32.mrb[0].mxu0
      %v3842 = vadd.f32 %v3681, %v3841
      %v3843 = vpop.f32.mrb[0].mxu0
      %v3844 = vpop.f32.mrb[0].mxu0
      %v3845 = vadd.f32 %v3684, %v3844
      %v3846 = vpop.f32.mrb[0].mxu0
      %3847 = vmatprep.mubr.bf16.mxu0 %v1606
      %3848 = vmatmul.mubr.bf16.gmra.mrb[0].mxu0 %v1605
      %v3849 = vpop.f32.mrb[0].mxu0
      %v3850 = vadd.f32 %v3689, %v3849
      %v3851 = vpop.f32.mrb[0].mxu0
      %v3852 = vpop.f32.mrb[0].mxu0
      %v3853 = vadd.f32 %v3692, %v3852
      %v3854 = vpop.f32.mrb[0].mxu0
      %3855 = vmatprep.mubr.bf16.mxu0 %v1622
      %3856 = vmatmul.mubr.bf16.gmra.mrb[0].mxu0 %v1621
      %v3857 = vpop.f32.mrb[0].mxu0
      %v3858 = vadd.f32 %v3697, %v3857
      %v3859 = vpop.f32.mrb[0].mxu0
      %v3860 = vpop.f32.mrb[0].mxu0
      %v3861 = vadd.f32 %v3700, %v3860
      %v3862 = vpop.f32.mrb[0].mxu0
      %3863 = vmatprep.mubr.bf16.mxu0 %v1638
      %3864 = vmatmul.mubr.bf16.gmra.mrb[0].mxu0 %v1637
      %v3865 = vpop.f32.mrb[0].mxu0
      %v3866 = vadd.f32 %v3705, %v3865
      %v3867 = vpop.f32.mrb[0].mxu0
      %v3868 = vpop.f32.mrb[0].mxu0
      %v3869 = vadd.f32 %v3708, %v3868
      %v3870 = vpop.f32.mrb[0].mxu0
      %3871 = vmatprep.mubr.bf16.mxu0 %v1654
      %3872 = vmatmul.mubr.bf16.gmra.mrb[0].mxu0 %v1653
      %v3873 = vpop.f32.mrb[0].mxu0
      %v3874 = vadd.f32 %v3713, %v3873
      %v3875 = vpop.f32.mrb[0].mxu0
      %v3876 = vpop.f32.mrb[0].mxu0
      %v3877 = vadd.f32 %v3716, %v3876
      %v3878 = vpop.f32.mrb[0].mxu0
      %3879 = vmatprep.mubr.bf16.mxu0 %v1670
      %3880 = vmatmul.mubr.bf16.gmra.mrb[0].mxu0 %v1669
      %v3881 = vpop.f32.mrb[0].mxu0
      %v3882 = vadd.f32 %v3721, %v3881
      %v3883 = vpop.f32.mrb[0].mxu0
      %v3884 = vpop.f32.mrb[0].mxu0
      %v3885 = vadd.f32 %v3724, %v3884
      %v3886 = vpop.f32.mrb[0].mxu0
      %3887 = vmatprep.mubr.bf16.mxu0 %v1686
      %3888 = vmatmul.mubr.bf16.gmra.mrb[0].mxu0 %v1685
      %v3889 = vpop.f32.mrb[0].mxu0
      %v3890 = vadd.f32 %v3729, %v3889
      %v3891 = vpop.f32.mrb[0].mxu0
      %v3892 = vpop.f32.mrb[0].mxu0
      %v3893 = vadd.f32 %v3732, %v3892
      %v3894 = vpop.f32.mrb[0].mxu0
      %3895 = vmatprep.mubr.bf16.mxu0 %v1702
      %3896 = vmatmul.mubr.bf16.gmra.mrb[0].mxu0 %v1701
      %v3897 = vpop.f32.mrb[0].mxu0
      %v3898 = vadd.f32 %v3737, %v3897
      %v3899 = vpop.f32.mrb[0].mxu0
      %v3900 = vpop.f32.mrb[0].mxu0
      %v3901 = vadd.f32 %v3740, %v3900
      %v3902 = vpop.f32.mrb[0].mxu0
      %3903 = vmatprep.mubr.bf16.mxu0 %v1718
      %3904 = vmatmul.mubr.bf16.gmra.mrb[0].mxu0 %v1717
      %v3905 = vpop.f32.mrb[0].mxu0
      %v3906 = vadd.f32 %v3745, %v3905
      %v3907 = vpop.f32.mrb[0].mxu0
      %v3908 = vpop.f32.mrb[0].mxu0
      %v3909 = vadd.f32 %v3748, %v3908
      %v3910 = vpop.f32.mrb[0].mxu0
      %3911 = vmatprep.mubr.bf16.mxu0 %v1734
      %3912 = vmatmul.mubr.bf16.gmra.mrb[0].mxu0 %v1733
      %v3913 = vpop.f32.mrb[0].mxu0
      %v3914 = vadd.f32 %v3753, %v3913
      %v3915 = vpop.f32.mrb[0].mxu0
      %v3916 = vpop.f32.mrb[0].mxu0
      %v3917 = vadd.f32 %v3756, %v3916
      %v3918 = vpop.f32.mrb[0].mxu0
      %3919 = vmatprep.mubr.bf16.mxu0 %v1750
      %3920 = vmatmul.mubr.bf16.gmra.mrb[0].mxu0 %v1749
      %v3921 = vpop.f32.mrb[0].mxu0
      %v3922 = vadd.f32 %v3761, %v3921
      %v3923 = vpop.f32.mrb[0].mxu0
      %v3924 = vpop.f32.mrb[0].mxu0
      %v3925 = vadd.f32 %v3764, %v3924
      %v3926 = vpop.f32.mrb[0].mxu0
      %3927 = vmatprep.mubr.bf16.mxu0 %v1766
      %3928 = vmatmul.mubr.bf16.gmra.mrb[0].mxu0 %v1765
      %v3929 = vpop.f32.mrb[0].mxu0
      %v3930 = vadd.f32 %v3769, %v3929
      %v3931 = vpop.f32.mrb[0].mxu0
      %v3932 = vpop.f32.mrb[0].mxu0
      %v3933 = vadd.f32 %v3772, %v3932
      %v3934 = vpop.f32.mrb[0].mxu0
      %3935 = vmatprep.mubr.bf16.mxu0 %v1782
      %3936 = vmatmul.mubr.bf16.gmra.mrb[0].mxu0 %v1781
      %v3937 = vpop.f32.mrb[0].mxu0
      %v3938 = vadd.f32 %v3777, %v3937
      %v3939 = vpop.f32.mrb[0].mxu0
      %v3940 = vpop.f32.mrb[0].mxu0
      %v3941 = vadd.f32 %v3780, %v3940
      %v3942 = vpop.f32.mrb[0].mxu0
      %3943 = vmatprep.mubr.bf16.mxu0 %v1798
      %3944 = vmatmul.mubr.bf16.gmra.mrb[0].mxu0 %v1797
      %v3945 = vpop.f32.mrb[0].mxu0
      %v3946 = vadd.f32 %v3785, %v3945
      %v3947 = vpop.f32.mrb[0].mxu0
      %v3948 = vpop.f32.mrb[0].mxu0
      %v3949 = vadd.f32 %v3788, %v3948
      %v3950 = vpop.f32.mrb[0].mxu0
      %3951 = vdwg.mxu0
      %3952 = vmatprep.subr.bf16.mxu0 0
      %3953 = vmatpush1.bf16.msra.mxu0 %v2681
      %3954 = vmatprep.subr.bf16.mxu0 0
      %3955 = vmatpush1.bf16.msra.mxu0 %v2682
      %3956 = vmatprep.subr.bf16.mxu0 0
      %3957 = vmatpush1.bf16.msra.mxu0 %v2683
      %3958 = vmatprep.subr.bf16.mxu0 0
      %3959 = vmatpush1.bf16.msra.mxu0 %v2684
      %3960 = vmatprep.subr.bf16.mxu0 0
      %3961 = vmatpush1.bf16.msra.mxu0 %v2685
      %3962 = vmatprep.subr.bf16.mxu0 0
      %3963 = vmatpush1.bf16.msra.mxu0 %v2686
      %3964 = vmatprep.subr.bf16.mxu0 0
      %3965 = vmatpush1.bf16.msra.mxu0 %v2687
      %3966 = vmatprep.subr.bf16.mxu0 0
      %3967 = vmatpush1.bf16.msra.mxu0 %v2688
      %3968 = vmatprep.subr.bf16.mxu0 0
      %3969 = vmatpush1.bf16.msra.mxu0 %v2689
      %3970 = vmatprep.subr.bf16.mxu0 0
      %3971 = vmatpush1.bf16.msra.mxu0 %v2690
      %3972 = vmatprep.subr.bf16.mxu0 0
      %3973 = vmatpush1.bf16.msra.mxu0 %v2691
      %3974 = vmatprep.subr.bf16.mxu0 0
      %3975 = vmatpush1.bf16.msra.mxu0 %v2692
      %3976 = vmatprep.subr.bf16.mxu0 0
      %3977 = vmatpush1.bf16.msra.mxu0 %v2693
      %3978 = vmatprep.subr.bf16.mxu0 0
      %3979 = vmatpush1.bf16.msra.mxu0 %v2694
      %3980 = vmatprep.subr.bf16.mxu0 0
      %3981 = vmatpush1.bf16.msra.mxu0 %v2695
      %3982 = vmatprep.subr.bf16.mxu0 0
      %3983 = vmatpush1.bf16.msra.mxu0 %v2696
      %3984 = vmatprep.mubr.bf16.mxu0 %v1560
      %3985 = vmatmul.mubr.bf16.gmra.mrb[0].mxu0 %v1559
      %v3986 = vpop.f32.mrb[0].mxu0
      %v3987 = vadd.f32 %v3826, %v3986
      %v3988 = vpop.f32.mrb[0].mxu0
      %v3989 = vpop.f32.mrb[0].mxu0
      %v3990 = vadd.f32 %v3829, %v3989
      %v3991 = vpop.f32.mrb[0].mxu0
      %3992 = vmatprep.mubr.bf16.mxu0 %v1576
      %3993 = vmatmul.mubr.bf16.gmra.mrb[0].mxu0 %v1575
      %v3994 = vpop.f32.mrb[0].mxu0
      %v3995 = vadd.f32 %v3834, %v3994
      %v3996 = vpop.f32.mrb[0].mxu0
      %v3997 = vpop.f32.mrb[0].mxu0
      %v3998 = vadd.f32 %v3837, %v3997
      %v3999 = vpop.f32.mrb[0].mxu0
      %4000 = vmatprep.mubr.bf16.mxu0 %v1592
      %4001 = vmatmul.mubr.bf16.gmra.mrb[0].mxu0 %v1591
      %v4002 = vpop.f32.mrb[0].mxu0
      %v4003 = vadd.f32 %v3842, %v4002
      %v4004 = vpop.f32.mrb[0].mxu0
      %v4005 = vpop.f32.mrb[0].mxu0
      %v4006 = vadd.f32 %v3845, %v4005
      %v4007 = vpop.f32.mrb[0].mxu0
      %4008 = vmatprep.mubr.bf16.mxu0 %v1608
      %4009 = vmatmul.mubr.bf16.gmra.mrb[0].mxu0 %v1607
      %v4010 = vpop.f32.mrb[0].mxu0
      %v4011 = vadd.f32 %v3850, %v4010
      %v4012 = vpop.f32.mrb[0].mxu0
      %v4013 = vpop.f32.mrb[0].mxu0
      %v4014 = vadd.f32 %v3853, %v4013
      %v4015 = vpop.f32.mrb[0].mxu0
      %4016 = vmatprep.mubr.bf16.mxu0 %v1624
      %4017 = vmatmul.mubr.bf16.gmra.mrb[0].mxu0 %v1623
      %v4018 = vpop.f32.mrb[0].mxu0
      %v4019 = vadd.f32 %v3858, %v4018
      %v4020 = vpop.f32.mrb[0].mxu0
      %v4021 = vpop.f32.mrb[0].mxu0
      %v4022 = vadd.f32 %v3861, %v4021
      %v4023 = vpop.f32.mrb[0].mxu0
      %4024 = vmatprep.mubr.bf16.mxu0 %v1640
      %4025 = vmatmul.mubr.bf16.gmra.mrb[0].mxu0 %v1639
      %v4026 = vpop.f32.mrb[0].mxu0
      %v4027 = vadd.f32 %v3866, %v4026
      %v4028 = vpop.f32.mrb[0].mxu0
      %v4029 = vpop.f32.mrb[0].mxu0
      %v4030 = vadd.f32 %v3869, %v4029
      %v4031 = vpop.f32.mrb[0].mxu0
      %4032 = vmatprep.mubr.bf16.mxu0 %v1656
      %4033 = vmatmul.mubr.bf16.gmra.mrb[0].mxu0 %v1655
      %v4034 = vpop.f32.mrb[0].mxu0
      %v4035 = vadd.f32 %v3874, %v4034
      %v4036 = vpop.f32.mrb[0].mxu0
      %v4037 = vpop.f32.mrb[0].mxu0
      %v4038 = vadd.f32 %v3877, %v4037
      %v4039 = vpop.f32.mrb[0].mxu0
      %4040 = vmatprep.mubr.bf16.mxu0 %v1672
      %4041 = vmatmul.mubr.bf16.gmra.mrb[0].mxu0 %v1671
      %v4042 = vpop.f32.mrb[0].mxu0
      %v4043 = vadd.f32 %v3882, %v4042
      %v4044 = vpop.f32.mrb[0].mxu0
      %v4045 = vpop.f32.mrb[0].mxu0
      %v4046 = vadd.f32 %v3885, %v4045
      %v4047 = vpop.f32.mrb[0].mxu0
      %4048 = vmatprep.mubr.bf16.mxu0 %v1688
      %4049 = vmatmul.mubr.bf16.gmra.mrb[0].mxu0 %v1687
      %v4050 = vpop.f32.mrb[0].mxu0
      %v4051 = vadd.f32 %v3890, %v4050
      %v4052 = vpop.f32.mrb[0].mxu0
      %v4053 = vpop.f32.mrb[0].mxu0
      %v4054 = vadd.f32 %v3893, %v4053
      %v4055 = vpop.f32.mrb[0].mxu0
      %4056 = vmatprep.mubr.bf16.mxu0 %v1704
      %4057 = vmatmul.mubr.bf16.gmra.mrb[0].mxu0 %v1703
      %v4058 = vpop.f32.mrb[0].mxu0
      %v4059 = vadd.f32 %v3898, %v4058
      %v4060 = vpop.f32.mrb[0].mxu0
      %v4061 = vpop.f32.mrb[0].mxu0
      %v4062 = vadd.f32 %v3901, %v4061
      %v4063 = vpop.f32.mrb[0].mxu0
      %4064 = vmatprep.mubr.bf16.mxu0 %v1720
      %4065 = vmatmul.mubr.bf16.gmra.mrb[0].mxu0 %v1719
      %v4066 = vpop.f32.mrb[0].mxu0
      %v4067 = vadd.f32 %v3906, %v4066
      %v4068 = vpop.f32.mrb[0].mxu0
      %v4069 = vpop.f32.mrb[0].mxu0
      %v4070 = vadd.f32 %v3909, %v4069
      %v4071 = vpop.f32.mrb[0].mxu0
      %4072 = vmatprep.mubr.bf16.mxu0 %v1736
      %4073 = vmatmul.mubr.bf16.gmra.mrb[0].mxu0 %v1735
      %v4074 = vpop.f32.mrb[0].mxu0
      %v4075 = vadd.f32 %v3914, %v4074
      %v4076 = vpop.f32.mrb[0].mxu0
      %v4077 = vpop.f32.mrb[0].mxu0
      %v4078 = vadd.f32 %v3917, %v4077
      %v4079 = vpop.f32.mrb[0].mxu0
      %4080 = vmatprep.mubr.bf16.mxu0 %v1752
      %4081 = vmatmul.mubr.bf16.gmra.mrb[0].mxu0 %v1751
      %v4082 = vpop.f32.mrb[0].mxu0
      %v4083 = vadd.f32 %v3922, %v4082
      %v4084 = vpop.f32.mrb[0].mxu0
      %v4085 = vpop.f32.mrb[0].mxu0
      %v4086 = vadd.f32 %v3925, %v4085
      %v4087 = vpop.f32.mrb[0].mxu0
      %4088 = vmatprep.mubr.bf16.mxu0 %v1768
      %4089 = vmatmul.mubr.bf16.gmra.mrb[0].mxu0 %v1767
      %v4090 = vpop.f32.mrb[0].mxu0
      %v4091 = vadd.f32 %v3930, %v4090
      %v4092 = vpop.f32.mrb[0].mxu0
      %v4093 = vpop.f32.mrb[0].mxu0
      %v4094 = vadd.f32 %v3933, %v4093
      %v4095 = vpop.f32.mrb[0].mxu0
      %4096 = vmatprep.mubr.bf16.mxu0 %v1784
      %4097 = vmatmul.mubr.bf16.gmra.mrb[0].mxu0 %v1783
      %v4098 = vpop.f32.mrb[0].mxu0
      %v4099 = vadd.f32 %v3938, %v4098
      %v4100 = vpop.f32.mrb[0].mxu0
      %v4101 = vpop.f32.mrb[0].mxu0
      %v4102 = vadd.f32 %v3941, %v4101
      %v4103 = vpop.f32.mrb[0].mxu0
      %4104 = vmatprep.mubr.bf16.mxu0 %v1800
      %4105 = vmatmul.mubr.bf16.gmra.mrb[0].mxu0 %v1799
      %v4106 = vpop.f32.mrb[0].mxu0
      %v4107 = vadd.f32 %v3946, %v4106
      %v4108 = vpop.f32.mrb[0].mxu0
      %v4109 = vpop.f32.mrb[0].mxu0
      %v4110 = vadd.f32 %v3949, %v4109
      %v4111 = vpop.f32.mrb[0].mxu0
      %4112 = vdwg.mxu0
      %v4113 = vpack.c.bf16 %v3990, %v3987
      %v4114 = vpack.c.bf16 %v3998, %v3995
      %v4115 = vpack.c.bf16 %v4006, %v4003
      %v4116 = vpack.c.bf16 %v4014, %v4011
      %v4117 = vpack.c.bf16 %v4022, %v4019
      %v4118 = vpack.c.bf16 %v4030, %v4027
      %v4119 = vpack.c.bf16 %v4038, %v4035
      %v4120 = vpack.c.bf16 %v4046, %v4043
      %v4121 = vpack.c.bf16 %v4054, %v4051
      %v4122 = vpack.c.bf16 %v4062, %v4059
      %v4123 = vpack.c.bf16 %v4070, %v4067
      %v4124 = vpack.c.bf16 %v4078, %v4075
      %v4125 = vpack.c.bf16 %v4086, %v4083
      %v4126 = vpack.c.bf16 %v4094, %v4091
      %v4127 = vpack.c.bf16 %v4102, %v4099
      %v4128 = vpack.c.bf16 %v4110, %v4107
      %v4145 = vunpack.c.l.b16 %v4113
      %v4146 = vunpack.c.h.b16 %v4113
      %v4147 = vunpack.c.l.b16 %v4114
      %v4148 = vunpack.c.h.b16 %v4114
      %v4149 = vunpack.c.l.b16 %v4115
      %v4150 = vunpack.c.h.b16 %v4115
      %v4151 = vunpack.c.l.b16 %v4116
      %v4152 = vunpack.c.h.b16 %v4116
      %v4153 = vunpack.c.l.b16 %v4117
      %v4154 = vunpack.c.h.b16 %v4117
      %v4155 = vunpack.c.l.b16 %v4118
      %v4156 = vunpack.c.h.b16 %v4118
      %v4157 = vunpack.c.l.b16 %v4119
      %v4158 = vunpack.c.h.b16 %v4119
      %v4159 = vunpack.c.l.b16 %v4120
      %v4160 = vunpack.c.h.b16 %v4120
      %v4161 = vunpack.c.l.b16 %v4121
      %v4162 = vunpack.c.h.b16 %v4121
      %v4163 = vunpack.c.l.b16 %v4122
      %v4164 = vunpack.c.h.b16 %v4122
      %v4165 = vunpack.c.l.b16 %v4123
      %v4166 = vunpack.c.h.b16 %v4123
      %v4167 = vunpack.c.l.b16 %v4124
      %v4168 = vunpack.c.h.b16 %v4124
      %v4169 = vunpack.c.l.b16 %v4125
      %v4170 = vunpack.c.h.b16 %v4125
      %v4171 = vunpack.c.l.b16 %v4126
      %v4172 = vunpack.c.h.b16 %v4126
      %v4173 = vunpack.c.l.b16 %v4127
      %v4174 = vunpack.c.h.b16 %v4127
      %v4175 = vunpack.c.l.b16 %v4128
      %v4176 = vunpack.c.h.b16 %v4128
      %v4177 = vpack.c.b16 %v4145, %v4145
      %v4178 = vpack.c.b16 %v4146, %v4146
      %v4179 = vpack.c.b16 %v4147, %v4147
      %v4180 = vpack.c.b16 %v4148, %v4148
      %v4181 = vpack.c.b16 %v4149, %v4149
      %v4182 = vpack.c.b16 %v4150, %v4150
      %v4183 = vpack.c.b16 %v4151, %v4151
      %v4184 = vpack.c.b16 %v4152, %v4152
      %v4185 = vpack.c.b16 %v4153, %v4153
      %v4186 = vpack.c.b16 %v4154, %v4154
      %v4187 = vpack.c.b16 %v4155, %v4155
      %v4188 = vpack.c.b16 %v4156, %v4156
      %v4189 = vpack.c.b16 %v4157, %v4157
      %v4190 = vpack.c.b16 %v4158, %v4158
      %v4191 = vpack.c.b16 %v4159, %v4159
      %v4192 = vpack.c.b16 %v4160, %v4160
      %v4193 = vpack.c.b16 %v4161, %v4161
      %v4194 = vpack.c.b16 %v4162, %v4162
      %v4195 = vpack.c.b16 %v4163, %v4163
      %v4196 = vpack.c.b16 %v4164, %v4164
      %v4197 = vpack.c.b16 %v4165, %v4165
      %v4198 = vpack.c.b16 %v4166, %v4166
      %v4199 = vpack.c.b16 %v4167, %v4167
      %v4200 = vpack.c.b16 %v4168, %v4168
      %v4201 = vpack.c.b16 %v4169, %v4169
      %v4202 = vpack.c.b16 %v4170, %v4170
      %v4203 = vpack.c.b16 %v4171, %v4171
      %v4204 = vpack.c.b16 %v4172, %v4172
      %v4205 = vpack.c.b16 %v4173, %v4173
      %v4206 = vpack.c.b16 %v4174, %v4174
      %v4207 = vpack.c.b16 %v4175, %v4175
      %v4208 = vpack.c.b16 %v4176, %v4176
      %4241 = vst [vmem:[%s250] sm:$0xf] %v4177
      %4242 = vst [vmem:[%s250 + $0x4] sm:$0xf] %v4178
      %4243 = vst [vmem:[%s250 + $0x8] sm:$0xf] %v4179
      %4244 = vst [vmem:[%s250 + $0xc] sm:$0xf] %v4180
      %4245 = vst [vmem:[%s250 + $0x10] sm:$0xf] %v4181
      %4246 = vst [vmem:[%s250 + $0x14] sm:$0xf] %v4182
      %4247 = vst [vmem:[%s250 + $0x18] sm:$0xf] %v4183
      %4248 = vst [vmem:[%s250 + $0x1c] sm:$0xf] %v4184
      %4249 = vst [vmem:[%s250 + $0x20] sm:$0xf] %v4185
      %4250 = vst [vmem:[%s250 + $0x24] sm:$0xf] %v4186
      %4251 = vst [vmem:[%s250 + $0x28] sm:$0xf] %v4187
      %4252 = vst [vmem:[%s250 + $0x2c] sm:$0xf] %v4188
      %4253 = vst [vmem:[%s250 + $0x30] sm:$0xf] %v4189
      %4254 = vst [vmem:[%s250 + $0x34] sm:$0xf] %v4190
      %4255 = vst [vmem:[%s250 + $0x38] sm:$0xf] %v4191
      %4256 = vst [vmem:[%s250 + $0x3c] sm:$0xf] %v4192
      %4257 = vst [vmem:[%s250 + $0x40] sm:$0xf] %v4193
      %4258 = vst [vmem:[%s250 + $0x44] sm:$0xf] %v4194
      %4259 = vst [vmem:[%s250 + $0x48] sm:$0xf] %v4195
      %4260 = vst [vmem:[%s250 + $0x4c] sm:$0xf] %v4196
      %4261 = vst [vmem:[%s250 + $0x50] sm:$0xf] %v4197
      %4262 = vst [vmem:[%s250 + $0x54] sm:$0xf] %v4198
      %4263 = vst [vmem:[%s250 + $0x58] sm:$0xf] %v4199
      %4264 = vst [vmem:[%s250 + $0x5c] sm:$0xf] %v4200
      %4265 = vst [vmem:[%s250 + $0x60] sm:$0xf] %v4201
      %4266 = vst [vmem:[%s250 + $0x64] sm:$0xf] %v4202
      %4267 = vst [vmem:[%s250 + $0x68] sm:$0xf] %v4203
      %4268 = vst [vmem:[%s250 + $0x6c] sm:$0xf] %v4204
      %4269 = vst [vmem:[%s250 + $0x70] sm:$0xf] %v4205
      %4270 = vst [vmem:[%s250 + $0x74] sm:$0xf] %v4206
      %4271 = vst [vmem:[%s250 + $0x78] sm:$0xf] %v4207
      %4272 = vst [vmem:[%s250 + $0x7c] sm:$0xf] %v4208
      %v4273 = vld [vmem:[%s254] sm:$0x1]
      %v4274 = vadd.f32 %v3987, %v3990
      %v4275 = vadd.f32 %v4274, %v3995
      %v4276 = vadd.f32 %v4275, %v3998
      %v4277 = vadd.f32 %v4276, %v4003
      %v4278 = vadd.f32 %v4277, %v4006
      %v4279 = vadd.f32 %v4278, %v4011
      %v4280 = vadd.f32 %v4279, %v4014
      %v4281 = vadd.f32 %v4280, %v4019
      %v4282 = vadd.f32 %v4281, %v4022
      %v4283 = vadd.f32 %v4282, %v4027
      %v4284 = vadd.f32 %v4283, %v4030
      %v4285 = vadd.f32 %v4284, %v4035
      %v4286 = vadd.f32 %v4285, %v4038
      %v4287 = vadd.f32 %v4286, %v4043
      %v4288 = vadd.f32 %v4287, %v4046
      %v4289 = vadd.f32 %v4288, %v4051
      %v4290 = vadd.f32 %v4289, %v4054
      %v4291 = vadd.f32 %v4290, %v4059
      %v4292 = vadd.f32 %v4291, %v4062
      %v4293 = vadd.f32 %v4292, %v4067
      %v4294 = vadd.f32 %v4293, %v4070
      %v4295 = vadd.f32 %v4294, %v4075
      %v4296 = vadd.f32 %v4295, %v4078
      %v4297 = vadd.f32 %v4296, %v4083
      %v4298 = vadd.f32 %v4297, %v4086
      %v4299 = vadd.f32 %v4298, %v4091
      %v4300 = vadd.f32 %v4299, %v4094
      %v4301 = vadd.f32 %v4300, %v4099
      %v4302 = vadd.f32 %v4301, %v4102
      %v4303 = vadd.f32 %v4302, %v4107
      %v4304 = vadd.f32 %v4303, %v4110
      %v4305 = vrot.slane %v4304, 4
      %v4306 = vadd.f32 %v4304, %v4305
      %v4307 = vrot.slane %v4306, 2
      %v4308 = vadd.f32 %v4306, %v4307
      %v4309 = vrot.slane %v4308, 1
      %v4310 = vadd.f32 %v4308, %v4309
      %v4311 = vadd.f32 %v4273, %v4310
      %4312 = vst [vmem:[%s254] sm:$0x1] %v4311
      %v4313 = vld [vmem:[%s257] sm:$0x1]
      %v4314 = vmul.f32 %v3987, %v3987
      %v4315 = vmul.f32 %v3990, %v3990
      %v4316 = vmul.f32 %v3995, %v3995
      %v4317 = vmul.f32 %v3998, %v3998
      %v4318 = vmul.f32 %v4003, %v4003
      %v4319 = vmul.f32 %v4006, %v4006
      %v4320 = vmul.f32 %v4011, %v4011
      %v4321 = vmul.f32 %v4014, %v4014
      %v4322 = vmul.f32 %v4019, %v4019
      %v4323 = vmul.f32 %v4022, %v4022
      %v4324 = vmul.f32 %v4027, %v4027
      %v4325 = vmul.f32 %v4030, %v4030
      %v4326 = vmul.f32 %v4035, %v4035
      %v4327 = vmul.f32 %v4038, %v4038
      %v4328 = vmul.f32 %v4043, %v4043
      %v4329 = vmul.f32 %v4046, %v4046
      %v4330 = vmul.f32 %v4051, %v4051
      %v4331 = vmul.f32 %v4054, %v4054
      %v4332 = vmul.f32 %v4059, %v4059
      %v4333 = vmul.f32 %v4062, %v4062
      %v4334 = vmul.f32 %v4067, %v4067
      %v4335 = vmul.f32 %v4070, %v4070
      %v4336 = vmul.f32 %v4075, %v4075
      %v4337 = vmul.f32 %v4078, %v4078
      %v4338 = vmul.f32 %v4083, %v4083
      %v4339 = vmul.f32 %v4086, %v4086
      %v4340 = vmul.f32 %v4091, %v4091
      %v4341 = vmul.f32 %v4094, %v4094
      %v4342 = vmul.f32 %v4099, %v4099
      %v4343 = vmul.f32 %v4102, %v4102
      %v4344 = vmul.f32 %v4107, %v4107
      %v4345 = vmul.f32 %v4110, %v4110
      %v4346 = vadd.f32 %v4314, %v4315
      %v4347 = vadd.f32 %v4346, %v4316
      %v4348 = vadd.f32 %v4347, %v4317
      %v4349 = vadd.f32 %v4348, %v4318
      %v4350 = vadd.f32 %v4349, %v4319
      %v4351 = vadd.f32 %v4350, %v4320
      %v4352 = vadd.f32 %v4351, %v4321
      %v4353 = vadd.f32 %v4352, %v4322
      %v4354 = vadd.f32 %v4353, %v4323
      %v4355 = vadd.f32 %v4354, %v4324
      %v4356 = vadd.f32 %v4355, %v4325
      %v4357 = vadd.f32 %v4356, %v4326
      %v4358 = vadd.f32 %v4357, %v4327
      %v4359 = vadd.f32 %v4358, %v4328
      %v4360 = vadd.f32 %v4359, %v4329
      %v4361 = vadd.f32 %v4360, %v4330
      %v4362 = vadd.f32 %v4361, %v4331
      %v4363 = vadd.f32 %v4362, %v4332
      %v4364 = vadd.f32 %v4363, %v4333
      %v4365 = vadd.f32 %v4364, %v4334
      %v4366 = vadd.f32 %v4365, %v4335
      %v4367 = vadd.f32 %v4366, %v4336
      %v4368 = vadd.f32 %v4367, %v4337
      %v4369 = vadd.f32 %v4368, %v4338
      %v4370 = vadd.f32 %v4369, %v4339
      %v4371 = vadd.f32 %v4370, %v4340
      %v4372 = vadd.f32 %v4371, %v4341
      %v4373 = vadd.f32 %v4372, %v4342
      %v4374 = vadd.f32 %v4373, %v4343
      %v4375 = vadd.f32 %v4374, %v4344
      %v4376 = vadd.f32 %v4375, %v4345
      %v4377 = vrot.slane %v4376, 4
      %v4378 = vadd.f32 %v4376, %v4377
      %v4379 = vrot.slane %v4378, 2
      %v4380 = vadd.f32 %v4378, %v4379
      %v4381 = vrot.slane %v4380, 1
      %v4382 = vadd.f32 %v4380, %v4381
      %v4383 = vadd.f32 %v4313, %v4382
      %4384 = vst [vmem:[%s257] sm:$0x1] %v4383
      %s4385 = smul.u32 32, %s21
      %p4386 = scmp.lt.s32.totalorder %s4385, 63
      %s4387 = scalar_select %p4386, %s4385, 63
      %p4388 = scmp.lt.s32.totalorder %s20, 0
      %s4389 = scalar_select %p4388, %s20, 0
      %s4390 = sadd.s32 %s4389, %s4387
      %s4391 = smul.addr %s4390, 4
      %s4392 = scalar_lea.vmem %s2, %s4391
      %p4393 = scmp.lt.s32.totalorder %s20, 0
      %s4394 = scalar_select %p4393, %s20, 0
      %s4395 = scalar_lea.vmem %s3, %s4394
      %p4396 = scmp.lt.s32.totalorder %s20, 0
      %s4397 = scalar_select %p4396, %s20, 0
      %s4398 = scalar_lea.vmem %s4, %s4397
      // Predicated region
      $region33: #{frame_discriminator_forward.6} parent=27 // pred_check
        %p4399 = pneg %p100
      $region34: #{frame_discriminator_forward.6} parent=27 // pred_check_branch
        %4401 = sbr.rel (%p4399) target = $region36
      $region35: #{frame_discriminator_forward.6} parent=27 // pred_region
        %s4402 = smul.u32 32, %s21
      $region36: #{frame_discriminator_forward.6} parent=27 // pred_fallthru
        _
      // Predicated region
      $region37: #{frame_discriminator_forward.6} parent=27 // pred_check
        %p4403 = pneg %p126
      $region38: #{frame_discriminator_forward.6} parent=27 // pred_check_branch
        %4405 = sbr.rel (%p4403) target = $region40
      $region39: #{frame_discriminator_forward.6} parent=27 // pred_region
        _
      $region40: #{frame_discriminator_forward.6} parent=27 // pred_fallthru
        _
      // Predicated region
      $region41: #{frame_discriminator_forward.6} parent=27 // pred_check
        %p4406 = pneg %p152
      $region42: #{frame_discriminator_forward.6} parent=27 // pred_check_branch
        %4408 = sbr.rel (%p4406) target = $region44
      $region43: #{frame_discriminator_forward.6} parent=27 // pred_region
        _
      $region44: #{frame_discriminator_forward.6} parent=27 // pred_fallthru
        _
      // Predicated region
      $region45: #{frame_discriminator_forward.6} parent=27 // pred_check
        %p4409 = pneg %p126
      $region46: #{frame_discriminator_forward.6} parent=27 // pred_check_branch
        %4411 = sbr.rel (%p4409) target = $region48
      $region47: #{frame_discriminator_forward.6} parent=27 // pred_region
        %p4412 = scmp.lt.s32.totalorder %s20, 0
        %s4413 = scalar_select %p4412, %s20, 0
        %s4414 = scalar_lea.vmem %s3, %s4413
      $region48: #{frame_discriminator_forward.6} parent=27 // pred_fallthru
        _
      // Predicated region
      $region49: #{frame_discriminator_forward.6} parent=27 // pred_check
        %p4415 = pneg %p152
      $region50: #{frame_discriminator_forward.6} parent=27 // pred_check_branch
        %4417 = sbr.rel (%p4415) target = $region52
      $region51: #{frame_discriminator_forward.6} parent=27 // pred_region
        %p4418 = scmp.lt.s32.totalorder %s20, 0
        %s4419 = scalar_select %p4418, %s20, 0
        %s4420 = scalar_lea.vmem %s4, %s4419
      $region52: #{frame_discriminator_forward.6} parent=27 // pred_fallthru
        _
    $region28: #{frame_discriminator_forward.6} parent=5 // pred_fallthru
      _
    %p4421 = scmp.le.s32.totalorder 2, %s11
    // Predicated region
    $region53: #{frame_discriminator_forward.6} parent=5 // pred_check
      %p4422 = pneg %p4421
    $region54: #{frame_discriminator_forward.6} parent=5 // pred_check_branch
      %4424 = sbr.rel (%p4422) target = $region56
    $region55: #{frame_discriminator_forward.6} parent=5 // pred_region
      %s4425 = ssub.s32 %s11, 2
      // Predicated region
      $region57: #{frame_discriminator_forward.6} parent=55 // pred_check
        %p4426 = pneg %p106
      $region58: #{frame_discriminator_forward.6} parent=55 // pred_check_branch
        %4428 = sbr.rel (%p4426) target = $region60
      $region59: #{frame_discriminator_forward.6} parent=55 // pred_region
        %s4429 = smul.u32 32, %s23
        %p4430 = scmp.lt.s32.totalorder %s4429, 63
        %s4431 = scalar_select %p4430, %s4429, 63
        %p4432 = scmp.lt.s32.totalorder %s22, 0
        %s4433 = scalar_select %p4432, %s22, 0
        %s4434 = sadd.s32 %s4433, %s4431
        %s4435 = smul.addr %s4434, 4
        %s4436 = scalar_lea.vmem %s2, %s4435
      $region60: #{frame_discriminator_forward.6} parent=55 // pred_fallthru
        _
    $region56: #{frame_discriminator_forward.6} parent=5 // pred_fallthru
      _
  $region6: #{frame_discriminator_forward.6} parent=0 // loop_footer
    %s15 = sadd.s32 1, %s11
  $region7: #{frame_discriminator_forward.6} parent=0 // loop_footer_branch
    %10 = sbr.rel target = $region3
  $region8: #{frame_discriminator_forward.6} parent=0 // loop_exit
    _

// kernel: frame_discriminator_forward.7
$region0: #{frame_discriminator_forward.7}
  #allocation0 [shape = 'u32[]', space=smem, size = 0x4, offset = 0x4, fixed_abs, tag = 'smem constant byte address 0x4 - core index']
  #allocation1 [shape = 'u32[144,128]{1,0:T(1,128)}', space=vmem, size = 0x12000, scoped, tag = 'internal scratch']
  %s0 = inlined_call_operand.vmem [shape: bf16[256,2048], index: 0, kind: input, shape index: {}]
  %s1 = inlined_call_operand.vmem [shape: bf16[2048,128], index: 1, kind: input, shape index: {}]
  %s2 = inlined_call_operand.vmem [shape: bf16[256,128], index: 2, kind: output, shape index: {0}]
  %s3 = inlined_call_operand.vmem [shape: f32[1,128], index: 3, kind: output, shape index: {1}]
  %s4 = inlined_call_operand.vmem [shape: f32[1,128], index: 4, kind: output, shape index: {2}]
  %5 = xla_tuple %s2, %s3, %s4
  %s6 = sld [smem:[#allocation0]]
  $region38: #{frame_discriminator_forward.7} parent=0
    _
  %s8 = ssub.s32 1, %s6
  %s9 = scalar_select 0, %s8, %s6
  // Predicated region
  $region2: #{frame_discriminator_forward.7} parent=0 // pred_check
    _
  $region3: #{frame_discriminator_forward.7} parent=0 // pred_check_branch
    %11 = sbr.rel (0) target = $region5
  $region4: #{frame_discriminator_forward.7} parent=0 // pred_region
    _
  $region5: #{frame_discriminator_forward.7} parent=0 // pred_fallthru
    _
  // Predicated region
  $region6: #{frame_discriminator_forward.7} parent=0 // pred_check
    _
  $region7: #{frame_discriminator_forward.7} parent=0 // pred_check_branch
    %13 = sbr.rel (0) target = $region9
  $region8: #{frame_discriminator_forward.7} parent=0 // pred_region
    _
  $region9: #{frame_discriminator_forward.7} parent=0 // pred_fallthru
    _
  %p15 = scmp.eq.s32.totalorder 0, 0
  // Predicated region
  $region10: #{frame_discriminator_forward.7} parent=0 // pred_check
    %p16 = pneg %p15
  $region11: #{frame_discriminator_forward.7} parent=0 // pred_check_branch
    %18 = sbr.rel (%p16) target = $region13
  $region12: #{frame_discriminator_forward.7} parent=0 // pred_region
    %19 = vst [vmem:[%s3] sm:$0x1] 0.0
    %20 = vst [vmem:[%s4] sm:$0x1] 0.0
  $region13: #{frame_discriminator_forward.7} parent=0 // pred_fallthru
    _
  %v21 = vld [vmem:[%s0] sm:$0xff]
  %v22 = vld [vmem:[%s0 + $0x8] sm:$0xff]
  %v23 = vld [vmem:[%s0 + $0x10] sm:$0xff]
  %v24 = vld [vmem:[%s0 + $0x18] sm:$0xff]
  %v25 = vld [vmem:[%s0 + $0x20] sm:$0xff]
  %v26 = vld [vmem:[%s0 + $0x28] sm:$0xff]
  %v27 = vld [vmem:[%s0 + $0x30] sm:$0xff]
  %v28 = vld [vmem:[%s0 + $0x38] sm:$0xff]
  %v29 = vld [vmem:[%s0 + $0x40] sm:$0xff]
  %v30 = vld [vmem:[%s0 + $0x48] sm:$0xff]
  %v31 = vld [vmem:[%s0 + $0x50] sm:$0xff]
  %v32 = vld [vmem:[%s0 + $0x58] sm:$0xff]
  %v33 = vld [vmem:[%s0 + $0x60] sm:$0xff]
  %v34 = vld [vmem:[%s0 + $0x68] sm:$0xff]
  %v35 = vld [vmem:[%s0 + $0x70] sm:$0xff]
  %v36 = vld [vmem:[%s0 + $0x78] sm:$0xff]
  %v37 = vld [vmem:[%s0 + $0x80] sm:$0xff]
  %v38 = vld [vmem:[%s0 + $0x88] sm:$0xff]
  %v39 = vld [vmem:[%s0 + $0x90] sm:$0xff]
  %v40 = vld [vmem:[%s0 + $0x98] sm:$0xff]
  %v41 = vld [vmem:[%s0 + $0xa0] sm:$0xff]
  %v42 = vld [vmem:[%s0 + $0xa8] sm:$0xff]
  %v43 = vld [vmem:[%s0 + $0xb0] sm:$0xff]
  %v44 = vld [vmem:[%s0 + $0xb8] sm:$0xff]
  %v45 = vld [vmem:[%s0 + $0xc0] sm:$0xff]
  %v46 = vld [vmem:[%s0 + $0xc8] sm:$0xff]
  %v47 = vld [vmem:[%s0 + $0xd0] sm:$0xff]
  %v48 = vld [vmem:[%s0 + $0xd8] sm:$0xff]
  %v49 = vld [vmem:[%s0 + $0xe0] sm:$0xff]
  %v50 = vld [vmem:[%s0 + $0xe8] sm:$0xff]
  %v51 = vld [vmem:[%s0 + $0xf0] sm:$0xff]
  %v52 = vld [vmem:[%s0 + $0xf8] sm:$0xff]
  %v53 = vld [vmem:[%s0 + $0x100] sm:$0xff]
  %v54 = vld [vmem:[%s0 + $0x108] sm:$0xff]
  %v55 = vld [vmem:[%s0 + $0x110] sm:$0xff]
  %v56 = vld [vmem:[%s0 + $0x118] sm:$0xff]
  %v57 = vld [vmem:[%s0 + $0x120] sm:$0xff]
  %v58 = vld [vmem:[%s0 + $0x128] sm:$0xff]
  %v59 = vld [vmem:[%s0 + $0x130] sm:$0xff]
  %v60 = vld [vmem:[%s0 + $0x138] sm:$0xff]
  %v61 = vld [vmem:[%s0 + $0x140] sm:$0xff]
  %v62 = vld [vmem:[%s0 + $0x148] sm:$0xff]
  %v63 = vld [vmem:[%s0 + $0x150] sm:$0xff]
  %v64 = vld [vmem:[%s0 + $0x158] sm:$0xff]
  %v65 = vld [vmem:[%s0 + $0x160] sm:$0xff]
  %v66 = vld [vmem:[%s0 + $0x168] sm:$0xff]
  %v67 = vld [vmem:[%s0 + $0x170] sm:$0xff]
  %v68 = vld [vmem:[%s0 + $0x178] sm:$0xff]
  %v69 = vld [vmem:[%s0 + $0x180] sm:$0xff]
  %v70 = vld [vmem:[%s0 + $0x188] sm:$0xff]
  %v71 = vld [vmem:[%s0 + $0x190] sm:$0xff]
  %v72 = vld [vmem:[%s0 + $0x198] sm:$0xff]
  %v73 = vld [vmem:[%s0 + $0x1a0] sm:$0xff]
  %v74 = vld [vmem:[%s0 + $0x1a8] sm:$0xff]
  %v75 = vld [vmem:[%s0 + $0x1b0] sm:$0xff]
  %v76 = vld [vmem:[%s0 + $0x1b8] sm:$0xff]
  %v77 = vld [vmem:[%s0 + $0x1c0] sm:$0xff]
  %v78 = vld [vmem:[%s0 + $0x1c8] sm:$0xff]
  %v79 = vld [vmem:[%s0 + $0x1d0] sm:$0xff]
  %v80 = vld [vmem:[%s0 + $0x1d8] sm:$0xff]
  %v81 = vld [vmem:[%s0 + $0x1e0] sm:$0xff]
  %v82 = vld [vmem:[%s0 + $0x1e8] sm:$0xff]
  %v83 = vld [vmem:[%s0 + $0x1f0] sm:$0xff]
  %v84 = vld [vmem:[%s0 + $0x1f8] sm:$0xff]
  %v85 = vld [vmem:[%s0 + $0x200] sm:$0xff]
  %v86 = vld [vmem:[%s0 + $0x208] sm:$0xff]
  %v87 = vld [vmem:[%s0 + $0x210] sm:$0xff]
  %v88 = vld [vmem:[%s0 + $0x218] sm:$0xff]
  %v89 = vld [vmem:[%s0 + $0x220] sm:$0xff]
  %v90 = vld [vmem:[%s0 + $0x228] sm:$0xff]
  %v91 = vld [vmem:[%s0 + $0x230] sm:$0xff]
  %v92 = vld [vmem:[%s0 + $0x238] sm:$0xff]
  %v93 = vld [vmem:[%s0 + $0x240] sm:$0xff]
  %v94 = vld [vmem:[%s0 + $0x248] sm:$0xff]
  %v95 = vld [vmem:[%s0 + $0x250] sm:$0xff]
  %v96 = vld [vmem:[%s0 + $0x258] sm:$0xff]
  %v97 = vld [vmem:[%s0 + $0x260] sm:$0xff]
  %v98 = vld [vmem:[%s0 + $0x268] sm:$0xff]
  %v99 = vld [vmem:[%s0 + $0x270] sm:$0xff]
  %v100 = vld [vmem:[%s0 + $0x278] sm:$0xff]
  %v101 = vld [vmem:[%s0 + $0x280] sm:$0xff]
  %v102 = vld [vmem:[%s0 + $0x288] sm:$0xff]
  %v103 = vld [vmem:[%s0 + $0x290] sm:$0xff]
  %v104 = vld [vmem:[%s0 + $0x298] sm:$0xff]
  %v105 = vld [vmem:[%s0 + $0x2a0] sm:$0xff]
  %v106 = vld [vmem:[%s0 + $0x2a8] sm:$0xff]
  %v107 = vld [vmem:[%s0 + $0x2b0] sm:$0xff]
  %v108 = vld [vmem:[%s0 + $0x2b8] sm:$0xff]
  %v109 = vld [vmem:[%s0 + $0x2c0] sm:$0xff]
  %v110 = vld [vmem:[%s0 + $0x2c8] sm:$0xff]
  %v111 = vld [vmem:[%s0 + $0x2d0] sm:$0xff]
  %v112 = vld [vmem:[%s0 + $0x2d8] sm:$0xff]
  %v113 = vld [vmem:[%s0 + $0x2e0] sm:$0xff]
  %v114 = vld [vmem:[%s0 + $0x2e8] sm:$0xff]
  %v115 = vld [vmem:[%s0 + $0x2f0] sm:$0xff]
  %v116 = vld [vmem:[%s0 + $0x2f8] sm:$0xff]
  %v117 = vld [vmem:[%s0 + $0x300] sm:$0xff]
  %v118 = vld [vmem:[%s0 + $0x308] sm:$0xff]
  %v119 = vld [vmem:[%s0 + $0x310] sm:$0xff]
  %v120 = vld [vmem:[%s0 + $0x318] sm:$0xff]
  %v121 = vld [vmem:[%s0 + $0x320] sm:$0xff]
  %v122 = vld [vmem:[%s0 + $0x328] sm:$0xff]
  %v123 = vld [vmem:[%s0 + $0x330] sm:$0xff]
  %v124 = vld [vmem:[%s0 + $0x338] sm:$0xff]
  %v125 = vld [vmem:[%s0 + $0x340] sm:$0xff]
  %v126 = vld [vmem:[%s0 + $0x348] sm:$0xff]
  %v127 = vld [vmem:[%s0 + $0x350] sm:$0xff]
  %v128 = vld [vmem:[%s0 + $0x358] sm:$0xff]
  %v129 = vld [vmem:[%s0 + $0x360] sm:$0xff]
  %v130 = vld [vmem:[%s0 + $0x368] sm:$0xff]
  %v131 = vld [vmem:[%s0 + $0x370] sm:$0xff]
  %v132 = vld [vmem:[%s0 + $0x378] sm:$0xff]
  %v133 = vld [vmem:[%s0 + $0x380] sm:$0xff]
  %v134 = vld [vmem:[%s0 + $0x388] sm:$0xff]
  %v135 = vld [vmem:[%s0 + $0x390] sm:$0xff]
  %v136 = vld [vmem:[%s0 + $0x398] sm:$0xff]
  %v137 = vld [vmem:[%s0 + $0x3a0] sm:$0xff]
  %v138 = vld [vmem:[%s0 + $0x3a8] sm:$0xff]
  %v139 = vld [vmem:[%s0 + $0x3b0] sm:$0xff]
  %v140 = vld [vmem:[%s0 + $0x3b8] sm:$0xff]
  %v141 = vld [vmem:[%s0 + $0x3c0] sm:$0xff]
  %v142 = vld [vmem:[%s0 + $0x3c8] sm:$0xff]
  %v143 = vld [vmem:[%s0 + $0x3d0] sm:$0xff]
  %v144 = vld [vmem:[%s0 + $0x3d8] sm:$0xff]
  %v145 = vld [vmem:[%s0 + $0x3e0] sm:$0xff]
  %v146 = vld [vmem:[%s0 + $0x3e8] sm:$0xff]
  %v147 = vld [vmem:[%s0 + $0x3f0] sm:$0xff]
  %v148 = vld [vmem:[%s0 + $0x3f8] sm:$0xff]
  %v149 = vld [vmem:[%s0 + $0x400] sm:$0xff]
  %v150 = vld [vmem:[%s0 + $0x408] sm:$0xff]
  %v151 = vld [vmem:[%s0 + $0x410] sm:$0xff]
  %v152 = vld [vmem:[%s0 + $0x418] sm:$0xff]
  %v153 = vld [vmem:[%s0 + $0x420] sm:$0xff]
  %v154 = vld [vmem:[%s0 + $0x428] sm:$0xff]
  %v155 = vld [vmem:[%s0 + $0x430] sm:$0xff]
  %v156 = vld [vmem:[%s0 + $0x438] sm:$0xff]
  %v157 = vld [vmem:[%s0 + $0x440] sm:$0xff]
  %v158 = vld [vmem:[%s0 + $0x448] sm:$0xff]
  %v159 = vld [vmem:[%s0 + $0x450] sm:$0xff]
  %v160 = vld [vmem:[%s0 + $0x458] sm:$0xff]
  %v161 = vld [vmem:[%s0 + $0x460] sm:$0xff]
  %v162 = vld [vmem:[%s0 + $0x468] sm:$0xff]
  %v163 = vld [vmem:[%s0 + $0x470] sm:$0xff]
  %v164 = vld [vmem:[%s0 + $0x478] sm:$0xff]
  %v165 = vld [vmem:[%s0 + $0x480] sm:$0xff]
  %v166 = vld [vmem:[%s0 + $0x488] sm:$0xff]
  %v167 = vld [vmem:[%s0 + $0x490] sm:$0xff]
  %v168 = vld [vmem:[%s0 + $0x498] sm:$0xff]
  %v169 = vld [vmem:[%s0 + $0x4a0] sm:$0xff]
  %v170 = vld [vmem:[%s0 + $0x4a8] sm:$0xff]
  %v171 = vld [vmem:[%s0 + $0x4b0] sm:$0xff]
  %v172 = vld [vmem:[%s0 + $0x4b8] sm:$0xff]
  %v173 = vld [vmem:[%s0 + $0x4c0] sm:$0xff]
  %v174 = vld [vmem:[%s0 + $0x4c8] sm:$0xff]
  %v175 = vld [vmem:[%s0 + $0x4d0] sm:$0xff]
  %v176 = vld [vmem:[%s0 + $0x4d8] sm:$0xff]
  %v177 = vld [vmem:[%s0 + $0x4e0] sm:$0xff]
  %v178 = vld [vmem:[%s0 + $0x4e8] sm:$0xff]
  %v179 = vld [vmem:[%s0 + $0x4f0] sm:$0xff]
  %v180 = vld [vmem:[%s0 + $0x4f8] sm:$0xff]
  %v181 = vld [vmem:[%s0 + $0x500] sm:$0xff]
  %v182 = vld [vmem:[%s0 + $0x508] sm:$0xff]
  %v183 = vld [vmem:[%s0 + $0x510] sm:$0xff]
  %v184 = vld [vmem:[%s0 + $0x518] sm:$0xff]
  %v185 = vld [vmem:[%s0 + $0x520] sm:$0xff]
  %v186 = vld [vmem:[%s0 + $0x528] sm:$0xff]
  %v187 = vld [vmem:[%s0 + $0x530] sm:$0xff]
  %v188 = vld [vmem:[%s0 + $0x538] sm:$0xff]
  %v189 = vld [vmem:[%s0 + $0x540] sm:$0xff]
  %v190 = vld [vmem:[%s0 + $0x548] sm:$0xff]
  %v191 = vld [vmem:[%s0 + $0x550] sm:$0xff]
  %v192 = vld [vmem:[%s0 + $0x558] sm:$0xff]
  %v193 = vld [vmem:[%s0 + $0x560] sm:$0xff]
  %v194 = vld [vmem:[%s0 + $0x568] sm:$0xff]
  %v195 = vld [vmem:[%s0 + $0x570] sm:$0xff]
  %v196 = vld [vmem:[%s0 + $0x578] sm:$0xff]
  %v197 = vld [vmem:[%s0 + $0x580] sm:$0xff]
  %v198 = vld [vmem:[%s0 + $0x588] sm:$0xff]
  %v199 = vld [vmem:[%s0 + $0x590] sm:$0xff]
  %v200 = vld [vmem:[%s0 + $0x598] sm:$0xff]
  %v201 = vld [vmem:[%s0 + $0x5a0] sm:$0xff]
  %v202 = vld [vmem:[%s0 + $0x5a8] sm:$0xff]
  %v203 = vld [vmem:[%s0 + $0x5b0] sm:$0xff]
  %v204 = vld [vmem:[%s0 + $0x5b8] sm:$0xff]
  %v205 = vld [vmem:[%s0 + $0x5c0] sm:$0xff]
  %v206 = vld [vmem:[%s0 + $0x5c8] sm:$0xff]
  %v207 = vld [vmem:[%s0 + $0x5d0] sm:$0xff]
  %v208 = vld [vmem:[%s0 + $0x5d8] sm:$0xff]
  %v209 = vld [vmem:[%s0 + $0x5e0] sm:$0xff]
  %v210 = vld [vmem:[%s0 + $0x5e8] sm:$0xff]
  %v211 = vld [vmem:[%s0 + $0x5f0] sm:$0xff]
  %v212 = vld [vmem:[%s0 + $0x5f8] sm:$0xff]
  %v213 = vld [vmem:[%s0 + $0x600] sm:$0xff]
  %v214 = vld [vmem:[%s0 + $0x608] sm:$0xff]
  %v215 = vld [vmem:[%s0 + $0x610] sm:$0xff]
  %v216 = vld [vmem:[%s0 + $0x618] sm:$0xff]
  %v217 = vld [vmem:[%s0 + $0x620] sm:$0xff]
  %v218 = vld [vmem:[%s0 + $0x628] sm:$0xff]
  %v219 = vld [vmem:[%s0 + $0x630] sm:$0xff]
  %v220 = vld [vmem:[%s0 + $0x638] sm:$0xff]
  %v221 = vld [vmem:[%s0 + $0x640] sm:$0xff]
  %v222 = vld [vmem:[%s0 + $0x648] sm:$0xff]
  %v223 = vld [vmem:[%s0 + $0x650] sm:$0xff]
  %v224 = vld [vmem:[%s0 + $0x658] sm:$0xff]
  %v225 = vld [vmem:[%s0 + $0x660] sm:$0xff]
  %v226 = vld [vmem:[%s0 + $0x668] sm:$0xff]
  %v227 = vld [vmem:[%s0 + $0x670] sm:$0xff]
  %v228 = vld [vmem:[%s0 + $0x678] sm:$0xff]
  %v229 = vld [vmem:[%s0 + $0x680] sm:$0xff]
  %v230 = vld [vmem:[%s0 + $0x688] sm:$0xff]
  %v231 = vld [vmem:[%s0 + $0x690] sm:$0xff]
  %v232 = vld [vmem:[%s0 + $0x698] sm:$0xff]
  %v233 = vld [vmem:[%s0 + $0x6a0] sm:$0xff]
  %v234 = vld [vmem:[%s0 + $0x6a8] sm:$0xff]
  %v235 = vld [vmem:[%s0 + $0x6b0] sm:$0xff]
  %v236 = vld [vmem:[%s0 + $0x6b8] sm:$0xff]
  %v237 = vld [vmem:[%s0 + $0x6c0] sm:$0xff]
  %v238 = vld [vmem:[%s0 + $0x6c8] sm:$0xff]
  %v239 = vld [vmem:[%s0 + $0x6d0] sm:$0xff]
  %v240 = vld [vmem:[%s0 + $0x6d8] sm:$0xff]
  %v241 = vld [vmem:[%s0 + $0x6e0] sm:$0xff]
  %v242 = vld [vmem:[%s0 + $0x6e8] sm:$0xff]
  %v243 = vld [vmem:[%s0 + $0x6f0] sm:$0xff]
  %v244 = vld [vmem:[%s0 + $0x6f8] sm:$0xff]
  %v245 = vld [vmem:[%s0 + $0x700] sm:$0xff]
  %v246 = vld [vmem:[%s0 + $0x708] sm:$0xff]
  %v247 = vld [vmem:[%s0 + $0x710] sm:$0xff]
  %v248 = vld [vmem:[%s0 + $0x718] sm:$0xff]
  %v249 = vld [vmem:[%s0 + $0x720] sm:$0xff]
  %v250 = vld [vmem:[%s0 + $0x728] sm:$0xff]
  %v251 = vld [vmem:[%s0 + $0x730] sm:$0xff]
  %v252 = vld [vmem:[%s0 + $0x738] sm:$0xff]
  %v253 = vld [vmem:[%s0 + $0x740] sm:$0xff]
  %v254 = vld [vmem:[%s0 + $0x748] sm:$0xff]
  %v255 = vld [vmem:[%s0 + $0x750] sm:$0xff]
  %v256 = vld [vmem:[%s0 + $0x758] sm:$0xff]
  %v257 = vld [vmem:[%s0 + $0x760] sm:$0xff]
  %v258 = vld [vmem:[%s0 + $0x768] sm:$0xff]
  %v259 = vld [vmem:[%s0 + $0x770] sm:$0xff]
  %v260 = vld [vmem:[%s0 + $0x778] sm:$0xff]
  %v261 = vld [vmem:[%s0 + $0x780] sm:$0xff]
  %v262 = vld [vmem:[%s0 + $0x788] sm:$0xff]
  %v263 = vld [vmem:[%s0 + $0x790] sm:$0xff]
  %v264 = vld [vmem:[%s0 + $0x798] sm:$0xff]
  %v265 = vld [vmem:[%s0 + $0x7a0] sm:$0xff]
  %v266 = vld [vmem:[%s0 + $0x7a8] sm:$0xff]
  %v267 = vld [vmem:[%s0 + $0x7b0] sm:$0xff]
  %v268 = vld [vmem:[%s0 + $0x7b8] sm:$0xff]
  %v269 = vld [vmem:[%s0 + $0x7c0] sm:$0xff]
  %v270 = vld [vmem:[%s0 + $0x7c8] sm:$0xff]
  %v271 = vld [vmem:[%s0 + $0x7d0] sm:$0xff]
  %v272 = vld [vmem:[%s0 + $0x7d8] sm:$0xff]
  %v273 = vld [vmem:[%s0 + $0x7e0] sm:$0xff]
  %v274 = vld [vmem:[%s0 + $0x7e8] sm:$0xff]
  %v275 = vld [vmem:[%s0 + $0x7f0] sm:$0xff]
  %v276 = vld [vmem:[%s0 + $0x7f8] sm:$0xff]
  %v277 = vld [vmem:[%s1] sm:$0xf]
  %v278 = vld [vmem:[%s1 + $0x4] sm:$0xf]
  %v279 = vld [vmem:[%s1 + $0x8] sm:$0xf]
  %v280 = vld [vmem:[%s1 + $0xc] sm:$0xf]
  %v281 = vld [vmem:[%s1 + $0x10] sm:$0xf]
  %v282 = vld [vmem:[%s1 + $0x14] sm:$0xf]
  %v283 = vld [vmem:[%s1 + $0x18] sm:$0xf]
  %v284 = vld [vmem:[%s1 + $0x1c] sm:$0xf]
  %v285 = vld [vmem:[%s1 + $0x20] sm:$0xf]
  %v286 = vld [vmem:[%s1 + $0x24] sm:$0xf]
  %v287 = vld [vmem:[%s1 + $0x28] sm:$0xf]
  %v288 = vld [vmem:[%s1 + $0x2c] sm:$0xf]
  %v289 = vld [vmem:[%s1 + $0x30] sm:$0xf]
  %v290 = vld [vmem:[%s1 + $0x34] sm:$0xf]
  %v291 = vld [vmem:[%s1 + $0x38] sm:$0xf]
  %v292 = vld [vmem:[%s1 + $0x3c] sm:$0xf]
  %v293 = vld [vmem:[%s1 + $0x40] sm:$0xf]
  %v294 = vld [vmem:[%s1 + $0x44] sm:$0xf]
  %v295 = vld [vmem:[%s1 + $0x48] sm:$0xf]
  %v296 = vld [vmem:[%s1 + $0x4c] sm:$0xf]
  %v297 = vld [vmem:[%s1 + $0x50] sm:$0xf]
  %v298 = vld [vmem:[%s1 + $0x54] sm:$0xf]
  %v299 = vld [vmem:[%s1 + $0x58] sm:$0xf]
  %v300 = vld [vmem:[%s1 + $0x5c] sm:$0xf]
  %v301 = vld [vmem:[%s1 + $0x60] sm:$0xf]
  %v302 = vld [vmem:[%s1 + $0x64] sm:$0xf]
  %v303 = vld [vmem:[%s1 + $0x68] sm:$0xf]
  %v304 = vld [vmem:[%s1 + $0x6c] sm:$0xf]
  %v305 = vld [vmem:[%s1 + $0x70] sm:$0xf]
  %v306 = vld [vmem:[%s1 + $0x74] sm:$0xf]
  %v307 = vld [vmem:[%s1 + $0x78] sm:$0xf]
  %v308 = vld [vmem:[%s1 + $0x7c] sm:$0xf]
  %v309 = vld [vmem:[%s1 + $0x80] sm:$0xf]
  %v310 = vld [vmem:[%s1 + $0x84] sm:$0xf]
  %v311 = vld [vmem:[%s1 + $0x88] sm:$0xf]
  %v312 = vld [vmem:[%s1 + $0x8c] sm:$0xf]
  %v313 = vld [vmem:[%s1 + $0x90] sm:$0xf]
  %v314 = vld [vmem:[%s1 + $0x94] sm:$0xf]
  %v315 = vld [vmem:[%s1 + $0x98] sm:$0xf]
  %v316 = vld [vmem:[%s1 + $0x9c] sm:$0xf]
  %v317 = vld [vmem:[%s1 + $0xa0] sm:$0xf]
  %v318 = vld [vmem:[%s1 + $0xa4] sm:$0xf]
  %v319 = vld [vmem:[%s1 + $0xa8] sm:$0xf]
  %v320 = vld [vmem:[%s1 + $0xac] sm:$0xf]
  %v321 = vld [vmem:[%s1 + $0xb0] sm:$0xf]
  %v322 = vld [vmem:[%s1 + $0xb4] sm:$0xf]
  %v323 = vld [vmem:[%s1 + $0xb8] sm:$0xf]
  %v324 = vld [vmem:[%s1 + $0xbc] sm:$0xf]
  %v325 = vld [vmem:[%s1 + $0xc0] sm:$0xf]
  %v326 = vld [vmem:[%s1 + $0xc4] sm:$0xf]
  %v327 = vld [vmem:[%s1 + $0xc8] sm:$0xf]
  %v328 = vld [vmem:[%s1 + $0xcc] sm:$0xf]
  %v329 = vld [vmem:[%s1 + $0xd0] sm:$0xf]
  %v330 = vld [vmem:[%s1 + $0xd4] sm:$0xf]
  %v331 = vld [vmem:[%s1 + $0xd8] sm:$0xf]
  %v332 = vld [vmem:[%s1 + $0xdc] sm:$0xf]
  %v333 = vld [vmem:[%s1 + $0xe0] sm:$0xf]
  %v334 = vld [vmem:[%s1 + $0xe4] sm:$0xf]
  %v335 = vld [vmem:[%s1 + $0xe8] sm:$0xf]
  %v336 = vld [vmem:[%s1 + $0xec] sm:$0xf]
  %v337 = vld [vmem:[%s1 + $0xf0] sm:$0xf]
  %v338 = vld [vmem:[%s1 + $0xf4] sm:$0xf]
  %v339 = vld [vmem:[%s1 + $0xf8] sm:$0xf]
  %v340 = vld [vmem:[%s1 + $0xfc] sm:$0xf]
  %v341 = vld [vmem:[%s1 + $0x100] sm:$0xf]
  %v342 = vld [vmem:[%s1 + $0x104] sm:$0xf]
  %v343 = vld [vmem:[%s1 + $0x108] sm:$0xf]
  %v344 = vld [vmem:[%s1 + $0x10c] sm:$0xf]
  %v345 = vld [vmem:[%s1 + $0x110] sm:$0xf]
  %v346 = vld [vmem:[%s1 + $0x114] sm:$0xf]
  %v347 = vld [vmem:[%s1 + $0x118] sm:$0xf]
  %v348 = vld [vmem:[%s1 + $0x11c] sm:$0xf]
  %v349 = vld [vmem:[%s1 + $0x120] sm:$0xf]
  %v350 = vld [vmem:[%s1 + $0x124] sm:$0xf]
  %v351 = vld [vmem:[%s1 + $0x128] sm:$0xf]
  %v352 = vld [vmem:[%s1 + $0x12c] sm:$0xf]
  %v353 = vld [vmem:[%s1 + $0x130] sm:$0xf]
  %v354 = vld [vmem:[%s1 + $0x134] sm:$0xf]
  %v355 = vld [vmem:[%s1 + $0x138] sm:$0xf]
  %v356 = vld [vmem:[%s1 + $0x13c] sm:$0xf]
  %v357 = vld [vmem:[%s1 + $0x140] sm:$0xf]
  %v358 = vld [vmem:[%s1 + $0x144] sm:$0xf]
  %v359 = vld [vmem:[%s1 + $0x148] sm:$0xf]
  %v360 = vld [vmem:[%s1 + $0x14c] sm:$0xf]
  %v361 = vld [vmem:[%s1 + $0x150] sm:$0xf]
  %v362 = vld [vmem:[%s1 + $0x154] sm:$0xf]
  %v363 = vld [vmem:[%s1 + $0x158] sm:$0xf]
  %v364 = vld [vmem:[%s1 + $0x15c] sm:$0xf]
  %v365 = vld [vmem:[%s1 + $0x160] sm:$0xf]
  %v366 = vld [vmem:[%s1 + $0x164] sm:$0xf]
  %v367 = vld [vmem:[%s1 + $0x168] sm:$0xf]
  %v368 = vld [vmem:[%s1 + $0x16c] sm:$0xf]
  %v369 = vld [vmem:[%s1 + $0x170] sm:$0xf]
  %v370 = vld [vmem:[%s1 + $0x174] sm:$0xf]
  %v371 = vld [vmem:[%s1 + $0x178] sm:$0xf]
  %v372 = vld [vmem:[%s1 + $0x17c] sm:$0xf]
  %v373 = vld [vmem:[%s1 + $0x180] sm:$0xf]
  %v374 = vld [vmem:[%s1 + $0x184] sm:$0xf]
  %v375 = vld [vmem:[%s1 + $0x188] sm:$0xf]
  %v376 = vld [vmem:[%s1 + $0x18c] sm:$0xf]
  %v377 = vld [vmem:[%s1 + $0x190] sm:$0xf]
  %v378 = vld [vmem:[%s1 + $0x194] sm:$0xf]
  %v379 = vld [vmem:[%s1 + $0x198] sm:$0xf]
  %v380 = vld [vmem:[%s1 + $0x19c] sm:$0xf]
  %v381 = vld [vmem:[%s1 + $0x1a0] sm:$0xf]
  %v382 = vld [vmem:[%s1 + $0x1a4] sm:$0xf]
  %v383 = vld [vmem:[%s1 + $0x1a8] sm:$0xf]
  %v384 = vld [vmem:[%s1 + $0x1ac] sm:$0xf]
  %v385 = vld [vmem:[%s1 + $0x1b0] sm:$0xf]
  %v386 = vld [vmem:[%s1 + $0x1b4] sm:$0xf]
  %v387 = vld [vmem:[%s1 + $0x1b8] sm:$0xf]
  %v388 = vld [vmem:[%s1 + $0x1bc] sm:$0xf]
  %v389 = vld [vmem:[%s1 + $0x1c0] sm:$0xf]
  %v390 = vld [vmem:[%s1 + $0x1c4] sm:$0xf]
  %v391 = vld [vmem:[%s1 + $0x1c8] sm:$0xf]
  %v392 = vld [vmem:[%s1 + $0x1cc] sm:$0xf]
  %v393 = vld [vmem:[%s1 + $0x1d0] sm:$0xf]
  %v394 = vld [vmem:[%s1 + $0x1d4] sm:$0xf]
  %v395 = vld [vmem:[%s1 + $0x1d8] sm:$0xf]
  %v396 = vld [vmem:[%s1 + $0x1dc] sm:$0xf]
  %v397 = vld [vmem:[%s1 + $0x1e0] sm:$0xf]
  %v398 = vld [vmem:[%s1 + $0x1e4] sm:$0xf]
  %v399 = vld [vmem:[%s1 + $0x1e8] sm:$0xf]
  %v400 = vld [vmem:[%s1 + $0x1ec] sm:$0xf]
  %v401 = vld [vmem:[%s1 + $0x1f0] sm:$0xf]
  %v402 = vld [vmem:[%s1 + $0x1f4] sm:$0xf]
  %v403 = vld [vmem:[%s1 + $0x1f8] sm:$0xf]
  %v404 = vld [vmem:[%s1 + $0x1fc] sm:$0xf]
  %v405 = vld [vmem:[%s1 + $0x200] sm:$0xf]
  %v406 = vld [vmem:[%s1 + $0x204] sm:$0xf]
  %v407 = vld [vmem:[%s1 + $0x208] sm:$0xf]
  %v408 = vld [vmem:[%s1 + $0x20c] sm:$0xf]
  %v409 = vld [vmem:[%s1 + $0x210] sm:$0xf]
  %v410 = vld [vmem:[%s1 + $0x214] sm:$0xf]
  %v411 = vld [vmem:[%s1 + $0x218] sm:$0xf]
  %v412 = vld [vmem:[%s1 + $0x21c] sm:$0xf]
  %v413 = vld [vmem:[%s1 + $0x220] sm:$0xf]
  %v414 = vld [vmem:[%s1 + $0x224] sm:$0xf]
  %v415 = vld [vmem:[%s1 + $0x228] sm:$0xf]
  %v416 = vld [vmem:[%s1 + $0x22c] sm:$0xf]
  %v417 = vld [vmem:[%s1 + $0x230] sm:$0xf]
  %v418 = vld [vmem:[%s1 + $0x234] sm:$0xf]
  %v419 = vld [vmem:[%s1 + $0x238] sm:$0xf]
  %v420 = vld [vmem:[%s1 + $0x23c] sm:$0xf]
  %v421 = vld [vmem:[%s1 + $0x240] sm:$0xf]
  %v422 = vld [vmem:[%s1 + $0x244] sm:$0xf]
  %v423 = vld [vmem:[%s1 + $0x248] sm:$0xf]
  %v424 = vld [vmem:[%s1 + $0x24c] sm:$0xf]
  %v425 = vld [vmem:[%s1 + $0x250] sm:$0xf]
  %v426 = vld [vmem:[%s1 + $0x254] sm:$0xf]
  %v427 = vld [vmem:[%s1 + $0x258] sm:$0xf]
  %v428 = vld [vmem:[%s1 + $0x25c] sm:$0xf]
  %v429 = vld [vmem:[%s1 + $0x260] sm:$0xf]
  %v430 = vld [vmem:[%s1 + $0x264] sm:$0xf]
  %v431 = vld [vmem:[%s1 + $0x268] sm:$0xf]
  %v432 = vld [vmem:[%s1 + $0x26c] sm:$0xf]
  %v433 = vld [vmem:[%s1 + $0x270] sm:$0xf]
  %v434 = vld [vmem:[%s1 + $0x274] sm:$0xf]
  %v435 = vld [vmem:[%s1 + $0x278] sm:$0xf]
  %v436 = vld [vmem:[%s1 + $0x27c] sm:$0xf]
  %v437 = vld [vmem:[%s1 + $0x280] sm:$0xf]
  %v438 = vld [vmem:[%s1 + $0x284] sm:$0xf]
  %v439 = vld [vmem:[%s1 + $0x288] sm:$0xf]
  %v440 = vld [vmem:[%s1 + $0x28c] sm:$0xf]
  %v441 = vld [vmem:[%s1 + $0x290] sm:$0xf]
  %v442 = vld [vmem:[%s1 + $0x294] sm:$0xf]
  %v443 = vld [vmem:[%s1 + $0x298] sm:$0xf]
  %v444 = vld [vmem:[%s1 + $0x29c] sm:$0xf]
  %v445 = vld [vmem:[%s1 + $0x2a0] sm:$0xf]
  %v446 = vld [vmem:[%s1 + $0x2a4] sm:$0xf]
  %v447 = vld [vmem:[%s1 + $0x2a8] sm:$0xf]
  %v448 = vld [vmem:[%s1 + $0x2ac] sm:$0xf]
  %v449 = vld [vmem:[%s1 + $0x2b0] sm:$0xf]
  %v450 = vld [vmem:[%s1 + $0x2b4] sm:$0xf]
  %v451 = vld [vmem:[%s1 + $0x2b8] sm:$0xf]
  %v452 = vld [vmem:[%s1 + $0x2bc] sm:$0xf]
  %v453 = vld [vmem:[%s1 + $0x2c0] sm:$0xf]
  %v454 = vld [vmem:[%s1 + $0x2c4] sm:$0xf]
  %v455 = vld [vmem:[%s1 + $0x2c8] sm:$0xf]
  %v456 = vld [vmem:[%s1 + $0x2cc] sm:$0xf]
  %v457 = vld [vmem:[%s1 + $0x2d0] sm:$0xf]
  %v458 = vld [vmem:[%s1 + $0x2d4] sm:$0xf]
  %v459 = vld [vmem:[%s1 + $0x2d8] sm:$0xf]
  %v460 = vld [vmem:[%s1 + $0x2dc] sm:$0xf]
  %v461 = vld [vmem:[%s1 + $0x2e0] sm:$0xf]
  %v462 = vld [vmem:[%s1 + $0x2e4] sm:$0xf]
  %v463 = vld [vmem:[%s1 + $0x2e8] sm:$0xf]
  %v464 = vld [vmem:[%s1 + $0x2ec] sm:$0xf]
  %v465 = vld [vmem:[%s1 + $0x2f0] sm:$0xf]
  %v466 = vld [vmem:[%s1 + $0x2f4] sm:$0xf]
  %v467 = vld [vmem:[%s1 + $0x2f8] sm:$0xf]
  %v468 = vld [vmem:[%s1 + $0x2fc] sm:$0xf]
  %v469 = vld [vmem:[%s1 + $0x300] sm:$0xf]
  %v470 = vld [vmem:[%s1 + $0x304] sm:$0xf]
  %v471 = vld [vmem:[%s1 + $0x308] sm:$0xf]
  %v472 = vld [vmem:[%s1 + $0x30c] sm:$0xf]
  %v473 = vld [vmem:[%s1 + $0x310] sm:$0xf]
  %v474 = vld [vmem:[%s1 + $0x314] sm:$0xf]
  %v475 = vld [vmem:[%s1 + $0x318] sm:$0xf]
  %v476 = vld [vmem:[%s1 + $0x31c] sm:$0xf]
  %v477 = vld [vmem:[%s1 + $0x320] sm:$0xf]
  %v478 = vld [vmem:[%s1 + $0x324] sm:$0xf]
  %v479 = vld [vmem:[%s1 + $0x328] sm:$0xf]
  %v480 = vld [vmem:[%s1 + $0x32c] sm:$0xf]
  %v481 = vld [vmem:[%s1 + $0x330] sm:$0xf]
  %v482 = vld [vmem:[%s1 + $0x334] sm:$0xf]
  %v483 = vld [vmem:[%s1 + $0x338] sm:$0xf]
  %v484 = vld [vmem:[%s1 + $0x33c] sm:$0xf]
  %v485 = vld [vmem:[%s1 + $0x340] sm:$0xf]
  %v486 = vld [vmem:[%s1 + $0x344] sm:$0xf]
  %v487 = vld [vmem:[%s1 + $0x348] sm:$0xf]
  %v488 = vld [vmem:[%s1 + $0x34c] sm:$0xf]
  %v489 = vld [vmem:[%s1 + $0x350] sm:$0xf]
  %v490 = vld [vmem:[%s1 + $0x354] sm:$0xf]
  %v491 = vld [vmem:[%s1 + $0x358] sm:$0xf]
  %v492 = vld [vmem:[%s1 + $0x35c] sm:$0xf]
  %v493 = vld [vmem:[%s1 + $0x360] sm:$0xf]
  %v494 = vld [vmem:[%s1 + $0x364] sm:$0xf]
  %v495 = vld [vmem:[%s1 + $0x368] sm:$0xf]
  %v496 = vld [vmem:[%s1 + $0x36c] sm:$0xf]
  %v497 = vld [vmem:[%s1 + $0x370] sm:$0xf]
  %v498 = vld [vmem:[%s1 + $0x374] sm:$0xf]
  %v499 = vld [vmem:[%s1 + $0x378] sm:$0xf]
  %v500 = vld [vmem:[%s1 + $0x37c] sm:$0xf]
  %v501 = vld [vmem:[%s1 + $0x380] sm:$0xf]
  %v502 = vld [vmem:[%s1 + $0x384] sm:$0xf]
  %v503 = vld [vmem:[%s1 + $0x388] sm:$0xf]
  %v504 = vld [vmem:[%s1 + $0x38c] sm:$0xf]
  %v505 = vld [vmem:[%s1 + $0x390] sm:$0xf]
  %v506 = vld [vmem:[%s1 + $0x394] sm:$0xf]
  %v507 = vld [vmem:[%s1 + $0x398] sm:$0xf]
  %v508 = vld [vmem:[%s1 + $0x39c] sm:$0xf]
  %v509 = vld [vmem:[%s1 + $0x3a0] sm:$0xf]
  %v510 = vld [vmem:[%s1 + $0x3a4] sm:$0xf]
  %v511 = vld [vmem:[%s1 + $0x3a8] sm:$0xf]
  %v512 = vld [vmem:[%s1 + $0x3ac] sm:$0xf]
  %v513 = vld [vmem:[%s1 + $0x3b0] sm:$0xf]
  %v514 = vld [vmem:[%s1 + $0x3b4] sm:$0xf]
  %v515 = vld [vmem:[%s1 + $0x3b8] sm:$0xf]
  %v516 = vld [vmem:[%s1 + $0x3bc] sm:$0xf]
  %v517 = vld [vmem:[%s1 + $0x3c0] sm:$0xf]
  %v518 = vld [vmem:[%s1 + $0x3c4] sm:$0xf]
  %v519 = vld [vmem:[%s1 + $0x3c8] sm:$0xf]
  %v520 = vld [vmem:[%s1 + $0x3cc] sm:$0xf]
  %v521 = vld [vmem:[%s1 + $0x3d0] sm:$0xf]
  %v522 = vld [vmem:[%s1 + $0x3d4] sm:$0xf]
  %v523 = vld [vmem:[%s1 + $0x3d8] sm:$0xf]
  %v524 = vld [vmem:[%s1 + $0x3dc] sm:$0xf]
  %v525 = vld [vmem:[%s1 + $0x3e0] sm:$0xf]
  %v526 = vld [vmem:[%s1 + $0x3e4] sm:$0xf]
  %v527 = vld [vmem:[%s1 + $0x3e8] sm:$0xf]
  %v528 = vld [vmem:[%s1 + $0x3ec] sm:$0xf]
  %v529 = vld [vmem:[%s1 + $0x3f0] sm:$0xf]
  %v530 = vld [vmem:[%s1 + $0x3f4] sm:$0xf]
  %v531 = vld [vmem:[%s1 + $0x3f8] sm:$0xf]
  %v532 = vld [vmem:[%s1 + $0x3fc] sm:$0xf]
  %v789 = vunpack.c.l.b16 %v21
  %v790 = vunpack.c.h.b16 %v21
  %v791 = vunpack.c.l.b16 %v22
  %v792 = vunpack.c.h.b16 %v22
  %v793 = vunpack.c.l.b16 %v23
  %v794 = vunpack.c.h.b16 %v23
  %v795 = vunpack.c.l.b16 %v24
  %v796 = vunpack.c.h.b16 %v24
  %v797 = vunpack.c.l.b16 %v25
  %v798 = vunpack.c.h.b16 %v25
  %v799 = vunpack.c.l.b16 %v26
  %v800 = vunpack.c.h.b16 %v26
  %v801 = vunpack.c.l.b16 %v27
  %v802 = vunpack.c.h.b16 %v27
  %v803 = vunpack.c.l.b16 %v28
  %v804 = vunpack.c.h.b16 %v28
  %v805 = vunpack.c.l.b16 %v29
  %v806 = vunpack.c.h.b16 %v29
  %v807 = vunpack.c.l.b16 %v30
  %v808 = vunpack.c.h.b16 %v30
  %v809 = vunpack.c.l.b16 %v31
  %v810 = vunpack.c.h.b16 %v31
  %v811 = vunpack.c.l.b16 %v32
  %v812 = vunpack.c.h.b16 %v32
  %v813 = vunpack.c.l.b16 %v33
  %v814 = vunpack.c.h.b16 %v33
  %v815 = vunpack.c.l.b16 %v34
  %v816 = vunpack.c.h.b16 %v34
  %v817 = vunpack.c.l.b16 %v35
  %v818 = vunpack.c.h.b16 %v35
  %v819 = vunpack.c.l.b16 %v36
  %v820 = vunpack.c.h.b16 %v36
  %v821 = vunpack.c.l.b16 %v37
  %v822 = vunpack.c.h.b16 %v37
  %v823 = vunpack.c.l.b16 %v38
  %v824 = vunpack.c.h.b16 %v38
  %v825 = vunpack.c.l.b16 %v39
  %v826 = vunpack.c.h.b16 %v39
  %v827 = vunpack.c.l.b16 %v40
  %v828 = vunpack.c.h.b16 %v40
  %v829 = vunpack.c.l.b16 %v41
  %v830 = vunpack.c.h.b16 %v41
  %v831 = vunpack.c.l.b16 %v42
  %v832 = vunpack.c.h.b16 %v42
  %v833 = vunpack.c.l.b16 %v43
  %v834 = vunpack.c.h.b16 %v43
  %v835 = vunpack.c.l.b16 %v44
  %v836 = vunpack.c.h.b16 %v44
  %v837 = vunpack.c.l.b16 %v45
  %v838 = vunpack.c.h.b16 %v45
  %v839 = vunpack.c.l.b16 %v46
  %v840 = vunpack.c.h.b16 %v46
  %v841 = vunpack.c.l.b16 %v47
  %v842 = vunpack.c.h.b16 %v47
  %v843 = vunpack.c.l.b16 %v48
  %v844 = vunpack.c.h.b16 %v48
  %v845 = vunpack.c.l.b16 %v49
  %v846 = vunpack.c.h.b16 %v49
  %v847 = vunpack.c.l.b16 %v50
  %v848 = vunpack.c.h.b16 %v50
  %v849 = vunpack.c.l.b16 %v51
  %v850 = vunpack.c.h.b16 %v51
  %v851 = vunpack.c.l.b16 %v52
  %v852 = vunpack.c.h.b16 %v52
  %v853 = vunpack.c.l.b16 %v53
  %v854 = vunpack.c.h.b16 %v53
  %v855 = vunpack.c.l.b16 %v54
  %v856 = vunpack.c.h.b16 %v54
  %v857 = vunpack.c.l.b16 %v55
  %v858 = vunpack.c.h.b16 %v55
  %v859 = vunpack.c.l.b16 %v56
  %v860 = vunpack.c.h.b16 %v56
  %v861 = vunpack.c.l.b16 %v57
  %v862 = vunpack.c.h.b16 %v57
  %v863 = vunpack.c.l.b16 %v58
  %v864 = vunpack.c.h.b16 %v58
  %v865 = vunpack.c.l.b16 %v59
  %v866 = vunpack.c.h.b16 %v59
  %v867 = vunpack.c.l.b16 %v60
  %v868 = vunpack.c.h.b16 %v60
  %v869 = vunpack.c.l.b16 %v61
  %v870 = vunpack.c.h.b16 %v61
  %v871 = vunpack.c.l.b16 %v62
  %v872 = vunpack.c.h.b16 %v62
  %v873 = vunpack.c.l.b16 %v63
  %v874 = vunpack.c.h.b16 %v63
  %v875 = vunpack.c.l.b16 %v64
  %v876 = vunpack.c.h.b16 %v64
  %v877 = vunpack.c.l.b16 %v65
  %v878 = vunpack.c.h.b16 %v65
  %v879 = vunpack.c.l.b16 %v66
  %v880 = vunpack.c.h.b16 %v66
  %v881 = vunpack.c.l.b16 %v67
  %v882 = vunpack.c.h.b16 %v67
  %v883 = vunpack.c.l.b16 %v68
  %v884 = vunpack.c.h.b16 %v68
  %v885 = vunpack.c.l.b16 %v69
  %v886 = vunpack.c.h.b16 %v69
  %v887 = vunpack.c.l.b16 %v70
  %v888 = vunpack.c.h.b16 %v70
  %v889 = vunpack.c.l.b16 %v71
  %v890 = vunpack.c.h.b16 %v71
  %v891 = vunpack.c.l.b16 %v72
  %v892 = vunpack.c.h.b16 %v72
  %v893 = vunpack.c.l.b16 %v73
  %v894 = vunpack.c.h.b16 %v73
  %v895 = vunpack.c.l.b16 %v74
  %v896 = vunpack.c.h.b16 %v74
  %v897 = vunpack.c.l.b16 %v75
  %v898 = vunpack.c.h.b16 %v75
  %v899 = vunpack.c.l.b16 %v76
  %v900 = vunpack.c.h.b16 %v76
  %v901 = vunpack.c.l.b16 %v77
  %v902 = vunpack.c.h.b16 %v77
  %v903 = vunpack.c.l.b16 %v78
  %v904 = vunpack.c.h.b16 %v78
  %v905 = vunpack.c.l.b16 %v79
  %v906 = vunpack.c.h.b16 %v79
  %v907 = vunpack.c.l.b16 %v80
  %v908 = vunpack.c.h.b16 %v80
  %v909 = vunpack.c.l.b16 %v81
  %v910 = vunpack.c.h.b16 %v81
  %v911 = vunpack.c.l.b16 %v82
  %v912 = vunpack.c.h.b16 %v82
  %v913 = vunpack.c.l.b16 %v83
  %v914 = vunpack.c.h.b16 %v83
  %v915 = vunpack.c.l.b16 %v84
  %v916 = vunpack.c.h.b16 %v84
  %v917 = vunpack.c.l.b16 %v85
  %v918 = vunpack.c.h.b16 %v85
  %v919 = vunpack.c.l.b16 %v86
  %v920 = vunpack.c.h.b16 %v86
  %v921 = vunpack.c.l.b16 %v87
  %v922 = vunpack.c.h.b16 %v87
  %v923 = vunpack.c.l.b16 %v88
  %v924 = vunpack.c.h.b16 %v88
  %v925 = vunpack.c.l.b16 %v89
  %v926 = vunpack.c.h.b16 %v89
  %v927 = vunpack.c.l.b16 %v90
  %v928 = vunpack.c.h.b16 %v90
  %v929 = vunpack.c.l.b16 %v91
  %v930 = vunpack.c.h.b16 %v91
  %v931 = vunpack.c.l.b16 %v92
  %v932 = vunpack.c.h.b16 %v92
  %v933 = vunpack.c.l.b16 %v93
  %v934 = vunpack.c.h.b16 %v93
  %v935 = vunpack.c.l.b16 %v94
  %v936 = vunpack.c.h.b16 %v94
  %v937 = vunpack.c.l.b16 %v95
  %v938 = vunpack.c.h.b16 %v95
  %v939 = vunpack.c.l.b16 %v96
  %v940 = vunpack.c.h.b16 %v96
  %v941 = vunpack.c.l.b16 %v97
  %v942 = vunpack.c.h.b16 %v97
  %v943 = vunpack.c.l.b16 %v98
  %v944 = vunpack.c.h.b16 %v98
  %v945 = vunpack.c.l.b16 %v99
  %v946 = vunpack.c.h.b16 %v99
  %v947 = vunpack.c.l.b16 %v100
  %v948 = vunpack.c.h.b16 %v100
  %v949 = vunpack.c.l.b16 %v101
  %v950 = vunpack.c.h.b16 %v101
  %v951 = vunpack.c.l.b16 %v102
  %v952 = vunpack.c.h.b16 %v102
  %v953 = vunpack.c.l.b16 %v103
  %v954 = vunpack.c.h.b16 %v103
  %v955 = vunpack.c.l.b16 %v104
  %v956 = vunpack.c.h.b16 %v104
  %v957 = vunpack.c.l.b16 %v105
  %v958 = vunpack.c.h.b16 %v105
  %v959 = vunpack.c.l.b16 %v106
  %v960 = vunpack.c.h.b16 %v106
  %v961 = vunpack.c.l.b16 %v107
  %v962 = vunpack.c.h.b16 %v107
  %v963 = vunpack.c.l.b16 %v108
  %v964 = vunpack.c.h.b16 %v108
  %v965 = vunpack.c.l.b16 %v109
  %v966 = vunpack.c.h.b16 %v109
  %v967 = vunpack.c.l.b16 %v110
  %v968 = vunpack.c.h.b16 %v110
  %v969 = vunpack.c.l.b16 %v111
  %v970 = vunpack.c.h.b16 %v111
  %v971 = vunpack.c.l.b16 %v112
  %v972 = vunpack.c.h.b16 %v112
  %v973 = vunpack.c.l.b16 %v113
  %v974 = vunpack.c.h.b16 %v113
  %v975 = vunpack.c.l.b16 %v114
  %v976 = vunpack.c.h.b16 %v114
  %v977 = vunpack.c.l.b16 %v115
  %v978 = vunpack.c.h.b16 %v115
  %v979 = vunpack.c.l.b16 %v116
  %v980 = vunpack.c.h.b16 %v116
  %v981 = vunpack.c.l.b16 %v117
  %v982 = vunpack.c.h.b16 %v117
  %v983 = vunpack.c.l.b16 %v118
  %v984 = vunpack.c.h.b16 %v118
  %v985 = vunpack.c.l.b16 %v119
  %v986 = vunpack.c.h.b16 %v119
  %v987 = vunpack.c.l.b16 %v120
  %v988 = vunpack.c.h.b16 %v120
  %v989 = vunpack.c.l.b16 %v121
  %v990 = vunpack.c.h.b16 %v121
  %v991 = vunpack.c.l.b16 %v122
  %v992 = vunpack.c.h.b16 %v122
  %v993 = vunpack.c.l.b16 %v123
  %v994 = vunpack.c.h.b16 %v123
  %v995 = vunpack.c.l.b16 %v124
  %v996 = vunpack.c.h.b16 %v124
  %v997 = vunpack.c.l.b16 %v125
  %v998 = vunpack.c.h.b16 %v125
  %v999 = vunpack.c.l.b16 %v126
  %v1000 = vunpack.c.h.b16 %v126
  %v1001 = vunpack.c.l.b16 %v127
  %v1002 = vunpack.c.h.b16 %v127
  %v1003 = vunpack.c.l.b16 %v128
  %v1004 = vunpack.c.h.b16 %v128
  %v1005 = vunpack.c.l.b16 %v129
  %v1006 = vunpack.c.h.b16 %v129
  %v1007 = vunpack.c.l.b16 %v130
  %v1008 = vunpack.c.h.b16 %v130
  %v1009 = vunpack.c.l.b16 %v131
  %v1010 = vunpack.c.h.b16 %v131
  %v1011 = vunpack.c.l.b16 %v132
  %v1012 = vunpack.c.h.b16 %v132
  %v1013 = vunpack.c.l.b16 %v133
  %v1014 = vunpack.c.h.b16 %v133
  %v1015 = vunpack.c.l.b16 %v134
  %v1016 = vunpack.c.h.b16 %v134
  %v1017 = vunpack.c.l.b16 %v135
  %v1018 = vunpack.c.h.b16 %v135
  %v1019 = vunpack.c.l.b16 %v136
  %v1020 = vunpack.c.h.b16 %v136
  %v1021 = vunpack.c.l.b16 %v137
  %v1022 = vunpack.c.h.b16 %v137
  %v1023 = vunpack.c.l.b16 %v138
  %v1024 = vunpack.c.h.b16 %v138
  %v1025 = vunpack.c.l.b16 %v139
  %v1026 = vunpack.c.h.b16 %v139
  %v1027 = vunpack.c.l.b16 %v140
  %v1028 = vunpack.c.h.b16 %v140
  %v1029 = vunpack.c.l.b16 %v141
  %v1030 = vunpack.c.h.b16 %v141
  %v1031 = vunpack.c.l.b16 %v142
  %v1032 = vunpack.c.h.b16 %v142
  %v1033 = vunpack.c.l.b16 %v143
  %v1034 = vunpack.c.h.b16 %v143
  %v1035 = vunpack.c.l.b16 %v144
  %v1036 = vunpack.c.h.b16 %v144
  %v1037 = vunpack.c.l.b16 %v145
  %v1038 = vunpack.c.h.b16 %v145
  %v1039 = vunpack.c.l.b16 %v146
  %v1040 = vunpack.c.h.b16 %v146
  %v1041 = vunpack.c.l.b16 %v147
  %v1042 = vunpack.c.h.b16 %v147
  %v1043 = vunpack.c.l.b16 %v148
  %v1044 = vunpack.c.h.b16 %v148
  %v1045 = vunpack.c.l.b16 %v149
  %v1046 = vunpack.c.h.b16 %v149
  %v1047 = vunpack.c.l.b16 %v150
  %v1048 = vunpack.c.h.b16 %v150
  %v1049 = vunpack.c.l.b16 %v151
  %v1050 = vunpack.c.h.b16 %v151
  %v1051 = vunpack.c.l.b16 %v152
  %v1052 = vunpack.c.h.b16 %v152
  %v1053 = vunpack.c.l.b16 %v153
  %v1054 = vunpack.c.h.b16 %v153
  %v1055 = vunpack.c.l.b16 %v154
  %v1056 = vunpack.c.h.b16 %v154
  %v1057 = vunpack.c.l.b16 %v155
  %v1058 = vunpack.c.h.b16 %v155
  %v1059 = vunpack.c.l.b16 %v156
  %v1060 = vunpack.c.h.b16 %v156
  %v1061 = vunpack.c.l.b16 %v157
  %v1062 = vunpack.c.h.b16 %v157
  %v1063 = vunpack.c.l.b16 %v158
  %v1064 = vunpack.c.h.b16 %v158
  %v1065 = vunpack.c.l.b16 %v159
  %v1066 = vunpack.c.h.b16 %v159
  %v1067 = vunpack.c.l.b16 %v160
  %v1068 = vunpack.c.h.b16 %v160
  %v1069 = vunpack.c.l.b16 %v161
  %v1070 = vunpack.c.h.b16 %v161
  %v1071 = vunpack.c.l.b16 %v162
  %v1072 = vunpack.c.h.b16 %v162
  %v1073 = vunpack.c.l.b16 %v163
  %v1074 = vunpack.c.h.b16 %v163
  %v1075 = vunpack.c.l.b16 %v164
  %v1076 = vunpack.c.h.b16 %v164
  %v1077 = vunpack.c.l.b16 %v165
  %v1078 = vunpack.c.h.b16 %v165
  %v1079 = vunpack.c.l.b16 %v166
  %v1080 = vunpack.c.h.b16 %v166
  %v1081 = vunpack.c.l.b16 %v167
  %v1082 = vunpack.c.h.b16 %v167
  %v1083 = vunpack.c.l.b16 %v168
  %v1084 = vunpack.c.h.b16 %v168
  %v1085 = vunpack.c.l.b16 %v169
  %v1086 = vunpack.c.h.b16 %v169
  %v1087 = vunpack.c.l.b16 %v170
  %v1088 = vunpack.c.h.b16 %v170
  %v1089 = vunpack.c.l.b16 %v171
  %v1090 = vunpack.c.h.b16 %v171
  %v1091 = vunpack.c.l.b16 %v172
  %v1092 = vunpack.c.h.b16 %v172
  %v1093 = vunpack.c.l.b16 %v173
  %v1094 = vunpack.c.h.b16 %v173
  %v1095 = vunpack.c.l.b16 %v174
  %v1096 = vunpack.c.h.b16 %v174
  %v1097 = vunpack.c.l.b16 %v175
  %v1098 = vunpack.c.h.b16 %v175
  %v1099 = vunpack.c.l.b16 %v176
  %v1100 = vunpack.c.h.b16 %v176
  %v1101 = vunpack.c.l.b16 %v177
  %v1102 = vunpack.c.h.b16 %v177
  %v1103 = vunpack.c.l.b16 %v178
  %v1104 = vunpack.c.h.b16 %v178
  %v1105 = vunpack.c.l.b16 %v179
  %v1106 = vunpack.c.h.b16 %v179
  %v1107 = vunpack.c.l.b16 %v180
  %v1108 = vunpack.c.h.b16 %v180
  %v1109 = vunpack.c.l.b16 %v181
  %v1110 = vunpack.c.h.b16 %v181
  %v1111 = vunpack.c.l.b16 %v182
  %v1112 = vunpack.c.h.b16 %v182
  %v1113 = vunpack.c.l.b16 %v183
  %v1114 = vunpack.c.h.b16 %v183
  %v1115 = vunpack.c.l.b16 %v184
  %v1116 = vunpack.c.h.b16 %v184
  %v1117 = vunpack.c.l.b16 %v185
  %v1118 = vunpack.c.h.b16 %v185
  %v1119 = vunpack.c.l.b16 %v186
  %v1120 = vunpack.c.h.b16 %v186
  %v1121 = vunpack.c.l.b16 %v187
  %v1122 = vunpack.c.h.b16 %v187
  %v1123 = vunpack.c.l.b16 %v188
  %v1124 = vunpack.c.h.b16 %v188
  %v1125 = vunpack.c.l.b16 %v189
  %v1126 = vunpack.c.h.b16 %v189
  %v1127 = vunpack.c.l.b16 %v190
  %v1128 = vunpack.c.h.b16 %v190
  %v1129 = vunpack.c.l.b16 %v191
  %v1130 = vunpack.c.h.b16 %v191
  %v1131 = vunpack.c.l.b16 %v192
  %v1132 = vunpack.c.h.b16 %v192
  %v1133 = vunpack.c.l.b16 %v193
  %v1134 = vunpack.c.h.b16 %v193
  %v1135 = vunpack.c.l.b16 %v194
  %v1136 = vunpack.c.h.b16 %v194
  %v1137 = vunpack.c.l.b16 %v195
  %v1138 = vunpack.c.h.b16 %v195
  %v1139 = vunpack.c.l.b16 %v196
  %v1140 = vunpack.c.h.b16 %v196
  %v1141 = vunpack.c.l.b16 %v197
  %v1142 = vunpack.c.h.b16 %v197
  %v1143 = vunpack.c.l.b16 %v198
  %v1144 = vunpack.c.h.b16 %v198
  %v1145 = vunpack.c.l.b16 %v199
  %v1146 = vunpack.c.h.b16 %v199
  %v1147 = vunpack.c.l.b16 %v200
  %v1148 = vunpack.c.h.b16 %v200
  %v1149 = vunpack.c.l.b16 %v201
  %v1150 = vunpack.c.h.b16 %v201
  %v1151 = vunpack.c.l.b16 %v202
  %v1152 = vunpack.c.h.b16 %v202
  %v1153 = vunpack.c.l.b16 %v203
  %v1154 = vunpack.c.h.b16 %v203
  %v1155 = vunpack.c.l.b16 %v204
  %v1156 = vunpack.c.h.b16 %v204
  %v1157 = vunpack.c.l.b16 %v205
  %v1158 = vunpack.c.h.b16 %v205
  %v1159 = vunpack.c.l.b16 %v206
  %v1160 = vunpack.c.h.b16 %v206
  %v1161 = vunpack.c.l.b16 %v207
  %v1162 = vunpack.c.h.b16 %v207
  %v1163 = vunpack.c.l.b16 %v208
  %v1164 = vunpack.c.h.b16 %v208
  %v1165 = vunpack.c.l.b16 %v209
  %v1166 = vunpack.c.h.b16 %v209
  %v1167 = vunpack.c.l.b16 %v210
  %v1168 = vunpack.c.h.b16 %v210
  %v1169 = vunpack.c.l.b16 %v211
  %v1170 = vunpack.c.h.b16 %v211
  %v1171 = vunpack.c.l.b16 %v212
  %v1172 = vunpack.c.h.b16 %v212
  %v1173 = vunpack.c.l.b16 %v213
  %v1174 = vunpack.c.h.b16 %v213
  %v1175 = vunpack.c.l.b16 %v214
  %v1176 = vunpack.c.h.b16 %v214
  %v1177 = vunpack.c.l.b16 %v215
  %v1178 = vunpack.c.h.b16 %v215
  %v1179 = vunpack.c.l.b16 %v216
  %v1180 = vunpack.c.h.b16 %v216
  %v1181 = vunpack.c.l.b16 %v217
  %v1182 = vunpack.c.h.b16 %v217
  %v1183 = vunpack.c.l.b16 %v218
  %v1184 = vunpack.c.h.b16 %v218
  %v1185 = vunpack.c.l.b16 %v219
  %v1186 = vunpack.c.h.b16 %v219
  %v1187 = vunpack.c.l.b16 %v220
  %v1188 = vunpack.c.h.b16 %v220
  %v1189 = vunpack.c.l.b16 %v221
  %v1190 = vunpack.c.h.b16 %v221
  %v1191 = vunpack.c.l.b16 %v222
  %v1192 = vunpack.c.h.b16 %v222
  %v1193 = vunpack.c.l.b16 %v223
  %v1194 = vunpack.c.h.b16 %v223
  %v1195 = vunpack.c.l.b16 %v224
  %v1196 = vunpack.c.h.b16 %v224
  %v1197 = vunpack.c.l.b16 %v225
  %v1198 = vunpack.c.h.b16 %v225
  %v1199 = vunpack.c.l.b16 %v226
  %v1200 = vunpack.c.h.b16 %v226
  %v1201 = vunpack.c.l.b16 %v227
  %v1202 = vunpack.c.h.b16 %v227
  %v1203 = vunpack.c.l.b16 %v228
  %v1204 = vunpack.c.h.b16 %v228
  %v1205 = vunpack.c.l.b16 %v229
  %v1206 = vunpack.c.h.b16 %v229
  %v1207 = vunpack.c.l.b16 %v230
  %v1208 = vunpack.c.h.b16 %v230
  %v1209 = vunpack.c.l.b16 %v231
  %v1210 = vunpack.c.h.b16 %v231
  %v1211 = vunpack.c.l.b16 %v232
  %v1212 = vunpack.c.h.b16 %v232
  %v1213 = vunpack.c.l.b16 %v233
  %v1214 = vunpack.c.h.b16 %v233
  %v1215 = vunpack.c.l.b16 %v234
  %v1216 = vunpack.c.h.b16 %v234
  %v1217 = vunpack.c.l.b16 %v235
  %v1218 = vunpack.c.h.b16 %v235
  %v1219 = vunpack.c.l.b16 %v236
  %v1220 = vunpack.c.h.b16 %v236
  %v1221 = vunpack.c.l.b16 %v237
  %v1222 = vunpack.c.h.b16 %v237
  %v1223 = vunpack.c.l.b16 %v238
  %v1224 = vunpack.c.h.b16 %v238
  %v1225 = vunpack.c.l.b16 %v239
  %v1226 = vunpack.c.h.b16 %v239
  %v1227 = vunpack.c.l.b16 %v240
  %v1228 = vunpack.c.h.b16 %v240
  %v1229 = vunpack.c.l.b16 %v241
  %v1230 = vunpack.c.h.b16 %v241
  %v1231 = vunpack.c.l.b16 %v242
  %v1232 = vunpack.c.h.b16 %v242
  %v1233 = vunpack.c.l.b16 %v243
  %v1234 = vunpack.c.h.b16 %v243
  %v1235 = vunpack.c.l.b16 %v244
  %v1236 = vunpack.c.h.b16 %v244
  %v1237 = vunpack.c.l.b16 %v245
  %v1238 = vunpack.c.h.b16 %v245
  %v1239 = vunpack.c.l.b16 %v246
  %v1240 = vunpack.c.h.b16 %v246
  %v1241 = vunpack.c.l.b16 %v247
  %v1242 = vunpack.c.h.b16 %v247
  %v1243 = vunpack.c.l.b16 %v248
  %v1244 = vunpack.c.h.b16 %v248
  %v1245 = vunpack.c.l.b16 %v249
  %v1246 = vunpack.c.h.b16 %v249
  %v1247 = vunpack.c.l.b16 %v250
  %v1248 = vunpack.c.h.b16 %v250
  %v1249 = vunpack.c.l.b16 %v251
  %v1250 = vunpack.c.h.b16 %v251
  %v1251 = vunpack.c.l.b16 %v252
  %v1252 = vunpack.c.h.b16 %v252
  %v1253 = vunpack.c.l.b16 %v253
  %v1254 = vunpack.c.h.b16 %v253
  %v1255 = vunpack.c.l.b16 %v254
  %v1256 = vunpack.c.h.b16 %v254
  %v1257 = vunpack.c.l.b16 %v255
  %v1258 = vunpack.c.h.b16 %v255
  %v1259 = vunpack.c.l.b16 %v256
  %v1260 = vunpack.c.h.b16 %v256
  %v1261 = vunpack.c.l.b16 %v257
  %v1262 = vunpack.c.h.b16 %v257
  %v1263 = vunpack.c.l.b16 %v258
  %v1264 = vunpack.c.h.b16 %v258
  %v1265 = vunpack.c.l.b16 %v259
  %v1266 = vunpack.c.h.b16 %v259
  %v1267 = vunpack.c.l.b16 %v260
  %v1268 = vunpack.c.h.b16 %v260
  %v1269 = vunpack.c.l.b16 %v261
  %v1270 = vunpack.c.h.b16 %v261
  %v1271 = vunpack.c.l.b16 %v262
  %v1272 = vunpack.c.h.b16 %v262
  %v1273 = vunpack.c.l.b16 %v263
  %v1274 = vunpack.c.h.b16 %v263
  %v1275 = vunpack.c.l.b16 %v264
  %v1276 = vunpack.c.h.b16 %v264
  %v1277 = vunpack.c.l.b16 %v265
  %v1278 = vunpack.c.h.b16 %v265
  %v1279 = vunpack.c.l.b16 %v266
  %v1280 = vunpack.c.h.b16 %v266
  %v1281 = vunpack.c.l.b16 %v267
  %v1282 = vunpack.c.h.b16 %v267
  %v1283 = vunpack.c.l.b16 %v268
  %v1284 = vunpack.c.h.b16 %v268
  %v1285 = vunpack.c.l.b16 %v269
  %v1286 = vunpack.c.h.b16 %v269
  %v1287 = vunpack.c.l.b16 %v270
  %v1288 = vunpack.c.h.b16 %v270
  %v1289 = vunpack.c.l.b16 %v271
  %v1290 = vunpack.c.h.b16 %v271
  %v1291 = vunpack.c.l.b16 %v272
  %v1292 = vunpack.c.h.b16 %v272
  %v1293 = vunpack.c.l.b16 %v273
  %v1294 = vunpack.c.h.b16 %v273
  %v1295 = vunpack.c.l.b16 %v274
  %v1296 = vunpack.c.h.b16 %v274
  %v1297 = vunpack.c.l.b16 %v275
  %v1298 = vunpack.c.h.b16 %v275
  %v1299 = vunpack.c.l.b16 %v276
  %v1300 = vunpack.c.h.b16 %v276
  %v1301 = vpack.c.b16 %v805, %v789
  %v1302 = vpack.c.b16 %v806, %v790
  %v1303 = vpack.c.b16 %v807, %v791
  %v1304 = vpack.c.b16 %v808, %v792
  %v1305 = vpack.c.b16 %v809, %v793
  %v1306 = vpack.c.b16 %v810, %v794
  %v1307 = vpack.c.b16 %v811, %v795
  %v1308 = vpack.c.b16 %v812, %v796
  %v1309 = vpack.c.b16 %v813, %v797
  %v1310 = vpack.c.b16 %v814, %v798
  %v1311 = vpack.c.b16 %v815, %v799
  %v1312 = vpack.c.b16 %v816, %v800
  %v1313 = vpack.c.b16 %v817, %v801
  %v1314 = vpack.c.b16 %v818, %v802
  %v1315 = vpack.c.b16 %v819, %v803
  %v1316 = vpack.c.b16 %v820, %v804
  %v1317 = vpack.c.b16 %v837, %v821
  %v1318 = vpack.c.b16 %v838, %v822
  %v1319 = vpack.c.b16 %v839, %v823
  %v1320 = vpack.c.b16 %v840, %v824
  %v1321 = vpack.c.b16 %v841, %v825
  %v1322 = vpack.c.b16 %v842, %v826
  %v1323 = vpack.c.b16 %v843, %v827
  %v1324 = vpack.c.b16 %v844, %v828
  %v1325 = vpack.c.b16 %v845, %v829
  %v1326 = vpack.c.b16 %v846, %v830
  %v1327 = vpack.c.b16 %v847, %v831
  %v1328 = vpack.c.b16 %v848, %v832
  %v1329 = vpack.c.b16 %v849, %v833
  %v1330 = vpack.c.b16 %v850, %v834
  %v1331 = vpack.c.b16 %v851, %v835
  %v1332 = vpack.c.b16 %v852, %v836
  %v1333 = vpack.c.b16 %v869, %v853
  %v1334 = vpack.c.b16 %v870, %v854
  %v1335 = vpack.c.b16 %v871, %v855
  %v1336 = vpack.c.b16 %v872, %v856
  %v1337 = vpack.c.b16 %v873, %v857
  %v1338 = vpack.c.b16 %v874, %v858
  %v1339 = vpack.c.b16 %v875, %v859
  %v1340 = vpack.c.b16 %v876, %v860
  %v1341 = vpack.c.b16 %v877, %v861
  %v1342 = vpack.c.b16 %v878, %v862
  %v1343 = vpack.c.b16 %v879, %v863
  %v1344 = vpack.c.b16 %v880, %v864
  %v1345 = vpack.c.b16 %v881, %v865
  %v1346 = vpack.c.b16 %v882, %v866
  %v1347 = vpack.c.b16 %v883, %v867
  %v1348 = vpack.c.b16 %v884, %v868
  %v1349 = vpack.c.b16 %v901, %v885
  %v1350 = vpack.c.b16 %v902, %v886
  %v1351 = vpack.c.b16 %v903, %v887
  %v1352 = vpack.c.b16 %v904, %v888
  %v1353 = vpack.c.b16 %v905, %v889
  %v1354 = vpack.c.b16 %v906, %v890
  %v1355 = vpack.c.b16 %v907, %v891
  %v1356 = vpack.c.b16 %v908, %v892
  %v1357 = vpack.c.b16 %v909, %v893
  %v1358 = vpack.c.b16 %v910, %v894
  %v1359 = vpack.c.b16 %v911, %v895
  %v1360 = vpack.c.b16 %v912, %v896
  %v1361 = vpack.c.b16 %v913, %v897
  %v1362 = vpack.c.b16 %v914, %v898
  %v1363 = vpack.c.b16 %v915, %v899
  %v1364 = vpack.c.b16 %v916, %v900
  %v1365 = vpack.c.b16 %v933, %v917
  %v1366 = vpack.c.b16 %v934, %v918
  %v1367 = vpack.c.b16 %v935, %v919
  %v1368 = vpack.c.b16 %v936, %v920
  %v1369 = vpack.c.b16 %v937, %v921
  %v1370 = vpack.c.b16 %v938, %v922
  %v1371 = vpack.c.b16 %v939, %v923
  %v1372 = vpack.c.b16 %v940, %v924
  %v1373 = vpack.c.b16 %v941, %v925
  %v1374 = vpack.c.b16 %v942, %v926
  %v1375 = vpack.c.b16 %v943, %v927
  %v1376 = vpack.c.b16 %v944, %v928
  %v1377 = vpack.c.b16 %v945, %v929
  %v1378 = vpack.c.b16 %v946, %v930
  %v1379 = vpack.c.b16 %v947, %v931
  %v1380 = vpack.c.b16 %v948, %v932
  %v1381 = vpack.c.b16 %v965, %v949
  %v1382 = vpack.c.b16 %v966, %v950
  %v1383 = vpack.c.b16 %v967, %v951
  %v1384 = vpack.c.b16 %v968, %v952
  %v1385 = vpack.c.b16 %v969, %v953
  %v1386 = vpack.c.b16 %v970, %v954
  %v1387 = vpack.c.b16 %v971, %v955
  %v1388 = vpack.c.b16 %v972, %v956
  %v1389 = vpack.c.b16 %v973, %v957
  %v1390 = vpack.c.b16 %v974, %v958
  %v1391 = vpack.c.b16 %v975, %v959
  %v1392 = vpack.c.b16 %v976, %v960
  %v1393 = vpack.c.b16 %v977, %v961
  %v1394 = vpack.c.b16 %v978, %v962
  %v1395 = vpack.c.b16 %v979, %v963
  %v1396 = vpack.c.b16 %v980, %v964
  %v1397 = vpack.c.b16 %v997, %v981
  %v1398 = vpack.c.b16 %v998, %v982
  %v1399 = vpack.c.b16 %v999, %v983
  %v1400 = vpack.c.b16 %v1000, %v984
  %v1401 = vpack.c.b16 %v1001, %v985
  %v1402 = vpack.c.b16 %v1002, %v986
  %v1403 = vpack.c.b16 %v1003, %v987
  %v1404 = vpack.c.b16 %v1004, %v988
  %v1405 = vpack.c.b16 %v1005, %v989
  %v1406 = vpack.c.b16 %v1006, %v990
  %v1407 = vpack.c.b16 %v1007, %v991
  %v1408 = vpack.c.b16 %v1008, %v992
  %v1409 = vpack.c.b16 %v1009, %v993
  %v1410 = vpack.c.b16 %v1010, %v994
  %v1411 = vpack.c.b16 %v1011, %v995
  %v1412 = vpack.c.b16 %v1012, %v996
  %v1413 = vpack.c.b16 %v1029, %v1013
  %v1414 = vpack.c.b16 %v1030, %v1014
  %v1415 = vpack.c.b16 %v1031, %v1015
  %v1416 = vpack.c.b16 %v1032, %v1016
  %v1417 = vpack.c.b16 %v1033, %v1017
  %v1418 = vpack.c.b16 %v1034, %v1018
  %v1419 = vpack.c.b16 %v1035, %v1019
  %v1420 = vpack.c.b16 %v1036, %v1020
  %v1421 = vpack.c.b16 %v1037, %v1021
  %v1422 = vpack.c.b16 %v1038, %v1022
  %v1423 = vpack.c.b16 %v1039, %v1023
  %v1424 = vpack.c.b16 %v1040, %v1024
  %v1425 = vpack.c.b16 %v1041, %v1025
  %v1426 = vpack.c.b16 %v1042, %v1026
  %v1427 = vpack.c.b16 %v1043, %v1027
  %v1428 = vpack.c.b16 %v1044, %v1028
  %v1429 = vpack.c.b16 %v1061, %v1045
  %v1430 = vpack.c.b16 %v1062, %v1046
  %v1431 = vpack.c.b16 %v1063, %v1047
  %v1432 = vpack.c.b16 %v1064, %v1048
  %v1433 = vpack.c.b16 %v1065, %v1049
  %v1434 = vpack.c.b16 %v1066, %v1050
  %v1435 = vpack.c.b16 %v1067, %v1051
  %v1436 = vpack.c.b16 %v1068, %v1052
  %v1437 = vpack.c.b16 %v1069, %v1053
  %v1438 = vpack.c.b16 %v1070, %v1054
  %v1439 = vpack.c.b16 %v1071, %v1055
  %v1440 = vpack.c.b16 %v1072, %v1056
  %v1441 = vpack.c.b16 %v1073, %v1057
  %v1442 = vpack.c.b16 %v1074, %v1058
  %v1443 = vpack.c.b16 %v1075, %v1059
  %v1444 = vpack.c.b16 %v1076, %v1060
  %v1445 = vpack.c.b16 %v1093, %v1077
  %v1446 = vpack.c.b16 %v1094, %v1078
  %v1447 = vpack.c.b16 %v1095, %v1079
  %v1448 = vpack.c.b16 %v1096, %v1080
  %v1449 = vpack.c.b16 %v1097, %v1081
  %v1450 = vpack.c.b16 %v1098, %v1082
  %v1451 = vpack.c.b16 %v1099, %v1083
  %v1452 = vpack.c.b16 %v1100, %v1084
  %v1453 = vpack.c.b16 %v1101, %v1085
  %v1454 = vpack.c.b16 %v1102, %v1086
  %v1455 = vpack.c.b16 %v1103, %v1087
  %v1456 = vpack.c.b16 %v1104, %v1088
  %v1457 = vpack.c.b16 %v1105, %v1089
  %v1458 = vpack.c.b16 %v1106, %v1090
  %v1459 = vpack.c.b16 %v1107, %v1091
  %v1460 = vpack.c.b16 %v1108, %v1092
  %v1461 = vpack.c.b16 %v1125, %v1109
  %v1462 = vpack.c.b16 %v1126, %v1110
  %v1463 = vpack.c.b16 %v1127, %v1111
  %v1464 = vpack.c.b16 %v1128, %v1112
  %v1465 = vpack.c.b16 %v1129, %v1113
  %v1466 = vpack.c.b16 %v1130, %v1114
  %v1467 = vpack.c.b16 %v1131, %v1115
  %v1468 = vpack.c.b16 %v1132, %v1116
  %v1469 = vpack.c.b16 %v1133, %v1117
  %v1470 = vpack.c.b16 %v1134, %v1118
  %v1471 = vpack.c.b16 %v1135, %v1119
  %v1472 = vpack.c.b16 %v1136, %v1120
  %v1473 = vpack.c.b16 %v1137, %v1121
  %v1474 = vpack.c.b16 %v1138, %v1122
  %v1475 = vpack.c.b16 %v1139, %v1123
  %v1476 = vpack.c.b16 %v1140, %v1124
  %v1477 = vpack.c.b16 %v1157, %v1141
  %v1478 = vpack.c.b16 %v1158, %v1142
  %v1479 = vpack.c.b16 %v1159, %v1143
  %v1480 = vpack.c.b16 %v1160, %v1144
  %v1481 = vpack.c.b16 %v1161, %v1145
  %v1482 = vpack.c.b16 %v1162, %v1146
  %v1483 = vpack.c.b16 %v1163, %v1147
  %v1484 = vpack.c.b16 %v1164, %v1148
  %v1485 = vpack.c.b16 %v1165, %v1149
  %v1486 = vpack.c.b16 %v1166, %v1150
  %v1487 = vpack.c.b16 %v1167, %v1151
  %v1488 = vpack.c.b16 %v1168, %v1152
  %v1489 = vpack.c.b16 %v1169, %v1153
  %v1490 = vpack.c.b16 %v1170, %v1154
  %v1491 = vpack.c.b16 %v1171, %v1155
  %v1492 = vpack.c.b16 %v1172, %v1156
  %v1493 = vpack.c.b16 %v1189, %v1173
  %v1494 = vpack.c.b16 %v1190, %v1174
  %v1495 = vpack.c.b16 %v1191, %v1175
  %v1496 = vpack.c.b16 %v1192, %v1176
  %v1497 = vpack.c.b16 %v1193, %v1177
  %v1498 = vpack.c.b16 %v1194, %v1178
  %v1499 = vpack.c.b16 %v1195, %v1179
  %v1500 = vpack.c.b16 %v1196, %v1180
  %v1501 = vpack.c.b16 %v1197, %v1181
  %v1502 = vpack.c.b16 %v1198, %v1182
  %v1503 = vpack.c.b16 %v1199, %v1183
  %v1504 = vpack.c.b16 %v1200, %v1184
  %v1505 = vpack.c.b16 %v1201, %v1185
  %v1506 = vpack.c.b16 %v1202, %v1186
  %v1507 = vpack.c.b16 %v1203, %v1187
  %v1508 = vpack.c.b16 %v1204, %v1188
  %v1509 = vpack.c.b16 %v1221, %v1205
  %v1510 = vpack.c.b16 %v1222, %v1206
  %v1511 = vpack.c.b16 %v1223, %v1207
  %v1512 = vpack.c.b16 %v1224, %v1208
  %v1513 = vpack.c.b16 %v1225, %v1209
  %v1514 = vpack.c.b16 %v1226, %v1210
  %v1515 = vpack.c.b16 %v1227, %v1211
  %v1516 = vpack.c.b16 %v1228, %v1212
  %v1517 = vpack.c.b16 %v1229, %v1213
  %v1518 = vpack.c.b16 %v1230, %v1214
  %v1519 = vpack.c.b16 %v1231, %v1215
  %v1520 = vpack.c.b16 %v1232, %v1216
  %v1521 = vpack.c.b16 %v1233, %v1217
  %v1522 = vpack.c.b16 %v1234, %v1218
  %v1523 = vpack.c.b16 %v1235, %v1219
  %v1524 = vpack.c.b16 %v1236, %v1220
  %v1525 = vpack.c.b16 %v1253, %v1237
  %v1526 = vpack.c.b16 %v1254, %v1238
  %v1527 = vpack.c.b16 %v1255, %v1239
  %v1528 = vpack.c.b16 %v1256, %v1240
  %v1529 = vpack.c.b16 %v1257, %v1241
  %v1530 = vpack.c.b16 %v1258, %v1242
  %v1531 = vpack.c.b16 %v1259, %v1243
  %v1532 = vpack.c.b16 %v1260, %v1244
  %v1533 = vpack.c.b16 %v1261, %v1245
  %v1534 = vpack.c.b16 %v1262, %v1246
  %v1535 = vpack.c.b16 %v1263, %v1247
  %v1536 = vpack.c.b16 %v1264, %v1248
  %v1537 = vpack.c.b16 %v1265, %v1249
  %v1538 = vpack.c.b16 %v1266, %v1250
  %v1539 = vpack.c.b16 %v1267, %v1251
  %v1540 = vpack.c.b16 %v1268, %v1252
  %v1541 = vpack.c.b16 %v1285, %v1269
  %v1542 = vpack.c.b16 %v1286, %v1270
  %v1543 = vpack.c.b16 %v1287, %v1271
  %v1544 = vpack.c.b16 %v1288, %v1272
  %v1545 = vpack.c.b16 %v1289, %v1273
  %v1546 = vpack.c.b16 %v1290, %v1274
  %v1547 = vpack.c.b16 %v1291, %v1275
  %v1548 = vpack.c.b16 %v1292, %v1276
  %v1549 = vpack.c.b16 %v1293, %v1277
  %v1550 = vpack.c.b16 %v1294, %v1278
  %v1551 = vpack.c.b16 %v1295, %v1279
  %v1552 = vpack.c.b16 %v1296, %v1280
  %v1553 = vpack.c.b16 %v1297, %v1281
  %v1554 = vpack.c.b16 %v1298, %v1282
  %v1555 = vpack.c.b16 %v1299, %v1283
  %v1556 = vpack.c.b16 %v1300, %v1284
  %v2069 = vunpack.c.l.b16 %v277
  %v2070 = vunpack.c.l.b16 %v278
  %v2071 = vunpack.c.l.b16 %v279
  %v2072 = vunpack.c.l.b16 %v280
  %v2073 = vunpack.c.l.b16 %v281
  %v2074 = vunpack.c.l.b16 %v282
  %v2075 = vunpack.c.l.b16 %v283
  %v2076 = vunpack.c.l.b16 %v284
  %v2077 = vunpack.c.l.b16 %v285
  %v2078 = vunpack.c.l.b16 %v286
  %v2079 = vunpack.c.l.b16 %v287
  %v2080 = vunpack.c.l.b16 %v288
  %v2081 = vunpack.c.l.b16 %v289
  %v2082 = vunpack.c.l.b16 %v290
  %v2083 = vunpack.c.l.b16 %v291
  %v2084 = vunpack.c.l.b16 %v292
  %v2085 = vunpack.c.l.b16 %v293
  %v2086 = vunpack.c.l.b16 %v294
  %v2087 = vunpack.c.l.b16 %v295
  %v2088 = vunpack.c.l.b16 %v296
  %v2089 = vunpack.c.l.b16 %v297
  %v2090 = vunpack.c.l.b16 %v298
  %v2091 = vunpack.c.l.b16 %v299
  %v2092 = vunpack.c.l.b16 %v300
  %v2093 = vunpack.c.l.b16 %v301
  %v2094 = vunpack.c.l.b16 %v302
  %v2095 = vunpack.c.l.b16 %v303
  %v2096 = vunpack.c.l.b16 %v304
  %v2097 = vunpack.c.l.b16 %v305
  %v2098 = vunpack.c.l.b16 %v306
  %v2099 = vunpack.c.l.b16 %v307
  %v2100 = vunpack.c.l.b16 %v308
  %v2101 = vunpack.c.l.b16 %v309
  %v2102 = vunpack.c.l.b16 %v310
  %v2103 = vunpack.c.l.b16 %v311
  %v2104 = vunpack.c.l.b16 %v312
  %v2105 = vunpack.c.l.b16 %v313
  %v2106 = vunpack.c.l.b16 %v314
  %v2107 = vunpack.c.l.b16 %v315
  %v2108 = vunpack.c.l.b16 %v316
  %v2109 = vunpack.c.l.b16 %v317
  %v2110 = vunpack.c.l.b16 %v318
  %v2111 = vunpack.c.l.b16 %v319
  %v2112 = vunpack.c.l.b16 %v320
  %v2113 = vunpack.c.l.b16 %v321
  %v2114 = vunpack.c.l.b16 %v322
  %v2115 = vunpack.c.l.b16 %v323
  %v2116 = vunpack.c.l.b16 %v324
  %v2117 = vunpack.c.l.b16 %v325
  %v2118 = vunpack.c.l.b16 %v326
  %v2119 = vunpack.c.l.b16 %v327
  %v2120 = vunpack.c.l.b16 %v328
  %v2121 = vunpack.c.l.b16 %v329
  %v2122 = vunpack.c.l.b16 %v330
  %v2123 = vunpack.c.l.b16 %v331
  %v2124 = vunpack.c.l.b16 %v332
  %v2125 = vunpack.c.l.b16 %v333
  %v2126 = vunpack.c.l.b16 %v334
  %v2127 = vunpack.c.l.b16 %v335
  %v2128 = vunpack.c.l.b16 %v336
  %v2129 = vunpack.c.l.b16 %v337
  %v2130 = vunpack.c.l.b16 %v338
  %v2131 = vunpack.c.l.b16 %v339
  %v2132 = vunpack.c.l.b16 %v340
  %v2133 = vunpack.c.l.b16 %v341
  %v2134 = vunpack.c.l.b16 %v342
  %v2135 = vunpack.c.l.b16 %v343
  %v2136 = vunpack.c.l.b16 %v344
  %v2137 = vunpack.c.l.b16 %v345
  %v2138 = vunpack.c.l.b16 %v346
  %v2139 = vunpack.c.l.b16 %v347
  %v2140 = vunpack.c.l.b16 %v348
  %v2141 = vunpack.c.l.b16 %v349
  %v2142 = vunpack.c.l.b16 %v350
  %v2143 = vunpack.c.l.b16 %v351
  %v2144 = vunpack.c.l.b16 %v352
  %v2145 = vunpack.c.l.b16 %v353
  %v2146 = vunpack.c.l.b16 %v354
  %v2147 = vunpack.c.l.b16 %v355
  %v2148 = vunpack.c.l.b16 %v356
  %v2149 = vunpack.c.l.b16 %v357
  %v2150 = vunpack.c.l.b16 %v358
  %v2151 = vunpack.c.l.b16 %v359
  %v2152 = vunpack.c.l.b16 %v360
  %v2153 = vunpack.c.l.b16 %v361
  %v2154 = vunpack.c.l.b16 %v362
  %v2155 = vunpack.c.l.b16 %v363
  %v2156 = vunpack.c.l.b16 %v364
  %v2157 = vunpack.c.l.b16 %v365
  %v2158 = vunpack.c.l.b16 %v366
  %v2159 = vunpack.c.l.b16 %v367
  %v2160 = vunpack.c.l.b16 %v368
  %v2161 = vunpack.c.l.b16 %v369
  %v2162 = vunpack.c.l.b16 %v370
  %v2163 = vunpack.c.l.b16 %v371
  %v2164 = vunpack.c.l.b16 %v372
  %v2165 = vunpack.c.l.b16 %v373
  %v2166 = vunpack.c.l.b16 %v374
  %v2167 = vunpack.c.l.b16 %v375
  %v2168 = vunpack.c.l.b16 %v376
  %v2169 = vunpack.c.l.b16 %v377
  %v2170 = vunpack.c.l.b16 %v378
  %v2171 = vunpack.c.l.b16 %v379
  %v2172 = vunpack.c.l.b16 %v380
  %v2173 = vunpack.c.l.b16 %v381
  %v2174 = vunpack.c.l.b16 %v382
  %v2175 = vunpack.c.l.b16 %v383
  %v2176 = vunpack.c.l.b16 %v384
  %v2177 = vunpack.c.l.b16 %v385
  %v2178 = vunpack.c.l.b16 %v386
  %v2179 = vunpack.c.l.b16 %v387
  %v2180 = vunpack.c.l.b16 %v388
  %v2181 = vunpack.c.l.b16 %v389
  %v2182 = vunpack.c.l.b16 %v390
  %v2183 = vunpack.c.l.b16 %v391
  %v2184 = vunpack.c.l.b16 %v392
  %v2185 = vunpack.c.l.b16 %v393
  %v2186 = vunpack.c.l.b16 %v394
  %v2187 = vunpack.c.l.b16 %v395
  %v2188 = vunpack.c.l.b16 %v396
  %v2189 = vunpack.c.l.b16 %v397
  %v2190 = vunpack.c.l.b16 %v398
  %v2191 = vunpack.c.l.b16 %v399
  %v2192 = vunpack.c.l.b16 %v400
  %v2193 = vunpack.c.l.b16 %v401
  %v2194 = vunpack.c.l.b16 %v402
  %v2195 = vunpack.c.l.b16 %v403
  %v2196 = vunpack.c.l.b16 %v404
  %v2197 = vunpack.c.l.b16 %v405
  %v2198 = vunpack.c.l.b16 %v406
  %v2199 = vunpack.c.l.b16 %v407
  %v2200 = vunpack.c.l.b16 %v408
  %v2201 = vunpack.c.l.b16 %v409
  %v2202 = vunpack.c.l.b16 %v410
  %v2203 = vunpack.c.l.b16 %v411
  %v2204 = vunpack.c.l.b16 %v412
  %v2205 = vunpack.c.l.b16 %v413
  %v2206 = vunpack.c.l.b16 %v414
  %v2207 = vunpack.c.l.b16 %v415
  %v2208 = vunpack.c.l.b16 %v416
  %v2209 = vunpack.c.l.b16 %v417
  %v2210 = vunpack.c.l.b16 %v418
  %v2211 = vunpack.c.l.b16 %v419
  %v2212 = vunpack.c.l.b16 %v420
  %v2213 = vunpack.c.l.b16 %v421
  %v2214 = vunpack.c.l.b16 %v422
  %v2215 = vunpack.c.l.b16 %v423
  %v2216 = vunpack.c.l.b16 %v424
  %v2217 = vunpack.c.l.b16 %v425
  %v2218 = vunpack.c.l.b16 %v426
  %v2219 = vunpack.c.l.b16 %v427
  %v2220 = vunpack.c.l.b16 %v428
  %v2221 = vunpack.c.l.b16 %v429
  %v2222 = vunpack.c.l.b16 %v430
  %v2223 = vunpack.c.l.b16 %v431
  %v2224 = vunpack.c.l.b16 %v432
  %v2225 = vunpack.c.l.b16 %v433
  %v2226 = vunpack.c.l.b16 %v434
  %v2227 = vunpack.c.l.b16 %v435
  %v2228 = vunpack.c.l.b16 %v436
  %v2229 = vunpack.c.l.b16 %v437
  %v2230 = vunpack.c.l.b16 %v438
  %v2231 = vunpack.c.l.b16 %v439
  %v2232 = vunpack.c.l.b16 %v440
  %v2233 = vunpack.c.l.b16 %v441
  %v2234 = vunpack.c.l.b16 %v442
  %v2235 = vunpack.c.l.b16 %v443
  %v2236 = vunpack.c.l.b16 %v444
  %v2237 = vunpack.c.l.b16 %v445
  %v2238 = vunpack.c.l.b16 %v446
  %v2239 = vunpack.c.l.b16 %v447
  %v2240 = vunpack.c.l.b16 %v448
  %v2241 = vunpack.c.l.b16 %v449
  %v2242 = vunpack.c.l.b16 %v450
  %v2243 = vunpack.c.l.b16 %v451
  %v2244 = vunpack.c.l.b16 %v452
  %v2245 = vunpack.c.l.b16 %v453
  %v2246 = vunpack.c.l.b16 %v454
  %v2247 = vunpack.c.l.b16 %v455
  %v2248 = vunpack.c.l.b16 %v456
  %v2249 = vunpack.c.l.b16 %v457
  %v2250 = vunpack.c.l.b16 %v458
  %v2251 = vunpack.c.l.b16 %v459
  %v2252 = vunpack.c.l.b16 %v460
  %v2253 = vunpack.c.l.b16 %v461
  %v2254 = vunpack.c.l.b16 %v462
  %v2255 = vunpack.c.l.b16 %v463
  %v2256 = vunpack.c.l.b16 %v464
  %v2257 = vunpack.c.l.b16 %v465
  %v2258 = vunpack.c.l.b16 %v466
  %v2259 = vunpack.c.l.b16 %v467
  %v2260 = vunpack.c.l.b16 %v468
  %v2261 = vunpack.c.l.b16 %v469
  %v2262 = vunpack.c.l.b16 %v470
  %v2263 = vunpack.c.l.b16 %v471
  %v2264 = vunpack.c.l.b16 %v472
  %v2265 = vunpack.c.l.b16 %v473
  %v2266 = vunpack.c.l.b16 %v474
  %v2267 = vunpack.c.l.b16 %v475
  %v2268 = vunpack.c.l.b16 %v476
  %v2269 = vunpack.c.l.b16 %v477
  %v2270 = vunpack.c.l.b16 %v478
  %v2271 = vunpack.c.l.b16 %v479
  %v2272 = vunpack.c.l.b16 %v480
  %v2273 = vunpack.c.l.b16 %v481
  %v2274 = vunpack.c.l.b16 %v482
  %v2275 = vunpack.c.l.b16 %v483
  %v2276 = vunpack.c.l.b16 %v484
  %v2277 = vunpack.c.l.b16 %v485
  %v2278 = vunpack.c.l.b16 %v486
  %v2279 = vunpack.c.l.b16 %v487
  %v2280 = vunpack.c.l.b16 %v488
  %v2281 = vunpack.c.l.b16 %v489
  %v2282 = vunpack.c.l.b16 %v490
  %v2283 = vunpack.c.l.b16 %v491
  %v2284 = vunpack.c.l.b16 %v492
  %v2285 = vunpack.c.l.b16 %v493
  %v2286 = vunpack.c.l.b16 %v494
  %v2287 = vunpack.c.l.b16 %v495
  %v2288 = vunpack.c.l.b16 %v496
  %v2289 = vunpack.c.l.b16 %v497
  %v2290 = vunpack.c.l.b16 %v498
  %v2291 = vunpack.c.l.b16 %v499
  %v2292 = vunpack.c.l.b16 %v500
  %v2293 = vunpack.c.l.b16 %v501
  %v2294 = vunpack.c.l.b16 %v502
  %v2295 = vunpack.c.l.b16 %v503
  %v2296 = vunpack.c.l.b16 %v504
  %v2297 = vunpack.c.l.b16 %v505
  %v2298 = vunpack.c.l.b16 %v506
  %v2299 = vunpack.c.l.b16 %v507
  %v2300 = vunpack.c.l.b16 %v508
  %v2301 = vunpack.c.l.b16 %v509
  %v2302 = vunpack.c.l.b16 %v510
  %v2303 = vunpack.c.l.b16 %v511
  %v2304 = vunpack.c.l.b16 %v512
  %v2305 = vunpack.c.l.b16 %v513
  %v2306 = vunpack.c.l.b16 %v514
  %v2307 = vunpack.c.l.b16 %v515
  %v2308 = vunpack.c.l.b16 %v516
  %v2309 = vunpack.c.l.b16 %v517
  %v2310 = vunpack.c.l.b16 %v518
  %v2311 = vunpack.c.l.b16 %v519
  %v2312 = vunpack.c.l.b16 %v520
  %v2313 = vunpack.c.l.b16 %v521
  %v2314 = vunpack.c.l.b16 %v522
  %v2315 = vunpack.c.l.b16 %v523
  %v2316 = vunpack.c.l.b16 %v524
  %v2317 = vunpack.c.l.b16 %v525
  %v2318 = vunpack.c.l.b16 %v526
  %v2319 = vunpack.c.l.b16 %v527
  %v2320 = vunpack.c.l.b16 %v528
  %v2321 = vunpack.c.l.b16 %v529
  %v2322 = vunpack.c.l.b16 %v530
  %v2323 = vunpack.c.l.b16 %v531
  %v2324 = vunpack.c.l.b16 %v532
  %v2325 = vpack.c.b16 %v2070, %v2069
  %v2326 = vpack.c.b16 %v2072, %v2071
  %v2327 = vpack.c.b16 %v2074, %v2073
  %v2328 = vpack.c.b16 %v2076, %v2075
  %v2329 = vpack.c.b16 %v2078, %v2077
  %v2330 = vpack.c.b16 %v2080, %v2079
  %v2331 = vpack.c.b16 %v2082, %v2081
  %v2332 = vpack.c.b16 %v2084, %v2083
  %v2333 = vpack.c.b16 %v2086, %v2085
  %v2334 = vpack.c.b16 %v2088, %v2087
  %v2335 = vpack.c.b16 %v2090, %v2089
  %v2336 = vpack.c.b16 %v2092, %v2091
  %v2337 = vpack.c.b16 %v2094, %v2093
  %v2338 = vpack.c.b16 %v2096, %v2095
  %v2339 = vpack.c.b16 %v2098, %v2097
  %v2340 = vpack.c.b16 %v2100, %v2099
  %v2341 = vpack.c.b16 %v2102, %v2101
  %v2342 = vpack.c.b16 %v2104, %v2103
  %v2343 = vpack.c.b16 %v2106, %v2105
  %v2344 = vpack.c.b16 %v2108, %v2107
  %v2345 = vpack.c.b16 %v2110, %v2109
  %v2346 = vpack.c.b16 %v2112, %v2111
  %v2347 = vpack.c.b16 %v2114, %v2113
  %v2348 = vpack.c.b16 %v2116, %v2115
  %v2349 = vpack.c.b16 %v2118, %v2117
  %v2350 = vpack.c.b16 %v2120, %v2119
  %v2351 = vpack.c.b16 %v2122, %v2121
  %v2352 = vpack.c.b16 %v2124, %v2123
  %v2353 = vpack.c.b16 %v2126, %v2125
  %v2354 = vpack.c.b16 %v2128, %v2127
  %v2355 = vpack.c.b16 %v2130, %v2129
  %v2356 = vpack.c.b16 %v2132, %v2131
  %v2357 = vpack.c.b16 %v2134, %v2133
  %v2358 = vpack.c.b16 %v2136, %v2135
  %v2359 = vpack.c.b16 %v2138, %v2137
  %v2360 = vpack.c.b16 %v2140, %v2139
  %v2361 = vpack.c.b16 %v2142, %v2141
  %v2362 = vpack.c.b16 %v2144, %v2143
  %v2363 = vpack.c.b16 %v2146, %v2145
  %v2364 = vpack.c.b16 %v2148, %v2147
  %v2365 = vpack.c.b16 %v2150, %v2149
  %v2366 = vpack.c.b16 %v2152, %v2151
  %v2367 = vpack.c.b16 %v2154, %v2153
  %v2368 = vpack.c.b16 %v2156, %v2155
  %v2369 = vpack.c.b16 %v2158, %v2157
  %v2370 = vpack.c.b16 %v2160, %v2159
  %v2371 = vpack.c.b16 %v2162, %v2161
  %v2372 = vpack.c.b16 %v2164, %v2163
  %v2373 = vpack.c.b16 %v2166, %v2165
  %v2374 = vpack.c.b16 %v2168, %v2167
  %v2375 = vpack.c.b16 %v2170, %v2169
  %v2376 = vpack.c.b16 %v2172, %v2171
  %v2377 = vpack.c.b16 %v2174, %v2173
  %v2378 = vpack.c.b16 %v2176, %v2175
  %v2379 = vpack.c.b16 %v2178, %v2177
  %v2380 = vpack.c.b16 %v2180, %v2179
  %v2381 = vpack.c.b16 %v2182, %v2181
  %v2382 = vpack.c.b16 %v2184, %v2183
  %v2383 = vpack.c.b16 %v2186, %v2185
  %v2384 = vpack.c.b16 %v2188, %v2187
  %v2385 = vpack.c.b16 %v2190, %v2189
  %v2386 = vpack.c.b16 %v2192, %v2191
  %v2387 = vpack.c.b16 %v2194, %v2193
  %v2388 = vpack.c.b16 %v2196, %v2195
  %v2389 = vpack.c.b16 %v2198, %v2197
  %v2390 = vpack.c.b16 %v2200, %v2199
  %v2391 = vpack.c.b16 %v2202, %v2201
  %v2392 = vpack.c.b16 %v2204, %v2203
  %v2393 = vpack.c.b16 %v2206, %v2205
  %v2394 = vpack.c.b16 %v2208, %v2207
  %v2395 = vpack.c.b16 %v2210, %v2209
  %v2396 = vpack.c.b16 %v2212, %v2211
  %v2397 = vpack.c.b16 %v2214, %v2213
  %v2398 = vpack.c.b16 %v2216, %v2215
  %v2399 = vpack.c.b16 %v2218, %v2217
  %v2400 = vpack.c.b16 %v2220, %v2219
  %v2401 = vpack.c.b16 %v2222, %v2221
  %v2402 = vpack.c.b16 %v2224, %v2223
  %v2403 = vpack.c.b16 %v2226, %v2225
  %v2404 = vpack.c.b16 %v2228, %v2227
  %v2405 = vpack.c.b16 %v2230, %v2229
  %v2406 = vpack.c.b16 %v2232, %v2231
  %v2407 = vpack.c.b16 %v2234, %v2233
  %v2408 = vpack.c.b16 %v2236, %v2235
  %v2409 = vpack.c.b16 %v2238, %v2237
  %v2410 = vpack.c.b16 %v2240, %v2239
  %v2411 = vpack.c.b16 %v2242, %v2241
  %v2412 = vpack.c.b16 %v2244, %v2243
  %v2413 = vpack.c.b16 %v2246, %v2245
  %v2414 = vpack.c.b16 %v2248, %v2247
  %v2415 = vpack.c.b16 %v2250, %v2249
  %v2416 = vpack.c.b16 %v2252, %v2251
  %v2417 = vpack.c.b16 %v2254, %v2253
  %v2418 = vpack.c.b16 %v2256, %v2255
  %v2419 = vpack.c.b16 %v2258, %v2257
  %v2420 = vpack.c.b16 %v2260, %v2259
  %v2421 = vpack.c.b16 %v2262, %v2261
  %v2422 = vpack.c.b16 %v2264, %v2263
  %v2423 = vpack.c.b16 %v2266, %v2265
  %v2424 = vpack.c.b16 %v2268, %v2267
  %v2425 = vpack.c.b16 %v2270, %v2269
  %v2426 = vpack.c.b16 %v2272, %v2271
  %v2427 = vpack.c.b16 %v2274, %v2273
  %v2428 = vpack.c.b16 %v2276, %v2275
  %v2429 = vpack.c.b16 %v2278, %v2277
  %v2430 = vpack.c.b16 %v2280, %v2279
  %v2431 = vpack.c.b16 %v2282, %v2281
  %v2432 = vpack.c.b16 %v2284, %v2283
  %v2433 = vpack.c.b16 %v2286, %v2285
  %v2434 = vpack.c.b16 %v2288, %v2287
  %v2435 = vpack.c.b16 %v2290, %v2289
  %v2436 = vpack.c.b16 %v2292, %v2291
  %v2437 = vpack.c.b16 %v2294, %v2293
  %v2438 = vpack.c.b16 %v2296, %v2295
  %v2439 = vpack.c.b16 %v2298, %v2297
  %v2440 = vpack.c.b16 %v2300, %v2299
  %v2441 = vpack.c.b16 %v2302, %v2301
  %v2442 = vpack.c.b16 %v2304, %v2303
  %v2443 = vpack.c.b16 %v2306, %v2305
  %v2444 = vpack.c.b16 %v2308, %v2307
  %v2445 = vpack.c.b16 %v2310, %v2309
  %v2446 = vpack.c.b16 %v2312, %v2311
  %v2447 = vpack.c.b16 %v2314, %v2313
  %v2448 = vpack.c.b16 %v2316, %v2315
  %v2449 = vpack.c.b16 %v2318, %v2317
  %v2450 = vpack.c.b16 %v2320, %v2319
  %v2451 = vpack.c.b16 %v2322, %v2321
  %v2452 = vpack.c.b16 %v2324, %v2323
  %2581 = vmatprep.subr.bf16.mxu0 0
  %2582 = vmatpush1.bf16.msra.mxu0 %v2325
  %2583 = vmatprep.subr.bf16.mxu0 0
  %2584 = vmatpush1.bf16.msra.mxu0 %v2326
  %2585 = vmatprep.subr.bf16.mxu0 0
  %2586 = vmatpush1.bf16.msra.mxu0 %v2327
  %2587 = vmatprep.subr.bf16.mxu0 0
  %2588 = vmatpush1.bf16.msra.mxu0 %v2328
  %2589 = vmatprep.subr.bf16.mxu0 0
  %2590 = vmatpush1.bf16.msra.mxu0 %v2329
  %2591 = vmatprep.subr.bf16.mxu0 0
  %2592 = vmatpush1.bf16.msra.mxu0 %v2330
  %2593 = vmatprep.subr.bf16.mxu0 0
  %2594 = vmatpush1.bf16.msra.mxu0 %v2331
  %2595 = vmatprep.subr.bf16.mxu0 0
  %2596 = vmatpush1.bf16.msra.mxu0 %v2332
  %2597 = vmatprep.subr.bf16.mxu0 0
  %2598 = vmatpush1.bf16.msra.mxu0 %v2333
  %2599 = vmatprep.subr.bf16.mxu0 0
  %2600 = vmatpush1.bf16.msra.mxu0 %v2334
  %2601 = vmatprep.subr.bf16.mxu0 0
  %2602 = vmatpush1.bf16.msra.mxu0 %v2335
  %2603 = vmatprep.subr.bf16.mxu0 0
  %2604 = vmatpush1.bf16.msra.mxu0 %v2336
  %2605 = vmatprep.subr.bf16.mxu0 0
  %2606 = vmatpush1.bf16.msra.mxu0 %v2337
  %2607 = vmatprep.subr.bf16.mxu0 0
  %2608 = vmatpush1.bf16.msra.mxu0 %v2338
  %2609 = vmatprep.subr.bf16.mxu0 0
  %2610 = vmatpush1.bf16.msra.mxu0 %v2339
  %2611 = vmatprep.subr.bf16.mxu0 0
  %2612 = vmatpush1.bf16.msra.mxu0 %v2340
  %2613 = vmatprep.mubr.bf16.mxu0 %v1302
  %2614 = vmatmul.mubr.bf16.gmra.mrb[0].mxu0 %v1301
  %v2615 = vpop.f32.mrb[0].mxu0
  %v2616 = vadd.f32 0.0, %v2615
  %v2617 = vpop.f32.mrb[0].mxu0
  %v2618 = vpop.f32.mrb[0].mxu0
  %v2619 = vadd.f32 0.0, %v2618
  %v2620 = vpop.f32.mrb[0].mxu0
  %2621 = vmatprep.mubr.bf16.mxu0 %v1318
  %2622 = vmatmul.mubr.bf16.gmra.mrb[0].mxu0 %v1317
  %v2623 = vpop.f32.mrb[0].mxu0
  %v2624 = vadd.f32 0.0, %v2623
  %v2625 = vpop.f32.mrb[0].mxu0
  %v2626 = vpop.f32.mrb[0].mxu0
  %v2627 = vadd.f32 0.0, %v2626
  %v2628 = vpop.f32.mrb[0].mxu0
  %2629 = vmatprep.mubr.bf16.mxu0 %v1334
  %2630 = vmatmul.mubr.bf16.gmra.mrb[0].mxu0 %v1333
  %v2631 = vpop.f32.mrb[0].mxu0
  %v2632 = vadd.f32 0.0, %v2631
  %v2633 = vpop.f32.mrb[0].mxu0
  %v2634 = vpop.f32.mrb[0].mxu0
  %v2635 = vadd.f32 0.0, %v2634
  %v2636 = vpop.f32.mrb[0].mxu0
  %2637 = vmatprep.mubr.bf16.mxu0 %v1350
  %2638 = vmatmul.mubr.bf16.gmra.mrb[0].mxu0 %v1349
  %v2639 = vpop.f32.mrb[0].mxu0
  %v2640 = vadd.f32 0.0, %v2639
  %v2641 = vpop.f32.mrb[0].mxu0
  %v2642 = vpop.f32.mrb[0].mxu0
  %v2643 = vadd.f32 0.0, %v2642
  %v2644 = vpop.f32.mrb[0].mxu0
  %2645 = vmatprep.mubr.bf16.mxu0 %v1366
  %2646 = vmatmul.mubr.bf16.gmra.mrb[0].mxu0 %v1365
  %v2647 = vpop.f32.mrb[0].mxu0
  %v2648 = vadd.f32 0.0, %v2647
  %v2649 = vpop.f32.mrb[0].mxu0
  %v2650 = vpop.f32.mrb[0].mxu0
  %v2651 = vadd.f32 0.0, %v2650
  %v2652 = vpop.f32.mrb[0].mxu0
  %2653 = vmatprep.mubr.bf16.mxu0 %v1382
  %2654 = vmatmul.mubr.bf16.gmra.mrb[0].mxu0 %v1381
  %v2655 = vpop.f32.mrb[0].mxu0
  %v2656 = vadd.f32 0.0, %v2655
  %v2657 = vpop.f32.mrb[0].mxu0
  %v2658 = vpop.f32.mrb[0].mxu0
  %v2659 = vadd.f32 0.0, %v2658
  %v2660 = vpop.f32.mrb[0].mxu0
  %2661 = vmatprep.mubr.bf16.mxu0 %v1398
  %2662 = vmatmul.mubr.bf16.gmra.mrb[0].mxu0 %v1397
  %v2663 = vpop.f32.mrb[0].mxu0
  %v2664 = vadd.f32 0.0, %v2663
  %v2665 = vpop.f32.mrb[0].mxu0
  %v2666 = vpop.f32.mrb[0].mxu0
  %v2667 = vadd.f32 0.0, %v2666
  %v2668 = vpop.f32.mrb[0].mxu0
  %2669 = vmatprep.mubr.bf16.mxu0 %v1414
  %2670 = vmatmul.mubr.bf16.gmra.mrb[0].mxu0 %v1413
  %v2671 = vpop.f32.mrb[0].mxu0
  %v2672 = vadd.f32 0.0, %v2671
  %v2673 = vpop.f32.mrb[0].mxu0
  %v2674 = vpop.f32.mrb[0].mxu0
  %v2675 = vadd.f32 0.0, %v2674
  %v2676 = vpop.f32.mrb[0].mxu0
  %2677 = vmatprep.mubr.bf16.mxu0 %v1430
  %2678 = vmatmul.mubr.bf16.gmra.mrb[0].mxu0 %v1429
  %v2679 = vpop.f32.mrb[0].mxu0
  %v2680 = vadd.f32 0.0, %v2679
  %v2681 = vpop.f32.mrb[0].mxu0
  %v2682 = vpop.f32.mrb[0].mxu0
  %v2683 = vadd.f32 0.0, %v2682
  %v2684 = vpop.f32.mrb[0].mxu0
  %2685 = vmatprep.mubr.bf16.mxu0 %v1446
  %2686 = vmatmul.mubr.bf16.gmra.mrb[0].mxu0 %v1445
  %v2687 = vpop.f32.mrb[0].mxu0
  %v2688 = vadd.f32 0.0, %v2687
  %v2689 = vpop.f32.mrb[0].mxu0
  %v2690 = vpop.f32.mrb[0].mxu0
  %v2691 = vadd.f32 0.0, %v2690
  %v2692 = vpop.f32.mrb[0].mxu0
  %2693 = vmatprep.mubr.bf16.mxu0 %v1462
  %2694 = vmatmul.mubr.bf16.gmra.mrb[0].mxu0 %v1461
  %v2695 = vpop.f32.mrb[0].mxu0
  %v2696 = vadd.f32 0.0, %v2695
  %v2697 = vpop.f32.mrb[0].mxu0
  %v2698 = vpop.f32.mrb[0].mxu0
  %v2699 = vadd.f32 0.0, %v2698
  %v2700 = vpop.f32.mrb[0].mxu0
  %2701 = vmatprep.mubr.bf16.mxu0 %v1478
  %2702 = vmatmul.mubr.bf16.gmra.mrb[0].mxu0 %v1477
  %v2703 = vpop.f32.mrb[0].mxu0
  %v2704 = vadd.f32 0.0, %v2703
  %v2705 = vpop.f32.mrb[0].mxu0
  %v2706 = vpop.f32.mrb[0].mxu0
  %v2707 = vadd.f32 0.0, %v2706
  %v2708 = vpop.f32.mrb[0].mxu0
  %2709 = vmatprep.mubr.bf16.mxu0 %v1494
  %2710 = vmatmul.mubr.bf16.gmra.mrb[0].mxu0 %v1493
  %v2711 = vpop.f32.mrb[0].mxu0
  %v2712 = vadd.f32 0.0, %v2711
  %v2713 = vpop.f32.mrb[0].mxu0
  %v2714 = vpop.f32.mrb[0].mxu0
  %v2715 = vadd.f32 0.0, %v2714
  %v2716 = vpop.f32.mrb[0].mxu0
  %2717 = vmatprep.mubr.bf16.mxu0 %v1510
  %2718 = vmatmul.mubr.bf16.gmra.mrb[0].mxu0 %v1509
  %v2719 = vpop.f32.mrb[0].mxu0
  %v2720 = vadd.f32 0.0, %v2719
  %v2721 = vpop.f32.mrb[0].mxu0
  %v2722 = vpop.f32.mrb[0].mxu0
  %v2723 = vadd.f32 0.0, %v2722
  %v2724 = vpop.f32.mrb[0].mxu0
  %2725 = vmatprep.mubr.bf16.mxu0 %v1526
  %2726 = vmatmul.mubr.bf16.gmra.mrb[0].mxu0 %v1525
  %v2727 = vpop.f32.mrb[0].mxu0
  %v2728 = vadd.f32 0.0, %v2727
  %v2729 = vpop.f32.mrb[0].mxu0
  %v2730 = vpop.f32.mrb[0].mxu0
  %v2731 = vadd.f32 0.0, %v2730
  %v2732 = vpop.f32.mrb[0].mxu0
  %2733 = vmatprep.mubr.bf16.mxu0 %v1542
  %2734 = vmatmul.mubr.bf16.gmra.mrb[0].mxu0 %v1541
  %v2735 = vpop.f32.mrb[0].mxu0
  %v2736 = vadd.f32 0.0, %v2735
  %v2737 = vpop.f32.mrb[0].mxu0
  %v2738 = vpop.f32.mrb[0].mxu0
  %v2739 = vadd.f32 0.0, %v2738
  %v2740 = vpop.f32.mrb[0].mxu0
  %2741 = vdwg.mxu0
  %2742 = vmatprep.subr.bf16.mxu0 0
  %2743 = vmatpush1.bf16.msra.mxu0 %v2341
  %2744 = vmatprep.subr.bf16.mxu0 0
  %2745 = vmatpush1.bf16.msra.mxu0 %v2342
  %2746 = vmatprep.subr.bf16.mxu0 0
  %2747 = vmatpush1.bf16.msra.mxu0 %v2343
  %2748 = vmatprep.subr.bf16.mxu0 0
  %2749 = vmatpush1.bf16.msra.mxu0 %v2344
  %2750 = vmatprep.subr.bf16.mxu0 0
  %2751 = vmatpush1.bf16.msra.mxu0 %v2345
  %2752 = vmatprep.subr.bf16.mxu0 0
  %2753 = vmatpush1.bf16.msra.mxu0 %v2346
  %2754 = vmatprep.subr.bf16.mxu0 0
  %2755 = vmatpush1.bf16.msra.mxu0 %v2347
  %2756 = vmatprep.subr.bf16.mxu0 0
  %2757 = vmatpush1.bf16.msra.mxu0 %v2348
  %2758 = vmatprep.subr.bf16.mxu0 0
  %2759 = vmatpush1.bf16.msra.mxu0 %v2349
  %2760 = vmatprep.subr.bf16.mxu0 0
  %2761 = vmatpush1.bf16.msra.mxu0 %v2350
  %2762 = vmatprep.subr.bf16.mxu0 0
  %2763 = vmatpush1.bf16.msra.mxu0 %v2351
  %2764 = vmatprep.subr.bf16.mxu0 0
  %2765 = vmatpush1.bf16.msra.mxu0 %v2352
  %2766 = vmatprep.subr.bf16.mxu0 0
  %2767 = vmatpush1.bf16.msra.mxu0 %v2353
  %2768 = vmatprep.subr.bf16.mxu0 0
  %2769 = vmatpush1.bf16.msra.mxu0 %v2354
  %2770 = vmatprep.subr.bf16.mxu0 0
  %2771 = vmatpush1.bf16.msra.mxu0 %v2355
  %2772 = vmatprep.subr.bf16.mxu0 0
  %2773 = vmatpush1.bf16.msra.mxu0 %v2356
  %2774 = vmatprep.mubr.bf16.mxu0 %v1304
  %2775 = vmatmul.mubr.bf16.gmra.mrb[0].mxu0 %v1303
  %v2776 = vpop.f32.mrb[0].mxu0
  %v2777 = vadd.f32 %v2616, %v2776
  %v2778 = vpop.f32.mrb[0].mxu0
  %v2779 = vpop.f32.mrb[0].mxu0
  %v2780 = vadd.f32 %v2619, %v2779
  %v2781 = vpop.f32.mrb[0].mxu0
  %2782 = vmatprep.mubr.bf16.mxu0 %v1320
  %2783 = vmatmul.mubr.bf16.gmra.mrb[0].mxu0 %v1319
  %v2784 = vpop.f32.mrb[0].mxu0
  %v2785 = vadd.f32 %v2624, %v2784
  %v2786 = vpop.f32.mrb[0].mxu0
  %v2787 = vpop.f32.mrb[0].mxu0
  %v2788 = vadd.f32 %v2627, %v2787
  %v2789 = vpop.f32.mrb[0].mxu0
  %2790 = vmatprep.mubr.bf16.mxu0 %v1336
  %2791 = vmatmul.mubr.bf16.gmra.mrb[0].mxu0 %v1335
  %v2792 = vpop.f32.mrb[0].mxu0
  %v2793 = vadd.f32 %v2632, %v2792
  %v2794 = vpop.f32.mrb[0].mxu0
  %v2795 = vpop.f32.mrb[0].mxu0
  %v2796 = vadd.f32 %v2635, %v2795
  %v2797 = vpop.f32.mrb[0].mxu0
  %2798 = vmatprep.mubr.bf16.mxu0 %v1352
  %2799 = vmatmul.mubr.bf16.gmra.mrb[0].mxu0 %v1351
  %v2800 = vpop.f32.mrb[0].mxu0
  %v2801 = vadd.f32 %v2640, %v2800
  %v2802 = vpop.f32.mrb[0].mxu0
  %v2803 = vpop.f32.mrb[0].mxu0
  %v2804 = vadd.f32 %v2643, %v2803
  %v2805 = vpop.f32.mrb[0].mxu0
  %2806 = vmatprep.mubr.bf16.mxu0 %v1368
  %2807 = vmatmul.mubr.bf16.gmra.mrb[0].mxu0 %v1367
  %v2808 = vpop.f32.mrb[0].mxu0
  %v2809 = vadd.f32 %v2648, %v2808
  %v2810 = vpop.f32.mrb[0].mxu0
  %v2811 = vpop.f32.mrb[0].mxu0
  %v2812 = vadd.f32 %v2651, %v2811
  %v2813 = vpop.f32.mrb[0].mxu0
  %2814 = vmatprep.mubr.bf16.mxu0 %v1384
  %2815 = vmatmul.mubr.bf16.gmra.mrb[0].mxu0 %v1383
  %v2816 = vpop.f32.mrb[0].mxu0
  %v2817 = vadd.f32 %v2656, %v2816
  %v2818 = vpop.f32.mrb[0].mxu0
  %v2819 = vpop.f32.mrb[0].mxu0
  %v2820 = vadd.f32 %v2659, %v2819
  %v2821 = vpop.f32.mrb[0].mxu0
  %2822 = vmatprep.mubr.bf16.mxu0 %v1400
  %2823 = vmatmul.mubr.bf16.gmra.mrb[0].mxu0 %v1399
  %v2824 = vpop.f32.mrb[0].mxu0
  %v2825 = vadd.f32 %v2664, %v2824
  %v2826 = vpop.f32.mrb[0].mxu0
  %v2827 = vpop.f32.mrb[0].mxu0
  %v2828 = vadd.f32 %v2667, %v2827
  %v2829 = vpop.f32.mrb[0].mxu0
  %2830 = vmatprep.mubr.bf16.mxu0 %v1416
  %2831 = vmatmul.mubr.bf16.gmra.mrb[0].mxu0 %v1415
  %v2832 = vpop.f32.mrb[0].mxu0
  %v2833 = vadd.f32 %v2672, %v2832
  %v2834 = vpop.f32.mrb[0].mxu0
  %v2835 = vpop.f32.mrb[0].mxu0
  %v2836 = vadd.f32 %v2675, %v2835
  %v2837 = vpop.f32.mrb[0].mxu0
  %2838 = vmatprep.mubr.bf16.mxu0 %v1432
  %2839 = vmatmul.mubr.bf16.gmra.mrb[0].mxu0 %v1431
  %v2840 = vpop.f32.mrb[0].mxu0
  %v2841 = vadd.f32 %v2680, %v2840
  %v2842 = vpop.f32.mrb[0].mxu0
  %v2843 = vpop.f32.mrb[0].mxu0
  %v2844 = vadd.f32 %v2683, %v2843
  %v2845 = vpop.f32.mrb[0].mxu0
  %2846 = vmatprep.mubr.bf16.mxu0 %v1448
  %2847 = vmatmul.mubr.bf16.gmra.mrb[0].mxu0 %v1447
  %v2848 = vpop.f32.mrb[0].mxu0
  %v2849 = vadd.f32 %v2688, %v2848
  %v2850 = vpop.f32.mrb[0].mxu0
  %v2851 = vpop.f32.mrb[0].mxu0
  %v2852 = vadd.f32 %v2691, %v2851
  %v2853 = vpop.f32.mrb[0].mxu0
  %2854 = vmatprep.mubr.bf16.mxu0 %v1464
  %2855 = vmatmul.mubr.bf16.gmra.mrb[0].mxu0 %v1463
  %v2856 = vpop.f32.mrb[0].mxu0
  %v2857 = vadd.f32 %v2696, %v2856
  %v2858 = vpop.f32.mrb[0].mxu0
  %v2859 = vpop.f32.mrb[0].mxu0
  %v2860 = vadd.f32 %v2699, %v2859
  %v2861 = vpop.f32.mrb[0].mxu0
  %2862 = vmatprep.mubr.bf16.mxu0 %v1480
  %2863 = vmatmul.mubr.bf16.gmra.mrb[0].mxu0 %v1479
  %v2864 = vpop.f32.mrb[0].mxu0
  %v2865 = vadd.f32 %v2704, %v2864
  %v2866 = vpop.f32.mrb[0].mxu0
  %v2867 = vpop.f32.mrb[0].mxu0
  %v2868 = vadd.f32 %v2707, %v2867
  %v2869 = vpop.f32.mrb[0].mxu0
  %2870 = vmatprep.mubr.bf16.mxu0 %v1496
  %2871 = vmatmul.mubr.bf16.gmra.mrb[0].mxu0 %v1495
  %v2872 = vpop.f32.mrb[0].mxu0
  %v2873 = vadd.f32 %v2712, %v2872
  %v2874 = vpop.f32.mrb[0].mxu0
  %v2875 = vpop.f32.mrb[0].mxu0
  %v2876 = vadd.f32 %v2715, %v2875
  %v2877 = vpop.f32.mrb[0].mxu0
  %2878 = vmatprep.mubr.bf16.mxu0 %v1512
  %2879 = vmatmul.mubr.bf16.gmra.mrb[0].mxu0 %v1511
  %v2880 = vpop.f32.mrb[0].mxu0
  %v2881 = vadd.f32 %v2720, %v2880
  %v2882 = vpop.f32.mrb[0].mxu0
  %v2883 = vpop.f32.mrb[0].mxu0
  %v2884 = vadd.f32 %v2723, %v2883
  %v2885 = vpop.f32.mrb[0].mxu0
  %2886 = vmatprep.mubr.bf16.mxu0 %v1528
  %2887 = vmatmul.mubr.bf16.gmra.mrb[0].mxu0 %v1527
  %v2888 = vpop.f32.mrb[0].mxu0
  %v2889 = vadd.f32 %v2728, %v2888
  %v2890 = vpop.f32.mrb[0].mxu0
  %v2891 = vpop.f32.mrb[0].mxu0
  %v2892 = vadd.f32 %v2731, %v2891
  %v2893 = vpop.f32.mrb[0].mxu0
  %2894 = vmatprep.mubr.bf16.mxu0 %v1544
  %2895 = vmatmul.mubr.bf16.gmra.mrb[0].mxu0 %v1543
  %v2896 = vpop.f32.mrb[0].mxu0
  %v2897 = vadd.f32 %v2736, %v2896
  %v2898 = vpop.f32.mrb[0].mxu0
  %v2899 = vpop.f32.mrb[0].mxu0
  %v2900 = vadd.f32 %v2739, %v2899
  %v2901 = vpop.f32.mrb[0].mxu0
  %2902 = vdwg.mxu0
  %2903 = vmatprep.subr.bf16.mxu0 0
  %2904 = vmatpush1.bf16.msra.mxu0 %v2357
  %2905 = vmatprep.subr.bf16.mxu0 0
  %2906 = vmatpush1.bf16.msra.mxu0 %v2358
  %2907 = vmatprep.subr.bf16.mxu0 0
  %2908 = vmatpush1.bf16.msra.mxu0 %v2359
  %2909 = vmatprep.subr.bf16.mxu0 0
  %2910 = vmatpush1.bf16.msra.mxu0 %v2360
  %2911 = vmatprep.subr.bf16.mxu0 0
  %2912 = vmatpush1.bf16.msra.mxu0 %v2361
  %2913 = vmatprep.subr.bf16.mxu0 0
  %2914 = vmatpush1.bf16.msra.mxu0 %v2362
  %2915 = vmatprep.subr.bf16.mxu0 0
  %2916 = vmatpush1.bf16.msra.mxu0 %v2363
  %2917 = vmatprep.subr.bf16.mxu0 0
  %2918 = vmatpush1.bf16.msra.mxu0 %v2364
  %2919 = vmatprep.subr.bf16.mxu0 0
  %2920 = vmatpush1.bf16.msra.mxu0 %v2365
  %2921 = vmatprep.subr.bf16.mxu0 0
  %2922 = vmatpush1.bf16.msra.mxu0 %v2366
  %2923 = vmatprep.subr.bf16.mxu0 0
  %2924 = vmatpush1.bf16.msra.mxu0 %v2367
  %2925 = vmatprep.subr.bf16.mxu0 0
  %2926 = vmatpush1.bf16.msra.mxu0 %v2368
  %2927 = vmatprep.subr.bf16.mxu0 0
  %2928 = vmatpush1.bf16.msra.mxu0 %v2369
  %2929 = vmatprep.subr.bf16.mxu0 0
  %2930 = vmatpush1.bf16.msra.mxu0 %v2370
  %2931 = vmatprep.subr.bf16.mxu0 0
  %2932 = vmatpush1.bf16.msra.mxu0 %v2371
  %2933 = vmatprep.subr.bf16.mxu0 0
  %2934 = vmatpush1.bf16.msra.mxu0 %v2372
  %2935 = vmatprep.mubr.bf16.mxu0 %v1306
  %2936 = vmatmul.mubr.bf16.gmra.mrb[0].mxu0 %v1305
  %v2937 = vpop.f32.mrb[0].mxu0
  %v2938 = vadd.f32 %v2777, %v2937
  %v2939 = vpop.f32.mrb[0].mxu0
  %v2940 = vpop.f32.mrb[0].mxu0
  %v2941 = vadd.f32 %v2780, %v2940
  %v2942 = vpop.f32.mrb[0].mxu0
  %2943 = vmatprep.mubr.bf16.mxu0 %v1322
  %2944 = vmatmul.mubr.bf16.gmra.mrb[0].mxu0 %v1321
  %v2945 = vpop.f32.mrb[0].mxu0
  %v2946 = vadd.f32 %v2785, %v2945
  %v2947 = vpop.f32.mrb[0].mxu0
  %v2948 = vpop.f32.mrb[0].mxu0
  %v2949 = vadd.f32 %v2788, %v2948
  %v2950 = vpop.f32.mrb[0].mxu0
  %2951 = vmatprep.mubr.bf16.mxu0 %v1338
  %2952 = vmatmul.mubr.bf16.gmra.mrb[0].mxu0 %v1337
  %v2953 = vpop.f32.mrb[0].mxu0
  %v2954 = vadd.f32 %v2793, %v2953
  %v2955 = vpop.f32.mrb[0].mxu0
  %v2956 = vpop.f32.mrb[0].mxu0
  %v2957 = vadd.f32 %v2796, %v2956
  %v2958 = vpop.f32.mrb[0].mxu0
  %2959 = vmatprep.mubr.bf16.mxu0 %v1354
  %2960 = vmatmul.mubr.bf16.gmra.mrb[0].mxu0 %v1353
  %v2961 = vpop.f32.mrb[0].mxu0
  %v2962 = vadd.f32 %v2801, %v2961
  %v2963 = vpop.f32.mrb[0].mxu0
  %v2964 = vpop.f32.mrb[0].mxu0
  %v2965 = vadd.f32 %v2804, %v2964
  %v2966 = vpop.f32.mrb[0].mxu0
  %2967 = vmatprep.mubr.bf16.mxu0 %v1370
  %2968 = vmatmul.mubr.bf16.gmra.mrb[0].mxu0 %v1369
  %v2969 = vpop.f32.mrb[0].mxu0
  %v2970 = vadd.f32 %v2809, %v2969
  %v2971 = vpop.f32.mrb[0].mxu0
  %v2972 = vpop.f32.mrb[0].mxu0
  %v2973 = vadd.f32 %v2812, %v2972
  %v2974 = vpop.f32.mrb[0].mxu0
  %2975 = vmatprep.mubr.bf16.mxu0 %v1386
  %2976 = vmatmul.mubr.bf16.gmra.mrb[0].mxu0 %v1385
  %v2977 = vpop.f32.mrb[0].mxu0
  %v2978 = vadd.f32 %v2817, %v2977
  %v2979 = vpop.f32.mrb[0].mxu0
  %v2980 = vpop.f32.mrb[0].mxu0
  %v2981 = vadd.f32 %v2820, %v2980
  %v2982 = vpop.f32.mrb[0].mxu0
  %2983 = vmatprep.mubr.bf16.mxu0 %v1402
  %2984 = vmatmul.mubr.bf16.gmra.mrb[0].mxu0 %v1401
  %v2985 = vpop.f32.mrb[0].mxu0
  %v2986 = vadd.f32 %v2825, %v2985
  %v2987 = vpop.f32.mrb[0].mxu0
  %v2988 = vpop.f32.mrb[0].mxu0
  %v2989 = vadd.f32 %v2828, %v2988
  %v2990 = vpop.f32.mrb[0].mxu0
  %2991 = vmatprep.mubr.bf16.mxu0 %v1418
  %2992 = vmatmul.mubr.bf16.gmra.mrb[0].mxu0 %v1417
  %v2993 = vpop.f32.mrb[0].mxu0
  %v2994 = vadd.f32 %v2833, %v2993
  %v2995 = vpop.f32.mrb[0].mxu0
  %v2996 = vpop.f32.mrb[0].mxu0
  %v2997 = vadd.f32 %v2836, %v2996
  %v2998 = vpop.f32.mrb[0].mxu0
  %2999 = vmatprep.mubr.bf16.mxu0 %v1434
  %3000 = vmatmul.mubr.bf16.gmra.mrb[0].mxu0 %v1433
  %v3001 = vpop.f32.mrb[0].mxu0
  %v3002 = vadd.f32 %v2841, %v3001
  %v3003 = vpop.f32.mrb[0].mxu0
  %v3004 = vpop.f32.mrb[0].mxu0
  %v3005 = vadd.f32 %v2844, %v3004
  %v3006 = vpop.f32.mrb[0].mxu0
  %3007 = vmatprep.mubr.bf16.mxu0 %v1450
  %3008 = vmatmul.mubr.bf16.gmra.mrb[0].mxu0 %v1449
  %v3009 = vpop.f32.mrb[0].mxu0
  %v3010 = vadd.f32 %v2849, %v3009
  %v3011 = vpop.f32.mrb[0].mxu0
  %v3012 = vpop.f32.mrb[0].mxu0
  %v3013 = vadd.f32 %v2852, %v3012
  %v3014 = vpop.f32.mrb[0].mxu0
  %3015 = vmatprep.mubr.bf16.mxu0 %v1466
  %3016 = vmatmul.mubr.bf16.gmra.mrb[0].mxu0 %v1465
  %v3017 = vpop.f32.mrb[0].mxu0
  %v3018 = vadd.f32 %v2857, %v3017
  %v3019 = vpop.f32.mrb[0].mxu0
  %v3020 = vpop.f32.mrb[0].mxu0
  %v3021 = vadd.f32 %v2860, %v3020
  %v3022 = vpop.f32.mrb[0].mxu0
  %3023 = vmatprep.mubr.bf16.mxu0 %v1482
  %3024 = vmatmul.mubr.bf16.gmra.mrb[0].mxu0 %v1481
  %v3025 = vpop.f32.mrb[0].mxu0
  %v3026 = vadd.f32 %v2865, %v3025
  %v3027 = vpop.f32.mrb[0].mxu0
  %v3028 = vpop.f32.mrb[0].mxu0
  %v3029 = vadd.f32 %v2868, %v3028
  %v3030 = vpop.f32.mrb[0].mxu0
  %3031 = vmatprep.mubr.bf16.mxu0 %v1498
  %3032 = vmatmul.mubr.bf16.gmra.mrb[0].mxu0 %v1497
  %v3033 = vpop.f32.mrb[0].mxu0
  %v3034 = vadd.f32 %v2873, %v3033
  %v3035 = vpop.f32.mrb[0].mxu0
  %v3036 = vpop.f32.mrb[0].mxu0
  %v3037 = vadd.f32 %v2876, %v3036
  %v3038 = vpop.f32.mrb[0].mxu0
  %3039 = vmatprep.mubr.bf16.mxu0 %v1514
  %3040 = vmatmul.mubr.bf16.gmra.mrb[0].mxu0 %v1513
  %v3041 = vpop.f32.mrb[0].mxu0
  %v3042 = vadd.f32 %v2881, %v3041
  %v3043 = vpop.f32.mrb[0].mxu0
  %v3044 = vpop.f32.mrb[0].mxu0
  %v3045 = vadd.f32 %v2884, %v3044
  %v3046 = vpop.f32.mrb[0].mxu0
  %3047 = vmatprep.mubr.bf16.mxu0 %v1530
  %3048 = vmatmul.mubr.bf16.gmra.mrb[0].mxu0 %v1529
  %v3049 = vpop.f32.mrb[0].mxu0
  %v3050 = vadd.f32 %v2889, %v3049
  %v3051 = vpop.f32.mrb[0].mxu0
  %v3052 = vpop.f32.mrb[0].mxu0
  %v3053 = vadd.f32 %v2892, %v3052
  %v3054 = vpop.f32.mrb[0].mxu0
  %3055 = vmatprep.mubr.bf16.mxu0 %v1546
  %3056 = vmatmul.mubr.bf16.gmra.mrb[0].mxu0 %v1545
  %v3057 = vpop.f32.mrb[0].mxu0
  %v3058 = vadd.f32 %v2897, %v3057
  %v3059 = vpop.f32.mrb[0].mxu0
  %v3060 = vpop.f32.mrb[0].mxu0
  %v3061 = vadd.f32 %v2900, %v3060
  %v3062 = vpop.f32.mrb[0].mxu0
  %3063 = vdwg.mxu0
  %3064 = vmatprep.subr.bf16.mxu0 0
  %3065 = vmatpush1.bf16.msra.mxu0 %v2373
  %3066 = vmatprep.subr.bf16.mxu0 0
  %3067 = vmatpush1.bf16.msra.mxu0 %v2374
  %3068 = vmatprep.subr.bf16.mxu0 0
  %3069 = vmatpush1.bf16.msra.mxu0 %v2375
  %3070 = vmatprep.subr.bf16.mxu0 0
  %3071 = vmatpush1.bf16.msra.mxu0 %v2376
  %3072 = vmatprep.subr.bf16.mxu0 0
  %3073 = vmatpush1.bf16.msra.mxu0 %v2377
  %3074 = vmatprep.subr.bf16.mxu0 0
  %3075 = vmatpush1.bf16.msra.mxu0 %v2378
  %3076 = vmatprep.subr.bf16.mxu0 0
  %3077 = vmatpush1.bf16.msra.mxu0 %v2379
  %3078 = vmatprep.subr.bf16.mxu0 0
  %3079 = vmatpush1.bf16.msra.mxu0 %v2380
  %3080 = vmatprep.subr.bf16.mxu0 0
  %3081 = vmatpush1.bf16.msra.mxu0 %v2381
  %3082 = vmatprep.subr.bf16.mxu0 0
  %3083 = vmatpush1.bf16.msra.mxu0 %v2382
  %3084 = vmatprep.subr.bf16.mxu0 0
  %3085 = vmatpush1.bf16.msra.mxu0 %v2383
  %3086 = vmatprep.subr.bf16.mxu0 0
  %3087 = vmatpush1.bf16.msra.mxu0 %v2384
  %3088 = vmatprep.subr.bf16.mxu0 0
  %3089 = vmatpush1.bf16.msra.mxu0 %v2385
  %3090 = vmatprep.subr.bf16.mxu0 0
  %3091 = vmatpush1.bf16.msra.mxu0 %v2386
  %3092 = vmatprep.subr.bf16.mxu0 0
  %3093 = vmatpush1.bf16.msra.mxu0 %v2387
  %3094 = vmatprep.subr.bf16.mxu0 0
  %3095 = vmatpush1.bf16.msra.mxu0 %v2388
  %3096 = vmatprep.mubr.bf16.mxu0 %v1308
  %3097 = vmatmul.mubr.bf16.gmra.mrb[0].mxu0 %v1307
  %v3098 = vpop.f32.mrb[0].mxu0
  %v3099 = vadd.f32 %v2938, %v3098
  %v3100 = vpop.f32.mrb[0].mxu0
  %v3101 = vpop.f32.mrb[0].mxu0
  %v3102 = vadd.f32 %v2941, %v3101
  %v3103 = vpop.f32.mrb[0].mxu0
  %3104 = vmatprep.mubr.bf16.mxu0 %v1324
  %3105 = vmatmul.mubr.bf16.gmra.mrb[0].mxu0 %v1323
  %v3106 = vpop.f32.mrb[0].mxu0
  %v3107 = vadd.f32 %v2946, %v3106
  %v3108 = vpop.f32.mrb[0].mxu0
  %v3109 = vpop.f32.mrb[0].mxu0
  %v3110 = vadd.f32 %v2949, %v3109
  %v3111 = vpop.f32.mrb[0].mxu0
  %3112 = vmatprep.mubr.bf16.mxu0 %v1340
  %3113 = vmatmul.mubr.bf16.gmra.mrb[0].mxu0 %v1339
  %v3114 = vpop.f32.mrb[0].mxu0
  %v3115 = vadd.f32 %v2954, %v3114
  %v3116 = vpop.f32.mrb[0].mxu0
  %v3117 = vpop.f32.mrb[0].mxu0
  %v3118 = vadd.f32 %v2957, %v3117
  %v3119 = vpop.f32.mrb[0].mxu0
  %3120 = vmatprep.mubr.bf16.mxu0 %v1356
  %3121 = vmatmul.mubr.bf16.gmra.mrb[0].mxu0 %v1355
  %v3122 = vpop.f32.mrb[0].mxu0
  %v3123 = vadd.f32 %v2962, %v3122
  %v3124 = vpop.f32.mrb[0].mxu0
  %v3125 = vpop.f32.mrb[0].mxu0
  %v3126 = vadd.f32 %v2965, %v3125
  %v3127 = vpop.f32.mrb[0].mxu0
  %3128 = vmatprep.mubr.bf16.mxu0 %v1372
  %3129 = vmatmul.mubr.bf16.gmra.mrb[0].mxu0 %v1371
  %v3130 = vpop.f32.mrb[0].mxu0
  %v3131 = vadd.f32 %v2970, %v3130
  %v3132 = vpop.f32.mrb[0].mxu0
  %v3133 = vpop.f32.mrb[0].mxu0
  %v3134 = vadd.f32 %v2973, %v3133
  %v3135 = vpop.f32.mrb[0].mxu0
  %3136 = vmatprep.mubr.bf16.mxu0 %v1388
  %3137 = vmatmul.mubr.bf16.gmra.mrb[0].mxu0 %v1387
  %v3138 = vpop.f32.mrb[0].mxu0
  %v3139 = vadd.f32 %v2978, %v3138
  %v3140 = vpop.f32.mrb[0].mxu0
  %v3141 = vpop.f32.mrb[0].mxu0
  %v3142 = vadd.f32 %v2981, %v3141
  %v3143 = vpop.f32.mrb[0].mxu0
  %3144 = vmatprep.mubr.bf16.mxu0 %v1404
  %3145 = vmatmul.mubr.bf16.gmra.mrb[0].mxu0 %v1403
  %v3146 = vpop.f32.mrb[0].mxu0
  %v3147 = vadd.f32 %v2986, %v3146
  %v3148 = vpop.f32.mrb[0].mxu0
  %v3149 = vpop.f32.mrb[0].mxu0
  %v3150 = vadd.f32 %v2989, %v3149
  %v3151 = vpop.f32.mrb[0].mxu0
  %3152 = vmatprep.mubr.bf16.mxu0 %v1420
  %3153 = vmatmul.mubr.bf16.gmra.mrb[0].mxu0 %v1419
  %v3154 = vpop.f32.mrb[0].mxu0
  %v3155 = vadd.f32 %v2994, %v3154
  %v3156 = vpop.f32.mrb[0].mxu0
  %v3157 = vpop.f32.mrb[0].mxu0
  %v3158 = vadd.f32 %v2997, %v3157
  %v3159 = vpop.f32.mrb[0].mxu0
  %3160 = vmatprep.mubr.bf16.mxu0 %v1436
  %3161 = vmatmul.mubr.bf16.gmra.mrb[0].mxu0 %v1435
  %v3162 = vpop.f32.mrb[0].mxu0
  %v3163 = vadd.f32 %v3002, %v3162
  %v3164 = vpop.f32.mrb[0].mxu0
  %v3165 = vpop.f32.mrb[0].mxu0
  %v3166 = vadd.f32 %v3005, %v3165
  %v3167 = vpop.f32.mrb[0].mxu0
  %3168 = vmatprep.mubr.bf16.mxu0 %v1452
  %3169 = vmatmul.mubr.bf16.gmra.mrb[0].mxu0 %v1451
  %v3170 = vpop.f32.mrb[0].mxu0
  %v3171 = vadd.f32 %v3010, %v3170
  %v3172 = vpop.f32.mrb[0].mxu0
  %v3173 = vpop.f32.mrb[0].mxu0
  %v3174 = vadd.f32 %v3013, %v3173
  %v3175 = vpop.f32.mrb[0].mxu0
  %3176 = vmatprep.mubr.bf16.mxu0 %v1468
  %3177 = vmatmul.mubr.bf16.gmra.mrb[0].mxu0 %v1467
  %v3178 = vpop.f32.mrb[0].mxu0
  %v3179 = vadd.f32 %v3018, %v3178
  %v3180 = vpop.f32.mrb[0].mxu0
  %v3181 = vpop.f32.mrb[0].mxu0
  %v3182 = vadd.f32 %v3021, %v3181
  %v3183 = vpop.f32.mrb[0].mxu0
  %3184 = vmatprep.mubr.bf16.mxu0 %v1484
  %3185 = vmatmul.mubr.bf16.gmra.mrb[0].mxu0 %v1483
  %v3186 = vpop.f32.mrb[0].mxu0
  %v3187 = vadd.f32 %v3026, %v3186
  %v3188 = vpop.f32.mrb[0].mxu0
  %v3189 = vpop.f32.mrb[0].mxu0
  %v3190 = vadd.f32 %v3029, %v3189
  %v3191 = vpop.f32.mrb[0].mxu0
  %3192 = vmatprep.mubr.bf16.mxu0 %v1500
  %3193 = vmatmul.mubr.bf16.gmra.mrb[0].mxu0 %v1499
  %v3194 = vpop.f32.mrb[0].mxu0
  %v3195 = vadd.f32 %v3034, %v3194
  %v3196 = vpop.f32.mrb[0].mxu0
  %v3197 = vpop.f32.mrb[0].mxu0
  %v3198 = vadd.f32 %v3037, %v3197
  %v3199 = vpop.f32.mrb[0].mxu0
  %3200 = vmatprep.mubr.bf16.mxu0 %v1516
  %3201 = vmatmul.mubr.bf16.gmra.mrb[0].mxu0 %v1515
  %v3202 = vpop.f32.mrb[0].mxu0
  %v3203 = vadd.f32 %v3042, %v3202
  %v3204 = vpop.f32.mrb[0].mxu0
  %v3205 = vpop.f32.mrb[0].mxu0
  %v3206 = vadd.f32 %v3045, %v3205
  %v3207 = vpop.f32.mrb[0].mxu0
  %3208 = vmatprep.mubr.bf16.mxu0 %v1532
  %3209 = vmatmul.mubr.bf16.gmra.mrb[0].mxu0 %v1531
  %v3210 = vpop.f32.mrb[0].mxu0
  %v3211 = vadd.f32 %v3050, %v3210
  %v3212 = vpop.f32.mrb[0].mxu0
  %v3213 = vpop.f32.mrb[0].mxu0
  %v3214 = vadd.f32 %v3053, %v3213
  %v3215 = vpop.f32.mrb[0].mxu0
  %3216 = vmatprep.mubr.bf16.mxu0 %v1548
  %3217 = vmatmul.mubr.bf16.gmra.mrb[0].mxu0 %v1547
  %v3218 = vpop.f32.mrb[0].mxu0
  %v3219 = vadd.f32 %v3058, %v3218
  %v3220 = vpop.f32.mrb[0].mxu0
  %v3221 = vpop.f32.mrb[0].mxu0
  %v3222 = vadd.f32 %v3061, %v3221
  %v3223 = vpop.f32.mrb[0].mxu0
  %3224 = vdwg.mxu0
  %3225 = vmatprep.subr.bf16.mxu0 0
  %3226 = vmatpush1.bf16.msra.mxu0 %v2389
  %3227 = vmatprep.subr.bf16.mxu0 0
  %3228 = vmatpush1.bf16.msra.mxu0 %v2390
  %3229 = vmatprep.subr.bf16.mxu0 0
  %3230 = vmatpush1.bf16.msra.mxu0 %v2391
  %3231 = vmatprep.subr.bf16.mxu0 0
  %3232 = vmatpush1.bf16.msra.mxu0 %v2392
  %3233 = vmatprep.subr.bf16.mxu0 0
  %3234 = vmatpush1.bf16.msra.mxu0 %v2393
  %3235 = vmatprep.subr.bf16.mxu0 0
  %3236 = vmatpush1.bf16.msra.mxu0 %v2394
  %3237 = vmatprep.subr.bf16.mxu0 0
  %3238 = vmatpush1.bf16.msra.mxu0 %v2395
  %3239 = vmatprep.subr.bf16.mxu0 0
  %3240 = vmatpush1.bf16.msra.mxu0 %v2396
  %3241 = vmatprep.subr.bf16.mxu0 0
  %3242 = vmatpush1.bf16.msra.mxu0 %v2397
  %3243 = vmatprep.subr.bf16.mxu0 0
  %3244 = vmatpush1.bf16.msra.mxu0 %v2398
  %3245 = vmatprep.subr.bf16.mxu0 0
  %3246 = vmatpush1.bf16.msra.mxu0 %v2399
  %3247 = vmatprep.subr.bf16.mxu0 0
  %3248 = vmatpush1.bf16.msra.mxu0 %v2400
  %3249 = vmatprep.subr.bf16.mxu0 0
  %3250 = vmatpush1.bf16.msra.mxu0 %v2401
  %3251 = vmatprep.subr.bf16.mxu0 0
  %3252 = vmatpush1.bf16.msra.mxu0 %v2402
  %3253 = vmatprep.subr.bf16.mxu0 0
  %3254 = vmatpush1.bf16.msra.mxu0 %v2403
  %3255 = vmatprep.subr.bf16.mxu0 0
  %3256 = vmatpush1.bf16.msra.mxu0 %v2404
  %3257 = vmatprep.mubr.bf16.mxu0 %v1310
  %3258 = vmatmul.mubr.bf16.gmra.mrb[0].mxu0 %v1309
  %v3259 = vpop.f32.mrb[0].mxu0
  %v3260 = vadd.f32 %v3099, %v3259
  %v3261 = vpop.f32.mrb[0].mxu0
  %v3262 = vpop.f32.mrb[0].mxu0
  %v3263 = vadd.f32 %v3102, %v3262
  %v3264 = vpop.f32.mrb[0].mxu0
  %3265 = vmatprep.mubr.bf16.mxu0 %v1326
  %3266 = vmatmul.mubr.bf16.gmra.mrb[0].mxu0 %v1325
  %v3267 = vpop.f32.mrb[0].mxu0
  %v3268 = vadd.f32 %v3107, %v3267
  %v3269 = vpop.f32.mrb[0].mxu0
  %v3270 = vpop.f32.mrb[0].mxu0
  %v3271 = vadd.f32 %v3110, %v3270
  %v3272 = vpop.f32.mrb[0].mxu0
  %3273 = vmatprep.mubr.bf16.mxu0 %v1342
  %3274 = vmatmul.mubr.bf16.gmra.mrb[0].mxu0 %v1341
  %v3275 = vpop.f32.mrb[0].mxu0
  %v3276 = vadd.f32 %v3115, %v3275
  %v3277 = vpop.f32.mrb[0].mxu0
  %v3278 = vpop.f32.mrb[0].mxu0
  %v3279 = vadd.f32 %v3118, %v3278
  %v3280 = vpop.f32.mrb[0].mxu0
  %3281 = vmatprep.mubr.bf16.mxu0 %v1358
  %3282 = vmatmul.mubr.bf16.gmra.mrb[0].mxu0 %v1357
  %v3283 = vpop.f32.mrb[0].mxu0
  %v3284 = vadd.f32 %v3123, %v3283
  %v3285 = vpop.f32.mrb[0].mxu0
  %v3286 = vpop.f32.mrb[0].mxu0
  %v3287 = vadd.f32 %v3126, %v3286
  %v3288 = vpop.f32.mrb[0].mxu0
  %3289 = vmatprep.mubr.bf16.mxu0 %v1374
  %3290 = vmatmul.mubr.bf16.gmra.mrb[0].mxu0 %v1373
  %v3291 = vpop.f32.mrb[0].mxu0
  %v3292 = vadd.f32 %v3131, %v3291
  %v3293 = vpop.f32.mrb[0].mxu0
  %v3294 = vpop.f32.mrb[0].mxu0
  %v3295 = vadd.f32 %v3134, %v3294
  %v3296 = vpop.f32.mrb[0].mxu0
  %3297 = vmatprep.mubr.bf16.mxu0 %v1390
  %3298 = vmatmul.mubr.bf16.gmra.mrb[0].mxu0 %v1389
  %v3299 = vpop.f32.mrb[0].mxu0
  %v3300 = vadd.f32 %v3139, %v3299
  %v3301 = vpop.f32.mrb[0].mxu0
  %v3302 = vpop.f32.mrb[0].mxu0
  %v3303 = vadd.f32 %v3142, %v3302
  %v3304 = vpop.f32.mrb[0].mxu0
  %3305 = vmatprep.mubr.bf16.mxu0 %v1406
  %3306 = vmatmul.mubr.bf16.gmra.mrb[0].mxu0 %v1405
  %v3307 = vpop.f32.mrb[0].mxu0
  %v3308 = vadd.f32 %v3147, %v3307
  %v3309 = vpop.f32.mrb[0].mxu0
  %v3310 = vpop.f32.mrb[0].mxu0
  %v3311 = vadd.f32 %v3150, %v3310
  %v3312 = vpop.f32.mrb[0].mxu0
  %3313 = vmatprep.mubr.bf16.mxu0 %v1422
  %3314 = vmatmul.mubr.bf16.gmra.mrb[0].mxu0 %v1421
  %v3315 = vpop.f32.mrb[0].mxu0
  %v3316 = vadd.f32 %v3155, %v3315
  %v3317 = vpop.f32.mrb[0].mxu0
  %v3318 = vpop.f32.mrb[0].mxu0
  %v3319 = vadd.f32 %v3158, %v3318
  %v3320 = vpop.f32.mrb[0].mxu0
  %3321 = vmatprep.mubr.bf16.mxu0 %v1438
  %3322 = vmatmul.mubr.bf16.gmra.mrb[0].mxu0 %v1437
  %v3323 = vpop.f32.mrb[0].mxu0
  %v3324 = vadd.f32 %v3163, %v3323
  %v3325 = vpop.f32.mrb[0].mxu0
  %v3326 = vpop.f32.mrb[0].mxu0
  %v3327 = vadd.f32 %v3166, %v3326
  %v3328 = vpop.f32.mrb[0].mxu0
  %3329 = vmatprep.mubr.bf16.mxu0 %v1454
  %3330 = vmatmul.mubr.bf16.gmra.mrb[0].mxu0 %v1453
  %v3331 = vpop.f32.mrb[0].mxu0
  %v3332 = vadd.f32 %v3171, %v3331
  %v3333 = vpop.f32.mrb[0].mxu0
  %v3334 = vpop.f32.mrb[0].mxu0
  %v3335 = vadd.f32 %v3174, %v3334
  %v3336 = vpop.f32.mrb[0].mxu0
  %3337 = vmatprep.mubr.bf16.mxu0 %v1470
  %3338 = vmatmul.mubr.bf16.gmra.mrb[0].mxu0 %v1469
  %v3339 = vpop.f32.mrb[0].mxu0
  %v3340 = vadd.f32 %v3179, %v3339
  %v3341 = vpop.f32.mrb[0].mxu0
  %v3342 = vpop.f32.mrb[0].mxu0
  %v3343 = vadd.f32 %v3182, %v3342
  %v3344 = vpop.f32.mrb[0].mxu0
  %3345 = vmatprep.mubr.bf16.mxu0 %v1486
  %3346 = vmatmul.mubr.bf16.gmra.mrb[0].mxu0 %v1485
  %v3347 = vpop.f32.mrb[0].mxu0
  %v3348 = vadd.f32 %v3187, %v3347
  %v3349 = vpop.f32.mrb[0].mxu0
  %v3350 = vpop.f32.mrb[0].mxu0
  %v3351 = vadd.f32 %v3190, %v3350
  %v3352 = vpop.f32.mrb[0].mxu0
  %3353 = vmatprep.mubr.bf16.mxu0 %v1502
  %3354 = vmatmul.mubr.bf16.gmra.mrb[0].mxu0 %v1501
  %v3355 = vpop.f32.mrb[0].mxu0
  %v3356 = vadd.f32 %v3195, %v3355
  %v3357 = vpop.f32.mrb[0].mxu0
  %v3358 = vpop.f32.mrb[0].mxu0
  %v3359 = vadd.f32 %v3198, %v3358
  %v3360 = vpop.f32.mrb[0].mxu0
  %3361 = vmatprep.mubr.bf16.mxu0 %v1518
  %3362 = vmatmul.mubr.bf16.gmra.mrb[0].mxu0 %v1517
  %v3363 = vpop.f32.mrb[0].mxu0
  %v3364 = vadd.f32 %v3203, %v3363
  %v3365 = vpop.f32.mrb[0].mxu0
  %v3366 = vpop.f32.mrb[0].mxu0
  %v3367 = vadd.f32 %v3206, %v3366
  %v3368 = vpop.f32.mrb[0].mxu0
  %3369 = vmatprep.mubr.bf16.mxu0 %v1534
  %3370 = vmatmul.mubr.bf16.gmra.mrb[0].mxu0 %v1533
  %v3371 = vpop.f32.mrb[0].mxu0
  %v3372 = vadd.f32 %v3211, %v3371
  %v3373 = vpop.f32.mrb[0].mxu0
  %v3374 = vpop.f32.mrb[0].mxu0
  %v3375 = vadd.f32 %v3214, %v3374
  %v3376 = vpop.f32.mrb[0].mxu0
  %3377 = vmatprep.mubr.bf16.mxu0 %v1550
  %3378 = vmatmul.mubr.bf16.gmra.mrb[0].mxu0 %v1549
  %v3379 = vpop.f32.mrb[0].mxu0
  %v3380 = vadd.f32 %v3219, %v3379
  %v3381 = vpop.f32.mrb[0].mxu0
  %v3382 = vpop.f32.mrb[0].mxu0
  %v3383 = vadd.f32 %v3222, %v3382
  %v3384 = vpop.f32.mrb[0].mxu0
  %3385 = vdwg.mxu0
  %3386 = vmatprep.subr.bf16.mxu0 0
  %3387 = vmatpush1.bf16.msra.mxu0 %v2405
  %3388 = vmatprep.subr.bf16.mxu0 0
  %3389 = vmatpush1.bf16.msra.mxu0 %v2406
  %3390 = vmatprep.subr.bf16.mxu0 0
  %3391 = vmatpush1.bf16.msra.mxu0 %v2407
  %3392 = vmatprep.subr.bf16.mxu0 0
  %3393 = vmatpush1.bf16.msra.mxu0 %v2408
  %3394 = vmatprep.subr.bf16.mxu0 0
  %3395 = vmatpush1.bf16.msra.mxu0 %v2409
  %3396 = vmatprep.subr.bf16.mxu0 0
  %3397 = vmatpush1.bf16.msra.mxu0 %v2410
  %3398 = vmatprep.subr.bf16.mxu0 0
  %3399 = vmatpush1.bf16.msra.mxu0 %v2411
  %3400 = vmatprep.subr.bf16.mxu0 0
  %3401 = vmatpush1.bf16.msra.mxu0 %v2412
  %3402 = vmatprep.subr.bf16.mxu0 0
  %3403 = vmatpush1.bf16.msra.mxu0 %v2413
  %3404 = vmatprep.subr.bf16.mxu0 0
  %3405 = vmatpush1.bf16.msra.mxu0 %v2414
  %3406 = vmatprep.subr.bf16.mxu0 0
  %3407 = vmatpush1.bf16.msra.mxu0 %v2415
  %3408 = vmatprep.subr.bf16.mxu0 0
  %3409 = vmatpush1.bf16.msra.mxu0 %v2416
  %3410 = vmatprep.subr.bf16.mxu0 0
  %3411 = vmatpush1.bf16.msra.mxu0 %v2417
  %3412 = vmatprep.subr.bf16.mxu0 0
  %3413 = vmatpush1.bf16.msra.mxu0 %v2418
  %3414 = vmatprep.subr.bf16.mxu0 0
  %3415 = vmatpush1.bf16.msra.mxu0 %v2419
  %3416 = vmatprep.subr.bf16.mxu0 0
  %3417 = vmatpush1.bf16.msra.mxu0 %v2420
  %3418 = vmatprep.mubr.bf16.mxu0 %v1312
  %3419 = vmatmul.mubr.bf16.gmra.mrb[0].mxu0 %v1311
  %v3420 = vpop.f32.mrb[0].mxu0
  %v3421 = vadd.f32 %v3260, %v3420
  %v3422 = vpop.f32.mrb[0].mxu0
  %v3423 = vpop.f32.mrb[0].mxu0
  %v3424 = vadd.f32 %v3263, %v3423
  %v3425 = vpop.f32.mrb[0].mxu0
  %3426 = vmatprep.mubr.bf16.mxu0 %v1328
  %3427 = vmatmul.mubr.bf16.gmra.mrb[0].mxu0 %v1327
  %v3428 = vpop.f32.mrb[0].mxu0
  %v3429 = vadd.f32 %v3268, %v3428
  %v3430 = vpop.f32.mrb[0].mxu0
  %v3431 = vpop.f32.mrb[0].mxu0
  %v3432 = vadd.f32 %v3271, %v3431
  %v3433 = vpop.f32.mrb[0].mxu0
  %3434 = vmatprep.mubr.bf16.mxu0 %v1344
  %3435 = vmatmul.mubr.bf16.gmra.mrb[0].mxu0 %v1343
  %v3436 = vpop.f32.mrb[0].mxu0
  %v3437 = vadd.f32 %v3276, %v3436
  %v3438 = vpop.f32.mrb[0].mxu0
  %v3439 = vpop.f32.mrb[0].mxu0
  %v3440 = vadd.f32 %v3279, %v3439
  %v3441 = vpop.f32.mrb[0].mxu0
  %3442 = vmatprep.mubr.bf16.mxu0 %v1360
  %3443 = vmatmul.mubr.bf16.gmra.mrb[0].mxu0 %v1359
  %v3444 = vpop.f32.mrb[0].mxu0
  %v3445 = vadd.f32 %v3284, %v3444
  %v3446 = vpop.f32.mrb[0].mxu0
  %v3447 = vpop.f32.mrb[0].mxu0
  %v3448 = vadd.f32 %v3287, %v3447
  %v3449 = vpop.f32.mrb[0].mxu0
  %3450 = vmatprep.mubr.bf16.mxu0 %v1376
  %3451 = vmatmul.mubr.bf16.gmra.mrb[0].mxu0 %v1375
  %v3452 = vpop.f32.mrb[0].mxu0
  %v3453 = vadd.f32 %v3292, %v3452
  %v3454 = vpop.f32.mrb[0].mxu0
  %v3455 = vpop.f32.mrb[0].mxu0
  %v3456 = vadd.f32 %v3295, %v3455
  %v3457 = vpop.f32.mrb[0].mxu0
  %3458 = vmatprep.mubr.bf16.mxu0 %v1392
  %3459 = vmatmul.mubr.bf16.gmra.mrb[0].mxu0 %v1391
  %v3460 = vpop.f32.mrb[0].mxu0
  %v3461 = vadd.f32 %v3300, %v3460
  %v3462 = vpop.f32.mrb[0].mxu0
  %v3463 = vpop.f32.mrb[0].mxu0
  %v3464 = vadd.f32 %v3303, %v3463
  %v3465 = vpop.f32.mrb[0].mxu0
  %3466 = vmatprep.mubr.bf16.mxu0 %v1408
  %3467 = vmatmul.mubr.bf16.gmra.mrb[0].mxu0 %v1407
  %v3468 = vpop.f32.mrb[0].mxu0
  %v3469 = vadd.f32 %v3308, %v3468
  %v3470 = vpop.f32.mrb[0].mxu0
  %v3471 = vpop.f32.mrb[0].mxu0
  %v3472 = vadd.f32 %v3311, %v3471
  %v3473 = vpop.f32.mrb[0].mxu0
  %3474 = vmatprep.mubr.bf16.mxu0 %v1424
  %3475 = vmatmul.mubr.bf16.gmra.mrb[0].mxu0 %v1423
  %v3476 = vpop.f32.mrb[0].mxu0
  %v3477 = vadd.f32 %v3316, %v3476
  %v3478 = vpop.f32.mrb[0].mxu0
  %v3479 = vpop.f32.mrb[0].mxu0
  %v3480 = vadd.f32 %v3319, %v3479
  %v3481 = vpop.f32.mrb[0].mxu0
  %3482 = vmatprep.mubr.bf16.mxu0 %v1440
  %3483 = vmatmul.mubr.bf16.gmra.mrb[0].mxu0 %v1439
  %v3484 = vpop.f32.mrb[0].mxu0
  %v3485 = vadd.f32 %v3324, %v3484
  %v3486 = vpop.f32.mrb[0].mxu0
  %v3487 = vpop.f32.mrb[0].mxu0
  %v3488 = vadd.f32 %v3327, %v3487
  %v3489 = vpop.f32.mrb[0].mxu0
  %3490 = vmatprep.mubr.bf16.mxu0 %v1456
  %3491 = vmatmul.mubr.bf16.gmra.mrb[0].mxu0 %v1455
  %v3492 = vpop.f32.mrb[0].mxu0
  %v3493 = vadd.f32 %v3332, %v3492
  %v3494 = vpop.f32.mrb[0].mxu0
  %v3495 = vpop.f32.mrb[0].mxu0
  %v3496 = vadd.f32 %v3335, %v3495
  %v3497 = vpop.f32.mrb[0].mxu0
  %3498 = vmatprep.mubr.bf16.mxu0 %v1472
  %3499 = vmatmul.mubr.bf16.gmra.mrb[0].mxu0 %v1471
  %v3500 = vpop.f32.mrb[0].mxu0
  %v3501 = vadd.f32 %v3340, %v3500
  %v3502 = vpop.f32.mrb[0].mxu0
  %v3503 = vpop.f32.mrb[0].mxu0
  %v3504 = vadd.f32 %v3343, %v3503
  %v3505 = vpop.f32.mrb[0].mxu0
  %3506 = vmatprep.mubr.bf16.mxu0 %v1488
  %3507 = vmatmul.mubr.bf16.gmra.mrb[0].mxu0 %v1487
  %v3508 = vpop.f32.mrb[0].mxu0
  %v3509 = vadd.f32 %v3348, %v3508
  %v3510 = vpop.f32.mrb[0].mxu0
  %v3511 = vpop.f32.mrb[0].mxu0
  %v3512 = vadd.f32 %v3351, %v3511
  %v3513 = vpop.f32.mrb[0].mxu0
  %3514 = vmatprep.mubr.bf16.mxu0 %v1504
  %3515 = vmatmul.mubr.bf16.gmra.mrb[0].mxu0 %v1503
  %v3516 = vpop.f32.mrb[0].mxu0
  %v3517 = vadd.f32 %v3356, %v3516
  %v3518 = vpop.f32.mrb[0].mxu0
  %v3519 = vpop.f32.mrb[0].mxu0
  %v3520 = vadd.f32 %v3359, %v3519
  %v3521 = vpop.f32.mrb[0].mxu0
  %3522 = vmatprep.mubr.bf16.mxu0 %v1520
  %3523 = vmatmul.mubr.bf16.gmra.mrb[0].mxu0 %v1519
  %v3524 = vpop.f32.mrb[0].mxu0
  %v3525 = vadd.f32 %v3364, %v3524
  %v3526 = vpop.f32.mrb[0].mxu0
  %v3527 = vpop.f32.mrb[0].mxu0
  %v3528 = vadd.f32 %v3367, %v3527
  %v3529 = vpop.f32.mrb[0].mxu0
  %3530 = vmatprep.mubr.bf16.mxu0 %v1536
  %3531 = vmatmul.mubr.bf16.gmra.mrb[0].mxu0 %v1535
  %v3532 = vpop.f32.mrb[0].mxu0
  %v3533 = vadd.f32 %v3372, %v3532
  %v3534 = vpop.f32.mrb[0].mxu0
  %v3535 = vpop.f32.mrb[0].mxu0
  %v3536 = vadd.f32 %v3375, %v3535
  %v3537 = vpop.f32.mrb[0].mxu0
  %3538 = vmatprep.mubr.bf16.mxu0 %v1552
  %3539 = vmatmul.mubr.bf16.gmra.mrb[0].mxu0 %v1551
  %v3540 = vpop.f32.mrb[0].mxu0
  %v3541 = vadd.f32 %v3380, %v3540
  %v3542 = vpop.f32.mrb[0].mxu0
  %v3543 = vpop.f32.mrb[0].mxu0
  %v3544 = vadd.f32 %v3383, %v3543
  %v3545 = vpop.f32.mrb[0].mxu0
  %3546 = vdwg.mxu0
  %3547 = vmatprep.subr.bf16.mxu0 0
  %3548 = vmatpush1.bf16.msra.mxu0 %v2421
  %3549 = vmatprep.subr.bf16.mxu0 0
  %3550 = vmatpush1.bf16.msra.mxu0 %v2422
  %3551 = vmatprep.subr.bf16.mxu0 0
  %3552 = vmatpush1.bf16.msra.mxu0 %v2423
  %3553 = vmatprep.subr.bf16.mxu0 0
  %3554 = vmatpush1.bf16.msra.mxu0 %v2424
  %3555 = vmatprep.subr.bf16.mxu0 0
  %3556 = vmatpush1.bf16.msra.mxu0 %v2425
  %3557 = vmatprep.subr.bf16.mxu0 0
  %3558 = vmatpush1.bf16.msra.mxu0 %v2426
  %3559 = vmatprep.subr.bf16.mxu0 0
  %3560 = vmatpush1.bf16.msra.mxu0 %v2427
  %3561 = vmatprep.subr.bf16.mxu0 0
  %3562 = vmatpush1.bf16.msra.mxu0 %v2428
  %3563 = vmatprep.subr.bf16.mxu0 0
  %3564 = vmatpush1.bf16.msra.mxu0 %v2429
  %3565 = vmatprep.subr.bf16.mxu0 0
  %3566 = vmatpush1.bf16.msra.mxu0 %v2430
  %3567 = vmatprep.subr.bf16.mxu0 0
  %3568 = vmatpush1.bf16.msra.mxu0 %v2431
  %3569 = vmatprep.subr.bf16.mxu0 0
  %3570 = vmatpush1.bf16.msra.mxu0 %v2432
  %3571 = vmatprep.subr.bf16.mxu0 0
  %3572 = vmatpush1.bf16.msra.mxu0 %v2433
  %3573 = vmatprep.subr.bf16.mxu0 0
  %3574 = vmatpush1.bf16.msra.mxu0 %v2434
  %3575 = vmatprep.subr.bf16.mxu0 0
  %3576 = vmatpush1.bf16.msra.mxu0 %v2435
  %3577 = vmatprep.subr.bf16.mxu0 0
  %3578 = vmatpush1.bf16.msra.mxu0 %v2436
  %3579 = vmatprep.mubr.bf16.mxu0 %v1314
  %3580 = vmatmul.mubr.bf16.gmra.mrb[0].mxu0 %v1313
  %v3581 = vpop.f32.mrb[0].mxu0
  %v3582 = vadd.f32 %v3421, %v3581
  %v3583 = vpop.f32.mrb[0].mxu0
  %v3584 = vpop.f32.mrb[0].mxu0
  %v3585 = vadd.f32 %v3424, %v3584
  %v3586 = vpop.f32.mrb[0].mxu0
  %3587 = vmatprep.mubr.bf16.mxu0 %v1330
  %3588 = vmatmul.mubr.bf16.gmra.mrb[0].mxu0 %v1329
  %v3589 = vpop.f32.mrb[0].mxu0
  %v3590 = vadd.f32 %v3429, %v3589
  %v3591 = vpop.f32.mrb[0].mxu0
  %v3592 = vpop.f32.mrb[0].mxu0
  %v3593 = vadd.f32 %v3432, %v3592
  %v3594 = vpop.f32.mrb[0].mxu0
  %3595 = vmatprep.mubr.bf16.mxu0 %v1346
  %3596 = vmatmul.mubr.bf16.gmra.mrb[0].mxu0 %v1345
  %v3597 = vpop.f32.mrb[0].mxu0
  %v3598 = vadd.f32 %v3437, %v3597
  %v3599 = vpop.f32.mrb[0].mxu0
  %v3600 = vpop.f32.mrb[0].mxu0
  %v3601 = vadd.f32 %v3440, %v3600
  %v3602 = vpop.f32.mrb[0].mxu0
  %3603 = vmatprep.mubr.bf16.mxu0 %v1362
  %3604 = vmatmul.mubr.bf16.gmra.mrb[0].mxu0 %v1361
  %v3605 = vpop.f32.mrb[0].mxu0
  %v3606 = vadd.f32 %v3445, %v3605
  %v3607 = vpop.f32.mrb[0].mxu0
  %v3608 = vpop.f32.mrb[0].mxu0
  %v3609 = vadd.f32 %v3448, %v3608
  %v3610 = vpop.f32.mrb[0].mxu0
  %3611 = vmatprep.mubr.bf16.mxu0 %v1378
  %3612 = vmatmul.mubr.bf16.gmra.mrb[0].mxu0 %v1377
  %v3613 = vpop.f32.mrb[0].mxu0
  %v3614 = vadd.f32 %v3453, %v3613
  %v3615 = vpop.f32.mrb[0].mxu0
  %v3616 = vpop.f32.mrb[0].mxu0
  %v3617 = vadd.f32 %v3456, %v3616
  %v3618 = vpop.f32.mrb[0].mxu0
  %3619 = vmatprep.mubr.bf16.mxu0 %v1394
  %3620 = vmatmul.mubr.bf16.gmra.mrb[0].mxu0 %v1393
  %v3621 = vpop.f32.mrb[0].mxu0
  %v3622 = vadd.f32 %v3461, %v3621
  %v3623 = vpop.f32.mrb[0].mxu0
  %v3624 = vpop.f32.mrb[0].mxu0
  %v3625 = vadd.f32 %v3464, %v3624
  %v3626 = vpop.f32.mrb[0].mxu0
  %3627 = vmatprep.mubr.bf16.mxu0 %v1410
  %3628 = vmatmul.mubr.bf16.gmra.mrb[0].mxu0 %v1409
  %v3629 = vpop.f32.mrb[0].mxu0
  %v3630 = vadd.f32 %v3469, %v3629
  %v3631 = vpop.f32.mrb[0].mxu0
  %v3632 = vpop.f32.mrb[0].mxu0
  %v3633 = vadd.f32 %v3472, %v3632
  %v3634 = vpop.f32.mrb[0].mxu0
  %3635 = vmatprep.mubr.bf16.mxu0 %v1426
  %3636 = vmatmul.mubr.bf16.gmra.mrb[0].mxu0 %v1425
  %v3637 = vpop.f32.mrb[0].mxu0
  %v3638 = vadd.f32 %v3477, %v3637
  %v3639 = vpop.f32.mrb[0].mxu0
  %v3640 = vpop.f32.mrb[0].mxu0
  %v3641 = vadd.f32 %v3480, %v3640
  %v3642 = vpop.f32.mrb[0].mxu0
  %3643 = vmatprep.mubr.bf16.mxu0 %v1442
  %3644 = vmatmul.mubr.bf16.gmra.mrb[0].mxu0 %v1441
  %v3645 = vpop.f32.mrb[0].mxu0
  %v3646 = vadd.f32 %v3485, %v3645
  %v3647 = vpop.f32.mrb[0].mxu0
  %v3648 = vpop.f32.mrb[0].mxu0
  %v3649 = vadd.f32 %v3488, %v3648
  %v3650 = vpop.f32.mrb[0].mxu0
  %3651 = vmatprep.mubr.bf16.mxu0 %v1458
  %3652 = vmatmul.mubr.bf16.gmra.mrb[0].mxu0 %v1457
  %v3653 = vpop.f32.mrb[0].mxu0
  %v3654 = vadd.f32 %v3493, %v3653
  %v3655 = vpop.f32.mrb[0].mxu0
  %v3656 = vpop.f32.mrb[0].mxu0
  %v3657 = vadd.f32 %v3496, %v3656
  %v3658 = vpop.f32.mrb[0].mxu0
  %3659 = vmatprep.mubr.bf16.mxu0 %v1474
  %3660 = vmatmul.mubr.bf16.gmra.mrb[0].mxu0 %v1473
  %v3661 = vpop.f32.mrb[0].mxu0
  %v3662 = vadd.f32 %v3501, %v3661
  %v3663 = vpop.f32.mrb[0].mxu0
  %v3664 = vpop.f32.mrb[0].mxu0
  %v3665 = vadd.f32 %v3504, %v3664
  %v3666 = vpop.f32.mrb[0].mxu0
  %3667 = vmatprep.mubr.bf16.mxu0 %v1490
  %3668 = vmatmul.mubr.bf16.gmra.mrb[0].mxu0 %v1489
  %v3669 = vpop.f32.mrb[0].mxu0
  %v3670 = vadd.f32 %v3509, %v3669
  %v3671 = vpop.f32.mrb[0].mxu0
  %v3672 = vpop.f32.mrb[0].mxu0
  %v3673 = vadd.f32 %v3512, %v3672
  %v3674 = vpop.f32.mrb[0].mxu0
  %3675 = vmatprep.mubr.bf16.mxu0 %v1506
  %3676 = vmatmul.mubr.bf16.gmra.mrb[0].mxu0 %v1505
  %v3677 = vpop.f32.mrb[0].mxu0
  %v3678 = vadd.f32 %v3517, %v3677
  %v3679 = vpop.f32.mrb[0].mxu0
  %v3680 = vpop.f32.mrb[0].mxu0
  %v3681 = vadd.f32 %v3520, %v3680
  %v3682 = vpop.f32.mrb[0].mxu0
  %3683 = vmatprep.mubr.bf16.mxu0 %v1522
  %3684 = vmatmul.mubr.bf16.gmra.mrb[0].mxu0 %v1521
  %v3685 = vpop.f32.mrb[0].mxu0
  %v3686 = vadd.f32 %v3525, %v3685
  %v3687 = vpop.f32.mrb[0].mxu0
  %v3688 = vpop.f32.mrb[0].mxu0
  %v3689 = vadd.f32 %v3528, %v3688
  %v3690 = vpop.f32.mrb[0].mxu0
  %3691 = vmatprep.mubr.bf16.mxu0 %v1538
  %3692 = vmatmul.mubr.bf16.gmra.mrb[0].mxu0 %v1537
  %v3693 = vpop.f32.mrb[0].mxu0
  %v3694 = vadd.f32 %v3533, %v3693
  %v3695 = vpop.f32.mrb[0].mxu0
  %v3696 = vpop.f32.mrb[0].mxu0
  %v3697 = vadd.f32 %v3536, %v3696
  %v3698 = vpop.f32.mrb[0].mxu0
  %3699 = vmatprep.mubr.bf16.mxu0 %v1554
  %3700 = vmatmul.mubr.bf16.gmra.mrb[0].mxu0 %v1553
  %v3701 = vpop.f32.mrb[0].mxu0
  %v3702 = vadd.f32 %v3541, %v3701
  %v3703 = vpop.f32.mrb[0].mxu0
  %v3704 = vpop.f32.mrb[0].mxu0
  %v3705 = vadd.f32 %v3544, %v3704
  %v3706 = vpop.f32.mrb[0].mxu0
  %3707 = vdwg.mxu0
  %3708 = vmatprep.subr.bf16.mxu0 0
  %3709 = vmatpush1.bf16.msra.mxu0 %v2437
  %3710 = vmatprep.subr.bf16.mxu0 0
  %3711 = vmatpush1.bf16.msra.mxu0 %v2438
  %3712 = vmatprep.subr.bf16.mxu0 0
  %3713 = vmatpush1.bf16.msra.mxu0 %v2439
  %3714 = vmatprep.subr.bf16.mxu0 0
  %3715 = vmatpush1.bf16.msra.mxu0 %v2440
  %3716 = vmatprep.subr.bf16.mxu0 0
  %3717 = vmatpush1.bf16.msra.mxu0 %v2441
  %3718 = vmatprep.subr.bf16.mxu0 0
  %3719 = vmatpush1.bf16.msra.mxu0 %v2442
  %3720 = vmatprep.subr.bf16.mxu0 0
  %3721 = vmatpush1.bf16.msra.mxu0 %v2443
  %3722 = vmatprep.subr.bf16.mxu0 0
  %3723 = vmatpush1.bf16.msra.mxu0 %v2444
  %3724 = vmatprep.subr.bf16.mxu0 0
  %3725 = vmatpush1.bf16.msra.mxu0 %v2445
  %3726 = vmatprep.subr.bf16.mxu0 0
  %3727 = vmatpush1.bf16.msra.mxu0 %v2446
  %3728 = vmatprep.subr.bf16.mxu0 0
  %3729 = vmatpush1.bf16.msra.mxu0 %v2447
  %3730 = vmatprep.subr.bf16.mxu0 0
  %3731 = vmatpush1.bf16.msra.mxu0 %v2448
  %3732 = vmatprep.subr.bf16.mxu0 0
  %3733 = vmatpush1.bf16.msra.mxu0 %v2449
  %3734 = vmatprep.subr.bf16.mxu0 0
  %3735 = vmatpush1.bf16.msra.mxu0 %v2450
  %3736 = vmatprep.subr.bf16.mxu0 0
  %3737 = vmatpush1.bf16.msra.mxu0 %v2451
  %3738 = vmatprep.subr.bf16.mxu0 0
  %3739 = vmatpush1.bf16.msra.mxu0 %v2452
  %3740 = vmatprep.mubr.bf16.mxu0 %v1316
  %3741 = vmatmul.mubr.bf16.gmra.mrb[0].mxu0 %v1315
  %v3742 = vpop.f32.mrb[0].mxu0
  %v3743 = vadd.f32 %v3582, %v3742
  %v3744 = vpop.f32.mrb[0].mxu0
  %v3745 = vpop.f32.mrb[0].mxu0
  %v3746 = vadd.f32 %v3585, %v3745
  %v3747 = vpop.f32.mrb[0].mxu0
  %3748 = vmatprep.mubr.bf16.mxu0 %v1332
  %3749 = vmatmul.mubr.bf16.gmra.mrb[0].mxu0 %v1331
  %v3750 = vpop.f32.mrb[0].mxu0
  %v3751 = vadd.f32 %v3590, %v3750
  %v3752 = vpop.f32.mrb[0].mxu0
  %v3753 = vpop.f32.mrb[0].mxu0
  %v3754 = vadd.f32 %v3593, %v3753
  %v3755 = vpop.f32.mrb[0].mxu0
  %3756 = vmatprep.mubr.bf16.mxu0 %v1348
  %3757 = vmatmul.mubr.bf16.gmra.mrb[0].mxu0 %v1347
  %v3758 = vpop.f32.mrb[0].mxu0
  %v3759 = vadd.f32 %v3598, %v3758
  %v3760 = vpop.f32.mrb[0].mxu0
  %v3761 = vpop.f32.mrb[0].mxu0
  %v3762 = vadd.f32 %v3601, %v3761
  %v3763 = vpop.f32.mrb[0].mxu0
  %3764 = vmatprep.mubr.bf16.mxu0 %v1364
  %3765 = vmatmul.mubr.bf16.gmra.mrb[0].mxu0 %v1363
  %v3766 = vpop.f32.mrb[0].mxu0
  %v3767 = vadd.f32 %v3606, %v3766
  %v3768 = vpop.f32.mrb[0].mxu0
  %v3769 = vpop.f32.mrb[0].mxu0
  %v3770 = vadd.f32 %v3609, %v3769
  %v3771 = vpop.f32.mrb[0].mxu0
  %3772 = vmatprep.mubr.bf16.mxu0 %v1380
  %3773 = vmatmul.mubr.bf16.gmra.mrb[0].mxu0 %v1379
  %v3774 = vpop.f32.mrb[0].mxu0
  %v3775 = vadd.f32 %v3614, %v3774
  %v3776 = vpop.f32.mrb[0].mxu0
  %v3777 = vpop.f32.mrb[0].mxu0
  %v3778 = vadd.f32 %v3617, %v3777
  %v3779 = vpop.f32.mrb[0].mxu0
  %3780 = vmatprep.mubr.bf16.mxu0 %v1396
  %3781 = vmatmul.mubr.bf16.gmra.mrb[0].mxu0 %v1395
  %v3782 = vpop.f32.mrb[0].mxu0
  %v3783 = vadd.f32 %v3622, %v3782
  %v3784 = vpop.f32.mrb[0].mxu0
  %v3785 = vpop.f32.mrb[0].mxu0
  %v3786 = vadd.f32 %v3625, %v3785
  %v3787 = vpop.f32.mrb[0].mxu0
  %3788 = vmatprep.mubr.bf16.mxu0 %v1412
  %3789 = vmatmul.mubr.bf16.gmra.mrb[0].mxu0 %v1411
  %v3790 = vpop.f32.mrb[0].mxu0
  %v3791 = vadd.f32 %v3630, %v3790
  %v3792 = vpop.f32.mrb[0].mxu0
  %v3793 = vpop.f32.mrb[0].mxu0
  %v3794 = vadd.f32 %v3633, %v3793
  %v3795 = vpop.f32.mrb[0].mxu0
  %3796 = vmatprep.mubr.bf16.mxu0 %v1428
  %3797 = vmatmul.mubr.bf16.gmra.mrb[0].mxu0 %v1427
  %v3798 = vpop.f32.mrb[0].mxu0
  %v3799 = vadd.f32 %v3638, %v3798
  %v3800 = vpop.f32.mrb[0].mxu0
  %v3801 = vpop.f32.mrb[0].mxu0
  %v3802 = vadd.f32 %v3641, %v3801
  %v3803 = vpop.f32.mrb[0].mxu0
  %3804 = vmatprep.mubr.bf16.mxu0 %v1444
  %3805 = vmatmul.mubr.bf16.gmra.mrb[0].mxu0 %v1443
  %v3806 = vpop.f32.mrb[0].mxu0
  %v3807 = vadd.f32 %v3646, %v3806
  %v3808 = vpop.f32.mrb[0].mxu0
  %v3809 = vpop.f32.mrb[0].mxu0
  %v3810 = vadd.f32 %v3649, %v3809
  %v3811 = vpop.f32.mrb[0].mxu0
  %3812 = vmatprep.mubr.bf16.mxu0 %v1460
  %3813 = vmatmul.mubr.bf16.gmra.mrb[0].mxu0 %v1459
  %v3814 = vpop.f32.mrb[0].mxu0
  %v3815 = vadd.f32 %v3654, %v3814
  %v3816 = vpop.f32.mrb[0].mxu0
  %v3817 = vpop.f32.mrb[0].mxu0
  %v3818 = vadd.f32 %v3657, %v3817
  %v3819 = vpop.f32.mrb[0].mxu0
  %3820 = vmatprep.mubr.bf16.mxu0 %v1476
  %3821 = vmatmul.mubr.bf16.gmra.mrb[0].mxu0 %v1475
  %v3822 = vpop.f32.mrb[0].mxu0
  %v3823 = vadd.f32 %v3662, %v3822
  %v3824 = vpop.f32.mrb[0].mxu0
  %v3825 = vpop.f32.mrb[0].mxu0
  %v3826 = vadd.f32 %v3665, %v3825
  %v3827 = vpop.f32.mrb[0].mxu0
  %3828 = vmatprep.mubr.bf16.mxu0 %v1492
  %3829 = vmatmul.mubr.bf16.gmra.mrb[0].mxu0 %v1491
  %v3830 = vpop.f32.mrb[0].mxu0
  %v3831 = vadd.f32 %v3670, %v3830
  %v3832 = vpop.f32.mrb[0].mxu0
  %v3833 = vpop.f32.mrb[0].mxu0
  %v3834 = vadd.f32 %v3673, %v3833
  %v3835 = vpop.f32.mrb[0].mxu0
  %3836 = vmatprep.mubr.bf16.mxu0 %v1508
  %3837 = vmatmul.mubr.bf16.gmra.mrb[0].mxu0 %v1507
  %v3838 = vpop.f32.mrb[0].mxu0
  %v3839 = vadd.f32 %v3678, %v3838
  %v3840 = vpop.f32.mrb[0].mxu0
  %v3841 = vpop.f32.mrb[0].mxu0
  %v3842 = vadd.f32 %v3681, %v3841
  %v3843 = vpop.f32.mrb[0].mxu0
  %3844 = vmatprep.mubr.bf16.mxu0 %v1524
  %3845 = vmatmul.mubr.bf16.gmra.mrb[0].mxu0 %v1523
  %v3846 = vpop.f32.mrb[0].mxu0
  %v3847 = vadd.f32 %v3686, %v3846
  %v3848 = vpop.f32.mrb[0].mxu0
  %v3849 = vpop.f32.mrb[0].mxu0
  %v3850 = vadd.f32 %v3689, %v3849
  %v3851 = vpop.f32.mrb[0].mxu0
  %3852 = vmatprep.mubr.bf16.mxu0 %v1540
  %3853 = vmatmul.mubr.bf16.gmra.mrb[0].mxu0 %v1539
  %v3854 = vpop.f32.mrb[0].mxu0
  %v3855 = vadd.f32 %v3694, %v3854
  %v3856 = vpop.f32.mrb[0].mxu0
  %v3857 = vpop.f32.mrb[0].mxu0
  %v3858 = vadd.f32 %v3697, %v3857
  %v3859 = vpop.f32.mrb[0].mxu0
  %3860 = vmatprep.mubr.bf16.mxu0 %v1556
  %3861 = vmatmul.mubr.bf16.gmra.mrb[0].mxu0 %v1555
  %v3862 = vpop.f32.mrb[0].mxu0
  %v3863 = vadd.f32 %v3702, %v3862
  %v3864 = vpop.f32.mrb[0].mxu0
  %v3865 = vpop.f32.mrb[0].mxu0
  %v3866 = vadd.f32 %v3705, %v3865
  %v3867 = vpop.f32.mrb[0].mxu0
  %3868 = vdwg.mxu0
  %v3869 = vpack.c.bf16 %v3746, %v3743
  %v3870 = vpack.c.bf16 %v3754, %v3751
  %v3871 = vpack.c.bf16 %v3762, %v3759
  %v3872 = vpack.c.bf16 %v3770, %v3767
  %v3873 = vpack.c.bf16 %v3778, %v3775
  %v3874 = vpack.c.bf16 %v3786, %v3783
  %v3875 = vpack.c.bf16 %v3794, %v3791
  %v3876 = vpack.c.bf16 %v3802, %v3799
  %v3877 = vpack.c.bf16 %v3810, %v3807
  %v3878 = vpack.c.bf16 %v3818, %v3815
  %v3879 = vpack.c.bf16 %v3826, %v3823
  %v3880 = vpack.c.bf16 %v3834, %v3831
  %v3881 = vpack.c.bf16 %v3842, %v3839
  %v3882 = vpack.c.bf16 %v3850, %v3847
  %v3883 = vpack.c.bf16 %v3858, %v3855
  %v3884 = vpack.c.bf16 %v3866, %v3863
  %v3901 = vunpack.c.l.b16 %v3869
  %v3902 = vunpack.c.h.b16 %v3869
  %v3903 = vunpack.c.l.b16 %v3870
  %v3904 = vunpack.c.h.b16 %v3870
  %v3905 = vunpack.c.l.b16 %v3871
  %v3906 = vunpack.c.h.b16 %v3871
  %v3907 = vunpack.c.l.b16 %v3872
  %v3908 = vunpack.c.h.b16 %v3872
  %v3909 = vunpack.c.l.b16 %v3873
  %v3910 = vunpack.c.h.b16 %v3873
  %v3911 = vunpack.c.l.b16 %v3874
  %v3912 = vunpack.c.h.b16 %v3874
  %v3913 = vunpack.c.l.b16 %v3875
  %v3914 = vunpack.c.h.b16 %v3875
  %v3915 = vunpack.c.l.b16 %v3876
  %v3916 = vunpack.c.h.b16 %v3876
  %v3917 = vunpack.c.l.b16 %v3877
  %v3918 = vunpack.c.h.b16 %v3877
  %v3919 = vunpack.c.l.b16 %v3878
  %v3920 = vunpack.c.h.b16 %v3878
  %v3921 = vunpack.c.l.b16 %v3879
  %v3922 = vunpack.c.h.b16 %v3879
  %v3923 = vunpack.c.l.b16 %v3880
  %v3924 = vunpack.c.h.b16 %v3880
  %v3925 = vunpack.c.l.b16 %v3881
  %v3926 = vunpack.c.h.b16 %v3881
  %v3927 = vunpack.c.l.b16 %v3882
  %v3928 = vunpack.c.h.b16 %v3882
  %v3929 = vunpack.c.l.b16 %v3883
  %v3930 = vunpack.c.h.b16 %v3883
  %v3931 = vunpack.c.l.b16 %v3884
  %v3932 = vunpack.c.h.b16 %v3884
  %v3933 = vpack.c.b16 %v3901, %v3901
  %v3934 = vpack.c.b16 %v3902, %v3902
  %v3935 = vpack.c.b16 %v3903, %v3903
  %v3936 = vpack.c.b16 %v3904, %v3904
  %v3937 = vpack.c.b16 %v3905, %v3905
  %v3938 = vpack.c.b16 %v3906, %v3906
  %v3939 = vpack.c.b16 %v3907, %v3907
  %v3940 = vpack.c.b16 %v3908, %v3908
  %v3941 = vpack.c.b16 %v3909, %v3909
  %v3942 = vpack.c.b16 %v3910, %v3910
  %v3943 = vpack.c.b16 %v3911, %v3911
  %v3944 = vpack.c.b16 %v3912, %v3912
  %v3945 = vpack.c.b16 %v3913, %v3913
  %v3946 = vpack.c.b16 %v3914, %v3914
  %v3947 = vpack.c.b16 %v3915, %v3915
  %v3948 = vpack.c.b16 %v3916, %v3916
  %v3949 = vpack.c.b16 %v3917, %v3917
  %v3950 = vpack.c.b16 %v3918, %v3918
  %v3951 = vpack.c.b16 %v3919, %v3919
  %v3952 = vpack.c.b16 %v3920, %v3920
  %v3953 = vpack.c.b16 %v3921, %v3921
  %v3954 = vpack.c.b16 %v3922, %v3922
  %v3955 = vpack.c.b16 %v3923, %v3923
  %v3956 = vpack.c.b16 %v3924, %v3924
  %v3957 = vpack.c.b16 %v3925, %v3925
  %v3958 = vpack.c.b16 %v3926, %v3926
  %v3959 = vpack.c.b16 %v3927, %v3927
  %v3960 = vpack.c.b16 %v3928, %v3928
  %v3961 = vpack.c.b16 %v3929, %v3929
  %v3962 = vpack.c.b16 %v3930, %v3930
  %v3963 = vpack.c.b16 %v3931, %v3931
  %v3964 = vpack.c.b16 %v3932, %v3932
  %3997 = vst [vmem:[%s2] sm:$0xf] %v3933
  %3998 = vst [vmem:[%s2 + $0x4] sm:$0xf] %v3934
  %3999 = vst [vmem:[%s2 + $0x8] sm:$0xf] %v3935
  %4000 = vst [vmem:[%s2 + $0xc] sm:$0xf] %v3936
  %4001 = vst [vmem:[%s2 + $0x10] sm:$0xf] %v3937
  %4002 = vst [vmem:[%s2 + $0x14] sm:$0xf] %v3938
  %4003 = vst [vmem:[%s2 + $0x18] sm:$0xf] %v3939
  %4004 = vst [vmem:[%s2 + $0x1c] sm:$0xf] %v3940
  %4005 = vst [vmem:[%s2 + $0x20] sm:$0xf] %v3941
  %4006 = vst [vmem:[%s2 + $0x24] sm:$0xf] %v3942
  %4007 = vst [vmem:[%s2 + $0x28] sm:$0xf] %v3943
  %4008 = vst [vmem:[%s2 + $0x2c] sm:$0xf] %v3944
  %4009 = vst [vmem:[%s2 + $0x30] sm:$0xf] %v3945
  %4010 = vst [vmem:[%s2 + $0x34] sm:$0xf] %v3946
  %4011 = vst [vmem:[%s2 + $0x38] sm:$0xf] %v3947
  %4012 = vst [vmem:[%s2 + $0x3c] sm:$0xf] %v3948
  %4013 = vst [vmem:[%s2 + $0x40] sm:$0xf] %v3949
  %4014 = vst [vmem:[%s2 + $0x44] sm:$0xf] %v3950
  %4015 = vst [vmem:[%s2 + $0x48] sm:$0xf] %v3951
  %4016 = vst [vmem:[%s2 + $0x4c] sm:$0xf] %v3952
  %4017 = vst [vmem:[%s2 + $0x50] sm:$0xf] %v3953
  %4018 = vst [vmem:[%s2 + $0x54] sm:$0xf] %v3954
  %4019 = vst [vmem:[%s2 + $0x58] sm:$0xf] %v3955
  %4020 = vst [vmem:[%s2 + $0x5c] sm:$0xf] %v3956
  %4021 = vst [vmem:[%s2 + $0x60] sm:$0xf] %v3957
  %4022 = vst [vmem:[%s2 + $0x64] sm:$0xf] %v3958
  %4023 = vst [vmem:[%s2 + $0x68] sm:$0xf] %v3959
  %4024 = vst [vmem:[%s2 + $0x6c] sm:$0xf] %v3960
  %4025 = vst [vmem:[%s2 + $0x70] sm:$0xf] %v3961
  %4026 = vst [vmem:[%s2 + $0x74] sm:$0xf] %v3962
  %4027 = vst [vmem:[%s2 + $0x78] sm:$0xf] %v3963
  %4028 = vst [vmem:[%s2 + $0x7c] sm:$0xf] %v3964
  %v4029 = vld [vmem:[%s3] sm:$0x1]
  %v4030 = vadd.f32 %v3743, %v3746
  %v4031 = vadd.f32 %v4030, %v3751
  %v4032 = vadd.f32 %v4031, %v3754
  %v4033 = vadd.f32 %v4032, %v3759
  %v4034 = vadd.f32 %v4033, %v3762
  %v4035 = vadd.f32 %v4034, %v3767
  %v4036 = vadd.f32 %v4035, %v3770
  %v4037 = vadd.f32 %v4036, %v3775
  %v4038 = vadd.f32 %v4037, %v3778
  %v4039 = vadd.f32 %v4038, %v3783
  %v4040 = vadd.f32 %v4039, %v3786
  %v4041 = vadd.f32 %v4040, %v3791
  %v4042 = vadd.f32 %v4041, %v3794
  %v4043 = vadd.f32 %v4042, %v3799
  %v4044 = vadd.f32 %v4043, %v3802
  %v4045 = vadd.f32 %v4044, %v3807
  %v4046 = vadd.f32 %v4045, %v3810
  %v4047 = vadd.f32 %v4046, %v3815
  %v4048 = vadd.f32 %v4047, %v3818
  %v4049 = vadd.f32 %v4048, %v3823
  %v4050 = vadd.f32 %v4049, %v3826
  %v4051 = vadd.f32 %v4050, %v3831
  %v4052 = vadd.f32 %v4051, %v3834
  %v4053 = vadd.f32 %v4052, %v3839
  %v4054 = vadd.f32 %v4053, %v3842
  %v4055 = vadd.f32 %v4054, %v3847
  %v4056 = vadd.f32 %v4055, %v3850
  %v4057 = vadd.f32 %v4056, %v3855
  %v4058 = vadd.f32 %v4057, %v3858
  %v4059 = vadd.f32 %v4058, %v3863
  %v4060 = vadd.f32 %v4059, %v3866
  %v4061 = vrot.slane %v4060, 4
  %v4062 = vadd.f32 %v4060, %v4061
  %v4063 = vrot.slane %v4062, 2
  %v4064 = vadd.f32 %v4062, %v4063
  %v4065 = vrot.slane %v4064, 1
  %v4066 = vadd.f32 %v4064, %v4065
  %v4067 = vadd.f32 %v4029, %v4066
  %4068 = vst [vmem:[%s3] sm:$0x1] %v4067
  %v4069 = vld [vmem:[%s4] sm:$0x1]
  %v4070 = vmul.f32 %v3743, %v3743
  %v4071 = vmul.f32 %v3746, %v3746
  %v4072 = vmul.f32 %v3751, %v3751
  %v4073 = vmul.f32 %v3754, %v3754
  %v4074 = vmul.f32 %v3759, %v3759
  %v4075 = vmul.f32 %v3762, %v3762
  %v4076 = vmul.f32 %v3767, %v3767
  %v4077 = vmul.f32 %v3770, %v3770
  %v4078 = vmul.f32 %v3775, %v3775
  %v4079 = vmul.f32 %v3778, %v3778
  %v4080 = vmul.f32 %v3783, %v3783
  %v4081 = vmul.f32 %v3786, %v3786
  %v4082 = vmul.f32 %v3791, %v3791
  %v4083 = vmul.f32 %v3794, %v3794
  %v4084 = vmul.f32 %v3799, %v3799
  %v4085 = vmul.f32 %v3802, %v3802
  %v4086 = vmul.f32 %v3807, %v3807
  %v4087 = vmul.f32 %v3810, %v3810
  %v4088 = vmul.f32 %v3815, %v3815
  %v4089 = vmul.f32 %v3818, %v3818
  %v4090 = vmul.f32 %v3823, %v3823
  %v4091 = vmul.f32 %v3826, %v3826
  %v4092 = vmul.f32 %v3831, %v3831
  %v4093 = vmul.f32 %v3834, %v3834
  %v4094 = vmul.f32 %v3839, %v3839
  %v4095 = vmul.f32 %v3842, %v3842
  %v4096 = vmul.f32 %v3847, %v3847
  %v4097 = vmul.f32 %v3850, %v3850
  %v4098 = vmul.f32 %v3855, %v3855
  %v4099 = vmul.f32 %v3858, %v3858
  %v4100 = vmul.f32 %v3863, %v3863
  %v4101 = vmul.f32 %v3866, %v3866
  %v4102 = vadd.f32 %v4070, %v4071
  %v4103 = vadd.f32 %v4102, %v4072
  %v4104 = vadd.f32 %v4103, %v4073
  %v4105 = vadd.f32 %v4104, %v4074
  %v4106 = vadd.f32 %v4105, %v4075
  %v4107 = vadd.f32 %v4106, %v4076
  %v4108 = vadd.f32 %v4107, %v4077
  %v4109 = vadd.f32 %v4108, %v4078
  %v4110 = vadd.f32 %v4109, %v4079
  %v4111 = vadd.f32 %v4110, %v4080
  %v4112 = vadd.f32 %v4111, %v4081
  %v4113 = vadd.f32 %v4112, %v4082
  %v4114 = vadd.f32 %v4113, %v4083
  %v4115 = vadd.f32 %v4114, %v4084
  %v4116 = vadd.f32 %v4115, %v4085
  %v4117 = vadd.f32 %v4116, %v4086
  %v4118 = vadd.f32 %v4117, %v4087
  %v4119 = vadd.f32 %v4118, %v4088
  %v4120 = vadd.f32 %v4119, %v4089
  %v4121 = vadd.f32 %v4120, %v4090
  %v4122 = vadd.f32 %v4121, %v4091
  %v4123 = vadd.f32 %v4122, %v4092
  %v4124 = vadd.f32 %v4123, %v4093
  %v4125 = vadd.f32 %v4124, %v4094
  %v4126 = vadd.f32 %v4125, %v4095
  %v4127 = vadd.f32 %v4126, %v4096
  %v4128 = vadd.f32 %v4127, %v4097
  %v4129 = vadd.f32 %v4128, %v4098
  %v4130 = vadd.f32 %v4129, %v4099
  %v4131 = vadd.f32 %v4130, %v4100
  %v4132 = vadd.f32 %v4131, %v4101
  %v4133 = vrot.slane %v4132, 4
  %v4134 = vadd.f32 %v4132, %v4133
  %v4135 = vrot.slane %v4134, 2
  %v4136 = vadd.f32 %v4134, %v4135
  %v4137 = vrot.slane %v4136, 1
  %v4138 = vadd.f32 %v4136, %v4137
  %v4139 = vadd.f32 %v4069, %v4138
  %4140 = vst [vmem:[%s4] sm:$0x1] %v4139
  // Predicated region
  $region14: #{frame_discriminator_forward.7} parent=0 // pred_check
    _
  $region15: #{frame_discriminator_forward.7} parent=0 // pred_check_branch
    %4142 = sbr.rel (0) target = $region17
  $region16: #{frame_discriminator_forward.7} parent=0 // pred_region
    _
  $region17: #{frame_discriminator_forward.7} parent=0 // pred_fallthru
    _
  // Predicated region
  $region18: #{frame_discriminator_forward.7} parent=0 // pred_check
    _
  $region19: #{frame_discriminator_forward.7} parent=0 // pred_check_branch
    %4144 = sbr.rel (0) target = $region21
  $region20: #{frame_discriminator_forward.7} parent=0 // pred_region
    _
  $region21: #{frame_discriminator_forward.7} parent=0 // pred_fallthru
    _
  // Predicated region
  $region22: #{frame_discriminator_forward.7} parent=0 // pred_check
    _
  $region23: #{frame_discriminator_forward.7} parent=0 // pred_check_branch
    %4146 = sbr.rel (0) target = $region25
  $region24: #{frame_discriminator_forward.7} parent=0 // pred_region
    _
  $region25: #{frame_discriminator_forward.7} parent=0 // pred_fallthru
    _
  // Predicated region
  $region26: #{frame_discriminator_forward.7} parent=0 // pred_check
    _
  $region27: #{frame_discriminator_forward.7} parent=0 // pred_check_branch
    %4148 = sbr.rel (0) target = $region29
  $region28: #{frame_discriminator_forward.7} parent=0 // pred_region
    _
  $region29: #{frame_discriminator_forward.7} parent=0 // pred_fallthru
    _
  // Predicated region
  $region30: #{frame_discriminator_forward.7} parent=0 // pred_check
    _
  $region31: #{frame_discriminator_forward.7} parent=0 // pred_check_branch
    %4150 = sbr.rel (0) target = $region33
  $region32: #{frame_discriminator_forward.7} parent=0 // pred_region
    _
  $region33: #{frame_discriminator_forward.7} parent=0 // pred_fallthru
    _
  // Predicated region
  $region34: #{frame_discriminator_forward.7} parent=0 // pred_check
    _
  $region35: #{frame_discriminator_forward.7} parent=0 // pred_check_branch
    %4152 = sbr.rel (0) target = $region37
  $region36: #{frame_discriminator_forward.7} parent=0 // pred_region
    _
  $region37: #{frame_discriminator_forward.7} parent=0 // pred_fallthru
    _

// kernel: frame_discriminator_forward.9
$region0: #{frame_discriminator_forward.9}
  #allocation0 [shape = 'u32[]', space=smem, size = 0x4, offset = 0x4, fixed_abs, tag = 'smem constant byte address 0x4 - core index']
  #allocation1 [shape = 'u32[144,128]{1,0:T(1,128)}', space=vmem, size = 0x12000, scoped, tag = 'internal scratch']
  %s0 = inlined_call_operand.vmem [shape: bf16[16,2048], index: 0, kind: input, shape index: {}]
  %s1 = inlined_call_operand.vmem [shape: f32[1,2048], index: 1, kind: input, shape index: {}]
  %s2 = inlined_call_operand.vmem [shape: f32[1,2048], index: 2, kind: input, shape index: {}]
  %s3 = inlined_call_operand.vmem [shape: f32[1,2048], index: 3, kind: input, shape index: {}]
  %s4 = inlined_call_operand.vmem [shape: f32[16,1], index: 4, kind: output, shape index: {}]
  %s5 = sld [smem:[#allocation0]]
  $region26: #{frame_discriminator_forward.9} parent=0
    _
  %s7 = ssub.s32 1, %s5
  %s8 = scalar_select 0, %s7, %s5
  // Predicated region
  $region2: #{frame_discriminator_forward.9} parent=0 // pred_check
    _
  $region3: #{frame_discriminator_forward.9} parent=0 // pred_check_branch
    %10 = sbr.rel (0) target = $region5
  $region4: #{frame_discriminator_forward.9} parent=0 // pred_region
    _
  $region5: #{frame_discriminator_forward.9} parent=0 // pred_fallthru
    _
  // Predicated region
  $region6: #{frame_discriminator_forward.9} parent=0 // pred_check
    _
  $region7: #{frame_discriminator_forward.9} parent=0 // pred_check_branch
    %12 = sbr.rel (0) target = $region9
  $region8: #{frame_discriminator_forward.9} parent=0 // pred_region
    _
  $region9: #{frame_discriminator_forward.9} parent=0 // pred_fallthru
    _
  // Predicated region
  $region10: #{frame_discriminator_forward.9} parent=0 // pred_check
    _
  $region11: #{frame_discriminator_forward.9} parent=0 // pred_check_branch
    %14 = sbr.rel (0) target = $region13
  $region12: #{frame_discriminator_forward.9} parent=0 // pred_region
    _
  $region13: #{frame_discriminator_forward.9} parent=0 // pred_fallthru
    _
  // Predicated region
  $region14: #{frame_discriminator_forward.9} parent=0 // pred_check
    _
  $region15: #{frame_discriminator_forward.9} parent=0 // pred_check_branch
    %16 = sbr.rel (0) target = $region17
  $region16: #{frame_discriminator_forward.9} parent=0 // pred_region
    _
  $region17: #{frame_discriminator_forward.9} parent=0 // pred_fallthru
    _
  %v17 = vld [vmem:[%s0] sm:$0xff]
  %v18 = vld [vmem:[%s0 + $0x8] sm:$0xff]
  %v19 = vld [vmem:[%s0 + $0x10] sm:$0xff]
  %v20 = vld [vmem:[%s0 + $0x18] sm:$0xff]
  %v21 = vld [vmem:[%s0 + $0x20] sm:$0xff]
  %v22 = vld [vmem:[%s0 + $0x28] sm:$0xff]
  %v23 = vld [vmem:[%s0 + $0x30] sm:$0xff]
  %v24 = vld [vmem:[%s0 + $0x38] sm:$0xff]
  %v25 = vld [vmem:[%s0 + $0x40] sm:$0xff]
  %v26 = vld [vmem:[%s0 + $0x48] sm:$0xff]
  %v27 = vld [vmem:[%s0 + $0x50] sm:$0xff]
  %v28 = vld [vmem:[%s0 + $0x58] sm:$0xff]
  %v29 = vld [vmem:[%s0 + $0x60] sm:$0xff]
  %v30 = vld [vmem:[%s0 + $0x68] sm:$0xff]
  %v31 = vld [vmem:[%s0 + $0x70] sm:$0xff]
  %v32 = vld [vmem:[%s0 + $0x78] sm:$0xff]
  %v33 = vunpack.c.l.bf16 %v17
  %v34 = vunpack.c.h.bf16 %v17
  %v35 = vunpack.c.l.bf16 %v18
  %v36 = vunpack.c.h.bf16 %v18
  %v37 = vunpack.c.l.bf16 %v19
  %v38 = vunpack.c.h.bf16 %v19
  %v39 = vunpack.c.l.bf16 %v20
  %v40 = vunpack.c.h.bf16 %v20
  %v41 = vunpack.c.l.bf16 %v21
  %v42 = vunpack.c.h.bf16 %v21
  %v43 = vunpack.c.l.bf16 %v22
  %v44 = vunpack.c.h.bf16 %v22
  %v45 = vunpack.c.l.bf16 %v23
  %v46 = vunpack.c.h.bf16 %v23
  %v47 = vunpack.c.l.bf16 %v24
  %v48 = vunpack.c.h.bf16 %v24
  %v49 = vunpack.c.l.bf16 %v25
  %v50 = vunpack.c.h.bf16 %v25
  %v51 = vunpack.c.l.bf16 %v26
  %v52 = vunpack.c.h.bf16 %v26
  %v53 = vunpack.c.l.bf16 %v27
  %v54 = vunpack.c.h.bf16 %v27
  %v55 = vunpack.c.l.bf16 %v28
  %v56 = vunpack.c.h.bf16 %v28
  %v57 = vunpack.c.l.bf16 %v29
  %v58 = vunpack.c.h.bf16 %v29
  %v59 = vunpack.c.l.bf16 %v30
  %v60 = vunpack.c.h.bf16 %v30
  %v61 = vunpack.c.l.bf16 %v31
  %v62 = vunpack.c.h.bf16 %v31
  %v63 = vunpack.c.l.bf16 %v32
  %v64 = vunpack.c.h.bf16 %v32
  %v65 = vld [vmem:[%s2] sm:$0xff]
  %v66 = vld [vmem:[%s2 + $0x8] sm:$0xff]
  %v69 = vlaneseq
  %v70 = vshrl.u32 %v69, 7
  %v71 = vsub.s32 0, %v70
  %v72 = vrot.slane %v65, %v71
  %v73 = vlaneseq
  %v74 = vshrl.u32 %v73, 7
  %v75 = vsub.s32 1, %v74
  %v76 = vrot.slane %v65, %v75
  %v77 = vlaneseq
  %v78 = vshrl.u32 %v77, 7
  %v79 = vsub.s32 2, %v78
  %v80 = vrot.slane %v65, %v79
  %v81 = vlaneseq
  %v82 = vshrl.u32 %v81, 7
  %v83 = vsub.s32 3, %v82
  %v84 = vrot.slane %v65, %v83
  %v85 = vlaneseq
  %v86 = vshrl.u32 %v85, 7
  %v87 = vsub.s32 4, %v86
  %v88 = vrot.slane %v65, %v87
  %v89 = vlaneseq
  %v90 = vshrl.u32 %v89, 7
  %v91 = vsub.s32 5, %v90
  %v92 = vrot.slane %v65, %v91
  %v93 = vlaneseq
  %v94 = vshrl.u32 %v93, 7
  %v95 = vsub.s32 6, %v94
  %v96 = vrot.slane %v65, %v95
  %v97 = vlaneseq
  %v98 = vshrl.u32 %v97, 7
  %v99 = vsub.s32 7, %v98
  %v100 = vrot.slane %v65, %v99
  %v101 = vlaneseq
  %v102 = vshrl.u32 %v101, 7
  %v103 = vsub.s32 0, %v102
  %v104 = vrot.slane %v66, %v103
  %v105 = vlaneseq
  %v106 = vshrl.u32 %v105, 7
  %v107 = vsub.s32 1, %v106
  %v108 = vrot.slane %v66, %v107
  %v109 = vlaneseq
  %v110 = vshrl.u32 %v109, 7
  %v111 = vsub.s32 2, %v110
  %v112 = vrot.slane %v66, %v111
  %v113 = vlaneseq
  %v114 = vshrl.u32 %v113, 7
  %v115 = vsub.s32 3, %v114
  %v116 = vrot.slane %v66, %v115
  %v117 = vlaneseq
  %v118 = vshrl.u32 %v117, 7
  %v119 = vsub.s32 4, %v118
  %v120 = vrot.slane %v66, %v119
  %v121 = vlaneseq
  %v122 = vshrl.u32 %v121, 7
  %v123 = vsub.s32 5, %v122
  %v124 = vrot.slane %v66, %v123
  %v125 = vlaneseq
  %v126 = vshrl.u32 %v125, 7
  %v127 = vsub.s32 6, %v126
  %v128 = vrot.slane %v66, %v127
  %v129 = vlaneseq
  %v130 = vshrl.u32 %v129, 7
  %v131 = vsub.s32 7, %v130
  %v132 = vrot.slane %v66, %v131
  %v149 = vmul.f32 %v33, %v72
  %v150 = vmul.f32 %v34, %v76
  %v151 = vmul.f32 %v35, %v80
  %v152 = vmul.f32 %v36, %v84
  %v153 = vmul.f32 %v37, %v88
  %v154 = vmul.f32 %v38, %v92
  %v155 = vmul.f32 %v39, %v96
  %v156 = vmul.f32 %v40, %v100
  %v157 = vmul.f32 %v41, %v104
  %v158 = vmul.f32 %v42, %v108
  %v159 = vmul.f32 %v43, %v112
  %v160 = vmul.f32 %v44, %v116
  %v161 = vmul.f32 %v45, %v120
  %v162 = vmul.f32 %v46, %v124
  %v163 = vmul.f32 %v47, %v128
  %v164 = vmul.f32 %v48, %v132
  %v165 = vmul.f32 %v49, %v72
  %v166 = vmul.f32 %v50, %v76
  %v167 = vmul.f32 %v51, %v80
  %v168 = vmul.f32 %v52, %v84
  %v169 = vmul.f32 %v53, %v88
  %v170 = vmul.f32 %v54, %v92
  %v171 = vmul.f32 %v55, %v96
  %v172 = vmul.f32 %v56, %v100
  %v173 = vmul.f32 %v57, %v104
  %v174 = vmul.f32 %v58, %v108
  %v175 = vmul.f32 %v59, %v112
  %v176 = vmul.f32 %v60, %v116
  %v177 = vmul.f32 %v61, %v120
  %v178 = vmul.f32 %v62, %v124
  %v179 = vmul.f32 %v63, %v128
  %v180 = vmul.f32 %v64, %v132
  %v181 = vld [vmem:[%s3] sm:$0xff]
  %v182 = vld [vmem:[%s3 + $0x8] sm:$0xff]
  %v185 = vlaneseq
  %v186 = vshrl.u32 %v185, 7
  %v187 = vsub.s32 0, %v186
  %v188 = vrot.slane %v181, %v187
  %v189 = vlaneseq
  %v190 = vshrl.u32 %v189, 7
  %v191 = vsub.s32 1, %v190
  %v192 = vrot.slane %v181, %v191
  %v193 = vlaneseq
  %v194 = vshrl.u32 %v193, 7
  %v195 = vsub.s32 2, %v194
  %v196 = vrot.slane %v181, %v195
  %v197 = vlaneseq
  %v198 = vshrl.u32 %v197, 7
  %v199 = vsub.s32 3, %v198
  %v200 = vrot.slane %v181, %v199
  %v201 = vlaneseq
  %v202 = vshrl.u32 %v201, 7
  %v203 = vsub.s32 4, %v202
  %v204 = vrot.slane %v181, %v203
  %v205 = vlaneseq
  %v206 = vshrl.u32 %v205, 7
  %v207 = vsub.s32 5, %v206
  %v208 = vrot.slane %v181, %v207
  %v209 = vlaneseq
  %v210 = vshrl.u32 %v209, 7
  %v211 = vsub.s32 6, %v210
  %v212 = vrot.slane %v181, %v211
  %v213 = vlaneseq
  %v214 = vshrl.u32 %v213, 7
  %v215 = vsub.s32 7, %v214
  %v216 = vrot.slane %v181, %v215
  %v217 = vlaneseq
  %v218 = vshrl.u32 %v217, 7
  %v219 = vsub.s32 0, %v218
  %v220 = vrot.slane %v182, %v219
  %v221 = vlaneseq
  %v222 = vshrl.u32 %v221, 7
  %v223 = vsub.s32 1, %v222
  %v224 = vrot.slane %v182, %v223
  %v225 = vlaneseq
  %v226 = vshrl.u32 %v225, 7
  %v227 = vsub.s32 2, %v226
  %v228 = vrot.slane %v182, %v227
  %v229 = vlaneseq
  %v230 = vshrl.u32 %v229, 7
  %v231 = vsub.s32 3, %v230
  %v232 = vrot.slane %v182, %v231
  %v233 = vlaneseq
  %v234 = vshrl.u32 %v233, 7
  %v235 = vsub.s32 4, %v234
  %v236 = vrot.slane %v182, %v235
  %v237 = vlaneseq
  %v238 = vshrl.u32 %v237, 7
  %v239 = vsub.s32 5, %v238
  %v240 = vrot.slane %v182, %v239
  %v241 = vlaneseq
  %v242 = vshrl.u32 %v241, 7
  %v243 = vsub.s32 6, %v242
  %v244 = vrot.slane %v182, %v243
  %v245 = vlaneseq
  %v246 = vshrl.u32 %v245, 7
  %v247 = vsub.s32 7, %v246
  %v248 = vrot.slane %v182, %v247
  %v265 = vadd.f32 %v149, %v188
  %v266 = vadd.f32 %v150, %v192
  %v267 = vadd.f32 %v151, %v196
  %v268 = vadd.f32 %v152, %v200
  %v269 = vadd.f32 %v153, %v204
  %v270 = vadd.f32 %v154, %v208
  %v271 = vadd.f32 %v155, %v212
  %v272 = vadd.f32 %v156, %v216
  %v273 = vadd.f32 %v157, %v220
  %v274 = vadd.f32 %v158, %v224
  %v275 = vadd.f32 %v159, %v228
  %v276 = vadd.f32 %v160, %v232
  %v277 = vadd.f32 %v161, %v236
  %v278 = vadd.f32 %v162, %v240
  %v279 = vadd.f32 %v163, %v244
  %v280 = vadd.f32 %v164, %v248
  %v281 = vadd.f32 %v165, %v188
  %v282 = vadd.f32 %v166, %v192
  %v283 = vadd.f32 %v167, %v196
  %v284 = vadd.f32 %v168, %v200
  %v285 = vadd.f32 %v169, %v204
  %v286 = vadd.f32 %v170, %v208
  %v287 = vadd.f32 %v171, %v212
  %v288 = vadd.f32 %v172, %v216
  %v289 = vadd.f32 %v173, %v220
  %v290 = vadd.f32 %v174, %v224
  %v291 = vadd.f32 %v175, %v228
  %v292 = vadd.f32 %v176, %v232
  %v293 = vadd.f32 %v177, %v236
  %v294 = vadd.f32 %v178, %v240
  %v295 = vadd.f32 %v179, %v244
  %v296 = vadd.f32 %v180, %v248
  %vm297 = vcmp.gt.f32.partialorder %v265, 0.0
  %vm298 = vcmp.gt.f32.partialorder %v266, 0.0
  %vm299 = vcmp.gt.f32.partialorder %v267, 0.0
  %vm300 = vcmp.gt.f32.partialorder %v268, 0.0
  %vm301 = vcmp.gt.f32.partialorder %v269, 0.0
  %vm302 = vcmp.gt.f32.partialorder %v270, 0.0
  %vm303 = vcmp.gt.f32.partialorder %v271, 0.0
  %vm304 = vcmp.gt.f32.partialorder %v272, 0.0
  %vm305 = vcmp.gt.f32.partialorder %v273, 0.0
  %vm306 = vcmp.gt.f32.partialorder %v274, 0.0
  %vm307 = vcmp.gt.f32.partialorder %v275, 0.0
  %vm308 = vcmp.gt.f32.partialorder %v276, 0.0
  %vm309 = vcmp.gt.f32.partialorder %v277, 0.0
  %vm310 = vcmp.gt.f32.partialorder %v278, 0.0
  %vm311 = vcmp.gt.f32.partialorder %v279, 0.0
  %vm312 = vcmp.gt.f32.partialorder %v280, 0.0
  %vm313 = vcmp.gt.f32.partialorder %v281, 0.0
  %vm314 = vcmp.gt.f32.partialorder %v282, 0.0
  %vm315 = vcmp.gt.f32.partialorder %v283, 0.0
  %vm316 = vcmp.gt.f32.partialorder %v284, 0.0
  %vm317 = vcmp.gt.f32.partialorder %v285, 0.0
  %vm318 = vcmp.gt.f32.partialorder %v286, 0.0
  %vm319 = vcmp.gt.f32.partialorder %v287, 0.0
  %vm320 = vcmp.gt.f32.partialorder %v288, 0.0
  %vm321 = vcmp.gt.f32.partialorder %v289, 0.0
  %vm322 = vcmp.gt.f32.partialorder %v290, 0.0
  %vm323 = vcmp.gt.f32.partialorder %v291, 0.0
  %vm324 = vcmp.gt.f32.partialorder %v292, 0.0
  %vm325 = vcmp.gt.f32.partialorder %v293, 0.0
  %vm326 = vcmp.gt.f32.partialorder %v294, 0.0
  %vm327 = vcmp.gt.f32.partialorder %v295, 0.0
  %vm328 = vcmp.gt.f32.partialorder %v296, 0.0
  %v329 = vmul.f32 %v265, 0.2
  %v330 = vmul.f32 %v266, 0.2
  %v331 = vmul.f32 %v267, 0.2
  %v332 = vmul.f32 %v268, 0.2
  %v333 = vmul.f32 %v269, 0.2
  %v334 = vmul.f32 %v270, 0.2
  %v335 = vmul.f32 %v271, 0.2
  %v336 = vmul.f32 %v272, 0.2
  %v337 = vmul.f32 %v273, 0.2
  %v338 = vmul.f32 %v274, 0.2
  %v339 = vmul.f32 %v275, 0.2
  %v340 = vmul.f32 %v276, 0.2
  %v341 = vmul.f32 %v277, 0.2
  %v342 = vmul.f32 %v278, 0.2
  %v343 = vmul.f32 %v279, 0.2
  %v344 = vmul.f32 %v280, 0.2
  %v345 = vmul.f32 %v281, 0.2
  %v346 = vmul.f32 %v282, 0.2
  %v347 = vmul.f32 %v283, 0.2
  %v348 = vmul.f32 %v284, 0.2
  %v349 = vmul.f32 %v285, 0.2
  %v350 = vmul.f32 %v286, 0.2
  %v351 = vmul.f32 %v287, 0.2
  %v352 = vmul.f32 %v288, 0.2
  %v353 = vmul.f32 %v289, 0.2
  %v354 = vmul.f32 %v290, 0.2
  %v355 = vmul.f32 %v291, 0.2
  %v356 = vmul.f32 %v292, 0.2
  %v357 = vmul.f32 %v293, 0.2
  %v358 = vmul.f32 %v294, 0.2
  %v359 = vmul.f32 %v295, 0.2
  %v360 = vmul.f32 %v296, 0.2
  %v361 = vsel %vm297, %v265, %v329
  %v362 = vsel %vm298, %v266, %v330
  %v363 = vsel %vm299, %v267, %v331
  %v364 = vsel %vm300, %v268, %v332
  %v365 = vsel %vm301, %v269, %v333
  %v366 = vsel %vm302, %v270, %v334
  %v367 = vsel %vm303, %v271, %v335
  %v368 = vsel %vm304, %v272, %v336
  %v369 = vsel %vm305, %v273, %v337
  %v370 = vsel %vm306, %v274, %v338
  %v371 = vsel %vm307, %v275, %v339
  %v372 = vsel %vm308, %v276, %v340
  %v373 = vsel %vm309, %v277, %v341
  %v374 = vsel %vm310, %v278, %v342
  %v375 = vsel %vm311, %v279, %v343
  %v376 = vsel %vm312, %v280, %v344
  %v377 = vsel %vm313, %v281, %v345
  %v378 = vsel %vm314, %v282, %v346
  %v379 = vsel %vm315, %v283, %v347
  %v380 = vsel %vm316, %v284, %v348
  %v381 = vsel %vm317, %v285, %v349
  %v382 = vsel %vm318, %v286, %v350
  %v383 = vsel %vm319, %v287, %v351
  %v384 = vsel %vm320, %v288, %v352
  %v385 = vsel %vm321, %v289, %v353
  %v386 = vsel %vm322, %v290, %v354
  %v387 = vsel %vm323, %v291, %v355
  %v388 = vsel %vm324, %v292, %v356
  %v389 = vsel %vm325, %v293, %v357
  %v390 = vsel %vm326, %v294, %v358
  %v391 = vsel %vm327, %v295, %v359
  %v392 = vsel %vm328, %v296, %v360
  %v393 = vld [vmem:[%s1] sm:$0xff]
  %v394 = vld [vmem:[%s1 + $0x8] sm:$0xff]
  %v397 = vlaneseq
  %v398 = vshrl.u32 %v397, 7
  %v399 = vsub.s32 0, %v398
  %v400 = vrot.slane %v393, %v399
  %v401 = vlaneseq
  %v402 = vshrl.u32 %v401, 7
  %v403 = vsub.s32 1, %v402
  %v404 = vrot.slane %v393, %v403
  %v405 = vlaneseq
  %v406 = vshrl.u32 %v405, 7
  %v407 = vsub.s32 2, %v406
  %v408 = vrot.slane %v393, %v407
  %v409 = vlaneseq
  %v410 = vshrl.u32 %v409, 7
  %v411 = vsub.s32 3, %v410
  %v412 = vrot.slane %v393, %v411
  %v413 = vlaneseq
  %v414 = vshrl.u32 %v413, 7
  %v415 = vsub.s32 4, %v414
  %v416 = vrot.slane %v393, %v415
  %v417 = vlaneseq
  %v418 = vshrl.u32 %v417, 7
  %v419 = vsub.s32 5, %v418
  %v420 = vrot.slane %v393, %v419
  %v421 = vlaneseq
  %v422 = vshrl.u32 %v421, 7
  %v423 = vsub.s32 6, %v422
  %v424 = vrot.slane %v393, %v423
  %v425 = vlaneseq
  %v426 = vshrl.u32 %v425, 7
  %v427 = vsub.s32 7, %v426
  %v428 = vrot.slane %v393, %v427
  %v429 = vlaneseq
  %v430 = vshrl.u32 %v429, 7
  %v431 = vsub.s32 0, %v430
  %v432 = vrot.slane %v394, %v431
  %v433 = vlaneseq
  %v434 = vshrl.u32 %v433, 7
  %v435 = vsub.s32 1, %v434
  %v436 = vrot.slane %v394, %v435
  %v437 = vlaneseq
  %v438 = vshrl.u32 %v437, 7
  %v439 = vsub.s32 2, %v438
  %v440 = vrot.slane %v394, %v439
  %v441 = vlaneseq
  %v442 = vshrl.u32 %v441, 7
  %v443 = vsub.s32 3, %v442
  %v444 = vrot.slane %v394, %v443
  %v445 = vlaneseq
  %v446 = vshrl.u32 %v445, 7
  %v447 = vsub.s32 4, %v446
  %v448 = vrot.slane %v394, %v447
  %v449 = vlaneseq
  %v450 = vshrl.u32 %v449, 7
  %v451 = vsub.s32 5, %v450
  %v452 = vrot.slane %v394, %v451
  %v453 = vlaneseq
  %v454 = vshrl.u32 %v453, 7
  %v455 = vsub.s32 6, %v454
  %v456 = vrot.slane %v394, %v455
  %v457 = vlaneseq
  %v458 = vshrl.u32 %v457, 7
  %v459 = vsub.s32 7, %v458
  %v460 = vrot.slane %v394, %v459
  %v477 = vmul.f32 %v361, %v400
  %v478 = vmul.f32 %v362, %v404
  %v479 = vmul.f32 %v363, %v408
  %v480 = vmul.f32 %v364, %v412
  %v481 = vmul.f32 %v365, %v416
  %v482 = vmul.f32 %v366, %v420
  %v483 = vmul.f32 %v367, %v424
  %v484 = vmul.f32 %v368, %v428
  %v485 = vmul.f32 %v369, %v432
  %v486 = vmul.f32 %v370, %v436
  %v487 = vmul.f32 %v371, %v440
  %v488 = vmul.f32 %v372, %v444
  %v489 = vmul.f32 %v373, %v448
  %v490 = vmul.f32 %v374, %v452
  %v491 = vmul.f32 %v375, %v456
  %v492 = vmul.f32 %v376, %v460
  %v493 = vmul.f32 %v377, %v400
  %v494 = vmul.f32 %v378, %v404
  %v495 = vmul.f32 %v379, %v408
  %v496 = vmul.f32 %v380, %v412
  %v497 = vmul.f32 %v381, %v416
  %v498 = vmul.f32 %v382, %v420
  %v499 = vmul.f32 %v383, %v424
  %v500 = vmul.f32 %v384, %v428
  %v501 = vmul.f32 %v385, %v432
  %v502 = vmul.f32 %v386, %v436
  %v503 = vmul.f32 %v387, %v440
  %v504 = vmul.f32 %v388, %v444
  %v505 = vmul.f32 %v389, %v448
  %v506 = vmul.f32 %v390, %v452
  %v507 = vmul.f32 %v391, %v456
  %v508 = vmul.f32 %v392, %v460
  %v509 = vadd.f32 %v477, %v478
  %v510 = vadd.f32 %v509, %v479
  %v511 = vadd.f32 %v510, %v480
  %v512 = vadd.f32 %v511, %v481
  %v513 = vadd.f32 %v512, %v482
  %v514 = vadd.f32 %v513, %v483
  %v515 = vadd.f32 %v514, %v484
  %v516 = vadd.f32 %v515, %v485
  %v517 = vadd.f32 %v516, %v486
  %v518 = vadd.f32 %v517, %v487
  %v519 = vadd.f32 %v518, %v488
  %v520 = vadd.f32 %v519, %v489
  %v521 = vadd.f32 %v520, %v490
  %v522 = vadd.f32 %v521, %v491
  %v523 = vadd.f32 %v522, %v492
  %524 = vadd.xlane.f32.xlu0 %v523
  %v525 = vpop.xlane.xlu0 %524
  %v526 = vadd.f32 %v493, %v494
  %v527 = vadd.f32 %v526, %v495
  %v528 = vadd.f32 %v527, %v496
  %v529 = vadd.f32 %v528, %v497
  %v530 = vadd.f32 %v529, %v498
  %v531 = vadd.f32 %v530, %v499
  %v532 = vadd.f32 %v531, %v500
  %v533 = vadd.f32 %v532, %v501
  %v534 = vadd.f32 %v533, %v502
  %v535 = vadd.f32 %v534, %v503
  %v536 = vadd.f32 %v535, %v504
  %v537 = vadd.f32 %v536, %v505
  %v538 = vadd.f32 %v537, %v506
  %v539 = vadd.f32 %v538, %v507
  %v540 = vadd.f32 %v539, %v508
  %541 = vadd.xlane.f32.xlu0 %v540
  %v542 = vpop.xlane.xlu0 %541
  %v543 = vsub.f32 0.0, %v525
  %v544 = vsub.f32 0.0, %v542
  %v545 = vmul.f32 %v543, 1.442695
  %v546 = vpow.pop %v545
  %v547 = vmul.f32 %v544, 1.442695
  %v548 = vpow.pop %v547
  %v549 = vadd.f32 %v546, 1.0
  %v550 = vadd.f32 %v548, 1.0
  %v551 = vrcp.pop %v549
  %v552 = vmul.f32 1.0, %v551
  %v553 = vrcp.pop %v550
  %v554 = vmul.f32 1.0, %v553
  %vm555 = vcmask 7168
  %556 = vst.msk [vmem:[%s4] sm:$0xff] %vm555, %v552
  %557 = vst.msk [vmem:[%s4 + $0x8] sm:$0xff] %vm555, %v554
  // Predicated region
  $region18: #{frame_discriminator_forward.9} parent=0 // pred_check
    _
  $region19: #{frame_discriminator_forward.9} parent=0 // pred_check_branch
    %559 = sbr.rel (0) target = $region21
  $region20: #{frame_discriminator_forward.9} parent=0 // pred_region
    _
  $region21: #{frame_discriminator_forward.9} parent=0 // pred_fallthru
    _
  // Predicated region
  $region22: #{frame_discriminator_forward.9} parent=0 // pred_check
    _
  $region23: #{frame_discriminator_forward.9} parent=0 // pred_check_branch
    %561 = sbr.rel (0) target = $region25
  $region24: #{frame_discriminator_forward.9} parent=0 // pred_region
    _
  $region25: #{frame_discriminator_forward.9} parent=0 // pred_fallthru
    _

</llo_original>
